<compile_context>
chip_gen: v7x
topology: tpu7x:2x2x1
jax: 0.10.0
libtpu: 0.0.40
codegen_flags: <defaults>
</compile_context>

<pallas_src>
import functools

import numpy as np

import jax
import jax.numpy as jnp
from jax.experimental import pallas as pl
from jax.experimental.pallas import tpu as pltpu

NUM_CLASSES = 4
IMG_SIZE = 16
BATCH = 2


# ----------------------------- fused Pallas kernel --------------------------

def _fused_disc_kernel(x_ref, sel1_ref, w1blk_ref, b1_ref, sel2_ref, w2_ref,
                       w3_ref, vecs_ref, o_ref):
    f32 = jnp.float32
    _, b2 = x_ref.shape               # (256, 2B)
    B = b2 // 2
    CL = 64 * B                       # y1 lane width: (sample, out_channel)

    x = x_ref[...]                    # (256, 2B): pixels on sublanes, (b,c) on lanes

    # ---------------- layer 1: Conv(2->64, k4, s2, p1) + LeakyReLU ----------
    # Per tap: weight matmul first (full-width (256, 64B) result), then one
    # gather matmul with K=256.  All samples processed together.
    acc1 = jnp.zeros((64, CL), f32)
    for k in range(16):
        xw = jnp.dot(x, w1blk_ref[k], preferred_element_type=f32)       # (256, 64B)
        acc1 = acc1 + jnp.dot(sel1_ref[k].astype(f32), xw,
                              preferred_element_type=f32)               # (64, 64B)
    y1 = acc1 + b1_ref[...]                                             # bias b1 (tiled over b)
    y1 = jnp.where(y1 > 0, y1, 0.2 * y1)                                # LeakyReLU(0.2)

    # ---------------- layer 2: Conv(64->128, k4, s2, p1) --------------------
    # One stacked gather matmul shared by all samples, then per-sample channel
    # extraction (gather-via-matmul with tiny iota-built 0/1 matrices) and 16
    # tap weight matmuls.  All constants O(1) in batch.
    sel2 = sel2_ref[...].astype(f32)                                    # (256, 64)
    R = jnp.dot(sel2, y1, preferred_element_type=f32)                   # (256, 64B): rows (k, o2)

    l_id = jax.lax.broadcasted_iota(jnp.int32, (CL, 64), 0)
    c_id = jax.lax.broadcasted_iota(jnp.int32, (CL, 64), 1)
    y2_blocks = []
    for b in range(B):
        eb = (l_id == c_id + 64 * b).astype(f32)                        # (64B, 64) extraction
        rb = jnp.dot(R, eb, preferred_element_type=f32)                 # (256, 64)
        acc2 = jnp.zeros((16, 128), f32)
        for k in range(16):
            acc2 = acc2 + jnp.dot(rb[k * 16:(k + 1) * 16, :], w2_ref[k],
                                  preferred_element_type=f32)           # (16, 128)
        y2_blocks.append(acc2)
    y2 = jnp.concatenate(y2_blocks, axis=0) + vecs_ref[0:1, :]          # (B*16, 128) + b2

    # ------------- BatchNorm2d (training-mode batch stats) + LeakyReLU ------
    mean = jnp.mean(y2, axis=0, keepdims=True)
    d = y2 - mean                                                       # hoisted shared term
    var = jnp.mean(d * d, axis=0, keepdims=True)
    y2 = d * jax.lax.rsqrt(var + 1e-5)
    y2 = y2 * vecs_ref[1:2, :] + vecs_ref[2:3, :]                       # gamma, beta
    y2 = jnp.where(y2 > 0, y2, 0.2 * y2)                                # LeakyReLU(0.2)

    # ---------------- layer 3: Conv(128->1, k4, s1, p0) + Sigmoid -----------
    w3t = jnp.concatenate([w3_ref[...]] * B, axis=0)                    # (B*16, 128)
    prod = y2 * w3t
    r_id = jax.lax.broadcasted_iota(jnp.int32, (B, B * 16), 0)
    s_id = jax.lax.broadcasted_iota(jnp.int32, (B, B * 16), 1)
    bsum = ((s_id >= r_id * 16) & (s_id < (r_id + 1) * 16)).astype(f32)  # per-sample row sums
    per_b = jnp.dot(bsum, prod, preferred_element_type=f32)             # (B, 128)
    logit = jnp.sum(per_b, axis=1, keepdims=True) + vecs_ref[3:4, 0:1]
    o_ref[...] = jax.nn.sigmoid(logit)                                  # (B, 1)


# ----------------------- constant selection matrices ------------------------

@functools.lru_cache(maxsize=None)
def _selection_constants():
    """0/1 gather matrices for the two stride-2 convs (exact in bfloat16)."""
    # Conv1 taps: gather padded 16x16 pixels -> 8x8 outputs (per sample).
    sel1 = np.zeros((16, 64, IMG_SIZE * IMG_SIZE), np.float32)
    for kh in range(4):
        for kw in range(4):
            k = kh * 4 + kw
            for oh in range(8):
                for ow in range(8):
                    h, w = 2 * oh + kh - 1, 2 * ow + kw - 1
                    if 0 <= h < 16 and 0 <= w < 16:
                        sel1[k, oh * 8 + ow, h * 16 + w] = 1.0
    # Conv2 taps stacked along rows: (k*16 + o2, o1) gathers 8x8 -> 4x4.
    sel2 = np.zeros((256, 64), np.float32)
    for kh in range(4):
        for kw in range(4):
            k = kh * 4 + kw
            for oh in range(4):
                for ow in range(4):
                    h, w = 2 * oh + kh - 1, 2 * ow + kw - 1
                    if 0 <= h < 8 and 0 <= w < 8:
                        sel2[k * 16 + oh * 4 + ow, h * 8 + w] = 1.0
    return jnp.asarray(sel1, jnp.bfloat16), jnp.asarray(sel2, jnp.bfloat16)


# ------------------------------- params / prep ------------------------------

def init_params(key):
    ks = jax.random.split(key, 8)
    s = 0.05
    return {
        "emb": jax.random.normal(ks[0], (NUM_CLASSES, IMG_SIZE * IMG_SIZE), jnp.float32),
        "w1": s * jax.random.normal(ks[1], (64, 2, 4, 4), jnp.float32),     # OIHW
        "b1": s * jax.random.normal(ks[2], (64,), jnp.float32),
        "w2": s * jax.random.normal(ks[3], (128, 64, 4, 4), jnp.float32),   # OIHW
        "b2": s * jax.random.normal(ks[4], (128,), jnp.float32),
        "gamma": 1.0 + 0.1 * jax.random.normal(ks[5], (128,), jnp.float32),
        "beta": 0.1 * jax.random.normal(ks[6], (128,), jnp.float32),
        "w3": s * jax.random.normal(ks[7], (1, 128, 4, 4), jnp.float32),    # OIHW
        "b3": jnp.zeros((1,), jnp.float32),
    }


def prepare_params(params, batch):
    """One-time conversion of PyTorch-layout params into kernel-ready slabs."""
    B = batch
    sel1, sel2 = _selection_constants()
    w1s = jnp.transpose(params["w1"], (2, 3, 1, 0)).reshape(16, 2, 64)      # (k, c, oc)
    w2s = jnp.transpose(params["w2"], (2, 3, 1, 0)).reshape(16, 64, 128)    # (k, c, oc)
    w3 = jnp.transpose(params["w3"][0], (1, 2, 0)).reshape(16, 128)         # (o2, oc)
    # Layer-1 weights block-diagonal over batch: (16, 2B, 64B).  Only
    # batch-dependent constant (8 KiB * B^2) -- tiny even at large B.
    eye = jnp.eye(B, dtype=jnp.float32)
    w1blk = jnp.einsum("kco,bd->kbcdo", w1s, eye).reshape(16, 2 * B, 64 * B)
    b1row = jnp.tile(params["b1"], B).reshape(1, 64 * B)
    vecs = jnp.zeros((8, 128), jnp.float32)                                 # packed per-ch vectors
    vecs = vecs.at[0, :].set(params["b2"])
    vecs = vecs.at[1, :].set(params["gamma"])
    vecs = vecs.at[2, :].set(params["beta"])
    vecs = vecs.at[3, 0].set(params["b3"][0])
    return {"emb": params["emb"], "sel1": sel1, "sel2": sel2, "w1blk": w1blk,
            "b1row": b1row, "w2s": w2s, "w3": w3, "vecs": vecs}


# ------------------------------- forward ------------------------------------

def discriminator_forward(img_nchw, labels, prep):
    B = img_nchw.shape[0]
    npix = IMG_SIZE * IMG_SIZE

    # Embedding lookup + lane-dense channel packing in the wrapper.
    emb_rows = jnp.take(prep["emb"], labels, axis=0)                  # (B, 256)
    img_rows = img_nchw.reshape(B, npix)                              # (B, 256)
    x_all = jnp.stack([img_rows, emb_rows], axis=1)                   # (B, 2, 256)
    x_all = x_all.reshape(2 * B, npix).T                              # (256, 2B), lanes=(b,c)

    flops = 2 * (16 * (npix * 2 * B * 64 * B + 64 * npix * 64 * B)
                 + 256 * 64 * 64 * B
                 + B * (256 * 64 * B * 64 + 16 * 16 * 64 * 128)
                 + B * B * 16 * 128)
    bytes_accessed = int(x_all.size * 4 + prep["sel1"].size * 2
                         + prep["w1blk"].size * 4 + prep["b1row"].size * 4
                         + prep["sel2"].size * 2 + prep["w2s"].size * 4
                         + prep["w3"].size * 4 + prep["vecs"].size * 4 + B * 4)

    vmem = pl.BlockSpec(memory_space=pltpu.MemorySpace.VMEM)
    out = pl.pallas_call(
        _fused_disc_kernel,
        out_shape=jax.ShapeDtypeStruct((B, 1), jnp.float32),
        in_specs=[vmem] * 8,
        out_specs=vmem,
        cost_estimate=pl.CostEstimate(flops=flops, transcendentals=128 + B,
                                      bytes_accessed=bytes_accessed),
    )(x_all, prep["sel1"], prep["w1blk"], prep["b1row"], prep["sel2"],
      prep["w2s"], prep["w3"], prep["vecs"])
    return out.reshape(-1)                                            # (B,)


# ---------------------------- pure-JAX reference ----------------------------

def reference_forward(img_nchw, labels, params):
    B = img_nchw.shape[0]
    emb = jnp.take(params["emb"], labels, axis=0).reshape(B, 1, IMG_SIZE, IMG_SIZE)
    x = jnp.concatenate([img_nchw, emb], axis=1)

    def conv(x, w, b, stride, pad):
        y = jax.lax.conv_general_dilated(
            x, w, (stride, stride), [(pad, pad), (pad, pad)],
            dimension_numbers=("NCHW", "OIHW", "NCHW"))
        return y + b.reshape(1, -1, 1, 1)

    x = conv(x, params["w1"], params["b1"], 2, 1)
    x = jnp.where(x > 0, x, 0.2 * x)
    x = conv(x, params["w2"], params["b2"], 2, 1)
    mean = x.mean(axis=(0, 2, 3), keepdims=True)
    var = ((x - mean) ** 2).mean(axis=(0, 2, 3), keepdims=True)
    x = (x - mean) / jnp.sqrt(var + 1e-5)
    x = x * params["gamma"].reshape(1, -1, 1, 1) + params["beta"].reshape(1, -1, 1, 1)
    x = jnp.where(x > 0, x, 0.2 * x)
    x = conv(x, params["w3"], params["b3"], 1, 0)
    x = jax.nn.sigmoid(x)
    return x.reshape(-1, 1).squeeze(1)


# ---------------------------------- main ------------------------------------

if __name__ == "__main__":
    key = jax.random.PRNGKey(0)
    k_img, k_lab, k_par = jax.random.split(key, 3)

    img = jax.random.normal(k_img, (BATCH, 1, IMG_SIZE, IMG_SIZE), jnp.float32)
    labels = jax.random.randint(k_lab, (BATCH,), 0, NUM_CLASSES)
    params = init_params(k_par)

    prep = prepare_params(params, BATCH)                 # one-time weight prep
    fwd = jax.jit(discriminator_forward)

    out = jax.block_until_ready(fwd(img, labels, prep))
    ref = jax.block_until_ready(reference_forward(img, labels, params))

    assert out.shape == (BATCH,), out.shape
    assert jnp.allclose(out, ref, atol=1e-3, rtol=1e-3), (out, ref)

    print("KERNEL_OK")
</pallas_src>

<mosaic_0001>
module attributes {stable_mosaic.version = 11 : i64} {
  func.func @_fused_disc_kernel(%arg0: memref<256x4xf32, #tpu.memory_space<vmem>>, %arg1: memref<16x64x256xbf16, #tpu.memory_space<vmem>>, %arg2: memref<16x4x128xf32, #tpu.memory_space<vmem>>, %arg3: memref<1x128xf32, #tpu.memory_space<vmem>>, %arg4: memref<256x64xbf16, #tpu.memory_space<vmem>>, %arg5: memref<16x64x128xf32, #tpu.memory_space<vmem>>, %arg6: memref<16x128xf32, #tpu.memory_space<vmem>>, %arg7: memref<8x128xf32, #tpu.memory_space<vmem>>, %arg8: memref<2x1xf32, #tpu.memory_space<vmem>>) attributes {dimension_semantics = [], scalar_prefetch = 0 : i64, scratch_operands = 0 : i64, tpu.core_type = #tpu.core_type<tc>} {
    %c0 = arith.constant 0 : index
    %c0_0 = arith.constant 0 : index
    %0 = vector.load %arg0[%c0, %c0_0] : memref<256x4xf32, #tpu.memory_space<vmem>>, vector<256x4xf32>
    %cst = arith.constant 0.000000e+00 : f32
    %1 = vector.broadcast %cst : f32 to vector<64x128xf32>
    %c0_1 = arith.constant 0 : index
    %c0_2 = arith.constant 0 : index
    %c0_3 = arith.constant 0 : index
    %2 = vector.load %arg2[%c0_1, %c0_2, %c0_3] : memref<16x4x128xf32, #tpu.memory_space<vmem>>, vector<1x4x128xf32>
    %3 = vector.shape_cast %2 : vector<1x4x128xf32> to vector<4x128xf32>
    %cst_4 = arith.constant dense<0.000000e+00> : vector<256x128xf32>
    %4 = tpu.matmul %0, %3, %cst_4 {dimension_numbers = #tpu.dot_dimension_numbers<[1], [0], [0], [1], [0, 0, 1, 1], [], []>} : vector<256x4xf32>, vector<4x128xf32>, vector<256x128xf32> -> vector<256x128xf32>
    %c0_5 = arith.constant 0 : index
    %c0_6 = arith.constant 0 : index
    %c0_7 = arith.constant 0 : index
    %5 = vector.load %arg1[%c0_5, %c0_6, %c0_7] : memref<16x64x256xbf16, #tpu.memory_space<vmem>>, vector<1x64x256xbf16>
    %6 = vector.shape_cast %5 : vector<1x64x256xbf16> to vector<64x256xbf16>
    %7 = arith.extf %6 : vector<64x256xbf16> to vector<64x256xf32>
    %cst_8 = arith.constant dense<0.000000e+00> : vector<64x128xf32>
    %8 = tpu.matmul %7, %4, %cst_8 {dimension_numbers = #tpu.dot_dimension_numbers<[1], [0], [0], [1], [0, 0, 1, 1], [], []>} : vector<64x256xf32>, vector<256x128xf32>, vector<64x128xf32> -> vector<64x128xf32>
    %9 = arith.addf %1, %8 : vector<64x128xf32>
    %c1 = arith.constant 1 : index
    %c0_9 = arith.constant 0 : index
    %c0_10 = arith.constant 0 : index
    %10 = vector.load %arg2[%c1, %c0_9, %c0_10] : memref<16x4x128xf32, #tpu.memory_space<vmem>>, vector<1x4x128xf32>
    %11 = vector.shape_cast %10 : vector<1x4x128xf32> to vector<4x128xf32>
    %cst_11 = arith.constant dense<0.000000e+00> : vector<256x128xf32>
    %12 = tpu.matmul %0, %11, %cst_11 {dimension_numbers = #tpu.dot_dimension_numbers<[1], [0], [0], [1], [0, 0, 1, 1], [], []>} : vector<256x4xf32>, vector<4x128xf32>, vector<256x128xf32> -> vector<256x128xf32>
    %c1_12 = arith.constant 1 : index
    %c0_13 = arith.constant 0 : index
    %c0_14 = arith.constant 0 : index
    %13 = vector.load %arg1[%c1_12, %c0_13, %c0_14] : memref<16x64x256xbf16, #tpu.memory_space<vmem>>, vector<1x64x256xbf16>
    %14 = vector.shape_cast %13 : vector<1x64x256xbf16> to vector<64x256xbf16>
    %15 = arith.extf %14 : vector<64x256xbf16> to vector<64x256xf32>
    %cst_15 = arith.constant dense<0.000000e+00> : vector<64x128xf32>
    %16 = tpu.matmul %15, %12, %cst_15 {dimension_numbers = #tpu.dot_dimension_numbers<[1], [0], [0], [1], [0, 0, 1, 1], [], []>} : vector<64x256xf32>, vector<256x128xf32>, vector<64x128xf32> -> vector<64x128xf32>
    %17 = arith.addf %9, %16 : vector<64x128xf32>
    %c2 = arith.constant 2 : index
    %c0_16 = arith.constant 0 : index
    %c0_17 = arith.constant 0 : index
    %18 = vector.load %arg2[%c2, %c0_16, %c0_17] : memref<16x4x128xf32, #tpu.memory_space<vmem>>, vector<1x4x128xf32>
    %19 = vector.shape_cast %18 : vector<1x4x128xf32> to vector<4x128xf32>
    %cst_18 = arith.constant dense<0.000000e+00> : vector<256x128xf32>
    %20 = tpu.matmul %0, %19, %cst_18 {dimension_numbers = #tpu.dot_dimension_numbers<[1], [0], [0], [1], [0, 0, 1, 1], [], []>} : vector<256x4xf32>, vector<4x128xf32>, vector<256x128xf32> -> vector<256x128xf32>
    %c2_19 = arith.constant 2 : index
    %c0_20 = arith.constant 0 : index
    %c0_21 = arith.constant 0 : index
    %21 = vector.load %arg1[%c2_19, %c0_20, %c0_21] : memref<16x64x256xbf16, #tpu.memory_space<vmem>>, vector<1x64x256xbf16>
    %22 = vector.shape_cast %21 : vector<1x64x256xbf16> to vector<64x256xbf16>
    %23 = arith.extf %22 : vector<64x256xbf16> to vector<64x256xf32>
    %cst_22 = arith.constant dense<0.000000e+00> : vector<64x128xf32>
    %24 = tpu.matmul %23, %20, %cst_22 {dimension_numbers = #tpu.dot_dimension_numbers<[1], [0], [0], [1], [0, 0, 1, 1], [], []>} : vector<64x256xf32>, vector<256x128xf32>, vector<64x128xf32> -> vector<64x128xf32>
    %25 = arith.addf %17, %24 : vector<64x128xf32>
    %c3 = arith.constant 3 : index
    %c0_23 = arith.constant 0 : index
    %c0_24 = arith.constant 0 : index
    %26 = vector.load %arg2[%c3, %c0_23, %c0_24] : memref<16x4x128xf32, #tpu.memory_space<vmem>>, vector<1x4x128xf32>
    %27 = vector.shape_cast %26 : vector<1x4x128xf32> to vector<4x128xf32>
    %cst_25 = arith.constant dense<0.000000e+00> : vector<256x128xf32>
    %28 = tpu.matmul %0, %27, %cst_25 {dimension_numbers = #tpu.dot_dimension_numbers<[1], [0], [0], [1], [0, 0, 1, 1], [], []>} : vector<256x4xf32>, vector<4x128xf32>, vector<256x128xf32> -> vector<256x128xf32>
    %c3_26 = arith.constant 3 : index
    %c0_27 = arith.constant 0 : index
    %c0_28 = arith.constant 0 : index
    %29 = vector.load %arg1[%c3_26, %c0_27, %c0_28] : memref<16x64x256xbf16, #tpu.memory_space<vmem>>, vector<1x64x256xbf16>
    %30 = vector.shape_cast %29 : vector<1x64x256xbf16> to vector<64x256xbf16>
    %31 = arith.extf %30 : vector<64x256xbf16> to vector<64x256xf32>
    %cst_29 = arith.constant dense<0.000000e+00> : vector<64x128xf32>
    %32 = tpu.matmul %31, %28, %cst_29 {dimension_numbers = #tpu.dot_dimension_numbers<[1], [0], [0], [1], [0, 0, 1, 1], [], []>} : vector<64x256xf32>, vector<256x128xf32>, vector<64x128xf32> -> vector<64x128xf32>
    %33 = arith.addf %25, %32 : vector<64x128xf32>
    %c4 = arith.constant 4 : index
    %c0_30 = arith.constant 0 : index
    %c0_31 = arith.constant 0 : index
    %34 = vector.load %arg2[%c4, %c0_30, %c0_31] : memref<16x4x128xf32, #tpu.memory_space<vmem>>, vector<1x4x128xf32>
    %35 = vector.shape_cast %34 : vector<1x4x128xf32> to vector<4x128xf32>
    %cst_32 = arith.constant dense<0.000000e+00> : vector<256x128xf32>
    %36 = tpu.matmul %0, %35, %cst_32 {dimension_numbers = #tpu.dot_dimension_numbers<[1], [0], [0], [1], [0, 0, 1, 1], [], []>} : vector<256x4xf32>, vector<4x128xf32>, vector<256x128xf32> -> vector<256x128xf32>
    %c4_33 = arith.constant 4 : index
    %c0_34 = arith.constant 0 : index
    %c0_35 = arith.constant 0 : index
    %37 = vector.load %arg1[%c4_33, %c0_34, %c0_35] : memref<16x64x256xbf16, #tpu.memory_space<vmem>>, vector<1x64x256xbf16>
    %38 = vector.shape_cast %37 : vector<1x64x256xbf16> to vector<64x256xbf16>
    %39 = arith.extf %38 : vector<64x256xbf16> to vector<64x256xf32>
    %cst_36 = arith.constant dense<0.000000e+00> : vector<64x128xf32>
    %40 = tpu.matmul %39, %36, %cst_36 {dimension_numbers = #tpu.dot_dimension_numbers<[1], [0], [0], [1], [0, 0, 1, 1], [], []>} : vector<64x256xf32>, vector<256x128xf32>, vector<64x128xf32> -> vector<64x128xf32>
    %41 = arith.addf %33, %40 : vector<64x128xf32>
    %c5 = arith.constant 5 : index
    %c0_37 = arith.constant 0 : index
    %c0_38 = arith.constant 0 : index
    %42 = vector.load %arg2[%c5, %c0_37, %c0_38] : memref<16x4x128xf32, #tpu.memory_space<vmem>>, vector<1x4x128xf32>
    %43 = vector.shape_cast %42 : vector<1x4x128xf32> to vector<4x128xf32>
    %cst_39 = arith.constant dense<0.000000e+00> : vector<256x128xf32>
    %44 = tpu.matmul %0, %43, %cst_39 {dimension_numbers = #tpu.dot_dimension_numbers<[1], [0], [0], [1], [0, 0, 1, 1], [], []>} : vector<256x4xf32>, vector<4x128xf32>, vector<256x128xf32> -> vector<256x128xf32>
    %c5_40 = arith.constant 5 : index
    %c0_41 = arith.constant 0 : index
    %c0_42 = arith.constant 0 : index
    %45 = vector.load %arg1[%c5_40, %c0_41, %c0_42] : memref<16x64x256xbf16, #tpu.memory_space<vmem>>, vector<1x64x256xbf16>
    %46 = vector.shape_cast %45 : vector<1x64x256xbf16> to vector<64x256xbf16>
    %47 = arith.extf %46 : vector<64x256xbf16> to vector<64x256xf32>
    %cst_43 = arith.constant dense<0.000000e+00> : vector<64x128xf32>
    %48 = tpu.matmul %47, %44, %cst_43 {dimension_numbers = #tpu.dot_dimension_numbers<[1], [0], [0], [1], [0, 0, 1, 1], [], []>} : vector<64x256xf32>, vector<256x128xf32>, vector<64x128xf32> -> vector<64x128xf32>
    %49 = arith.addf %41, %48 : vector<64x128xf32>
    %c6 = arith.constant 6 : index
    %c0_44 = arith.constant 0 : index
    %c0_45 = arith.constant 0 : index
    %50 = vector.load %arg2[%c6, %c0_44, %c0_45] : memref<16x4x128xf32, #tpu.memory_space<vmem>>, vector<1x4x128xf32>
    %51 = vector.shape_cast %50 : vector<1x4x128xf32> to vector<4x128xf32>
    %cst_46 = arith.constant dense<0.000000e+00> : vector<256x128xf32>
    %52 = tpu.matmul %0, %51, %cst_46 {dimension_numbers = #tpu.dot_dimension_numbers<[1], [0], [0], [1], [0, 0, 1, 1], [], []>} : vector<256x4xf32>, vector<4x128xf32>, vector<256x128xf32> -> vector<256x128xf32>
    %c6_47 = arith.constant 6 : index
    %c0_48 = arith.constant 0 : index
    %c0_49 = arith.constant 0 : index
    %53 = vector.load %arg1[%c6_47, %c0_48, %c0_49] : memref<16x64x256xbf16, #tpu.memory_space<vmem>>, vector<1x64x256xbf16>
    %54 = vector.shape_cast %53 : vector<1x64x256xbf16> to vector<64x256xbf16>
    %55 = arith.extf %54 : vector<64x256xbf16> to vector<64x256xf32>
    %cst_50 = arith.constant dense<0.000000e+00> : vector<64x128xf32>
    %56 = tpu.matmul %55, %52, %cst_50 {dimension_numbers = #tpu.dot_dimension_numbers<[1], [0], [0], [1], [0, 0, 1, 1], [], []>} : vector<64x256xf32>, vector<256x128xf32>, vector<64x128xf32> -> vector<64x128xf32>
    %57 = arith.addf %49, %56 : vector<64x128xf32>
    %c7 = arith.constant 7 : index
    %c0_51 = arith.constant 0 : index
    %c0_52 = arith.constant 0 : index
    %58 = vector.load %arg2[%c7, %c0_51, %c0_52] : memref<16x4x128xf32, #tpu.memory_space<vmem>>, vector<1x4x128xf32>
    %59 = vector.shape_cast %58 : vector<1x4x128xf32> to vector<4x128xf32>
    %cst_53 = arith.constant dense<0.000000e+00> : vector<256x128xf32>
    %60 = tpu.matmul %0, %59, %cst_53 {dimension_numbers = #tpu.dot_dimension_numbers<[1], [0], [0], [1], [0, 0, 1, 1], [], []>} : vector<256x4xf32>, vector<4x128xf32>, vector<256x128xf32> -> vector<256x128xf32>
    %c7_54 = arith.constant 7 : index
    %c0_55 = arith.constant 0 : index
    %c0_56 = arith.constant 0 : index
    %61 = vector.load %arg1[%c7_54, %c0_55, %c0_56] : memref<16x64x256xbf16, #tpu.memory_space<vmem>>, vector<1x64x256xbf16>
    %62 = vector.shape_cast %61 : vector<1x64x256xbf16> to vector<64x256xbf16>
    %63 = arith.extf %62 : vector<64x256xbf16> to vector<64x256xf32>
    %cst_57 = arith.constant dense<0.000000e+00> : vector<64x128xf32>
    %64 = tpu.matmul %63, %60, %cst_57 {dimension_numbers = #tpu.dot_dimension_numbers<[1], [0], [0], [1], [0, 0, 1, 1], [], []>} : vector<64x256xf32>, vector<256x128xf32>, vector<64x128xf32> -> vector<64x128xf32>
    %65 = arith.addf %57, %64 : vector<64x128xf32>
    %c8 = arith.constant 8 : index
    %c0_58 = arith.constant 0 : index
    %c0_59 = arith.constant 0 : index
    %66 = vector.load %arg2[%c8, %c0_58, %c0_59] : memref<16x4x128xf32, #tpu.memory_space<vmem>>, vector<1x4x128xf32>
    %67 = vector.shape_cast %66 : vector<1x4x128xf32> to vector<4x128xf32>
    %cst_60 = arith.constant dense<0.000000e+00> : vector<256x128xf32>
    %68 = tpu.matmul %0, %67, %cst_60 {dimension_numbers = #tpu.dot_dimension_numbers<[1], [0], [0], [1], [0, 0, 1, 1], [], []>} : vector<256x4xf32>, vector<4x128xf32>, vector<256x128xf32> -> vector<256x128xf32>
    %c8_61 = arith.constant 8 : index
    %c0_62 = arith.constant 0 : index
    %c0_63 = arith.constant 0 : index
    %69 = vector.load %arg1[%c8_61, %c0_62, %c0_63] : memref<16x64x256xbf16, #tpu.memory_space<vmem>>, vector<1x64x256xbf16>
    %70 = vector.shape_cast %69 : vector<1x64x256xbf16> to vector<64x256xbf16>
    %71 = arith.extf %70 : vector<64x256xbf16> to vector<64x256xf32>
    %cst_64 = arith.constant dense<0.000000e+00> : vector<64x128xf32>
    %72 = tpu.matmul %71, %68, %cst_64 {dimension_numbers = #tpu.dot_dimension_numbers<[1], [0], [0], [1], [0, 0, 1, 1], [], []>} : vector<64x256xf32>, vector<256x128xf32>, vector<64x128xf32> -> vector<64x128xf32>
    %73 = arith.addf %65, %72 : vector<64x128xf32>
    %c9 = arith.constant 9 : index
    %c0_65 = arith.constant 0 : index
    %c0_66 = arith.constant 0 : index
    %74 = vector.load %arg2[%c9, %c0_65, %c0_66] : memref<16x4x128xf32, #tpu.memory_space<vmem>>, vector<1x4x128xf32>
    %75 = vector.shape_cast %74 : vector<1x4x128xf32> to vector<4x128xf32>
    %cst_67 = arith.constant dense<0.000000e+00> : vector<256x128xf32>
    %76 = tpu.matmul %0, %75, %cst_67 {dimension_numbers = #tpu.dot_dimension_numbers<[1], [0], [0], [1], [0, 0, 1, 1], [], []>} : vector<256x4xf32>, vector<4x128xf32>, vector<256x128xf32> -> vector<256x128xf32>
    %c9_68 = arith.constant 9 : index
    %c0_69 = arith.constant 0 : index
    %c0_70 = arith.constant 0 : index
    %77 = vector.load %arg1[%c9_68, %c0_69, %c0_70] : memref<16x64x256xbf16, #tpu.memory_space<vmem>>, vector<1x64x256xbf16>
    %78 = vector.shape_cast %77 : vector<1x64x256xbf16> to vector<64x256xbf16>
    %79 = arith.extf %78 : vector<64x256xbf16> to vector<64x256xf32>
    %cst_71 = arith.constant dense<0.000000e+00> : vector<64x128xf32>
    %80 = tpu.matmul %79, %76, %cst_71 {dimension_numbers = #tpu.dot_dimension_numbers<[1], [0], [0], [1], [0, 0, 1, 1], [], []>} : vector<64x256xf32>, vector<256x128xf32>, vector<64x128xf32> -> vector<64x128xf32>
    %81 = arith.addf %73, %80 : vector<64x128xf32>
    %c10 = arith.constant 10 : index
    %c0_72 = arith.constant 0 : index
    %c0_73 = arith.constant 0 : index
    %82 = vector.load %arg2[%c10, %c0_72, %c0_73] : memref<16x4x128xf32, #tpu.memory_space<vmem>>, vector<1x4x128xf32>
    %83 = vector.shape_cast %82 : vector<1x4x128xf32> to vector<4x128xf32>
    %cst_74 = arith.constant dense<0.000000e+00> : vector<256x128xf32>
    %84 = tpu.matmul %0, %83, %cst_74 {dimension_numbers = #tpu.dot_dimension_numbers<[1], [0], [0], [1], [0, 0, 1, 1], [], []>} : vector<256x4xf32>, vector<4x128xf32>, vector<256x128xf32> -> vector<256x128xf32>
    %c10_75 = arith.constant 10 : index
    %c0_76 = arith.constant 0 : index
    %c0_77 = arith.constant 0 : index
    %85 = vector.load %arg1[%c10_75, %c0_76, %c0_77] : memref<16x64x256xbf16, #tpu.memory_space<vmem>>, vector<1x64x256xbf16>
    %86 = vector.shape_cast %85 : vector<1x64x256xbf16> to vector<64x256xbf16>
    %87 = arith.extf %86 : vector<64x256xbf16> to vector<64x256xf32>
    %cst_78 = arith.constant dense<0.000000e+00> : vector<64x128xf32>
    %88 = tpu.matmul %87, %84, %cst_78 {dimension_numbers = #tpu.dot_dimension_numbers<[1], [0], [0], [1], [0, 0, 1, 1], [], []>} : vector<64x256xf32>, vector<256x128xf32>, vector<64x128xf32> -> vector<64x128xf32>
    %89 = arith.addf %81, %88 : vector<64x128xf32>
    %c11 = arith.constant 11 : index
    %c0_79 = arith.constant 0 : index
    %c0_80 = arith.constant 0 : index
    %90 = vector.load %arg2[%c11, %c0_79, %c0_80] : memref<16x4x128xf32, #tpu.memory_space<vmem>>, vector<1x4x128xf32>
    %91 = vector.shape_cast %90 : vector<1x4x128xf32> to vector<4x128xf32>
    %cst_81 = arith.constant dense<0.000000e+00> : vector<256x128xf32>
    %92 = tpu.matmul %0, %91, %cst_81 {dimension_numbers = #tpu.dot_dimension_numbers<[1], [0], [0], [1], [0, 0, 1, 1], [], []>} : vector<256x4xf32>, vector<4x128xf32>, vector<256x128xf32> -> vector<256x128xf32>
    %c11_82 = arith.constant 11 : index
    %c0_83 = arith.constant 0 : index
    %c0_84 = arith.constant 0 : index
    %93 = vector.load %arg1[%c11_82, %c0_83, %c0_84] : memref<16x64x256xbf16, #tpu.memory_space<vmem>>, vector<1x64x256xbf16>
    %94 = vector.shape_cast %93 : vector<1x64x256xbf16> to vector<64x256xbf16>
    %95 = arith.extf %94 : vector<64x256xbf16> to vector<64x256xf32>
    %cst_85 = arith.constant dense<0.000000e+00> : vector<64x128xf32>
    %96 = tpu.matmul %95, %92, %cst_85 {dimension_numbers = #tpu.dot_dimension_numbers<[1], [0], [0], [1], [0, 0, 1, 1], [], []>} : vector<64x256xf32>, vector<256x128xf32>, vector<64x128xf32> -> vector<64x128xf32>
    %97 = arith.addf %89, %96 : vector<64x128xf32>
    %c12 = arith.constant 12 : index
    %c0_86 = arith.constant 0 : index
    %c0_87 = arith.constant 0 : index
    %98 = vector.load %arg2[%c12, %c0_86, %c0_87] : memref<16x4x128xf32, #tpu.memory_space<vmem>>, vector<1x4x128xf32>
    %99 = vector.shape_cast %98 : vector<1x4x128xf32> to vector<4x128xf32>
    %cst_88 = arith.constant dense<0.000000e+00> : vector<256x128xf32>
    %100 = tpu.matmul %0, %99, %cst_88 {dimension_numbers = #tpu.dot_dimension_numbers<[1], [0], [0], [1], [0, 0, 1, 1], [], []>} : vector<256x4xf32>, vector<4x128xf32>, vector<256x128xf32> -> vector<256x128xf32>
    %c12_89 = arith.constant 12 : index
    %c0_90 = arith.constant 0 : index
    %c0_91 = arith.constant 0 : index
    %101 = vector.load %arg1[%c12_89, %c0_90, %c0_91] : memref<16x64x256xbf16, #tpu.memory_space<vmem>>, vector<1x64x256xbf16>
    %102 = vector.shape_cast %101 : vector<1x64x256xbf16> to vector<64x256xbf16>
    %103 = arith.extf %102 : vector<64x256xbf16> to vector<64x256xf32>
    %cst_92 = arith.constant dense<0.000000e+00> : vector<64x128xf32>
    %104 = tpu.matmul %103, %100, %cst_92 {dimension_numbers = #tpu.dot_dimension_numbers<[1], [0], [0], [1], [0, 0, 1, 1], [], []>} : vector<64x256xf32>, vector<256x128xf32>, vector<64x128xf32> -> vector<64x128xf32>
    %105 = arith.addf %97, %104 : vector<64x128xf32>
    %c13 = arith.constant 13 : index
    %c0_93 = arith.constant 0 : index
    %c0_94 = arith.constant 0 : index
    %106 = vector.load %arg2[%c13, %c0_93, %c0_94] : memref<16x4x128xf32, #tpu.memory_space<vmem>>, vector<1x4x128xf32>
    %107 = vector.shape_cast %106 : vector<1x4x128xf32> to vector<4x128xf32>
    %cst_95 = arith.constant dense<0.000000e+00> : vector<256x128xf32>
    %108 = tpu.matmul %0, %107, %cst_95 {dimension_numbers = #tpu.dot_dimension_numbers<[1], [0], [0], [1], [0, 0, 1, 1], [], []>} : vector<256x4xf32>, vector<4x128xf32>, vector<256x128xf32> -> vector<256x128xf32>
    %c13_96 = arith.constant 13 : index
    %c0_97 = arith.constant 0 : index
    %c0_98 = arith.constant 0 : index
    %109 = vector.load %arg1[%c13_96, %c0_97, %c0_98] : memref<16x64x256xbf16, #tpu.memory_space<vmem>>, vector<1x64x256xbf16>
    %110 = vector.shape_cast %109 : vector<1x64x256xbf16> to vector<64x256xbf16>
    %111 = arith.extf %110 : vector<64x256xbf16> to vector<64x256xf32>
    %cst_99 = arith.constant dense<0.000000e+00> : vector<64x128xf32>
    %112 = tpu.matmul %111, %108, %cst_99 {dimension_numbers = #tpu.dot_dimension_numbers<[1], [0], [0], [1], [0, 0, 1, 1], [], []>} : vector<64x256xf32>, vector<256x128xf32>, vector<64x128xf32> -> vector<64x128xf32>
    %113 = arith.addf %105, %112 : vector<64x128xf32>
    %c14 = arith.constant 14 : index
    %c0_100 = arith.constant 0 : index
    %c0_101 = arith.constant 0 : index
    %114 = vector.load %arg2[%c14, %c0_100, %c0_101] : memref<16x4x128xf32, #tpu.memory_space<vmem>>, vector<1x4x128xf32>
    %115 = vector.shape_cast %114 : vector<1x4x128xf32> to vector<4x128xf32>
    %cst_102 = arith.constant dense<0.000000e+00> : vector<256x128xf32>
    %116 = tpu.matmul %0, %115, %cst_102 {dimension_numbers = #tpu.dot_dimension_numbers<[1], [0], [0], [1], [0, 0, 1, 1], [], []>} : vector<256x4xf32>, vector<4x128xf32>, vector<256x128xf32> -> vector<256x128xf32>
    %c14_103 = arith.constant 14 : index
    %c0_104 = arith.constant 0 : index
    %c0_105 = arith.constant 0 : index
    %117 = vector.load %arg1[%c14_103, %c0_104, %c0_105] : memref<16x64x256xbf16, #tpu.memory_space<vmem>>, vector<1x64x256xbf16>
    %118 = vector.shape_cast %117 : vector<1x64x256xbf16> to vector<64x256xbf16>
    %119 = arith.extf %118 : vector<64x256xbf16> to vector<64x256xf32>
    %cst_106 = arith.constant dense<0.000000e+00> : vector<64x128xf32>
    %120 = tpu.matmul %119, %116, %cst_106 {dimension_numbers = #tpu.dot_dimension_numbers<[1], [0], [0], [1], [0, 0, 1, 1], [], []>} : vector<64x256xf32>, vector<256x128xf32>, vector<64x128xf32> -> vector<64x128xf32>
    %121 = arith.addf %113, %120 : vector<64x128xf32>
    %c15 = arith.constant 15 : index
    %c0_107 = arith.constant 0 : index
    %c0_108 = arith.constant 0 : index
    %122 = vector.load %arg2[%c15, %c0_107, %c0_108] : memref<16x4x128xf32, #tpu.memory_space<vmem>>, vector<1x4x128xf32>
    %123 = vector.shape_cast %122 : vector<1x4x128xf32> to vector<4x128xf32>
    %cst_109 = arith.constant dense<0.000000e+00> : vector<256x128xf32>
    %124 = tpu.matmul %0, %123, %cst_109 {dimension_numbers = #tpu.dot_dimension_numbers<[1], [0], [0], [1], [0, 0, 1, 1], [], []>} : vector<256x4xf32>, vector<4x128xf32>, vector<256x128xf32> -> vector<256x128xf32>
    %c15_110 = arith.constant 15 : index
    %c0_111 = arith.constant 0 : index
    %c0_112 = arith.constant 0 : index
    %125 = vector.load %arg1[%c15_110, %c0_111, %c0_112] : memref<16x64x256xbf16, #tpu.memory_space<vmem>>, vector<1x64x256xbf16>
    %126 = vector.shape_cast %125 : vector<1x64x256xbf16> to vector<64x256xbf16>
    %127 = arith.extf %126 : vector<64x256xbf16> to vector<64x256xf32>
    %cst_113 = arith.constant dense<0.000000e+00> : vector<64x128xf32>
    %128 = tpu.matmul %127, %124, %cst_113 {dimension_numbers = #tpu.dot_dimension_numbers<[1], [0], [0], [1], [0, 0, 1, 1], [], []>} : vector<64x256xf32>, vector<256x128xf32>, vector<64x128xf32> -> vector<64x128xf32>
    %129 = arith.addf %121, %128 : vector<64x128xf32>
    %c0_114 = arith.constant 0 : index
    %c0_115 = arith.constant 0 : index
    %130 = vector.load %arg3[%c0_114, %c0_115] : memref<1x128xf32, #tpu.memory_space<vmem>>, vector<1x128xf32>
    %131 = vector.broadcast %130 : vector<1x128xf32> to vector<64x128xf32>
    %132 = arith.addf %129, %131 : vector<64x128xf32>
    %cst_116 = arith.constant 0.000000e+00 : f32
    %133 = vector.broadcast %cst_116 : f32 to vector<64x128xf32>
    %134 = arith.cmpf ogt, %132, %133 : vector<64x128xf32>
    %cst_117 = arith.constant 2.000000e-01 : f32
    %135 = vector.broadcast %cst_117 : f32 to vector<64x128xf32>
    %136 = arith.mulf %135, %132 : vector<64x128xf32>
    %137 = arith.select %134, %132, %136 : vector<64x128xi1>, vector<64x128xf32>
    %c0_118 = arith.constant 0 : index
    %c0_119 = arith.constant 0 : index
    %138 = vector.load %arg4[%c0_118, %c0_119] : memref<256x64xbf16, #tpu.memory_space<vmem>>, vector<256x64xbf16>
    %139 = arith.extf %138 : vector<256x64xbf16> to vector<256x64xf32>
    %cst_120 = arith.constant dense<0.000000e+00> : vector<256x128xf32>
    %140 = tpu.matmul %139, %137, %cst_120 {dimension_numbers = #tpu.dot_dimension_numbers<[1], [0], [0], [1], [0, 0, 1, 1], [], []>} : vector<256x64xf32>, vector<64x128xf32>, vector<256x128xf32> -> vector<256x128xf32>
    %141 = tpu.iota {dimensions = array<i32: 0>} : vector<128x64xi32>
    %142 = tpu.iota {dimensions = array<i32: 1>} : vector<128x64xi32>
    %c0_i32 = arith.constant 0 : i32
    %143 = vector.broadcast %c0_i32 : i32 to vector<128x64xi32>
    %144 = arith.addi %142, %143 : vector<128x64xi32>
    %145 = arith.cmpi eq, %141, %144 : vector<128x64xi32>
    %146 = arith.extui %145 : vector<128x64xi1> to vector<128x64xi32>
    %147 = arith.sitofp %146 : vector<128x64xi32> to vector<128x64xf32>
    %cst_121 = arith.constant dense<0.000000e+00> : vector<256x64xf32>
    %148 = tpu.matmul %140, %147, %cst_121 {dimension_numbers = #tpu.dot_dimension_numbers<[1], [0], [0], [1], [0, 0, 1, 1], [], []>} : vector<256x128xf32>, vector<128x64xf32>, vector<256x64xf32> -> vector<256x64xf32>
    %cst_122 = arith.constant 0.000000e+00 : f32
    %149 = vector.broadcast %cst_122 : f32 to vector<16x128xf32>
    %150 = vector.extract_strided_slice %148 {offsets = [0, 0], sizes = [16, 64], strides = [1, 1]} : vector<256x64xf32> to vector<16x64xf32>
    %c0_123 = arith.constant 0 : index
    %c0_124 = arith.constant 0 : index
    %c0_125 = arith.constant 0 : index
    %151 = vector.load %arg5[%c0_123, %c0_124, %c0_125] : memref<16x64x128xf32, #tpu.memory_space<vmem>>, vector<1x64x128xf32>
    %152 = vector.shape_cast %151 : vector<1x64x128xf32> to vector<64x128xf32>
    %cst_126 = arith.constant dense<0.000000e+00> : vector<16x128xf32>
    %153 = tpu.matmul %150, %152, %cst_126 {dimension_numbers = #tpu.dot_dimension_numbers<[1], [0], [0], [1], [0, 0, 1, 1], [], []>} : vector<16x64xf32>, vector<64x128xf32>, vector<16x128xf32> -> vector<16x128xf32>
    %154 = arith.addf %149, %153 : vector<16x128xf32>
    %155 = vector.extract_strided_slice %148 {offsets = [16, 0], sizes = [16, 64], strides = [1, 1]} : vector<256x64xf32> to vector<16x64xf32>
    %c1_127 = arith.constant 1 : index
    %c0_128 = arith.constant 0 : index
    %c0_129 = arith.constant 0 : index
    %156 = vector.load %arg5[%c1_127, %c0_128, %c0_129] : memref<16x64x128xf32, #tpu.memory_space<vmem>>, vector<1x64x128xf32>
    %157 = vector.shape_cast %156 : vector<1x64x128xf32> to vector<64x128xf32>
    %cst_130 = arith.constant dense<0.000000e+00> : vector<16x128xf32>
    %158 = tpu.matmul %155, %157, %cst_130 {dimension_numbers = #tpu.dot_dimension_numbers<[1], [0], [0], [1], [0, 0, 1, 1], [], []>} : vector<16x64xf32>, vector<64x128xf32>, vector<16x128xf32> -> vector<16x128xf32>
    %159 = arith.addf %154, %158 : vector<16x128xf32>
    %160 = vector.extract_strided_slice %148 {offsets = [32, 0], sizes = [16, 64], strides = [1, 1]} : vector<256x64xf32> to vector<16x64xf32>
    %c2_131 = arith.constant 2 : index
    %c0_132 = arith.constant 0 : index
    %c0_133 = arith.constant 0 : index
    %161 = vector.load %arg5[%c2_131, %c0_132, %c0_133] : memref<16x64x128xf32, #tpu.memory_space<vmem>>, vector<1x64x128xf32>
    %162 = vector.shape_cast %161 : vector<1x64x128xf32> to vector<64x128xf32>
    %cst_134 = arith.constant dense<0.000000e+00> : vector<16x128xf32>
    %163 = tpu.matmul %160, %162, %cst_134 {dimension_numbers = #tpu.dot_dimension_numbers<[1], [0], [0], [1], [0, 0, 1, 1], [], []>} : vector<16x64xf32>, vector<64x128xf32>, vector<16x128xf32> -> vector<16x128xf32>
    %164 = arith.addf %159, %163 : vector<16x128xf32>
    %165 = vector.extract_strided_slice %148 {offsets = [48, 0], sizes = [16, 64], strides = [1, 1]} : vector<256x64xf32> to vector<16x64xf32>
    %c3_135 = arith.constant 3 : index
    %c0_136 = arith.constant 0 : index
    %c0_137 = arith.constant 0 : index
    %166 = vector.load %arg5[%c3_135, %c0_136, %c0_137] : memref<16x64x128xf32, #tpu.memory_space<vmem>>, vector<1x64x128xf32>
    %167 = vector.shape_cast %166 : vector<1x64x128xf32> to vector<64x128xf32>
    %cst_138 = arith.constant dense<0.000000e+00> : vector<16x128xf32>
    %168 = tpu.matmul %165, %167, %cst_138 {dimension_numbers = #tpu.dot_dimension_numbers<[1], [0], [0], [1], [0, 0, 1, 1], [], []>} : vector<16x64xf32>, vector<64x128xf32>, vector<16x128xf32> -> vector<16x128xf32>
    %169 = arith.addf %164, %168 : vector<16x128xf32>
    %170 = vector.extract_strided_slice %148 {offsets = [64, 0], sizes = [16, 64], strides = [1, 1]} : vector<256x64xf32> to vector<16x64xf32>
    %c4_139 = arith.constant 4 : index
    %c0_140 = arith.constant 0 : index
    %c0_141 = arith.constant 0 : index
    %171 = vector.load %arg5[%c4_139, %c0_140, %c0_141] : memref<16x64x128xf32, #tpu.memory_space<vmem>>, vector<1x64x128xf32>
    %172 = vector.shape_cast %171 : vector<1x64x128xf32> to vector<64x128xf32>
    %cst_142 = arith.constant dense<0.000000e+00> : vector<16x128xf32>
    %173 = tpu.matmul %170, %172, %cst_142 {dimension_numbers = #tpu.dot_dimension_numbers<[1], [0], [0], [1], [0, 0, 1, 1], [], []>} : vector<16x64xf32>, vector<64x128xf32>, vector<16x128xf32> -> vector<16x128xf32>
    %174 = arith.addf %169, %173 : vector<16x128xf32>
    %175 = vector.extract_strided_slice %148 {offsets = [80, 0], sizes = [16, 64], strides = [1, 1]} : vector<256x64xf32> to vector<16x64xf32>
    %c5_143 = arith.constant 5 : index
    %c0_144 = arith.constant 0 : index
    %c0_145 = arith.constant 0 : index
    %176 = vector.load %arg5[%c5_143, %c0_144, %c0_145] : memref<16x64x128xf32, #tpu.memory_space<vmem>>, vector<1x64x128xf32>
    %177 = vector.shape_cast %176 : vector<1x64x128xf32> to vector<64x128xf32>
    %cst_146 = arith.constant dense<0.000000e+00> : vector<16x128xf32>
    %178 = tpu.matmul %175, %177, %cst_146 {dimension_numbers = #tpu.dot_dimension_numbers<[1], [0], [0], [1], [0, 0, 1, 1], [], []>} : vector<16x64xf32>, vector<64x128xf32>, vector<16x128xf32> -> vector<16x128xf32>
    %179 = arith.addf %174, %178 : vector<16x128xf32>
    %180 = vector.extract_strided_slice %148 {offsets = [96, 0], sizes = [16, 64], strides = [1, 1]} : vector<256x64xf32> to vector<16x64xf32>
    %c6_147 = arith.constant 6 : index
    %c0_148 = arith.constant 0 : index
    %c0_149 = arith.constant 0 : index
    %181 = vector.load %arg5[%c6_147, %c0_148, %c0_149] : memref<16x64x128xf32, #tpu.memory_space<vmem>>, vector<1x64x128xf32>
    %182 = vector.shape_cast %181 : vector<1x64x128xf32> to vector<64x128xf32>
    %cst_150 = arith.constant dense<0.000000e+00> : vector<16x128xf32>
    %183 = tpu.matmul %180, %182, %cst_150 {dimension_numbers = #tpu.dot_dimension_numbers<[1], [0], [0], [1], [0, 0, 1, 1], [], []>} : vector<16x64xf32>, vector<64x128xf32>, vector<16x128xf32> -> vector<16x128xf32>
    %184 = arith.addf %179, %183 : vector<16x128xf32>
    %185 = vector.extract_strided_slice %148 {offsets = [112, 0], sizes = [16, 64], strides = [1, 1]} : vector<256x64xf32> to vector<16x64xf32>
    %c7_151 = arith.constant 7 : index
    %c0_152 = arith.constant 0 : index
    %c0_153 = arith.constant 0 : index
    %186 = vector.load %arg5[%c7_151, %c0_152, %c0_153] : memref<16x64x128xf32, #tpu.memory_space<vmem>>, vector<1x64x128xf32>
    %187 = vector.shape_cast %186 : vector<1x64x128xf32> to vector<64x128xf32>
    %cst_154 = arith.constant dense<0.000000e+00> : vector<16x128xf32>
    %188 = tpu.matmul %185, %187, %cst_154 {dimension_numbers = #tpu.dot_dimension_numbers<[1], [0], [0], [1], [0, 0, 1, 1], [], []>} : vector<16x64xf32>, vector<64x128xf32>, vector<16x128xf32> -> vector<16x128xf32>
    %189 = arith.addf %184, %188 : vector<16x128xf32>
    %190 = vector.extract_strided_slice %148 {offsets = [128, 0], sizes = [16, 64], strides = [1, 1]} : vector<256x64xf32> to vector<16x64xf32>
    %c8_155 = arith.constant 8 : index
    %c0_156 = arith.constant 0 : index
    %c0_157 = arith.constant 0 : index
    %191 = vector.load %arg5[%c8_155, %c0_156, %c0_157] : memref<16x64x128xf32, #tpu.memory_space<vmem>>, vector<1x64x128xf32>
    %192 = vector.shape_cast %191 : vector<1x64x128xf32> to vector<64x128xf32>
    %cst_158 = arith.constant dense<0.000000e+00> : vector<16x128xf32>
    %193 = tpu.matmul %190, %192, %cst_158 {dimension_numbers = #tpu.dot_dimension_numbers<[1], [0], [0], [1], [0, 0, 1, 1], [], []>} : vector<16x64xf32>, vector<64x128xf32>, vector<16x128xf32> -> vector<16x128xf32>
    %194 = arith.addf %189, %193 : vector<16x128xf32>
    %195 = vector.extract_strided_slice %148 {offsets = [144, 0], sizes = [16, 64], strides = [1, 1]} : vector<256x64xf32> to vector<16x64xf32>
    %c9_159 = arith.constant 9 : index
    %c0_160 = arith.constant 0 : index
    %c0_161 = arith.constant 0 : index
    %196 = vector.load %arg5[%c9_159, %c0_160, %c0_161] : memref<16x64x128xf32, #tpu.memory_space<vmem>>, vector<1x64x128xf32>
    %197 = vector.shape_cast %196 : vector<1x64x128xf32> to vector<64x128xf32>
    %cst_162 = arith.constant dense<0.000000e+00> : vector<16x128xf32>
    %198 = tpu.matmul %195, %197, %cst_162 {dimension_numbers = #tpu.dot_dimension_numbers<[1], [0], [0], [1], [0, 0, 1, 1], [], []>} : vector<16x64xf32>, vector<64x128xf32>, vector<16x128xf32> -> vector<16x128xf32>
    %199 = arith.addf %194, %198 : vector<16x128xf32>
    %200 = vector.extract_strided_slice %148 {offsets = [160, 0], sizes = [16, 64], strides = [1, 1]} : vector<256x64xf32> to vector<16x64xf32>
    %c10_163 = arith.constant 10 : index
    %c0_164 = arith.constant 0 : index
    %c0_165 = arith.constant 0 : index
    %201 = vector.load %arg5[%c10_163, %c0_164, %c0_165] : memref<16x64x128xf32, #tpu.memory_space<vmem>>, vector<1x64x128xf32>
    %202 = vector.shape_cast %201 : vector<1x64x128xf32> to vector<64x128xf32>
    %cst_166 = arith.constant dense<0.000000e+00> : vector<16x128xf32>
    %203 = tpu.matmul %200, %202, %cst_166 {dimension_numbers = #tpu.dot_dimension_numbers<[1], [0], [0], [1], [0, 0, 1, 1], [], []>} : vector<16x64xf32>, vector<64x128xf32>, vector<16x128xf32> -> vector<16x128xf32>
    %204 = arith.addf %199, %203 : vector<16x128xf32>
    %205 = vector.extract_strided_slice %148 {offsets = [176, 0], sizes = [16, 64], strides = [1, 1]} : vector<256x64xf32> to vector<16x64xf32>
    %c11_167 = arith.constant 11 : index
    %c0_168 = arith.constant 0 : index
    %c0_169 = arith.constant 0 : index
    %206 = vector.load %arg5[%c11_167, %c0_168, %c0_169] : memref<16x64x128xf32, #tpu.memory_space<vmem>>, vector<1x64x128xf32>
    %207 = vector.shape_cast %206 : vector<1x64x128xf32> to vector<64x128xf32>
    %cst_170 = arith.constant dense<0.000000e+00> : vector<16x128xf32>
    %208 = tpu.matmul %205, %207, %cst_170 {dimension_numbers = #tpu.dot_dimension_numbers<[1], [0], [0], [1], [0, 0, 1, 1], [], []>} : vector<16x64xf32>, vector<64x128xf32>, vector<16x128xf32> -> vector<16x128xf32>
    %209 = arith.addf %204, %208 : vector<16x128xf32>
    %210 = vector.extract_strided_slice %148 {offsets = [192, 0], sizes = [16, 64], strides = [1, 1]} : vector<256x64xf32> to vector<16x64xf32>
    %c12_171 = arith.constant 12 : index
    %c0_172 = arith.constant 0 : index
    %c0_173 = arith.constant 0 : index
    %211 = vector.load %arg5[%c12_171, %c0_172, %c0_173] : memref<16x64x128xf32, #tpu.memory_space<vmem>>, vector<1x64x128xf32>
    %212 = vector.shape_cast %211 : vector<1x64x128xf32> to vector<64x128xf32>
    %cst_174 = arith.constant dense<0.000000e+00> : vector<16x128xf32>
    %213 = tpu.matmul %210, %212, %cst_174 {dimension_numbers = #tpu.dot_dimension_numbers<[1], [0], [0], [1], [0, 0, 1, 1], [], []>} : vector<16x64xf32>, vector<64x128xf32>, vector<16x128xf32> -> vector<16x128xf32>
    %214 = arith.addf %209, %213 : vector<16x128xf32>
    %215 = vector.extract_strided_slice %148 {offsets = [208, 0], sizes = [16, 64], strides = [1, 1]} : vector<256x64xf32> to vector<16x64xf32>
    %c13_175 = arith.constant 13 : index
    %c0_176 = arith.constant 0 : index
    %c0_177 = arith.constant 0 : index
    %216 = vector.load %arg5[%c13_175, %c0_176, %c0_177] : memref<16x64x128xf32, #tpu.memory_space<vmem>>, vector<1x64x128xf32>
    %217 = vector.shape_cast %216 : vector<1x64x128xf32> to vector<64x128xf32>
    %cst_178 = arith.constant dense<0.000000e+00> : vector<16x128xf32>
    %218 = tpu.matmul %215, %217, %cst_178 {dimension_numbers = #tpu.dot_dimension_numbers<[1], [0], [0], [1], [0, 0, 1, 1], [], []>} : vector<16x64xf32>, vector<64x128xf32>, vector<16x128xf32> -> vector<16x128xf32>
    %219 = arith.addf %214, %218 : vector<16x128xf32>
    %220 = vector.extract_strided_slice %148 {offsets = [224, 0], sizes = [16, 64], strides = [1, 1]} : vector<256x64xf32> to vector<16x64xf32>
    %c14_179 = arith.constant 14 : index
    %c0_180 = arith.constant 0 : index
    %c0_181 = arith.constant 0 : index
    %221 = vector.load %arg5[%c14_179, %c0_180, %c0_181] : memref<16x64x128xf32, #tpu.memory_space<vmem>>, vector<1x64x128xf32>
    %222 = vector.shape_cast %221 : vector<1x64x128xf32> to vector<64x128xf32>
    %cst_182 = arith.constant dense<0.000000e+00> : vector<16x128xf32>
    %223 = tpu.matmul %220, %222, %cst_182 {dimension_numbers = #tpu.dot_dimension_numbers<[1], [0], [0], [1], [0, 0, 1, 1], [], []>} : vector<16x64xf32>, vector<64x128xf32>, vector<16x128xf32> -> vector<16x128xf32>
    %224 = arith.addf %219, %223 : vector<16x128xf32>
    %225 = vector.extract_strided_slice %148 {offsets = [240, 0], sizes = [16, 64], strides = [1, 1]} : vector<256x64xf32> to vector<16x64xf32>
    %c15_183 = arith.constant 15 : index
    %c0_184 = arith.constant 0 : index
    %c0_185 = arith.constant 0 : index
    %226 = vector.load %arg5[%c15_183, %c0_184, %c0_185] : memref<16x64x128xf32, #tpu.memory_space<vmem>>, vector<1x64x128xf32>
    %227 = vector.shape_cast %226 : vector<1x64x128xf32> to vector<64x128xf32>
    %cst_186 = arith.constant dense<0.000000e+00> : vector<16x128xf32>
    %228 = tpu.matmul %225, %227, %cst_186 {dimension_numbers = #tpu.dot_dimension_numbers<[1], [0], [0], [1], [0, 0, 1, 1], [], []>} : vector<16x64xf32>, vector<64x128xf32>, vector<16x128xf32> -> vector<16x128xf32>
    %229 = arith.addf %224, %228 : vector<16x128xf32>
    %c64_i32 = arith.constant 64 : i32
    %230 = vector.broadcast %c64_i32 : i32 to vector<128x64xi32>
    %231 = arith.addi %142, %230 : vector<128x64xi32>
    %232 = arith.cmpi eq, %141, %231 : vector<128x64xi32>
    %233 = arith.extui %232 : vector<128x64xi1> to vector<128x64xi32>
    %234 = arith.sitofp %233 : vector<128x64xi32> to vector<128x64xf32>
    %cst_187 = arith.constant dense<0.000000e+00> : vector<256x64xf32>
    %235 = tpu.matmul %140, %234, %cst_187 {dimension_numbers = #tpu.dot_dimension_numbers<[1], [0], [0], [1], [0, 0, 1, 1], [], []>} : vector<256x128xf32>, vector<128x64xf32>, vector<256x64xf32> -> vector<256x64xf32>
    %cst_188 = arith.constant 0.000000e+00 : f32
    %236 = vector.broadcast %cst_188 : f32 to vector<16x128xf32>
    %237 = vector.extract_strided_slice %235 {offsets = [0, 0], sizes = [16, 64], strides = [1, 1]} : vector<256x64xf32> to vector<16x64xf32>
    %c0_189 = arith.constant 0 : index
    %c0_190 = arith.constant 0 : index
    %c0_191 = arith.constant 0 : index
    %238 = vector.load %arg5[%c0_189, %c0_190, %c0_191] : memref<16x64x128xf32, #tpu.memory_space<vmem>>, vector<1x64x128xf32>
    %239 = vector.shape_cast %238 : vector<1x64x128xf32> to vector<64x128xf32>
    %cst_192 = arith.constant dense<0.000000e+00> : vector<16x128xf32>
    %240 = tpu.matmul %237, %239, %cst_192 {dimension_numbers = #tpu.dot_dimension_numbers<[1], [0], [0], [1], [0, 0, 1, 1], [], []>} : vector<16x64xf32>, vector<64x128xf32>, vector<16x128xf32> -> vector<16x128xf32>
    %241 = arith.addf %236, %240 : vector<16x128xf32>
    %242 = vector.extract_strided_slice %235 {offsets = [16, 0], sizes = [16, 64], strides = [1, 1]} : vector<256x64xf32> to vector<16x64xf32>
    %c1_193 = arith.constant 1 : index
    %c0_194 = arith.constant 0 : index
    %c0_195 = arith.constant 0 : index
    %243 = vector.load %arg5[%c1_193, %c0_194, %c0_195] : memref<16x64x128xf32, #tpu.memory_space<vmem>>, vector<1x64x128xf32>
    %244 = vector.shape_cast %243 : vector<1x64x128xf32> to vector<64x128xf32>
    %cst_196 = arith.constant dense<0.000000e+00> : vector<16x128xf32>
    %245 = tpu.matmul %242, %244, %cst_196 {dimension_numbers = #tpu.dot_dimension_numbers<[1], [0], [0], [1], [0, 0, 1, 1], [], []>} : vector<16x64xf32>, vector<64x128xf32>, vector<16x128xf32> -> vector<16x128xf32>
    %246 = arith.addf %241, %245 : vector<16x128xf32>
    %247 = vector.extract_strided_slice %235 {offsets = [32, 0], sizes = [16, 64], strides = [1, 1]} : vector<256x64xf32> to vector<16x64xf32>
    %c2_197 = arith.constant 2 : index
    %c0_198 = arith.constant 0 : index
    %c0_199 = arith.constant 0 : index
    %248 = vector.load %arg5[%c2_197, %c0_198, %c0_199] : memref<16x64x128xf32, #tpu.memory_space<vmem>>, vector<1x64x128xf32>
    %249 = vector.shape_cast %248 : vector<1x64x128xf32> to vector<64x128xf32>
    %cst_200 = arith.constant dense<0.000000e+00> : vector<16x128xf32>
    %250 = tpu.matmul %247, %249, %cst_200 {dimension_numbers = #tpu.dot_dimension_numbers<[1], [0], [0], [1], [0, 0, 1, 1], [], []>} : vector<16x64xf32>, vector<64x128xf32>, vector<16x128xf32> -> vector<16x128xf32>
    %251 = arith.addf %246, %250 : vector<16x128xf32>
    %252 = vector.extract_strided_slice %235 {offsets = [48, 0], sizes = [16, 64], strides = [1, 1]} : vector<256x64xf32> to vector<16x64xf32>
    %c3_201 = arith.constant 3 : index
    %c0_202 = arith.constant 0 : index
    %c0_203 = arith.constant 0 : index
    %253 = vector.load %arg5[%c3_201, %c0_202, %c0_203] : memref<16x64x128xf32, #tpu.memory_space<vmem>>, vector<1x64x128xf32>
    %254 = vector.shape_cast %253 : vector<1x64x128xf32> to vector<64x128xf32>
    %cst_204 = arith.constant dense<0.000000e+00> : vector<16x128xf32>
    %255 = tpu.matmul %252, %254, %cst_204 {dimension_numbers = #tpu.dot_dimension_numbers<[1], [0], [0], [1], [0, 0, 1, 1], [], []>} : vector<16x64xf32>, vector<64x128xf32>, vector<16x128xf32> -> vector<16x128xf32>
    %256 = arith.addf %251, %255 : vector<16x128xf32>
    %257 = vector.extract_strided_slice %235 {offsets = [64, 0], sizes = [16, 64], strides = [1, 1]} : vector<256x64xf32> to vector<16x64xf32>
    %c4_205 = arith.constant 4 : index
    %c0_206 = arith.constant 0 : index
    %c0_207 = arith.constant 0 : index
    %258 = vector.load %arg5[%c4_205, %c0_206, %c0_207] : memref<16x64x128xf32, #tpu.memory_space<vmem>>, vector<1x64x128xf32>
    %259 = vector.shape_cast %258 : vector<1x64x128xf32> to vector<64x128xf32>
    %cst_208 = arith.constant dense<0.000000e+00> : vector<16x128xf32>
    %260 = tpu.matmul %257, %259, %cst_208 {dimension_numbers = #tpu.dot_dimension_numbers<[1], [0], [0], [1], [0, 0, 1, 1], [], []>} : vector<16x64xf32>, vector<64x128xf32>, vector<16x128xf32> -> vector<16x128xf32>
    %261 = arith.addf %256, %260 : vector<16x128xf32>
    %262 = vector.extract_strided_slice %235 {offsets = [80, 0], sizes = [16, 64], strides = [1, 1]} : vector<256x64xf32> to vector<16x64xf32>
    %c5_209 = arith.constant 5 : index
    %c0_210 = arith.constant 0 : index
    %c0_211 = arith.constant 0 : index
    %263 = vector.load %arg5[%c5_209, %c0_210, %c0_211] : memref<16x64x128xf32, #tpu.memory_space<vmem>>, vector<1x64x128xf32>
    %264 = vector.shape_cast %263 : vector<1x64x128xf32> to vector<64x128xf32>
    %cst_212 = arith.constant dense<0.000000e+00> : vector<16x128xf32>
    %265 = tpu.matmul %262, %264, %cst_212 {dimension_numbers = #tpu.dot_dimension_numbers<[1], [0], [0], [1], [0, 0, 1, 1], [], []>} : vector<16x64xf32>, vector<64x128xf32>, vector<16x128xf32> -> vector<16x128xf32>
    %266 = arith.addf %261, %265 : vector<16x128xf32>
    %267 = vector.extract_strided_slice %235 {offsets = [96, 0], sizes = [16, 64], strides = [1, 1]} : vector<256x64xf32> to vector<16x64xf32>
    %c6_213 = arith.constant 6 : index
    %c0_214 = arith.constant 0 : index
    %c0_215 = arith.constant 0 : index
    %268 = vector.load %arg5[%c6_213, %c0_214, %c0_215] : memref<16x64x128xf32, #tpu.memory_space<vmem>>, vector<1x64x128xf32>
    %269 = vector.shape_cast %268 : vector<1x64x128xf32> to vector<64x128xf32>
    %cst_216 = arith.constant dense<0.000000e+00> : vector<16x128xf32>
    %270 = tpu.matmul %267, %269, %cst_216 {dimension_numbers = #tpu.dot_dimension_numbers<[1], [0], [0], [1], [0, 0, 1, 1], [], []>} : vector<16x64xf32>, vector<64x128xf32>, vector<16x128xf32> -> vector<16x128xf32>
    %271 = arith.addf %266, %270 : vector<16x128xf32>
    %272 = vector.extract_strided_slice %235 {offsets = [112, 0], sizes = [16, 64], strides = [1, 1]} : vector<256x64xf32> to vector<16x64xf32>
    %c7_217 = arith.constant 7 : index
    %c0_218 = arith.constant 0 : index
    %c0_219 = arith.constant 0 : index
    %273 = vector.load %arg5[%c7_217, %c0_218, %c0_219] : memref<16x64x128xf32, #tpu.memory_space<vmem>>, vector<1x64x128xf32>
    %274 = vector.shape_cast %273 : vector<1x64x128xf32> to vector<64x128xf32>
    %cst_220 = arith.constant dense<0.000000e+00> : vector<16x128xf32>
    %275 = tpu.matmul %272, %274, %cst_220 {dimension_numbers = #tpu.dot_dimension_numbers<[1], [0], [0], [1], [0, 0, 1, 1], [], []>} : vector<16x64xf32>, vector<64x128xf32>, vector<16x128xf32> -> vector<16x128xf32>
    %276 = arith.addf %271, %275 : vector<16x128xf32>
    %277 = vector.extract_strided_slice %235 {offsets = [128, 0], sizes = [16, 64], strides = [1, 1]} : vector<256x64xf32> to vector<16x64xf32>
    %c8_221 = arith.constant 8 : index
    %c0_222 = arith.constant 0 : index
    %c0_223 = arith.constant 0 : index
    %278 = vector.load %arg5[%c8_221, %c0_222, %c0_223] : memref<16x64x128xf32, #tpu.memory_space<vmem>>, vector<1x64x128xf32>
    %279 = vector.shape_cast %278 : vector<1x64x128xf32> to vector<64x128xf32>
    %cst_224 = arith.constant dense<0.000000e+00> : vector<16x128xf32>
    %280 = tpu.matmul %277, %279, %cst_224 {dimension_numbers = #tpu.dot_dimension_numbers<[1], [0], [0], [1], [0, 0, 1, 1], [], []>} : vector<16x64xf32>, vector<64x128xf32>, vector<16x128xf32> -> vector<16x128xf32>
    %281 = arith.addf %276, %280 : vector<16x128xf32>
    %282 = vector.extract_strided_slice %235 {offsets = [144, 0], sizes = [16, 64], strides = [1, 1]} : vector<256x64xf32> to vector<16x64xf32>
    %c9_225 = arith.constant 9 : index
    %c0_226 = arith.constant 0 : index
    %c0_227 = arith.constant 0 : index
    %283 = vector.load %arg5[%c9_225, %c0_226, %c0_227] : memref<16x64x128xf32, #tpu.memory_space<vmem>>, vector<1x64x128xf32>
    %284 = vector.shape_cast %283 : vector<1x64x128xf32> to vector<64x128xf32>
    %cst_228 = arith.constant dense<0.000000e+00> : vector<16x128xf32>
    %285 = tpu.matmul %282, %284, %cst_228 {dimension_numbers = #tpu.dot_dimension_numbers<[1], [0], [0], [1], [0, 0, 1, 1], [], []>} : vector<16x64xf32>, vector<64x128xf32>, vector<16x128xf32> -> vector<16x128xf32>
    %286 = arith.addf %281, %285 : vector<16x128xf32>
    %287 = vector.extract_strided_slice %235 {offsets = [160, 0], sizes = [16, 64], strides = [1, 1]} : vector<256x64xf32> to vector<16x64xf32>
    %c10_229 = arith.constant 10 : index
    %c0_230 = arith.constant 0 : index
    %c0_231 = arith.constant 0 : index
    %288 = vector.load %arg5[%c10_229, %c0_230, %c0_231] : memref<16x64x128xf32, #tpu.memory_space<vmem>>, vector<1x64x128xf32>
    %289 = vector.shape_cast %288 : vector<1x64x128xf32> to vector<64x128xf32>
    %cst_232 = arith.constant dense<0.000000e+00> : vector<16x128xf32>
    %290 = tpu.matmul %287, %289, %cst_232 {dimension_numbers = #tpu.dot_dimension_numbers<[1], [0], [0], [1], [0, 0, 1, 1], [], []>} : vector<16x64xf32>, vector<64x128xf32>, vector<16x128xf32> -> vector<16x128xf32>
    %291 = arith.addf %286, %290 : vector<16x128xf32>
    %292 = vector.extract_strided_slice %235 {offsets = [176, 0], sizes = [16, 64], strides = [1, 1]} : vector<256x64xf32> to vector<16x64xf32>
    %c11_233 = arith.constant 11 : index
    %c0_234 = arith.constant 0 : index
    %c0_235 = arith.constant 0 : index
    %293 = vector.load %arg5[%c11_233, %c0_234, %c0_235] : memref<16x64x128xf32, #tpu.memory_space<vmem>>, vector<1x64x128xf32>
    %294 = vector.shape_cast %293 : vector<1x64x128xf32> to vector<64x128xf32>
    %cst_236 = arith.constant dense<0.000000e+00> : vector<16x128xf32>
    %295 = tpu.matmul %292, %294, %cst_236 {dimension_numbers = #tpu.dot_dimension_numbers<[1], [0], [0], [1], [0, 0, 1, 1], [], []>} : vector<16x64xf32>, vector<64x128xf32>, vector<16x128xf32> -> vector<16x128xf32>
    %296 = arith.addf %291, %295 : vector<16x128xf32>
    %297 = vector.extract_strided_slice %235 {offsets = [192, 0], sizes = [16, 64], strides = [1, 1]} : vector<256x64xf32> to vector<16x64xf32>
    %c12_237 = arith.constant 12 : index
    %c0_238 = arith.constant 0 : index
    %c0_239 = arith.constant 0 : index
    %298 = vector.load %arg5[%c12_237, %c0_238, %c0_239] : memref<16x64x128xf32, #tpu.memory_space<vmem>>, vector<1x64x128xf32>
    %299 = vector.shape_cast %298 : vector<1x64x128xf32> to vector<64x128xf32>
    %cst_240 = arith.constant dense<0.000000e+00> : vector<16x128xf32>
    %300 = tpu.matmul %297, %299, %cst_240 {dimension_numbers = #tpu.dot_dimension_numbers<[1], [0], [0], [1], [0, 0, 1, 1], [], []>} : vector<16x64xf32>, vector<64x128xf32>, vector<16x128xf32> -> vector<16x128xf32>
    %301 = arith.addf %296, %300 : vector<16x128xf32>
    %302 = vector.extract_strided_slice %235 {offsets = [208, 0], sizes = [16, 64], strides = [1, 1]} : vector<256x64xf32> to vector<16x64xf32>
    %c13_241 = arith.constant 13 : index
    %c0_242 = arith.constant 0 : index
    %c0_243 = arith.constant 0 : index
    %303 = vector.load %arg5[%c13_241, %c0_242, %c0_243] : memref<16x64x128xf32, #tpu.memory_space<vmem>>, vector<1x64x128xf32>
    %304 = vector.shape_cast %303 : vector<1x64x128xf32> to vector<64x128xf32>
    %cst_244 = arith.constant dense<0.000000e+00> : vector<16x128xf32>
    %305 = tpu.matmul %302, %304, %cst_244 {dimension_numbers = #tpu.dot_dimension_numbers<[1], [0], [0], [1], [0, 0, 1, 1], [], []>} : vector<16x64xf32>, vector<64x128xf32>, vector<16x128xf32> -> vector<16x128xf32>
    %306 = arith.addf %301, %305 : vector<16x128xf32>
    %307 = vector.extract_strided_slice %235 {offsets = [224, 0], sizes = [16, 64], strides = [1, 1]} : vector<256x64xf32> to vector<16x64xf32>
    %c14_245 = arith.constant 14 : index
    %c0_246 = arith.constant 0 : index
    %c0_247 = arith.constant 0 : index
    %308 = vector.load %arg5[%c14_245, %c0_246, %c0_247] : memref<16x64x128xf32, #tpu.memory_space<vmem>>, vector<1x64x128xf32>
    %309 = vector.shape_cast %308 : vector<1x64x128xf32> to vector<64x128xf32>
    %cst_248 = arith.constant dense<0.000000e+00> : vector<16x128xf32>
    %310 = tpu.matmul %307, %309, %cst_248 {dimension_numbers = #tpu.dot_dimension_numbers<[1], [0], [0], [1], [0, 0, 1, 1], [], []>} : vector<16x64xf32>, vector<64x128xf32>, vector<16x128xf32> -> vector<16x128xf32>
    %311 = arith.addf %306, %310 : vector<16x128xf32>
    %312 = vector.extract_strided_slice %235 {offsets = [240, 0], sizes = [16, 64], strides = [1, 1]} : vector<256x64xf32> to vector<16x64xf32>
    %c15_249 = arith.constant 15 : index
    %c0_250 = arith.constant 0 : index
    %c0_251 = arith.constant 0 : index
    %313 = vector.load %arg5[%c15_249, %c0_250, %c0_251] : memref<16x64x128xf32, #tpu.memory_space<vmem>>, vector<1x64x128xf32>
    %314 = vector.shape_cast %313 : vector<1x64x128xf32> to vector<64x128xf32>
    %cst_252 = arith.constant dense<0.000000e+00> : vector<16x128xf32>
    %315 = tpu.matmul %312, %314, %cst_252 {dimension_numbers = #tpu.dot_dimension_numbers<[1], [0], [0], [1], [0, 0, 1, 1], [], []>} : vector<16x64xf32>, vector<64x128xf32>, vector<16x128xf32> -> vector<16x128xf32>
    %316 = arith.addf %311, %315 : vector<16x128xf32>
    %317 = tpu.concatenate %229, %316 in 0 : vector<16x128xf32>, vector<16x128xf32> -> vector<32x128xf32>
    %c0_253 = arith.constant 0 : index
    %c0_254 = arith.constant 0 : index
    %318 = vector.load %arg7[%c0_253, %c0_254] : memref<8x128xf32, #tpu.memory_space<vmem>>, vector<1x128xf32>
    %319 = vector.broadcast %318 : vector<1x128xf32> to vector<32x128xf32>
    %320 = arith.addf %317, %319 : vector<32x128xf32>
    %cst_255 = arith.constant dense<0.000000e+00> : vector<128xf32>
    %321 = vector.multi_reduction <add>, %320, %cst_255 [0] : vector<32x128xf32> to vector<128xf32>
    %322 = vector.shape_cast %321 : vector<128xf32> to vector<1x128xf32>
    %cst_256 = arith.constant 3.200000e+01 : f32
    %323 = vector.broadcast %cst_256 : f32 to vector<1x128xf32>
    %324 = arith.divf %322, %323 : vector<1x128xf32>
    %325 = vector.broadcast %324 : vector<1x128xf32> to vector<32x128xf32>
    %326 = arith.subf %320, %325 : vector<32x128xf32>
    %327 = arith.mulf %326, %326 : vector<32x128xf32>
    %cst_257 = arith.constant dense<0.000000e+00> : vector<128xf32>
    %328 = vector.multi_reduction <add>, %327, %cst_257 [0] : vector<32x128xf32> to vector<128xf32>
    %329 = vector.shape_cast %328 : vector<128xf32> to vector<1x128xf32>
    %cst_258 = arith.constant 3.200000e+01 : f32
    %330 = vector.broadcast %cst_258 : f32 to vector<1x128xf32>
    %331 = arith.divf %329, %330 : vector<1x128xf32>
    %cst_259 = arith.constant 9.99999974E-6 : f32
    %332 = vector.broadcast %cst_259 : f32 to vector<1x128xf32>
    %333 = arith.addf %331, %332 : vector<1x128xf32>
    %334 = math.rsqrt %333 : vector<1x128xf32>
    %335 = vector.broadcast %334 : vector<1x128xf32> to vector<32x128xf32>
    %336 = arith.mulf %326, %335 : vector<32x128xf32>
    %c1_260 = arith.constant 1 : index
    %c0_261 = arith.constant 0 : index
    %337 = vector.load %arg7[%c1_260, %c0_261] : memref<8x128xf32, #tpu.memory_space<vmem>>, vector<1x128xf32>
    %338 = vector.broadcast %337 : vector<1x128xf32> to vector<32x128xf32>
    %339 = arith.mulf %336, %338 : vector<32x128xf32>
    %c2_262 = arith.constant 2 : index
    %c0_263 = arith.constant 0 : index
    %340 = vector.load %arg7[%c2_262, %c0_263] : memref<8x128xf32, #tpu.memory_space<vmem>>, vector<1x128xf32>
    %341 = vector.broadcast %340 : vector<1x128xf32> to vector<32x128xf32>
    %342 = arith.addf %339, %341 : vector<32x128xf32>
    %cst_264 = arith.constant 0.000000e+00 : f32
    %343 = vector.broadcast %cst_264 : f32 to vector<32x128xf32>
    %344 = arith.cmpf ogt, %342, %343 : vector<32x128xf32>
    %cst_265 = arith.constant 2.000000e-01 : f32
    %345 = vector.broadcast %cst_265 : f32 to vector<32x128xf32>
    %346 = arith.mulf %345, %342 : vector<32x128xf32>
    %347 = arith.select %344, %342, %346 : vector<32x128xi1>, vector<32x128xf32>
    %c0_266 = arith.constant 0 : index
    %c0_267 = arith.constant 0 : index
    %348 = vector.load %arg6[%c0_266, %c0_267] : memref<16x128xf32, #tpu.memory_space<vmem>>, vector<16x128xf32>
    %349 = tpu.concatenate %348, %348 in 0 : vector<16x128xf32>, vector<16x128xf32> -> vector<32x128xf32>
    %350 = arith.mulf %347, %349 : vector<32x128xf32>
    %351 = tpu.iota {dimensions = array<i32: 0>} : vector<2x32xi32>
    %352 = tpu.iota {dimensions = array<i32: 1>} : vector<2x32xi32>
    %c16_i32 = arith.constant 16 : i32
    %353 = vector.broadcast %c16_i32 : i32 to vector<2x32xi32>
    %354 = arith.muli %351, %353 : vector<2x32xi32>
    %355 = arith.cmpi sge, %352, %354 : vector<2x32xi32>
    %c1_i32 = arith.constant 1 : i32
    %356 = vector.broadcast %c1_i32 : i32 to vector<2x32xi32>
    %357 = arith.addi %351, %356 : vector<2x32xi32>
    %c16_i32_268 = arith.constant 16 : i32
    %358 = vector.broadcast %c16_i32_268 : i32 to vector<2x32xi32>
    %359 = arith.muli %357, %358 : vector<2x32xi32>
    %360 = arith.cmpi slt, %352, %359 : vector<2x32xi32>
    %361 = arith.andi %355, %360 : vector<2x32xi1>
    %362 = arith.extui %361 : vector<2x32xi1> to vector<2x32xi32>
    %363 = arith.sitofp %362 : vector<2x32xi32> to vector<2x32xf32>
    %cst_269 = arith.constant dense<0.000000e+00> : vector<2x128xf32>
    %364 = tpu.matmul %363, %350, %cst_269 {dimension_numbers = #tpu.dot_dimension_numbers<[1], [0], [0], [1], [0, 0, 1, 1], [], []>} : vector<2x32xf32>, vector<32x128xf32>, vector<2x128xf32> -> vector<2x128xf32>
    %cst_270 = arith.constant dense<0.000000e+00> : vector<2xf32>
    %365 = vector.multi_reduction <add>, %364, %cst_270 [1] : vector<2x128xf32> to vector<2xf32>
    %366 = vector.shape_cast %365 : vector<2xf32> to vector<2x1xf32>
    %c3_271 = arith.constant 3 : index
    %c0_272 = arith.constant 0 : index
    %367 = vector.load %arg7[%c3_271, %c0_272] : memref<8x128xf32, #tpu.memory_space<vmem>>, vector<1x1xf32>
    %368 = vector.broadcast %367 : vector<1x1xf32> to vector<2x1xf32>
    %369 = arith.addf %366, %368 : vector<2x1xf32>
    %370 = arith.negf %369 : vector<2x1xf32>
    %371 = math.exp %370 : vector<2x1xf32>
    %cst_273 = arith.constant 1.000000e+00 : f32
    %372 = vector.broadcast %cst_273 : f32 to vector<2x1xf32>
    %373 = arith.addf %372, %371 : vector<2x1xf32>
    %374 = arith.divf %372, %373 : vector<2x1xf32>
    %c0_274 = arith.constant 0 : index
    %c0_275 = arith.constant 0 : index
    %375 = vector.load %arg8[%c0_274, %c0_275] : memref<2x1xf32, #tpu.memory_space<vmem>>, vector<2x1xf32>
    tpu.vector_store %arg8[%c0_274, %c0_275], %374 {strides = array<i32>} : memref<2x1xf32, #tpu.memory_space<vmem>>, vector<2x1xf32>,
    return
  }
}

</mosaic_0001>

<llo_original>
// kernel: discriminator_forward.1
$region0: #{discriminator_forward.1}
  #allocation0 [shape = 'u32[]', space=smem, size = 0x4, offset = 0x4, fixed_abs, tag = 'smem constant byte address 0x4 - core index']
  #allocation1 [shape = 'u32[144,128]{1,0:T(1,128)}', space=vmem, size = 0x12000, scoped, tag = 'internal scratch']
  %s0 = inlined_call_operand.vmem [shape: f32[256,4], index: 0, kind: input, shape index: {}]
  %s1 = inlined_call_operand.hbm [shape: bf16[16,64,256], index: 1, kind: input, shape index: {}]
  %s2 = inlined_call_operand.vmem [shape: f32[16,4,128], index: 2, kind: input, shape index: {}]
  %s3 = inlined_call_operand.vmem [shape: f32[1,128], index: 3, kind: input, shape index: {}]
  %s4 = inlined_call_operand.vmem [shape: bf16[256,64], index: 4, kind: input, shape index: {}]
  %s5 = inlined_call_operand.hbm [shape: f32[16,64,128], index: 5, kind: input, shape index: {}]
  %s6 = inlined_call_operand.vmem [shape: f32[16,128], index: 6, kind: input, shape index: {}]
  %s7 = inlined_call_operand.vmem [shape: f32[8,128], index: 7, kind: input, shape index: {}]
  %s8 = inlined_call_operand.vmem [shape: f32[2,1], index: 8, kind: output, shape index: {}]
  %s9 = sld [smem:[#allocation0]]
  $region50: #{discriminator_forward.1} parent=0
    _
  %s11 = ssub.s32 1, %s9
  %s12 = scalar_select 0, %s11, %s9
  $region1: #{discriminator_forward.1} parent=0
    #allocation2 [shape = 'u8[524288]{0}', space=vmem, size = 0x80000, scoped, tag = 'input window, operand 1, single buffered']
    #allocation3 [shape = 's32[1]{0}', space=sflag, size = 0x4, scoped, tag = 'scoped memory for discriminator_forward.1']
    #allocation4 [shape = 'u8[524288]{0}', space=vmem, size = 0x80000, scoped, tag = 'input window, operand 5, single buffered']
    #allocation5 [shape = 's32[1]{0}', space=sflag, size = 0x4, scoped, tag = 'scoped memory for discriminator_forward.1']
    %13 = vsyncpa [#allocation3], 0
    %14 = vsyncpa [#allocation5], 0
    // Predicated region
    $region2: #{discriminator_forward.1} parent=1 // pred_check
      _
    $region3: #{discriminator_forward.1} parent=1 // pred_check_branch
      %16 = sbr.rel (0) target = $region5
    $region4: #{discriminator_forward.1} parent=1 // pred_region
      _
    $region5: #{discriminator_forward.1} parent=1 // pred_fallthru
      _
    // Predicated region
    $region6: #{discriminator_forward.1} parent=1 // pred_check
      _
    $region7: #{discriminator_forward.1} parent=1 // pred_check_branch
      %18 = sbr.rel (0) target = $region9
    $region8: #{discriminator_forward.1} parent=1 // pred_region
      %s20 = ssub.s32 16384, 16384
      %21 = vsyncadd [#allocation3], %s20
      %s22 = sshll.u32 [#allocation2], 4
      %s23 = int_to_ptr.vmem [resolvable:$true] %s22
      %28 = dma.hbm_to_vmem [thread:$0]  %s1, 16384, %s23, [#allocation3], 128, 128, 8
    $region9: #{discriminator_forward.1} parent=1 // pred_fallthru
      _
    // Predicated region
    $region10: #{discriminator_forward.1} parent=1 // pred_check
      _
    $region11: #{discriminator_forward.1} parent=1 // pred_check_branch
      %30 = sbr.rel (0) target = $region13
    $region12: #{discriminator_forward.1} parent=1 // pred_region
      _
    $region13: #{discriminator_forward.1} parent=1 // pred_fallthru
      _
    // Predicated region
    $region14: #{discriminator_forward.1} parent=1 // pred_check
      _
    $region15: #{discriminator_forward.1} parent=1 // pred_check_branch
      %32 = sbr.rel (0) target = $region17
    $region16: #{discriminator_forward.1} parent=1 // pred_region
      _
    $region17: #{discriminator_forward.1} parent=1 // pred_fallthru
      _
    // Predicated region
    $region18: #{discriminator_forward.1} parent=1 // pred_check
      _
    $region19: #{discriminator_forward.1} parent=1 // pred_check_branch
      %34 = sbr.rel (0) target = $region21
    $region20: #{discriminator_forward.1} parent=1 // pred_region
      _
    $region21: #{discriminator_forward.1} parent=1 // pred_fallthru
      _
    // Predicated region
    $region22: #{discriminator_forward.1} parent=1 // pred_check
      _
    $region23: #{discriminator_forward.1} parent=1 // pred_check_branch
      %36 = sbr.rel (0) target = $region25
    $region24: #{discriminator_forward.1} parent=1 // pred_region
      %s38 = ssub.s32 16384, 16384
      %39 = vsyncadd [#allocation5], %s38
      %s40 = sshll.u32 [#allocation4], 4
      %s41 = int_to_ptr.vmem [resolvable:$true] %s40
      %46 = dma.hbm_to_vmem [thread:$0]  %s5, 16384, %s41, [#allocation5], 128, 128, 8
    $region25: #{discriminator_forward.1} parent=1 // pred_fallthru
      _
    // Predicated region
    $region26: #{discriminator_forward.1} parent=1 // pred_check
      _
    $region27: #{discriminator_forward.1} parent=1 // pred_check_branch
      %48 = sbr.rel (0) target = $region29
    $region28: #{discriminator_forward.1} parent=1 // pred_region
      _
    $region29: #{discriminator_forward.1} parent=1 // pred_fallthru
      _
    // Predicated region
    $region30: #{discriminator_forward.1} parent=1 // pred_check
      _
    $region31: #{discriminator_forward.1} parent=1 // pred_check_branch
      %50 = sbr.rel (0) target = $region33
    $region32: #{discriminator_forward.1} parent=1 // pred_region
      _
    $region33: #{discriminator_forward.1} parent=1 // pred_fallthru
      _
    // Predicated region
    $region34: #{discriminator_forward.1} parent=1 // pred_check
      _
    $region35: #{discriminator_forward.1} parent=1 // pred_check_branch
      %52 = sbr.rel (0) target = $region37
    $region36: #{discriminator_forward.1} parent=1 // pred_region
      %53 = dma.done [#allocation3], 16384
    $region37: #{discriminator_forward.1} parent=1 // pred_fallthru
      _
    // Predicated region
    $region38: #{discriminator_forward.1} parent=1 // pred_check
      _
    $region39: #{discriminator_forward.1} parent=1 // pred_check_branch
      %55 = sbr.rel (0) target = $region41
    $region40: #{discriminator_forward.1} parent=1 // pred_region
      %56 = dma.done [#allocation5], 16384
    $region41: #{discriminator_forward.1} parent=1 // pred_fallthru
      _
    %v57 = vld [vmem:[%s0] sm:$0xff]
    %v58 = vld [vmem:[%s0 + $0x8] sm:$0xff]
    %v59 = vld [vmem:[%s0 + $0x10] sm:$0xff]
    %v60 = vld [vmem:[%s0 + $0x18] sm:$0xff]
    %v61 = vld [vmem:[%s0 + $0x20] sm:$0xff]
    %v62 = vld [vmem:[%s0 + $0x28] sm:$0xff]
    %v63 = vld [vmem:[%s0 + $0x30] sm:$0xff]
    %v64 = vld [vmem:[%s0 + $0x38] sm:$0xff]
    %v65 = vld [vmem:[%s0 + $0x40] sm:$0xff]
    %v66 = vld [vmem:[%s0 + $0x48] sm:$0xff]
    %v67 = vld [vmem:[%s0 + $0x50] sm:$0xff]
    %v68 = vld [vmem:[%s0 + $0x58] sm:$0xff]
    %v69 = vld [vmem:[%s0 + $0x60] sm:$0xff]
    %v70 = vld [vmem:[%s0 + $0x68] sm:$0xff]
    %v71 = vld [vmem:[%s0 + $0x70] sm:$0xff]
    %v72 = vld [vmem:[%s0 + $0x78] sm:$0xff]
    %v73 = vld [vmem:[%s0 + $0x80] sm:$0xff]
    %v74 = vld [vmem:[%s0 + $0x88] sm:$0xff]
    %v75 = vld [vmem:[%s0 + $0x90] sm:$0xff]
    %v76 = vld [vmem:[%s0 + $0x98] sm:$0xff]
    %v77 = vld [vmem:[%s0 + $0xa0] sm:$0xff]
    %v78 = vld [vmem:[%s0 + $0xa8] sm:$0xff]
    %v79 = vld [vmem:[%s0 + $0xb0] sm:$0xff]
    %v80 = vld [vmem:[%s0 + $0xb8] sm:$0xff]
    %v81 = vld [vmem:[%s0 + $0xc0] sm:$0xff]
    %v82 = vld [vmem:[%s0 + $0xc8] sm:$0xff]
    %v83 = vld [vmem:[%s0 + $0xd0] sm:$0xff]
    %v84 = vld [vmem:[%s0 + $0xd8] sm:$0xff]
    %v85 = vld [vmem:[%s0 + $0xe0] sm:$0xff]
    %v86 = vld [vmem:[%s0 + $0xe8] sm:$0xff]
    %v87 = vld [vmem:[%s0 + $0xf0] sm:$0xff]
    %v88 = vld [vmem:[%s0 + $0xf8] sm:$0xff]
    %v89 = vld [vmem:[%s2] sm:$0xf]
    %vm90 = vcmask 31744
    %v92 = vsel %vm90, %v57, 0
    %v95 = vsel %vm90, %v58, 0
    %v98 = vsel %vm90, %v59, 0
    %v101 = vsel %vm90, %v60, 0
    %v104 = vsel %vm90, %v61, 0
    %v107 = vsel %vm90, %v62, 0
    %v110 = vsel %vm90, %v63, 0
    %v113 = vsel %vm90, %v64, 0
    %v116 = vsel %vm90, %v65, 0
    %v119 = vsel %vm90, %v66, 0
    %v122 = vsel %vm90, %v67, 0
    %v125 = vsel %vm90, %v68, 0
    %v128 = vsel %vm90, %v69, 0
    %v131 = vsel %vm90, %v70, 0
    %v134 = vsel %vm90, %v71, 0
    %v137 = vsel %vm90, %v72, 0
    %v140 = vsel %vm90, %v73, 0
    %v143 = vsel %vm90, %v74, 0
    %v146 = vsel %vm90, %v75, 0
    %v149 = vsel %vm90, %v76, 0
    %v152 = vsel %vm90, %v77, 0
    %v155 = vsel %vm90, %v78, 0
    %v158 = vsel %vm90, %v79, 0
    %v161 = vsel %vm90, %v80, 0
    %v164 = vsel %vm90, %v81, 0
    %v167 = vsel %vm90, %v82, 0
    %v170 = vsel %vm90, %v83, 0
    %v173 = vsel %vm90, %v84, 0
    %v176 = vsel %vm90, %v85, 0
    %v179 = vsel %vm90, %v86, 0
    %v182 = vsel %vm90, %v87, 0
    %v185 = vsel %vm90, %v88, 0
    %vm187 = vcmask 1043456
    %v189 = vsel %vm187, %v89, 0
    %191 = vmatprep.subr.mxu0 0.0
    %192 = vmatpush1.msra.mxu0 %v189
    %193 = vmatprep.subr.mxu0 0.0
    %194 = vmatpush1.msra.mxu0 0.0
    %195 = vmatprep.subr.mxu0 0.0
    %196 = vmatpush1.msra.mxu0 0.0
    %197 = vmatprep.subr.mxu0 0.0
    %198 = vmatpush1.msra.mxu0 0.0
    %199 = vmatprep.subr.mxu0 0.0
    %200 = vmatpush1.msra.mxu0 0.0
    %201 = vmatprep.subr.mxu0 0.0
    %202 = vmatpush1.msra.mxu0 0.0
    %203 = vmatprep.subr.mxu0 0.0
    %204 = vmatpush1.msra.mxu0 0.0
    %205 = vmatprep.subr.mxu0 0.0
    %206 = vmatpush1.msra.mxu0 0.0
    %207 = vmatprep.subr.mxu0 0.0
    %208 = vmatpush1.msra.mxu0 0.0
    %209 = vmatprep.subr.mxu0 0.0
    %210 = vmatpush1.msra.mxu0 0.0
    %211 = vmatprep.subr.mxu0 0.0
    %212 = vmatpush1.msra.mxu0 0.0
    %213 = vmatprep.subr.mxu0 0.0
    %214 = vmatpush1.msra.mxu0 0.0
    %215 = vmatprep.subr.mxu0 0.0
    %216 = vmatpush1.msra.mxu0 0.0
    %217 = vmatprep.subr.mxu0 0.0
    %218 = vmatpush1.msra.mxu0 0.0
    %219 = vmatprep.subr.mxu0 0.0
    %220 = vmatpush1.msra.mxu0 0.0
    %221 = vmatprep.subr.mxu0 0.0
    %222 = vmatpush1.msra.mxu0 0.0
    %223 = vmatprep.subr.mxu0 0.0
    %224 = vmatpush1.msra.mxu0 0.0
    %225 = vmatprep.subr.mxu0 0.0
    %226 = vmatpush1.msra.mxu0 0.0
    %227 = vmatprep.subr.mxu0 0.0
    %228 = vmatpush1.msra.mxu0 0.0
    %229 = vmatprep.subr.mxu0 0.0
    %230 = vmatpush1.msra.mxu0 0.0
    %231 = vmatprep.subr.mxu0 0.0
    %232 = vmatpush1.msra.mxu0 0.0
    %233 = vmatprep.subr.mxu0 0.0
    %234 = vmatpush1.msra.mxu0 0.0
    %235 = vmatprep.subr.mxu0 0.0
    %236 = vmatpush1.msra.mxu0 0.0
    %237 = vmatprep.subr.mxu0 0.0
    %238 = vmatpush1.msra.mxu0 0.0
    %239 = vmatprep.subr.mxu0 0.0
    %240 = vmatpush1.msra.mxu0 0.0
    %241 = vmatprep.subr.mxu0 0.0
    %242 = vmatpush1.msra.mxu0 0.0
    %243 = vmatprep.subr.mxu0 0.0
    %244 = vmatpush1.msra.mxu0 0.0
    %245 = vmatprep.subr.mxu0 0.0
    %246 = vmatpush1.msra.mxu0 0.0
    %247 = vmatprep.subr.mxu0 0.0
    %248 = vmatpush1.msra.mxu0 0.0
    %249 = vmatprep.subr.mxu0 0.0
    %250 = vmatpush1.msra.mxu0 0.0
    %251 = vmatprep.subr.mxu0 0.0
    %252 = vmatpush1.msra.mxu0 0.0
    %253 = vmatprep.subr.mxu0 0.0
    %254 = vmatpush1.msra.mxu0 0.0
    %255 = vmatprep.mubr.f32.mxu0 0.0
    %256 = vmatmul.mubr.f32.gmra.mrb[0].mxu0 %v92
    %v257 = vpop.f32.mrb[0].mxu0
    %v258 = vadd.f32 0.0, %v257
    %v259 = vpop.f32.mrb[0].mxu0
    %260 = vmatprep.mubr.f32.mxu0 0.0
    %261 = vmatmul.mubr.f32.gmra.mrb[0].mxu0 %v95
    %v262 = vpop.f32.mrb[0].mxu0
    %v263 = vadd.f32 0.0, %v262
    %v264 = vpop.f32.mrb[0].mxu0
    %265 = vmatprep.mubr.f32.mxu0 0.0
    %266 = vmatmul.mubr.f32.gmra.mrb[0].mxu0 %v98
    %v267 = vpop.f32.mrb[0].mxu0
    %v268 = vadd.f32 0.0, %v267
    %v269 = vpop.f32.mrb[0].mxu0
    %270 = vmatprep.mubr.f32.mxu0 0.0
    %271 = vmatmul.mubr.f32.gmra.mrb[0].mxu0 %v101
    %v272 = vpop.f32.mrb[0].mxu0
    %v273 = vadd.f32 0.0, %v272
    %v274 = vpop.f32.mrb[0].mxu0
    %275 = vmatprep.mubr.f32.mxu0 0.0
    %276 = vmatmul.mubr.f32.gmra.mrb[0].mxu0 %v104
    %v277 = vpop.f32.mrb[0].mxu0
    %v278 = vadd.f32 0.0, %v277
    %v279 = vpop.f32.mrb[0].mxu0
    %280 = vmatprep.mubr.f32.mxu0 0.0
    %281 = vmatmul.mubr.f32.gmra.mrb[0].mxu0 %v107
    %v282 = vpop.f32.mrb[0].mxu0
    %v283 = vadd.f32 0.0, %v282
    %v284 = vpop.f32.mrb[0].mxu0
    %285 = vmatprep.mubr.f32.mxu0 0.0
    %286 = vmatmul.mubr.f32.gmra.mrb[0].mxu0 %v110
    %v287 = vpop.f32.mrb[0].mxu0
    %v288 = vadd.f32 0.0, %v287
    %v289 = vpop.f32.mrb[0].mxu0
    %290 = vmatprep.mubr.f32.mxu0 0.0
    %291 = vmatmul.mubr.f32.gmra.mrb[0].mxu0 %v113
    %v292 = vpop.f32.mrb[0].mxu0
    %v293 = vadd.f32 0.0, %v292
    %v294 = vpop.f32.mrb[0].mxu0
    %295 = vmatprep.mubr.f32.mxu0 0.0
    %296 = vmatmul.mubr.f32.gmra.mrb[0].mxu0 %v116
    %v297 = vpop.f32.mrb[0].mxu0
    %v298 = vadd.f32 0.0, %v297
    %v299 = vpop.f32.mrb[0].mxu0
    %300 = vmatprep.mubr.f32.mxu0 0.0
    %301 = vmatmul.mubr.f32.gmra.mrb[0].mxu0 %v119
    %v302 = vpop.f32.mrb[0].mxu0
    %v303 = vadd.f32 0.0, %v302
    %v304 = vpop.f32.mrb[0].mxu0
    %305 = vmatprep.mubr.f32.mxu0 0.0
    %306 = vmatmul.mubr.f32.gmra.mrb[0].mxu0 %v122
    %v307 = vpop.f32.mrb[0].mxu0
    %v308 = vadd.f32 0.0, %v307
    %v309 = vpop.f32.mrb[0].mxu0
    %310 = vmatprep.mubr.f32.mxu0 0.0
    %311 = vmatmul.mubr.f32.gmra.mrb[0].mxu0 %v125
    %v312 = vpop.f32.mrb[0].mxu0
    %v313 = vadd.f32 0.0, %v312
    %v314 = vpop.f32.mrb[0].mxu0
    %315 = vmatprep.mubr.f32.mxu0 0.0
    %316 = vmatmul.mubr.f32.gmra.mrb[0].mxu0 %v128
    %v317 = vpop.f32.mrb[0].mxu0
    %v318 = vadd.f32 0.0, %v317
    %v319 = vpop.f32.mrb[0].mxu0
    %320 = vmatprep.mubr.f32.mxu0 0.0
    %321 = vmatmul.mubr.f32.gmra.mrb[0].mxu0 %v131
    %v322 = vpop.f32.mrb[0].mxu0
    %v323 = vadd.f32 0.0, %v322
    %v324 = vpop.f32.mrb[0].mxu0
    %325 = vmatprep.mubr.f32.mxu0 0.0
    %326 = vmatmul.mubr.f32.gmra.mrb[0].mxu0 %v134
    %v327 = vpop.f32.mrb[0].mxu0
    %v328 = vadd.f32 0.0, %v327
    %v329 = vpop.f32.mrb[0].mxu0
    %330 = vmatprep.mubr.f32.mxu0 0.0
    %331 = vmatmul.mubr.f32.gmra.mrb[0].mxu0 %v137
    %v332 = vpop.f32.mrb[0].mxu0
    %v333 = vadd.f32 0.0, %v332
    %v334 = vpop.f32.mrb[0].mxu0
    %335 = vmatprep.mubr.f32.mxu0 0.0
    %336 = vmatmul.mubr.f32.gmra.mrb[0].mxu0 %v140
    %v337 = vpop.f32.mrb[0].mxu0
    %v338 = vadd.f32 0.0, %v337
    %v339 = vpop.f32.mrb[0].mxu0
    %340 = vmatprep.mubr.f32.mxu0 0.0
    %341 = vmatmul.mubr.f32.gmra.mrb[0].mxu0 %v143
    %v342 = vpop.f32.mrb[0].mxu0
    %v343 = vadd.f32 0.0, %v342
    %v344 = vpop.f32.mrb[0].mxu0
    %345 = vmatprep.mubr.f32.mxu0 0.0
    %346 = vmatmul.mubr.f32.gmra.mrb[0].mxu0 %v146
    %v347 = vpop.f32.mrb[0].mxu0
    %v348 = vadd.f32 0.0, %v347
    %v349 = vpop.f32.mrb[0].mxu0
    %350 = vmatprep.mubr.f32.mxu0 0.0
    %351 = vmatmul.mubr.f32.gmra.mrb[0].mxu0 %v149
    %v352 = vpop.f32.mrb[0].mxu0
    %v353 = vadd.f32 0.0, %v352
    %v354 = vpop.f32.mrb[0].mxu0
    %355 = vmatprep.mubr.f32.mxu0 0.0
    %356 = vmatmul.mubr.f32.gmra.mrb[0].mxu0 %v152
    %v357 = vpop.f32.mrb[0].mxu0
    %v358 = vadd.f32 0.0, %v357
    %v359 = vpop.f32.mrb[0].mxu0
    %360 = vmatprep.mubr.f32.mxu0 0.0
    %361 = vmatmul.mubr.f32.gmra.mrb[0].mxu0 %v155
    %v362 = vpop.f32.mrb[0].mxu0
    %v363 = vadd.f32 0.0, %v362
    %v364 = vpop.f32.mrb[0].mxu0
    %365 = vmatprep.mubr.f32.mxu0 0.0
    %366 = vmatmul.mubr.f32.gmra.mrb[0].mxu0 %v158
    %v367 = vpop.f32.mrb[0].mxu0
    %v368 = vadd.f32 0.0, %v367
    %v369 = vpop.f32.mrb[0].mxu0
    %370 = vmatprep.mubr.f32.mxu0 0.0
    %371 = vmatmul.mubr.f32.gmra.mrb[0].mxu0 %v161
    %v372 = vpop.f32.mrb[0].mxu0
    %v373 = vadd.f32 0.0, %v372
    %v374 = vpop.f32.mrb[0].mxu0
    %375 = vmatprep.mubr.f32.mxu0 0.0
    %376 = vmatmul.mubr.f32.gmra.mrb[0].mxu0 %v164
    %v377 = vpop.f32.mrb[0].mxu0
    %v378 = vadd.f32 0.0, %v377
    %v379 = vpop.f32.mrb[0].mxu0
    %380 = vmatprep.mubr.f32.mxu0 0.0
    %381 = vmatmul.mubr.f32.gmra.mrb[0].mxu0 %v167
    %v382 = vpop.f32.mrb[0].mxu0
    %v383 = vadd.f32 0.0, %v382
    %v384 = vpop.f32.mrb[0].mxu0
    %385 = vmatprep.mubr.f32.mxu0 0.0
    %386 = vmatmul.mubr.f32.gmra.mrb[0].mxu0 %v170
    %v387 = vpop.f32.mrb[0].mxu0
    %v388 = vadd.f32 0.0, %v387
    %v389 = vpop.f32.mrb[0].mxu0
    %390 = vmatprep.mubr.f32.mxu0 0.0
    %391 = vmatmul.mubr.f32.gmra.mrb[0].mxu0 %v173
    %v392 = vpop.f32.mrb[0].mxu0
    %v393 = vadd.f32 0.0, %v392
    %v394 = vpop.f32.mrb[0].mxu0
    %395 = vmatprep.mubr.f32.mxu0 0.0
    %396 = vmatmul.mubr.f32.gmra.mrb[0].mxu0 %v176
    %v397 = vpop.f32.mrb[0].mxu0
    %v398 = vadd.f32 0.0, %v397
    %v399 = vpop.f32.mrb[0].mxu0
    %400 = vmatprep.mubr.f32.mxu0 0.0
    %401 = vmatmul.mubr.f32.gmra.mrb[0].mxu0 %v179
    %v402 = vpop.f32.mrb[0].mxu0
    %v403 = vadd.f32 0.0, %v402
    %v404 = vpop.f32.mrb[0].mxu0
    %405 = vmatprep.mubr.f32.mxu0 0.0
    %406 = vmatmul.mubr.f32.gmra.mrb[0].mxu0 %v182
    %v407 = vpop.f32.mrb[0].mxu0
    %v408 = vadd.f32 0.0, %v407
    %v409 = vpop.f32.mrb[0].mxu0
    %410 = vmatprep.mubr.f32.mxu0 0.0
    %411 = vmatmul.mubr.f32.gmra.mrb[0].mxu0 %v185
    %v412 = vpop.f32.mrb[0].mxu0
    %v413 = vadd.f32 0.0, %v412
    %v414 = vpop.f32.mrb[0].mxu0
    %415 = vdwg.mxu0
    %v416 = vld [vmem:[#allocation2] sm:$0xff]
    %v417 = vld [vmem:[#allocation2 + $0x8] sm:$0xff]
    %v418 = vld [vmem:[#allocation2 + $0x10] sm:$0xff]
    %v419 = vld [vmem:[#allocation2 + $0x18] sm:$0xff]
    %v420 = vld [vmem:[#allocation2 + $0x20] sm:$0xff]
    %v421 = vld [vmem:[#allocation2 + $0x28] sm:$0xff]
    %v422 = vld [vmem:[#allocation2 + $0x30] sm:$0xff]
    %v423 = vld [vmem:[#allocation2 + $0x38] sm:$0xff]
    %v424 = vunpack.c.l.bf16 %v416
    %v425 = vunpack.c.h.bf16 %v416
    %v426 = vunpack.c.l.bf16 %v417
    %v427 = vunpack.c.h.bf16 %v417
    %v428 = vunpack.c.l.bf16 %v418
    %v429 = vunpack.c.h.bf16 %v418
    %v430 = vunpack.c.l.bf16 %v419
    %v431 = vunpack.c.h.bf16 %v419
    %v432 = vunpack.c.l.bf16 %v420
    %v433 = vunpack.c.h.bf16 %v420
    %v434 = vunpack.c.l.bf16 %v421
    %v435 = vunpack.c.h.bf16 %v421
    %v436 = vunpack.c.l.bf16 %v422
    %v437 = vunpack.c.h.bf16 %v422
    %v438 = vunpack.c.l.bf16 %v423
    %v439 = vunpack.c.h.bf16 %v423
    %s440 = scalar_lea.vmem %s2, 4
    %v441 = vld [vmem:[%s440] sm:$0xf]
    %v443 = vsel %vm187, %v441, 0
    %445 = vmatprep.subr.mxu0 0.0
    %446 = vmatpush1.msra.mxu0 %v443
    %447 = vmatprep.subr.mxu0 0.0
    %448 = vmatpush1.msra.mxu0 0.0
    %449 = vmatprep.subr.mxu0 0.0
    %450 = vmatpush1.msra.mxu0 0.0
    %451 = vmatprep.subr.mxu0 0.0
    %452 = vmatpush1.msra.mxu0 0.0
    %453 = vmatprep.subr.mxu0 0.0
    %454 = vmatpush1.msra.mxu0 0.0
    %455 = vmatprep.subr.mxu0 0.0
    %456 = vmatpush1.msra.mxu0 0.0
    %457 = vmatprep.subr.mxu0 0.0
    %458 = vmatpush1.msra.mxu0 0.0
    %459 = vmatprep.subr.mxu0 0.0
    %460 = vmatpush1.msra.mxu0 0.0
    %461 = vmatprep.subr.mxu0 0.0
    %462 = vmatpush1.msra.mxu0 0.0
    %463 = vmatprep.subr.mxu0 0.0
    %464 = vmatpush1.msra.mxu0 0.0
    %465 = vmatprep.subr.mxu0 0.0
    %466 = vmatpush1.msra.mxu0 0.0
    %467 = vmatprep.subr.mxu0 0.0
    %468 = vmatpush1.msra.mxu0 0.0
    %469 = vmatprep.subr.mxu0 0.0
    %470 = vmatpush1.msra.mxu0 0.0
    %471 = vmatprep.subr.mxu0 0.0
    %472 = vmatpush1.msra.mxu0 0.0
    %473 = vmatprep.subr.mxu0 0.0
    %474 = vmatpush1.msra.mxu0 0.0
    %475 = vmatprep.subr.mxu0 0.0
    %476 = vmatpush1.msra.mxu0 0.0
    %477 = vmatprep.subr.mxu0 0.0
    %478 = vmatpush1.msra.mxu0 0.0
    %479 = vmatprep.subr.mxu0 0.0
    %480 = vmatpush1.msra.mxu0 0.0
    %481 = vmatprep.subr.mxu0 0.0
    %482 = vmatpush1.msra.mxu0 0.0
    %483 = vmatprep.subr.mxu0 0.0
    %484 = vmatpush1.msra.mxu0 0.0
    %485 = vmatprep.subr.mxu0 0.0
    %486 = vmatpush1.msra.mxu0 0.0
    %487 = vmatprep.subr.mxu0 0.0
    %488 = vmatpush1.msra.mxu0 0.0
    %489 = vmatprep.subr.mxu0 0.0
    %490 = vmatpush1.msra.mxu0 0.0
    %491 = vmatprep.subr.mxu0 0.0
    %492 = vmatpush1.msra.mxu0 0.0
    %493 = vmatprep.subr.mxu0 0.0
    %494 = vmatpush1.msra.mxu0 0.0
    %495 = vmatprep.subr.mxu0 0.0
    %496 = vmatpush1.msra.mxu0 0.0
    %497 = vmatprep.subr.mxu0 0.0
    %498 = vmatpush1.msra.mxu0 0.0
    %499 = vmatprep.subr.mxu0 0.0
    %500 = vmatpush1.msra.mxu0 0.0
    %501 = vmatprep.subr.mxu0 0.0
    %502 = vmatpush1.msra.mxu0 0.0
    %503 = vmatprep.subr.mxu0 0.0
    %504 = vmatpush1.msra.mxu0 0.0
    %505 = vmatprep.subr.mxu0 0.0
    %506 = vmatpush1.msra.mxu0 0.0
    %507 = vmatprep.subr.mxu0 0.0
    %508 = vmatpush1.msra.mxu0 0.0
    %509 = vmatprep.mubr.f32.mxu0 0.0
    %510 = vmatmul.mubr.f32.gmra.mrb[0].mxu0 %v92
    %v511 = vpop.f32.mrb[0].mxu0
    %v512 = vadd.f32 0.0, %v511
    %v513 = vpop.f32.mrb[0].mxu0
    %514 = vmatprep.mubr.f32.mxu0 0.0
    %515 = vmatmul.mubr.f32.gmra.mrb[0].mxu0 %v95
    %v516 = vpop.f32.mrb[0].mxu0
    %v517 = vadd.f32 0.0, %v516
    %v518 = vpop.f32.mrb[0].mxu0
    %519 = vmatprep.mubr.f32.mxu0 0.0
    %520 = vmatmul.mubr.f32.gmra.mrb[0].mxu0 %v98
    %v521 = vpop.f32.mrb[0].mxu0
    %v522 = vadd.f32 0.0, %v521
    %v523 = vpop.f32.mrb[0].mxu0
    %524 = vmatprep.mubr.f32.mxu0 0.0
    %525 = vmatmul.mubr.f32.gmra.mrb[0].mxu0 %v101
    %v526 = vpop.f32.mrb[0].mxu0
    %v527 = vadd.f32 0.0, %v526
    %v528 = vpop.f32.mrb[0].mxu0
    %529 = vmatprep.mubr.f32.mxu0 0.0
    %530 = vmatmul.mubr.f32.gmra.mrb[0].mxu0 %v104
    %v531 = vpop.f32.mrb[0].mxu0
    %v532 = vadd.f32 0.0, %v531
    %v533 = vpop.f32.mrb[0].mxu0
    %534 = vmatprep.mubr.f32.mxu0 0.0
    %535 = vmatmul.mubr.f32.gmra.mrb[0].mxu0 %v107
    %v536 = vpop.f32.mrb[0].mxu0
    %v537 = vadd.f32 0.0, %v536
    %v538 = vpop.f32.mrb[0].mxu0
    %539 = vmatprep.mubr.f32.mxu0 0.0
    %540 = vmatmul.mubr.f32.gmra.mrb[0].mxu0 %v110
    %v541 = vpop.f32.mrb[0].mxu0
    %v542 = vadd.f32 0.0, %v541
    %v543 = vpop.f32.mrb[0].mxu0
    %544 = vmatprep.mubr.f32.mxu0 0.0
    %545 = vmatmul.mubr.f32.gmra.mrb[0].mxu0 %v113
    %v546 = vpop.f32.mrb[0].mxu0
    %v547 = vadd.f32 0.0, %v546
    %v548 = vpop.f32.mrb[0].mxu0
    %549 = vmatprep.mubr.f32.mxu0 0.0
    %550 = vmatmul.mubr.f32.gmra.mrb[0].mxu0 %v116
    %v551 = vpop.f32.mrb[0].mxu0
    %v552 = vadd.f32 0.0, %v551
    %v553 = vpop.f32.mrb[0].mxu0
    %554 = vmatprep.mubr.f32.mxu0 0.0
    %555 = vmatmul.mubr.f32.gmra.mrb[0].mxu0 %v119
    %v556 = vpop.f32.mrb[0].mxu0
    %v557 = vadd.f32 0.0, %v556
    %v558 = vpop.f32.mrb[0].mxu0
    %559 = vmatprep.mubr.f32.mxu0 0.0
    %560 = vmatmul.mubr.f32.gmra.mrb[0].mxu0 %v122
    %v561 = vpop.f32.mrb[0].mxu0
    %v562 = vadd.f32 0.0, %v561
    %v563 = vpop.f32.mrb[0].mxu0
    %564 = vmatprep.mubr.f32.mxu0 0.0
    %565 = vmatmul.mubr.f32.gmra.mrb[0].mxu0 %v125
    %v566 = vpop.f32.mrb[0].mxu0
    %v567 = vadd.f32 0.0, %v566
    %v568 = vpop.f32.mrb[0].mxu0
    %569 = vmatprep.mubr.f32.mxu0 0.0
    %570 = vmatmul.mubr.f32.gmra.mrb[0].mxu0 %v128
    %v571 = vpop.f32.mrb[0].mxu0
    %v572 = vadd.f32 0.0, %v571
    %v573 = vpop.f32.mrb[0].mxu0
    %574 = vmatprep.mubr.f32.mxu0 0.0
    %575 = vmatmul.mubr.f32.gmra.mrb[0].mxu0 %v131
    %v576 = vpop.f32.mrb[0].mxu0
    %v577 = vadd.f32 0.0, %v576
    %v578 = vpop.f32.mrb[0].mxu0
    %579 = vmatprep.mubr.f32.mxu0 0.0
    %580 = vmatmul.mubr.f32.gmra.mrb[0].mxu0 %v134
    %v581 = vpop.f32.mrb[0].mxu0
    %v582 = vadd.f32 0.0, %v581
    %v583 = vpop.f32.mrb[0].mxu0
    %584 = vmatprep.mubr.f32.mxu0 0.0
    %585 = vmatmul.mubr.f32.gmra.mrb[0].mxu0 %v137
    %v586 = vpop.f32.mrb[0].mxu0
    %v587 = vadd.f32 0.0, %v586
    %v588 = vpop.f32.mrb[0].mxu0
    %589 = vmatprep.mubr.f32.mxu0 0.0
    %590 = vmatmul.mubr.f32.gmra.mrb[0].mxu0 %v140
    %v591 = vpop.f32.mrb[0].mxu0
    %v592 = vadd.f32 0.0, %v591
    %v593 = vpop.f32.mrb[0].mxu0
    %594 = vmatprep.mubr.f32.mxu0 0.0
    %595 = vmatmul.mubr.f32.gmra.mrb[0].mxu0 %v143
    %v596 = vpop.f32.mrb[0].mxu0
    %v597 = vadd.f32 0.0, %v596
    %v598 = vpop.f32.mrb[0].mxu0
    %599 = vmatprep.mubr.f32.mxu0 0.0
    %600 = vmatmul.mubr.f32.gmra.mrb[0].mxu0 %v146
    %v601 = vpop.f32.mrb[0].mxu0
    %v602 = vadd.f32 0.0, %v601
    %v603 = vpop.f32.mrb[0].mxu0
    %604 = vmatprep.mubr.f32.mxu0 0.0
    %605 = vmatmul.mubr.f32.gmra.mrb[0].mxu0 %v149
    %v606 = vpop.f32.mrb[0].mxu0
    %v607 = vadd.f32 0.0, %v606
    %v608 = vpop.f32.mrb[0].mxu0
    %609 = vmatprep.mubr.f32.mxu0 0.0
    %610 = vmatmul.mubr.f32.gmra.mrb[0].mxu0 %v152
    %v611 = vpop.f32.mrb[0].mxu0
    %v612 = vadd.f32 0.0, %v611
    %v613 = vpop.f32.mrb[0].mxu0
    %614 = vmatprep.mubr.f32.mxu0 0.0
    %615 = vmatmul.mubr.f32.gmra.mrb[0].mxu0 %v155
    %v616 = vpop.f32.mrb[0].mxu0
    %v617 = vadd.f32 0.0, %v616
    %v618 = vpop.f32.mrb[0].mxu0
    %619 = vmatprep.mubr.f32.mxu0 0.0
    %620 = vmatmul.mubr.f32.gmra.mrb[0].mxu0 %v158
    %v621 = vpop.f32.mrb[0].mxu0
    %v622 = vadd.f32 0.0, %v621
    %v623 = vpop.f32.mrb[0].mxu0
    %624 = vmatprep.mubr.f32.mxu0 0.0
    %625 = vmatmul.mubr.f32.gmra.mrb[0].mxu0 %v161
    %v626 = vpop.f32.mrb[0].mxu0
    %v627 = vadd.f32 0.0, %v626
    %v628 = vpop.f32.mrb[0].mxu0
    %629 = vmatprep.mubr.f32.mxu0 0.0
    %630 = vmatmul.mubr.f32.gmra.mrb[0].mxu0 %v164
    %v631 = vpop.f32.mrb[0].mxu0
    %v632 = vadd.f32 0.0, %v631
    %v633 = vpop.f32.mrb[0].mxu0
    %634 = vmatprep.mubr.f32.mxu0 0.0
    %635 = vmatmul.mubr.f32.gmra.mrb[0].mxu0 %v167
    %v636 = vpop.f32.mrb[0].mxu0
    %v637 = vadd.f32 0.0, %v636
    %v638 = vpop.f32.mrb[0].mxu0
    %639 = vmatprep.mubr.f32.mxu0 0.0
    %640 = vmatmul.mubr.f32.gmra.mrb[0].mxu0 %v170
    %v641 = vpop.f32.mrb[0].mxu0
    %v642 = vadd.f32 0.0, %v641
    %v643 = vpop.f32.mrb[0].mxu0
    %644 = vmatprep.mubr.f32.mxu0 0.0
    %645 = vmatmul.mubr.f32.gmra.mrb[0].mxu0 %v173
    %v646 = vpop.f32.mrb[0].mxu0
    %v647 = vadd.f32 0.0, %v646
    %v648 = vpop.f32.mrb[0].mxu0
    %649 = vmatprep.mubr.f32.mxu0 0.0
    %650 = vmatmul.mubr.f32.gmra.mrb[0].mxu0 %v176
    %v651 = vpop.f32.mrb[0].mxu0
    %v652 = vadd.f32 0.0, %v651
    %v653 = vpop.f32.mrb[0].mxu0
    %654 = vmatprep.mubr.f32.mxu0 0.0
    %655 = vmatmul.mubr.f32.gmra.mrb[0].mxu0 %v179
    %v656 = vpop.f32.mrb[0].mxu0
    %v657 = vadd.f32 0.0, %v656
    %v658 = vpop.f32.mrb[0].mxu0
    %659 = vmatprep.mubr.f32.mxu0 0.0
    %660 = vmatmul.mubr.f32.gmra.mrb[0].mxu0 %v182
    %v661 = vpop.f32.mrb[0].mxu0
    %v662 = vadd.f32 0.0, %v661
    %v663 = vpop.f32.mrb[0].mxu0
    %664 = vmatprep.mubr.f32.mxu0 0.0
    %665 = vmatmul.mubr.f32.gmra.mrb[0].mxu0 %v185
    %v666 = vpop.f32.mrb[0].mxu0
    %v667 = vadd.f32 0.0, %v666
    %v668 = vpop.f32.mrb[0].mxu0
    %669 = vdwg.mxu0
    %s670 = scalar_lea.vmem [#allocation2], 64
    %v671 = vld [vmem:[%s670] sm:$0xff]
    %v672 = vld [vmem:[%s670 + $0x8] sm:$0xff]
    %v673 = vld [vmem:[%s670 + $0x10] sm:$0xff]
    %v674 = vld [vmem:[%s670 + $0x18] sm:$0xff]
    %v675 = vld [vmem:[%s670 + $0x20] sm:$0xff]
    %v676 = vld [vmem:[%s670 + $0x28] sm:$0xff]
    %v677 = vld [vmem:[%s670 + $0x30] sm:$0xff]
    %v678 = vld [vmem:[%s670 + $0x38] sm:$0xff]
    %v679 = vunpack.c.l.bf16 %v671
    %v680 = vunpack.c.h.bf16 %v671
    %v681 = vunpack.c.l.bf16 %v672
    %v682 = vunpack.c.h.bf16 %v672
    %v683 = vunpack.c.l.bf16 %v673
    %v684 = vunpack.c.h.bf16 %v673
    %v685 = vunpack.c.l.bf16 %v674
    %v686 = vunpack.c.h.bf16 %v674
    %v687 = vunpack.c.l.bf16 %v675
    %v688 = vunpack.c.h.bf16 %v675
    %v689 = vunpack.c.l.bf16 %v676
    %v690 = vunpack.c.h.bf16 %v676
    %v691 = vunpack.c.l.bf16 %v677
    %v692 = vunpack.c.h.bf16 %v677
    %v693 = vunpack.c.l.bf16 %v678
    %v694 = vunpack.c.h.bf16 %v678
    %695 = vmatprep.subr.mxu0 0.0
    %696 = vmatpush1.msra.mxu0 %v512
    %697 = vmatprep.subr.mxu0 0.0
    %698 = vmatpush1.msra.mxu0 %v517
    %699 = vmatprep.subr.mxu0 0.0
    %700 = vmatpush1.msra.mxu0 %v522
    %701 = vmatprep.subr.mxu0 0.0
    %702 = vmatpush1.msra.mxu0 %v527
    %703 = vmatprep.subr.mxu0 0.0
    %704 = vmatpush1.msra.mxu0 %v532
    %705 = vmatprep.subr.mxu0 0.0
    %706 = vmatpush1.msra.mxu0 %v537
    %707 = vmatprep.subr.mxu0 0.0
    %708 = vmatpush1.msra.mxu0 %v542
    %709 = vmatprep.subr.mxu0 0.0
    %710 = vmatpush1.msra.mxu0 %v547
    %711 = vmatprep.subr.mxu0 0.0
    %712 = vmatpush1.msra.mxu0 %v552
    %713 = vmatprep.subr.mxu0 0.0
    %714 = vmatpush1.msra.mxu0 %v557
    %715 = vmatprep.subr.mxu0 0.0
    %716 = vmatpush1.msra.mxu0 %v562
    %717 = vmatprep.subr.mxu0 0.0
    %718 = vmatpush1.msra.mxu0 %v567
    %719 = vmatprep.subr.mxu0 0.0
    %720 = vmatpush1.msra.mxu0 %v572
    %721 = vmatprep.subr.mxu0 0.0
    %722 = vmatpush1.msra.mxu0 %v577
    %723 = vmatprep.subr.mxu0 0.0
    %724 = vmatpush1.msra.mxu0 %v582
    %725 = vmatprep.subr.mxu0 0.0
    %726 = vmatpush1.msra.mxu0 %v587
    %727 = vmatprep.subr.mxu0 0.0
    %728 = vmatpush1.msra.mxu0 %v592
    %729 = vmatprep.subr.mxu0 0.0
    %730 = vmatpush1.msra.mxu0 %v597
    %731 = vmatprep.subr.mxu0 0.0
    %732 = vmatpush1.msra.mxu0 %v602
    %733 = vmatprep.subr.mxu0 0.0
    %734 = vmatpush1.msra.mxu0 %v607
    %735 = vmatprep.subr.mxu0 0.0
    %736 = vmatpush1.msra.mxu0 %v612
    %737 = vmatprep.subr.mxu0 0.0
    %738 = vmatpush1.msra.mxu0 %v617
    %739 = vmatprep.subr.mxu0 0.0
    %740 = vmatpush1.msra.mxu0 %v622
    %741 = vmatprep.subr.mxu0 0.0
    %742 = vmatpush1.msra.mxu0 %v627
    %743 = vmatprep.subr.mxu0 0.0
    %744 = vmatpush1.msra.mxu0 %v632
    %745 = vmatprep.subr.mxu0 0.0
    %746 = vmatpush1.msra.mxu0 %v637
    %747 = vmatprep.subr.mxu0 0.0
    %748 = vmatpush1.msra.mxu0 %v642
    %749 = vmatprep.subr.mxu0 0.0
    %750 = vmatpush1.msra.mxu0 %v647
    %751 = vmatprep.subr.mxu0 0.0
    %752 = vmatpush1.msra.mxu0 %v652
    %753 = vmatprep.subr.mxu0 0.0
    %754 = vmatpush1.msra.mxu0 %v657
    %755 = vmatprep.subr.mxu0 0.0
    %756 = vmatpush1.msra.mxu0 %v662
    %757 = vmatprep.subr.mxu0 0.0
    %758 = vmatpush1.msra.mxu0 %v667
    %759 = vmatprep.mubr.f32.mxu0 %v680
    %760 = vmatmul.mubr.f32.gmra.mrb[0].mxu0 %v679
    %v761 = vpop.f32.mrb[0].mxu0
    %v762 = vadd.f32 0.0, %v761
    %v763 = vpop.f32.mrb[0].mxu0
    %764 = vmatprep.mubr.f32.mxu0 %v682
    %765 = vmatmul.mubr.f32.gmra.mrb[0].mxu0 %v681
    %v766 = vpop.f32.mrb[0].mxu0
    %v767 = vadd.f32 0.0, %v766
    %v768 = vpop.f32.mrb[0].mxu0
    %769 = vmatprep.mubr.f32.mxu0 %v684
    %770 = vmatmul.mubr.f32.gmra.mrb[0].mxu0 %v683
    %v771 = vpop.f32.mrb[0].mxu0
    %v772 = vadd.f32 0.0, %v771
    %v773 = vpop.f32.mrb[0].mxu0
    %774 = vmatprep.mubr.f32.mxu0 %v686
    %775 = vmatmul.mubr.f32.gmra.mrb[0].mxu0 %v685
    %v776 = vpop.f32.mrb[0].mxu0
    %v777 = vadd.f32 0.0, %v776
    %v778 = vpop.f32.mrb[0].mxu0
    %779 = vmatprep.mubr.f32.mxu0 %v688
    %780 = vmatmul.mubr.f32.gmra.mrb[0].mxu0 %v687
    %v781 = vpop.f32.mrb[0].mxu0
    %v782 = vadd.f32 0.0, %v781
    %v783 = vpop.f32.mrb[0].mxu0
    %784 = vmatprep.mubr.f32.mxu0 %v690
    %785 = vmatmul.mubr.f32.gmra.mrb[0].mxu0 %v689
    %v786 = vpop.f32.mrb[0].mxu0
    %v787 = vadd.f32 0.0, %v786
    %v788 = vpop.f32.mrb[0].mxu0
    %789 = vmatprep.mubr.f32.mxu0 %v692
    %790 = vmatmul.mubr.f32.gmra.mrb[0].mxu0 %v691
    %v791 = vpop.f32.mrb[0].mxu0
    %v792 = vadd.f32 0.0, %v791
    %v793 = vpop.f32.mrb[0].mxu0
    %794 = vmatprep.mubr.f32.mxu0 %v694
    %795 = vmatmul.mubr.f32.gmra.mrb[0].mxu0 %v693
    %v796 = vpop.f32.mrb[0].mxu0
    %v797 = vadd.f32 0.0, %v796
    %v798 = vpop.f32.mrb[0].mxu0
    %799 = vdwg.mxu0
    %800 = vmatprep.subr.mxu0 0.0
    %801 = vmatpush1.msra.mxu0 %v258
    %802 = vmatprep.subr.mxu0 0.0
    %803 = vmatpush1.msra.mxu0 %v263
    %804 = vmatprep.subr.mxu0 0.0
    %805 = vmatpush1.msra.mxu0 %v268
    %806 = vmatprep.subr.mxu0 0.0
    %807 = vmatpush1.msra.mxu0 %v273
    %808 = vmatprep.subr.mxu0 0.0
    %809 = vmatpush1.msra.mxu0 %v278
    %810 = vmatprep.subr.mxu0 0.0
    %811 = vmatpush1.msra.mxu0 %v283
    %812 = vmatprep.subr.mxu0 0.0
    %813 = vmatpush1.msra.mxu0 %v288
    %814 = vmatprep.subr.mxu0 0.0
    %815 = vmatpush1.msra.mxu0 %v293
    %816 = vmatprep.subr.mxu0 0.0
    %817 = vmatpush1.msra.mxu0 %v298
    %818 = vmatprep.subr.mxu0 0.0
    %819 = vmatpush1.msra.mxu0 %v303
    %820 = vmatprep.subr.mxu0 0.0
    %821 = vmatpush1.msra.mxu0 %v308
    %822 = vmatprep.subr.mxu0 0.0
    %823 = vmatpush1.msra.mxu0 %v313
    %824 = vmatprep.subr.mxu0 0.0
    %825 = vmatpush1.msra.mxu0 %v318
    %826 = vmatprep.subr.mxu0 0.0
    %827 = vmatpush1.msra.mxu0 %v323
    %828 = vmatprep.subr.mxu0 0.0
    %829 = vmatpush1.msra.mxu0 %v328
    %830 = vmatprep.subr.mxu0 0.0
    %831 = vmatpush1.msra.mxu0 %v333
    %832 = vmatprep.subr.mxu0 0.0
    %833 = vmatpush1.msra.mxu0 %v338
    %834 = vmatprep.subr.mxu0 0.0
    %835 = vmatpush1.msra.mxu0 %v343
    %836 = vmatprep.subr.mxu0 0.0
    %837 = vmatpush1.msra.mxu0 %v348
    %838 = vmatprep.subr.mxu0 0.0
    %839 = vmatpush1.msra.mxu0 %v353
    %840 = vmatprep.subr.mxu0 0.0
    %841 = vmatpush1.msra.mxu0 %v358
    %842 = vmatprep.subr.mxu0 0.0
    %843 = vmatpush1.msra.mxu0 %v363
    %844 = vmatprep.subr.mxu0 0.0
    %845 = vmatpush1.msra.mxu0 %v368
    %846 = vmatprep.subr.mxu0 0.0
    %847 = vmatpush1.msra.mxu0 %v373
    %848 = vmatprep.subr.mxu0 0.0
    %849 = vmatpush1.msra.mxu0 %v378
    %850 = vmatprep.subr.mxu0 0.0
    %851 = vmatpush1.msra.mxu0 %v383
    %852 = vmatprep.subr.mxu0 0.0
    %853 = vmatpush1.msra.mxu0 %v388
    %854 = vmatprep.subr.mxu0 0.0
    %855 = vmatpush1.msra.mxu0 %v393
    %856 = vmatprep.subr.mxu0 0.0
    %857 = vmatpush1.msra.mxu0 %v398
    %858 = vmatprep.subr.mxu0 0.0
    %859 = vmatpush1.msra.mxu0 %v403
    %860 = vmatprep.subr.mxu0 0.0
    %861 = vmatpush1.msra.mxu0 %v408
    %862 = vmatprep.subr.mxu0 0.0
    %863 = vmatpush1.msra.mxu0 %v413
    %864 = vmatprep.mubr.f32.mxu0 %v425
    %865 = vmatmul.mubr.f32.gmra.mrb[0].mxu0 %v424
    %v866 = vpop.f32.mrb[0].mxu0
    %v867 = vadd.f32 %v762, %v866
    %v868 = vpop.f32.mrb[0].mxu0
    %869 = vmatprep.mubr.f32.mxu0 %v427
    %870 = vmatmul.mubr.f32.gmra.mrb[0].mxu0 %v426
    %v871 = vpop.f32.mrb[0].mxu0
    %v872 = vadd.f32 %v767, %v871
    %v873 = vpop.f32.mrb[0].mxu0
    %874 = vmatprep.mubr.f32.mxu0 %v429
    %875 = vmatmul.mubr.f32.gmra.mrb[0].mxu0 %v428
    %v876 = vpop.f32.mrb[0].mxu0
    %v877 = vadd.f32 %v772, %v876
    %v878 = vpop.f32.mrb[0].mxu0
    %879 = vmatprep.mubr.f32.mxu0 %v431
    %880 = vmatmul.mubr.f32.gmra.mrb[0].mxu0 %v430
    %v881 = vpop.f32.mrb[0].mxu0
    %v882 = vadd.f32 %v777, %v881
    %v883 = vpop.f32.mrb[0].mxu0
    %884 = vmatprep.mubr.f32.mxu0 %v433
    %885 = vmatmul.mubr.f32.gmra.mrb[0].mxu0 %v432
    %v886 = vpop.f32.mrb[0].mxu0
    %v887 = vadd.f32 %v782, %v886
    %v888 = vpop.f32.mrb[0].mxu0
    %889 = vmatprep.mubr.f32.mxu0 %v435
    %890 = vmatmul.mubr.f32.gmra.mrb[0].mxu0 %v434
    %v891 = vpop.f32.mrb[0].mxu0
    %v892 = vadd.f32 %v787, %v891
    %v893 = vpop.f32.mrb[0].mxu0
    %894 = vmatprep.mubr.f32.mxu0 %v437
    %895 = vmatmul.mubr.f32.gmra.mrb[0].mxu0 %v436
    %v896 = vpop.f32.mrb[0].mxu0
    %v897 = vadd.f32 %v792, %v896
    %v898 = vpop.f32.mrb[0].mxu0
    %899 = vmatprep.mubr.f32.mxu0 %v439
    %900 = vmatmul.mubr.f32.gmra.mrb[0].mxu0 %v438
    %v901 = vpop.f32.mrb[0].mxu0
    %v902 = vadd.f32 %v797, %v901
    %v903 = vpop.f32.mrb[0].mxu0
    %904 = vdwg.mxu0
    %s905 = scalar_lea.vmem %s2, 8
    %v906 = vld [vmem:[%s905] sm:$0xf]
    %v908 = vsel %vm187, %v906, 0
    %910 = vmatprep.subr.mxu0 0.0
    %911 = vmatpush1.msra.mxu0 %v908
    %912 = vmatprep.subr.mxu0 0.0
    %913 = vmatpush1.msra.mxu0 0.0
    %914 = vmatprep.subr.mxu0 0.0
    %915 = vmatpush1.msra.mxu0 0.0
    %916 = vmatprep.subr.mxu0 0.0
    %917 = vmatpush1.msra.mxu0 0.0
    %918 = vmatprep.subr.mxu0 0.0
    %919 = vmatpush1.msra.mxu0 0.0
    %920 = vmatprep.subr.mxu0 0.0
    %921 = vmatpush1.msra.mxu0 0.0
    %922 = vmatprep.subr.mxu0 0.0
    %923 = vmatpush1.msra.mxu0 0.0
    %924 = vmatprep.subr.mxu0 0.0
    %925 = vmatpush1.msra.mxu0 0.0
    %926 = vmatprep.subr.mxu0 0.0
    %927 = vmatpush1.msra.mxu0 0.0
    %928 = vmatprep.subr.mxu0 0.0
    %929 = vmatpush1.msra.mxu0 0.0
    %930 = vmatprep.subr.mxu0 0.0
    %931 = vmatpush1.msra.mxu0 0.0
    %932 = vmatprep.subr.mxu0 0.0
    %933 = vmatpush1.msra.mxu0 0.0
    %934 = vmatprep.subr.mxu0 0.0
    %935 = vmatpush1.msra.mxu0 0.0
    %936 = vmatprep.subr.mxu0 0.0
    %937 = vmatpush1.msra.mxu0 0.0
    %938 = vmatprep.subr.mxu0 0.0
    %939 = vmatpush1.msra.mxu0 0.0
    %940 = vmatprep.subr.mxu0 0.0
    %941 = vmatpush1.msra.mxu0 0.0
    %942 = vmatprep.subr.mxu0 0.0
    %943 = vmatpush1.msra.mxu0 0.0
    %944 = vmatprep.subr.mxu0 0.0
    %945 = vmatpush1.msra.mxu0 0.0
    %946 = vmatprep.subr.mxu0 0.0
    %947 = vmatpush1.msra.mxu0 0.0
    %948 = vmatprep.subr.mxu0 0.0
    %949 = vmatpush1.msra.mxu0 0.0
    %950 = vmatprep.subr.mxu0 0.0
    %951 = vmatpush1.msra.mxu0 0.0
    %952 = vmatprep.subr.mxu0 0.0
    %953 = vmatpush1.msra.mxu0 0.0
    %954 = vmatprep.subr.mxu0 0.0
    %955 = vmatpush1.msra.mxu0 0.0
    %956 = vmatprep.subr.mxu0 0.0
    %957 = vmatpush1.msra.mxu0 0.0
    %958 = vmatprep.subr.mxu0 0.0
    %959 = vmatpush1.msra.mxu0 0.0
    %960 = vmatprep.subr.mxu0 0.0
    %961 = vmatpush1.msra.mxu0 0.0
    %962 = vmatprep.subr.mxu0 0.0
    %963 = vmatpush1.msra.mxu0 0.0
    %964 = vmatprep.subr.mxu0 0.0
    %965 = vmatpush1.msra.mxu0 0.0
    %966 = vmatprep.subr.mxu0 0.0
    %967 = vmatpush1.msra.mxu0 0.0
    %968 = vmatprep.subr.mxu0 0.0
    %969 = vmatpush1.msra.mxu0 0.0
    %970 = vmatprep.subr.mxu0 0.0
    %971 = vmatpush1.msra.mxu0 0.0
    %972 = vmatprep.subr.mxu0 0.0
    %973 = vmatpush1.msra.mxu0 0.0
    %974 = vmatprep.mubr.f32.mxu0 0.0
    %975 = vmatmul.mubr.f32.gmra.mrb[0].mxu0 %v92
    %v976 = vpop.f32.mrb[0].mxu0
    %v977 = vadd.f32 0.0, %v976
    %v978 = vpop.f32.mrb[0].mxu0
    %979 = vmatprep.mubr.f32.mxu0 0.0
    %980 = vmatmul.mubr.f32.gmra.mrb[0].mxu0 %v95
    %v981 = vpop.f32.mrb[0].mxu0
    %v982 = vadd.f32 0.0, %v981
    %v983 = vpop.f32.mrb[0].mxu0
    %984 = vmatprep.mubr.f32.mxu0 0.0
    %985 = vmatmul.mubr.f32.gmra.mrb[0].mxu0 %v98
    %v986 = vpop.f32.mrb[0].mxu0
    %v987 = vadd.f32 0.0, %v986
    %v988 = vpop.f32.mrb[0].mxu0
    %989 = vmatprep.mubr.f32.mxu0 0.0
    %990 = vmatmul.mubr.f32.gmra.mrb[0].mxu0 %v101
    %v991 = vpop.f32.mrb[0].mxu0
    %v992 = vadd.f32 0.0, %v991
    %v993 = vpop.f32.mrb[0].mxu0
    %994 = vmatprep.mubr.f32.mxu0 0.0
    %995 = vmatmul.mubr.f32.gmra.mrb[0].mxu0 %v104
    %v996 = vpop.f32.mrb[0].mxu0
    %v997 = vadd.f32 0.0, %v996
    %v998 = vpop.f32.mrb[0].mxu0
    %999 = vmatprep.mubr.f32.mxu0 0.0
    %1000 = vmatmul.mubr.f32.gmra.mrb[0].mxu0 %v107
    %v1001 = vpop.f32.mrb[0].mxu0
    %v1002 = vadd.f32 0.0, %v1001
    %v1003 = vpop.f32.mrb[0].mxu0
    %1004 = vmatprep.mubr.f32.mxu0 0.0
    %1005 = vmatmul.mubr.f32.gmra.mrb[0].mxu0 %v110
    %v1006 = vpop.f32.mrb[0].mxu0
    %v1007 = vadd.f32 0.0, %v1006
    %v1008 = vpop.f32.mrb[0].mxu0
    %1009 = vmatprep.mubr.f32.mxu0 0.0
    %1010 = vmatmul.mubr.f32.gmra.mrb[0].mxu0 %v113
    %v1011 = vpop.f32.mrb[0].mxu0
    %v1012 = vadd.f32 0.0, %v1011
    %v1013 = vpop.f32.mrb[0].mxu0
    %1014 = vmatprep.mubr.f32.mxu0 0.0
    %1015 = vmatmul.mubr.f32.gmra.mrb[0].mxu0 %v116
    %v1016 = vpop.f32.mrb[0].mxu0
    %v1017 = vadd.f32 0.0, %v1016
    %v1018 = vpop.f32.mrb[0].mxu0
    %1019 = vmatprep.mubr.f32.mxu0 0.0
    %1020 = vmatmul.mubr.f32.gmra.mrb[0].mxu0 %v119
    %v1021 = vpop.f32.mrb[0].mxu0
    %v1022 = vadd.f32 0.0, %v1021
    %v1023 = vpop.f32.mrb[0].mxu0
    %1024 = vmatprep.mubr.f32.mxu0 0.0
    %1025 = vmatmul.mubr.f32.gmra.mrb[0].mxu0 %v122
    %v1026 = vpop.f32.mrb[0].mxu0
    %v1027 = vadd.f32 0.0, %v1026
    %v1028 = vpop.f32.mrb[0].mxu0
    %1029 = vmatprep.mubr.f32.mxu0 0.0
    %1030 = vmatmul.mubr.f32.gmra.mrb[0].mxu0 %v125
    %v1031 = vpop.f32.mrb[0].mxu0
    %v1032 = vadd.f32 0.0, %v1031
    %v1033 = vpop.f32.mrb[0].mxu0
    %1034 = vmatprep.mubr.f32.mxu0 0.0
    %1035 = vmatmul.mubr.f32.gmra.mrb[0].mxu0 %v128
    %v1036 = vpop.f32.mrb[0].mxu0
    %v1037 = vadd.f32 0.0, %v1036
    %v1038 = vpop.f32.mrb[0].mxu0
    %1039 = vmatprep.mubr.f32.mxu0 0.0
    %1040 = vmatmul.mubr.f32.gmra.mrb[0].mxu0 %v131
    %v1041 = vpop.f32.mrb[0].mxu0
    %v1042 = vadd.f32 0.0, %v1041
    %v1043 = vpop.f32.mrb[0].mxu0
    %1044 = vmatprep.mubr.f32.mxu0 0.0
    %1045 = vmatmul.mubr.f32.gmra.mrb[0].mxu0 %v134
    %v1046 = vpop.f32.mrb[0].mxu0
    %v1047 = vadd.f32 0.0, %v1046
    %v1048 = vpop.f32.mrb[0].mxu0
    %1049 = vmatprep.mubr.f32.mxu0 0.0
    %1050 = vmatmul.mubr.f32.gmra.mrb[0].mxu0 %v137
    %v1051 = vpop.f32.mrb[0].mxu0
    %v1052 = vadd.f32 0.0, %v1051
    %v1053 = vpop.f32.mrb[0].mxu0
    %1054 = vmatprep.mubr.f32.mxu0 0.0
    %1055 = vmatmul.mubr.f32.gmra.mrb[0].mxu0 %v140
    %v1056 = vpop.f32.mrb[0].mxu0
    %v1057 = vadd.f32 0.0, %v1056
    %v1058 = vpop.f32.mrb[0].mxu0
    %1059 = vmatprep.mubr.f32.mxu0 0.0
    %1060 = vmatmul.mubr.f32.gmra.mrb[0].mxu0 %v143
    %v1061 = vpop.f32.mrb[0].mxu0
    %v1062 = vadd.f32 0.0, %v1061
    %v1063 = vpop.f32.mrb[0].mxu0
    %1064 = vmatprep.mubr.f32.mxu0 0.0
    %1065 = vmatmul.mubr.f32.gmra.mrb[0].mxu0 %v146
    %v1066 = vpop.f32.mrb[0].mxu0
    %v1067 = vadd.f32 0.0, %v1066
    %v1068 = vpop.f32.mrb[0].mxu0
    %1069 = vmatprep.mubr.f32.mxu0 0.0
    %1070 = vmatmul.mubr.f32.gmra.mrb[0].mxu0 %v149
    %v1071 = vpop.f32.mrb[0].mxu0
    %v1072 = vadd.f32 0.0, %v1071
    %v1073 = vpop.f32.mrb[0].mxu0
    %1074 = vmatprep.mubr.f32.mxu0 0.0
    %1075 = vmatmul.mubr.f32.gmra.mrb[0].mxu0 %v152
    %v1076 = vpop.f32.mrb[0].mxu0
    %v1077 = vadd.f32 0.0, %v1076
    %v1078 = vpop.f32.mrb[0].mxu0
    %1079 = vmatprep.mubr.f32.mxu0 0.0
    %1080 = vmatmul.mubr.f32.gmra.mrb[0].mxu0 %v155
    %v1081 = vpop.f32.mrb[0].mxu0
    %v1082 = vadd.f32 0.0, %v1081
    %v1083 = vpop.f32.mrb[0].mxu0
    %1084 = vmatprep.mubr.f32.mxu0 0.0
    %1085 = vmatmul.mubr.f32.gmra.mrb[0].mxu0 %v158
    %v1086 = vpop.f32.mrb[0].mxu0
    %v1087 = vadd.f32 0.0, %v1086
    %v1088 = vpop.f32.mrb[0].mxu0
    %1089 = vmatprep.mubr.f32.mxu0 0.0
    %1090 = vmatmul.mubr.f32.gmra.mrb[0].mxu0 %v161
    %v1091 = vpop.f32.mrb[0].mxu0
    %v1092 = vadd.f32 0.0, %v1091
    %v1093 = vpop.f32.mrb[0].mxu0
    %1094 = vmatprep.mubr.f32.mxu0 0.0
    %1095 = vmatmul.mubr.f32.gmra.mrb[0].mxu0 %v164
    %v1096 = vpop.f32.mrb[0].mxu0
    %v1097 = vadd.f32 0.0, %v1096
    %v1098 = vpop.f32.mrb[0].mxu0
    %1099 = vmatprep.mubr.f32.mxu0 0.0
    %1100 = vmatmul.mubr.f32.gmra.mrb[0].mxu0 %v167
    %v1101 = vpop.f32.mrb[0].mxu0
    %v1102 = vadd.f32 0.0, %v1101
    %v1103 = vpop.f32.mrb[0].mxu0
    %1104 = vmatprep.mubr.f32.mxu0 0.0
    %1105 = vmatmul.mubr.f32.gmra.mrb[0].mxu0 %v170
    %v1106 = vpop.f32.mrb[0].mxu0
    %v1107 = vadd.f32 0.0, %v1106
    %v1108 = vpop.f32.mrb[0].mxu0
    %1109 = vmatprep.mubr.f32.mxu0 0.0
    %1110 = vmatmul.mubr.f32.gmra.mrb[0].mxu0 %v173
    %v1111 = vpop.f32.mrb[0].mxu0
    %v1112 = vadd.f32 0.0, %v1111
    %v1113 = vpop.f32.mrb[0].mxu0
    %1114 = vmatprep.mubr.f32.mxu0 0.0
    %1115 = vmatmul.mubr.f32.gmra.mrb[0].mxu0 %v176
    %v1116 = vpop.f32.mrb[0].mxu0
    %v1117 = vadd.f32 0.0, %v1116
    %v1118 = vpop.f32.mrb[0].mxu0
    %1119 = vmatprep.mubr.f32.mxu0 0.0
    %1120 = vmatmul.mubr.f32.gmra.mrb[0].mxu0 %v179
    %v1121 = vpop.f32.mrb[0].mxu0
    %v1122 = vadd.f32 0.0, %v1121
    %v1123 = vpop.f32.mrb[0].mxu0
    %1124 = vmatprep.mubr.f32.mxu0 0.0
    %1125 = vmatmul.mubr.f32.gmra.mrb[0].mxu0 %v182
    %v1126 = vpop.f32.mrb[0].mxu0
    %v1127 = vadd.f32 0.0, %v1126
    %v1128 = vpop.f32.mrb[0].mxu0
    %1129 = vmatprep.mubr.f32.mxu0 0.0
    %1130 = vmatmul.mubr.f32.gmra.mrb[0].mxu0 %v185
    %v1131 = vpop.f32.mrb[0].mxu0
    %v1132 = vadd.f32 0.0, %v1131
    %v1133 = vpop.f32.mrb[0].mxu0
    %1134 = vdwg.mxu0
    %s1135 = scalar_lea.vmem [#allocation2], 128
    %v1136 = vld [vmem:[%s1135] sm:$0xff]
    %v1137 = vld [vmem:[%s1135 + $0x8] sm:$0xff]
    %v1138 = vld [vmem:[%s1135 + $0x10] sm:$0xff]
    %v1139 = vld [vmem:[%s1135 + $0x18] sm:$0xff]
    %v1140 = vld [vmem:[%s1135 + $0x20] sm:$0xff]
    %v1141 = vld [vmem:[%s1135 + $0x28] sm:$0xff]
    %v1142 = vld [vmem:[%s1135 + $0x30] sm:$0xff]
    %v1143 = vld [vmem:[%s1135 + $0x38] sm:$0xff]
    %v1144 = vunpack.c.l.bf16 %v1136
    %v1145 = vunpack.c.h.bf16 %v1136
    %v1146 = vunpack.c.l.bf16 %v1137
    %v1147 = vunpack.c.h.bf16 %v1137
    %v1148 = vunpack.c.l.bf16 %v1138
    %v1149 = vunpack.c.h.bf16 %v1138
    %v1150 = vunpack.c.l.bf16 %v1139
    %v1151 = vunpack.c.h.bf16 %v1139
    %v1152 = vunpack.c.l.bf16 %v1140
    %v1153 = vunpack.c.h.bf16 %v1140
    %v1154 = vunpack.c.l.bf16 %v1141
    %v1155 = vunpack.c.h.bf16 %v1141
    %v1156 = vunpack.c.l.bf16 %v1142
    %v1157 = vunpack.c.h.bf16 %v1142
    %v1158 = vunpack.c.l.bf16 %v1143
    %v1159 = vunpack.c.h.bf16 %v1143
    %1160 = vmatprep.subr.mxu0 0.0
    %1161 = vmatpush1.msra.mxu0 %v977
    %1162 = vmatprep.subr.mxu0 0.0
    %1163 = vmatpush1.msra.mxu0 %v982
    %1164 = vmatprep.subr.mxu0 0.0
    %1165 = vmatpush1.msra.mxu0 %v987
    %1166 = vmatprep.subr.mxu0 0.0
    %1167 = vmatpush1.msra.mxu0 %v992
    %1168 = vmatprep.subr.mxu0 0.0
    %1169 = vmatpush1.msra.mxu0 %v997
    %1170 = vmatprep.subr.mxu0 0.0
    %1171 = vmatpush1.msra.mxu0 %v1002
    %1172 = vmatprep.subr.mxu0 0.0
    %1173 = vmatpush1.msra.mxu0 %v1007
    %1174 = vmatprep.subr.mxu0 0.0
    %1175 = vmatpush1.msra.mxu0 %v1012
    %1176 = vmatprep.subr.mxu0 0.0
    %1177 = vmatpush1.msra.mxu0 %v1017
    %1178 = vmatprep.subr.mxu0 0.0
    %1179 = vmatpush1.msra.mxu0 %v1022
    %1180 = vmatprep.subr.mxu0 0.0
    %1181 = vmatpush1.msra.mxu0 %v1027
    %1182 = vmatprep.subr.mxu0 0.0
    %1183 = vmatpush1.msra.mxu0 %v1032
    %1184 = vmatprep.subr.mxu0 0.0
    %1185 = vmatpush1.msra.mxu0 %v1037
    %1186 = vmatprep.subr.mxu0 0.0
    %1187 = vmatpush1.msra.mxu0 %v1042
    %1188 = vmatprep.subr.mxu0 0.0
    %1189 = vmatpush1.msra.mxu0 %v1047
    %1190 = vmatprep.subr.mxu0 0.0
    %1191 = vmatpush1.msra.mxu0 %v1052
    %1192 = vmatprep.subr.mxu0 0.0
    %1193 = vmatpush1.msra.mxu0 %v1057
    %1194 = vmatprep.subr.mxu0 0.0
    %1195 = vmatpush1.msra.mxu0 %v1062
    %1196 = vmatprep.subr.mxu0 0.0
    %1197 = vmatpush1.msra.mxu0 %v1067
    %1198 = vmatprep.subr.mxu0 0.0
    %1199 = vmatpush1.msra.mxu0 %v1072
    %1200 = vmatprep.subr.mxu0 0.0
    %1201 = vmatpush1.msra.mxu0 %v1077
    %1202 = vmatprep.subr.mxu0 0.0
    %1203 = vmatpush1.msra.mxu0 %v1082
    %1204 = vmatprep.subr.mxu0 0.0
    %1205 = vmatpush1.msra.mxu0 %v1087
    %1206 = vmatprep.subr.mxu0 0.0
    %1207 = vmatpush1.msra.mxu0 %v1092
    %1208 = vmatprep.subr.mxu0 0.0
    %1209 = vmatpush1.msra.mxu0 %v1097
    %1210 = vmatprep.subr.mxu0 0.0
    %1211 = vmatpush1.msra.mxu0 %v1102
    %1212 = vmatprep.subr.mxu0 0.0
    %1213 = vmatpush1.msra.mxu0 %v1107
    %1214 = vmatprep.subr.mxu0 0.0
    %1215 = vmatpush1.msra.mxu0 %v1112
    %1216 = vmatprep.subr.mxu0 0.0
    %1217 = vmatpush1.msra.mxu0 %v1117
    %1218 = vmatprep.subr.mxu0 0.0
    %1219 = vmatpush1.msra.mxu0 %v1122
    %1220 = vmatprep.subr.mxu0 0.0
    %1221 = vmatpush1.msra.mxu0 %v1127
    %1222 = vmatprep.subr.mxu0 0.0
    %1223 = vmatpush1.msra.mxu0 %v1132
    %1224 = vmatprep.mubr.f32.mxu0 %v1145
    %1225 = vmatmul.mubr.f32.gmra.mrb[0].mxu0 %v1144
    %v1226 = vpop.f32.mrb[0].mxu0
    %v1227 = vadd.f32 0.0, %v1226
    %v1228 = vpop.f32.mrb[0].mxu0
    %1229 = vmatprep.mubr.f32.mxu0 %v1147
    %1230 = vmatmul.mubr.f32.gmra.mrb[0].mxu0 %v1146
    %v1231 = vpop.f32.mrb[0].mxu0
    %v1232 = vadd.f32 0.0, %v1231
    %v1233 = vpop.f32.mrb[0].mxu0
    %1234 = vmatprep.mubr.f32.mxu0 %v1149
    %1235 = vmatmul.mubr.f32.gmra.mrb[0].mxu0 %v1148
    %v1236 = vpop.f32.mrb[0].mxu0
    %v1237 = vadd.f32 0.0, %v1236
    %v1238 = vpop.f32.mrb[0].mxu0
    %1239 = vmatprep.mubr.f32.mxu0 %v1151
    %1240 = vmatmul.mubr.f32.gmra.mrb[0].mxu0 %v1150
    %v1241 = vpop.f32.mrb[0].mxu0
    %v1242 = vadd.f32 0.0, %v1241
    %v1243 = vpop.f32.mrb[0].mxu0
    %1244 = vmatprep.mubr.f32.mxu0 %v1153
    %1245 = vmatmul.mubr.f32.gmra.mrb[0].mxu0 %v1152
    %v1246 = vpop.f32.mrb[0].mxu0
    %v1247 = vadd.f32 0.0, %v1246
    %v1248 = vpop.f32.mrb[0].mxu0
    %1249 = vmatprep.mubr.f32.mxu0 %v1155
    %1250 = vmatmul.mubr.f32.gmra.mrb[0].mxu0 %v1154
    %v1251 = vpop.f32.mrb[0].mxu0
    %v1252 = vadd.f32 0.0, %v1251
    %v1253 = vpop.f32.mrb[0].mxu0
    %1254 = vmatprep.mubr.f32.mxu0 %v1157
    %1255 = vmatmul.mubr.f32.gmra.mrb[0].mxu0 %v1156
    %v1256 = vpop.f32.mrb[0].mxu0
    %v1257 = vadd.f32 0.0, %v1256
    %v1258 = vpop.f32.mrb[0].mxu0
    %1259 = vmatprep.mubr.f32.mxu0 %v1159
    %1260 = vmatmul.mubr.f32.gmra.mrb[0].mxu0 %v1158
    %v1261 = vpop.f32.mrb[0].mxu0
    %v1262 = vadd.f32 0.0, %v1261
    %v1263 = vpop.f32.mrb[0].mxu0
    %1264 = vdwg.mxu0
    %v1265 = vadd.f32 %v867, %v1227
    %v1266 = vadd.f32 %v872, %v1232
    %v1267 = vadd.f32 %v877, %v1237
    %v1268 = vadd.f32 %v882, %v1242
    %v1269 = vadd.f32 %v887, %v1247
    %v1270 = vadd.f32 %v892, %v1252
    %v1271 = vadd.f32 %v897, %v1257
    %v1272 = vadd.f32 %v902, %v1262
    %s1273 = scalar_lea.vmem %s2, 12
    %v1274 = vld [vmem:[%s1273] sm:$0xf]
    %v1276 = vsel %vm187, %v1274, 0
    %1278 = vmatprep.subr.mxu0 0.0
    %1279 = vmatpush1.msra.mxu0 %v1276
    %1280 = vmatprep.subr.mxu0 0.0
    %1281 = vmatpush1.msra.mxu0 0.0
    %1282 = vmatprep.subr.mxu0 0.0
    %1283 = vmatpush1.msra.mxu0 0.0
    %1284 = vmatprep.subr.mxu0 0.0
    %1285 = vmatpush1.msra.mxu0 0.0
    %1286 = vmatprep.subr.mxu0 0.0
    %1287 = vmatpush1.msra.mxu0 0.0
    %1288 = vmatprep.subr.mxu0 0.0
    %1289 = vmatpush1.msra.mxu0 0.0
    %1290 = vmatprep.subr.mxu0 0.0
    %1291 = vmatpush1.msra.mxu0 0.0
    %1292 = vmatprep.subr.mxu0 0.0
    %1293 = vmatpush1.msra.mxu0 0.0
    %1294 = vmatprep.subr.mxu0 0.0
    %1295 = vmatpush1.msra.mxu0 0.0
    %1296 = vmatprep.subr.mxu0 0.0
    %1297 = vmatpush1.msra.mxu0 0.0
    %1298 = vmatprep.subr.mxu0 0.0
    %1299 = vmatpush1.msra.mxu0 0.0
    %1300 = vmatprep.subr.mxu0 0.0
    %1301 = vmatpush1.msra.mxu0 0.0
    %1302 = vmatprep.subr.mxu0 0.0
    %1303 = vmatpush1.msra.mxu0 0.0
    %1304 = vmatprep.subr.mxu0 0.0
    %1305 = vmatpush1.msra.mxu0 0.0
    %1306 = vmatprep.subr.mxu0 0.0
    %1307 = vmatpush1.msra.mxu0 0.0
    %1308 = vmatprep.subr.mxu0 0.0
    %1309 = vmatpush1.msra.mxu0 0.0
    %1310 = vmatprep.subr.mxu0 0.0
    %1311 = vmatpush1.msra.mxu0 0.0
    %1312 = vmatprep.subr.mxu0 0.0
    %1313 = vmatpush1.msra.mxu0 0.0
    %1314 = vmatprep.subr.mxu0 0.0
    %1315 = vmatpush1.msra.mxu0 0.0
    %1316 = vmatprep.subr.mxu0 0.0
    %1317 = vmatpush1.msra.mxu0 0.0
    %1318 = vmatprep.subr.mxu0 0.0
    %1319 = vmatpush1.msra.mxu0 0.0
    %1320 = vmatprep.subr.mxu0 0.0
    %1321 = vmatpush1.msra.mxu0 0.0
    %1322 = vmatprep.subr.mxu0 0.0
    %1323 = vmatpush1.msra.mxu0 0.0
    %1324 = vmatprep.subr.mxu0 0.0
    %1325 = vmatpush1.msra.mxu0 0.0
    %1326 = vmatprep.subr.mxu0 0.0
    %1327 = vmatpush1.msra.mxu0 0.0
    %1328 = vmatprep.subr.mxu0 0.0
    %1329 = vmatpush1.msra.mxu0 0.0
    %1330 = vmatprep.subr.mxu0 0.0
    %1331 = vmatpush1.msra.mxu0 0.0
    %1332 = vmatprep.subr.mxu0 0.0
    %1333 = vmatpush1.msra.mxu0 0.0
    %1334 = vmatprep.subr.mxu0 0.0
    %1335 = vmatpush1.msra.mxu0 0.0
    %1336 = vmatprep.subr.mxu0 0.0
    %1337 = vmatpush1.msra.mxu0 0.0
    %1338 = vmatprep.subr.mxu0 0.0
    %1339 = vmatpush1.msra.mxu0 0.0
    %1340 = vmatprep.subr.mxu0 0.0
    %1341 = vmatpush1.msra.mxu0 0.0
    %1342 = vmatprep.mubr.f32.mxu0 0.0
    %1343 = vmatmul.mubr.f32.gmra.mrb[0].mxu0 %v92
    %v1344 = vpop.f32.mrb[0].mxu0
    %v1345 = vadd.f32 0.0, %v1344
    %v1346 = vpop.f32.mrb[0].mxu0
    %1347 = vmatprep.mubr.f32.mxu0 0.0
    %1348 = vmatmul.mubr.f32.gmra.mrb[0].mxu0 %v95
    %v1349 = vpop.f32.mrb[0].mxu0
    %v1350 = vadd.f32 0.0, %v1349
    %v1351 = vpop.f32.mrb[0].mxu0
    %1352 = vmatprep.mubr.f32.mxu0 0.0
    %1353 = vmatmul.mubr.f32.gmra.mrb[0].mxu0 %v98
    %v1354 = vpop.f32.mrb[0].mxu0
    %v1355 = vadd.f32 0.0, %v1354
    %v1356 = vpop.f32.mrb[0].mxu0
    %1357 = vmatprep.mubr.f32.mxu0 0.0
    %1358 = vmatmul.mubr.f32.gmra.mrb[0].mxu0 %v101
    %v1359 = vpop.f32.mrb[0].mxu0
    %v1360 = vadd.f32 0.0, %v1359
    %v1361 = vpop.f32.mrb[0].mxu0
    %1362 = vmatprep.mubr.f32.mxu0 0.0
    %1363 = vmatmul.mubr.f32.gmra.mrb[0].mxu0 %v104
    %v1364 = vpop.f32.mrb[0].mxu0
    %v1365 = vadd.f32 0.0, %v1364
    %v1366 = vpop.f32.mrb[0].mxu0
    %1367 = vmatprep.mubr.f32.mxu0 0.0
    %1368 = vmatmul.mubr.f32.gmra.mrb[0].mxu0 %v107
    %v1369 = vpop.f32.mrb[0].mxu0
    %v1370 = vadd.f32 0.0, %v1369
    %v1371 = vpop.f32.mrb[0].mxu0
    %1372 = vmatprep.mubr.f32.mxu0 0.0
    %1373 = vmatmul.mubr.f32.gmra.mrb[0].mxu0 %v110
    %v1374 = vpop.f32.mrb[0].mxu0
    %v1375 = vadd.f32 0.0, %v1374
    %v1376 = vpop.f32.mrb[0].mxu0
    %1377 = vmatprep.mubr.f32.mxu0 0.0
    %1378 = vmatmul.mubr.f32.gmra.mrb[0].mxu0 %v113
    %v1379 = vpop.f32.mrb[0].mxu0
    %v1380 = vadd.f32 0.0, %v1379
    %v1381 = vpop.f32.mrb[0].mxu0
    %1382 = vmatprep.mubr.f32.mxu0 0.0
    %1383 = vmatmul.mubr.f32.gmra.mrb[0].mxu0 %v116
    %v1384 = vpop.f32.mrb[0].mxu0
    %v1385 = vadd.f32 0.0, %v1384
    %v1386 = vpop.f32.mrb[0].mxu0
    %1387 = vmatprep.mubr.f32.mxu0 0.0
    %1388 = vmatmul.mubr.f32.gmra.mrb[0].mxu0 %v119
    %v1389 = vpop.f32.mrb[0].mxu0
    %v1390 = vadd.f32 0.0, %v1389
    %v1391 = vpop.f32.mrb[0].mxu0
    %1392 = vmatprep.mubr.f32.mxu0 0.0
    %1393 = vmatmul.mubr.f32.gmra.mrb[0].mxu0 %v122
    %v1394 = vpop.f32.mrb[0].mxu0
    %v1395 = vadd.f32 0.0, %v1394
    %v1396 = vpop.f32.mrb[0].mxu0
    %1397 = vmatprep.mubr.f32.mxu0 0.0
    %1398 = vmatmul.mubr.f32.gmra.mrb[0].mxu0 %v125
    %v1399 = vpop.f32.mrb[0].mxu0
    %v1400 = vadd.f32 0.0, %v1399
    %v1401 = vpop.f32.mrb[0].mxu0
    %1402 = vmatprep.mubr.f32.mxu0 0.0
    %1403 = vmatmul.mubr.f32.gmra.mrb[0].mxu0 %v128
    %v1404 = vpop.f32.mrb[0].mxu0
    %v1405 = vadd.f32 0.0, %v1404
    %v1406 = vpop.f32.mrb[0].mxu0
    %1407 = vmatprep.mubr.f32.mxu0 0.0
    %1408 = vmatmul.mubr.f32.gmra.mrb[0].mxu0 %v131
    %v1409 = vpop.f32.mrb[0].mxu0
    %v1410 = vadd.f32 0.0, %v1409
    %v1411 = vpop.f32.mrb[0].mxu0
    %1412 = vmatprep.mubr.f32.mxu0 0.0
    %1413 = vmatmul.mubr.f32.gmra.mrb[0].mxu0 %v134
    %v1414 = vpop.f32.mrb[0].mxu0
    %v1415 = vadd.f32 0.0, %v1414
    %v1416 = vpop.f32.mrb[0].mxu0
    %1417 = vmatprep.mubr.f32.mxu0 0.0
    %1418 = vmatmul.mubr.f32.gmra.mrb[0].mxu0 %v137
    %v1419 = vpop.f32.mrb[0].mxu0
    %v1420 = vadd.f32 0.0, %v1419
    %v1421 = vpop.f32.mrb[0].mxu0
    %1422 = vmatprep.mubr.f32.mxu0 0.0
    %1423 = vmatmul.mubr.f32.gmra.mrb[0].mxu0 %v140
    %v1424 = vpop.f32.mrb[0].mxu0
    %v1425 = vadd.f32 0.0, %v1424
    %v1426 = vpop.f32.mrb[0].mxu0
    %1427 = vmatprep.mubr.f32.mxu0 0.0
    %1428 = vmatmul.mubr.f32.gmra.mrb[0].mxu0 %v143
    %v1429 = vpop.f32.mrb[0].mxu0
    %v1430 = vadd.f32 0.0, %v1429
    %v1431 = vpop.f32.mrb[0].mxu0
    %1432 = vmatprep.mubr.f32.mxu0 0.0
    %1433 = vmatmul.mubr.f32.gmra.mrb[0].mxu0 %v146
    %v1434 = vpop.f32.mrb[0].mxu0
    %v1435 = vadd.f32 0.0, %v1434
    %v1436 = vpop.f32.mrb[0].mxu0
    %1437 = vmatprep.mubr.f32.mxu0 0.0
    %1438 = vmatmul.mubr.f32.gmra.mrb[0].mxu0 %v149
    %v1439 = vpop.f32.mrb[0].mxu0
    %v1440 = vadd.f32 0.0, %v1439
    %v1441 = vpop.f32.mrb[0].mxu0
    %1442 = vmatprep.mubr.f32.mxu0 0.0
    %1443 = vmatmul.mubr.f32.gmra.mrb[0].mxu0 %v152
    %v1444 = vpop.f32.mrb[0].mxu0
    %v1445 = vadd.f32 0.0, %v1444
    %v1446 = vpop.f32.mrb[0].mxu0
    %1447 = vmatprep.mubr.f32.mxu0 0.0
    %1448 = vmatmul.mubr.f32.gmra.mrb[0].mxu0 %v155
    %v1449 = vpop.f32.mrb[0].mxu0
    %v1450 = vadd.f32 0.0, %v1449
    %v1451 = vpop.f32.mrb[0].mxu0
    %1452 = vmatprep.mubr.f32.mxu0 0.0
    %1453 = vmatmul.mubr.f32.gmra.mrb[0].mxu0 %v158
    %v1454 = vpop.f32.mrb[0].mxu0
    %v1455 = vadd.f32 0.0, %v1454
    %v1456 = vpop.f32.mrb[0].mxu0
    %1457 = vmatprep.mubr.f32.mxu0 0.0
    %1458 = vmatmul.mubr.f32.gmra.mrb[0].mxu0 %v161
    %v1459 = vpop.f32.mrb[0].mxu0
    %v1460 = vadd.f32 0.0, %v1459
    %v1461 = vpop.f32.mrb[0].mxu0
    %1462 = vmatprep.mubr.f32.mxu0 0.0
    %1463 = vmatmul.mubr.f32.gmra.mrb[0].mxu0 %v164
    %v1464 = vpop.f32.mrb[0].mxu0
    %v1465 = vadd.f32 0.0, %v1464
    %v1466 = vpop.f32.mrb[0].mxu0
    %1467 = vmatprep.mubr.f32.mxu0 0.0
    %1468 = vmatmul.mubr.f32.gmra.mrb[0].mxu0 %v167
    %v1469 = vpop.f32.mrb[0].mxu0
    %v1470 = vadd.f32 0.0, %v1469
    %v1471 = vpop.f32.mrb[0].mxu0
    %1472 = vmatprep.mubr.f32.mxu0 0.0
    %1473 = vmatmul.mubr.f32.gmra.mrb[0].mxu0 %v170
    %v1474 = vpop.f32.mrb[0].mxu0
    %v1475 = vadd.f32 0.0, %v1474
    %v1476 = vpop.f32.mrb[0].mxu0
    %1477 = vmatprep.mubr.f32.mxu0 0.0
    %1478 = vmatmul.mubr.f32.gmra.mrb[0].mxu0 %v173
    %v1479 = vpop.f32.mrb[0].mxu0
    %v1480 = vadd.f32 0.0, %v1479
    %v1481 = vpop.f32.mrb[0].mxu0
    %1482 = vmatprep.mubr.f32.mxu0 0.0
    %1483 = vmatmul.mubr.f32.gmra.mrb[0].mxu0 %v176
    %v1484 = vpop.f32.mrb[0].mxu0
    %v1485 = vadd.f32 0.0, %v1484
    %v1486 = vpop.f32.mrb[0].mxu0
    %1487 = vmatprep.mubr.f32.mxu0 0.0
    %1488 = vmatmul.mubr.f32.gmra.mrb[0].mxu0 %v179
    %v1489 = vpop.f32.mrb[0].mxu0
    %v1490 = vadd.f32 0.0, %v1489
    %v1491 = vpop.f32.mrb[0].mxu0
    %1492 = vmatprep.mubr.f32.mxu0 0.0
    %1493 = vmatmul.mubr.f32.gmra.mrb[0].mxu0 %v182
    %v1494 = vpop.f32.mrb[0].mxu0
    %v1495 = vadd.f32 0.0, %v1494
    %v1496 = vpop.f32.mrb[0].mxu0
    %1497 = vmatprep.mubr.f32.mxu0 0.0
    %1498 = vmatmul.mubr.f32.gmra.mrb[0].mxu0 %v185
    %v1499 = vpop.f32.mrb[0].mxu0
    %v1500 = vadd.f32 0.0, %v1499
    %v1501 = vpop.f32.mrb[0].mxu0
    %1502 = vdwg.mxu0
    %s1503 = scalar_lea.vmem [#allocation2], 192
    %v1504 = vld [vmem:[%s1503] sm:$0xff]
    %v1505 = vld [vmem:[%s1503 + $0x8] sm:$0xff]
    %v1506 = vld [vmem:[%s1503 + $0x10] sm:$0xff]
    %v1507 = vld [vmem:[%s1503 + $0x18] sm:$0xff]
    %v1508 = vld [vmem:[%s1503 + $0x20] sm:$0xff]
    %v1509 = vld [vmem:[%s1503 + $0x28] sm:$0xff]
    %v1510 = vld [vmem:[%s1503 + $0x30] sm:$0xff]
    %v1511 = vld [vmem:[%s1503 + $0x38] sm:$0xff]
    %v1512 = vunpack.c.l.bf16 %v1504
    %v1513 = vunpack.c.h.bf16 %v1504
    %v1514 = vunpack.c.l.bf16 %v1505
    %v1515 = vunpack.c.h.bf16 %v1505
    %v1516 = vunpack.c.l.bf16 %v1506
    %v1517 = vunpack.c.h.bf16 %v1506
    %v1518 = vunpack.c.l.bf16 %v1507
    %v1519 = vunpack.c.h.bf16 %v1507
    %v1520 = vunpack.c.l.bf16 %v1508
    %v1521 = vunpack.c.h.bf16 %v1508
    %v1522 = vunpack.c.l.bf16 %v1509
    %v1523 = vunpack.c.h.bf16 %v1509
    %v1524 = vunpack.c.l.bf16 %v1510
    %v1525 = vunpack.c.h.bf16 %v1510
    %v1526 = vunpack.c.l.bf16 %v1511
    %v1527 = vunpack.c.h.bf16 %v1511
    %1528 = vmatprep.subr.mxu0 0.0
    %1529 = vmatpush1.msra.mxu0 %v1345
    %1530 = vmatprep.subr.mxu0 0.0
    %1531 = vmatpush1.msra.mxu0 %v1350
    %1532 = vmatprep.subr.mxu0 0.0
    %1533 = vmatpush1.msra.mxu0 %v1355
    %1534 = vmatprep.subr.mxu0 0.0
    %1535 = vmatpush1.msra.mxu0 %v1360
    %1536 = vmatprep.subr.mxu0 0.0
    %1537 = vmatpush1.msra.mxu0 %v1365
    %1538 = vmatprep.subr.mxu0 0.0
    %1539 = vmatpush1.msra.mxu0 %v1370
    %1540 = vmatprep.subr.mxu0 0.0
    %1541 = vmatpush1.msra.mxu0 %v1375
    %1542 = vmatprep.subr.mxu0 0.0
    %1543 = vmatpush1.msra.mxu0 %v1380
    %1544 = vmatprep.subr.mxu0 0.0
    %1545 = vmatpush1.msra.mxu0 %v1385
    %1546 = vmatprep.subr.mxu0 0.0
    %1547 = vmatpush1.msra.mxu0 %v1390
    %1548 = vmatprep.subr.mxu0 0.0
    %1549 = vmatpush1.msra.mxu0 %v1395
    %1550 = vmatprep.subr.mxu0 0.0
    %1551 = vmatpush1.msra.mxu0 %v1400
    %1552 = vmatprep.subr.mxu0 0.0
    %1553 = vmatpush1.msra.mxu0 %v1405
    %1554 = vmatprep.subr.mxu0 0.0
    %1555 = vmatpush1.msra.mxu0 %v1410
    %1556 = vmatprep.subr.mxu0 0.0
    %1557 = vmatpush1.msra.mxu0 %v1415
    %1558 = vmatprep.subr.mxu0 0.0
    %1559 = vmatpush1.msra.mxu0 %v1420
    %1560 = vmatprep.subr.mxu0 0.0
    %1561 = vmatpush1.msra.mxu0 %v1425
    %1562 = vmatprep.subr.mxu0 0.0
    %1563 = vmatpush1.msra.mxu0 %v1430
    %1564 = vmatprep.subr.mxu0 0.0
    %1565 = vmatpush1.msra.mxu0 %v1435
    %1566 = vmatprep.subr.mxu0 0.0
    %1567 = vmatpush1.msra.mxu0 %v1440
    %1568 = vmatprep.subr.mxu0 0.0
    %1569 = vmatpush1.msra.mxu0 %v1445
    %1570 = vmatprep.subr.mxu0 0.0
    %1571 = vmatpush1.msra.mxu0 %v1450
    %1572 = vmatprep.subr.mxu0 0.0
    %1573 = vmatpush1.msra.mxu0 %v1455
    %1574 = vmatprep.subr.mxu0 0.0
    %1575 = vmatpush1.msra.mxu0 %v1460
    %1576 = vmatprep.subr.mxu0 0.0
    %1577 = vmatpush1.msra.mxu0 %v1465
    %1578 = vmatprep.subr.mxu0 0.0
    %1579 = vmatpush1.msra.mxu0 %v1470
    %1580 = vmatprep.subr.mxu0 0.0
    %1581 = vmatpush1.msra.mxu0 %v1475
    %1582 = vmatprep.subr.mxu0 0.0
    %1583 = vmatpush1.msra.mxu0 %v1480
    %1584 = vmatprep.subr.mxu0 0.0
    %1585 = vmatpush1.msra.mxu0 %v1485
    %1586 = vmatprep.subr.mxu0 0.0
    %1587 = vmatpush1.msra.mxu0 %v1490
    %1588 = vmatprep.subr.mxu0 0.0
    %1589 = vmatpush1.msra.mxu0 %v1495
    %1590 = vmatprep.subr.mxu0 0.0
    %1591 = vmatpush1.msra.mxu0 %v1500
    %1592 = vmatprep.mubr.f32.mxu0 %v1513
    %1593 = vmatmul.mubr.f32.gmra.mrb[0].mxu0 %v1512
    %v1594 = vpop.f32.mrb[0].mxu0
    %v1595 = vadd.f32 0.0, %v1594
    %v1596 = vpop.f32.mrb[0].mxu0
    %1597 = vmatprep.mubr.f32.mxu0 %v1515
    %1598 = vmatmul.mubr.f32.gmra.mrb[0].mxu0 %v1514
    %v1599 = vpop.f32.mrb[0].mxu0
    %v1600 = vadd.f32 0.0, %v1599
    %v1601 = vpop.f32.mrb[0].mxu0
    %1602 = vmatprep.mubr.f32.mxu0 %v1517
    %1603 = vmatmul.mubr.f32.gmra.mrb[0].mxu0 %v1516
    %v1604 = vpop.f32.mrb[0].mxu0
    %v1605 = vadd.f32 0.0, %v1604
    %v1606 = vpop.f32.mrb[0].mxu0
    %1607 = vmatprep.mubr.f32.mxu0 %v1519
    %1608 = vmatmul.mubr.f32.gmra.mrb[0].mxu0 %v1518
    %v1609 = vpop.f32.mrb[0].mxu0
    %v1610 = vadd.f32 0.0, %v1609
    %v1611 = vpop.f32.mrb[0].mxu0
    %1612 = vmatprep.mubr.f32.mxu0 %v1521
    %1613 = vmatmul.mubr.f32.gmra.mrb[0].mxu0 %v1520
    %v1614 = vpop.f32.mrb[0].mxu0
    %v1615 = vadd.f32 0.0, %v1614
    %v1616 = vpop.f32.mrb[0].mxu0
    %1617 = vmatprep.mubr.f32.mxu0 %v1523
    %1618 = vmatmul.mubr.f32.gmra.mrb[0].mxu0 %v1522
    %v1619 = vpop.f32.mrb[0].mxu0
    %v1620 = vadd.f32 0.0, %v1619
    %v1621 = vpop.f32.mrb[0].mxu0
    %1622 = vmatprep.mubr.f32.mxu0 %v1525
    %1623 = vmatmul.mubr.f32.gmra.mrb[0].mxu0 %v1524
    %v1624 = vpop.f32.mrb[0].mxu0
    %v1625 = vadd.f32 0.0, %v1624
    %v1626 = vpop.f32.mrb[0].mxu0
    %1627 = vmatprep.mubr.f32.mxu0 %v1527
    %1628 = vmatmul.mubr.f32.gmra.mrb[0].mxu0 %v1526
    %v1629 = vpop.f32.mrb[0].mxu0
    %v1630 = vadd.f32 0.0, %v1629
    %v1631 = vpop.f32.mrb[0].mxu0
    %1632 = vdwg.mxu0
    %v1633 = vadd.f32 %v1265, %v1595
    %v1634 = vadd.f32 %v1266, %v1600
    %v1635 = vadd.f32 %v1267, %v1605
    %v1636 = vadd.f32 %v1268, %v1610
    %v1637 = vadd.f32 %v1269, %v1615
    %v1638 = vadd.f32 %v1270, %v1620
    %v1639 = vadd.f32 %v1271, %v1625
    %v1640 = vadd.f32 %v1272, %v1630
    %s1641 = scalar_lea.vmem %s2, 16
    %v1642 = vld [vmem:[%s1641] sm:$0xf]
    %v1644 = vsel %vm187, %v1642, 0
    %1646 = vmatprep.subr.mxu0 0.0
    %1647 = vmatpush1.msra.mxu0 %v1644
    %1648 = vmatprep.subr.mxu0 0.0
    %1649 = vmatpush1.msra.mxu0 0.0
    %1650 = vmatprep.subr.mxu0 0.0
    %1651 = vmatpush1.msra.mxu0 0.0
    %1652 = vmatprep.subr.mxu0 0.0
    %1653 = vmatpush1.msra.mxu0 0.0
    %1654 = vmatprep.subr.mxu0 0.0
    %1655 = vmatpush1.msra.mxu0 0.0
    %1656 = vmatprep.subr.mxu0 0.0
    %1657 = vmatpush1.msra.mxu0 0.0
    %1658 = vmatprep.subr.mxu0 0.0
    %1659 = vmatpush1.msra.mxu0 0.0
    %1660 = vmatprep.subr.mxu0 0.0
    %1661 = vmatpush1.msra.mxu0 0.0
    %1662 = vmatprep.subr.mxu0 0.0
    %1663 = vmatpush1.msra.mxu0 0.0
    %1664 = vmatprep.subr.mxu0 0.0
    %1665 = vmatpush1.msra.mxu0 0.0
    %1666 = vmatprep.subr.mxu0 0.0
    %1667 = vmatpush1.msra.mxu0 0.0
    %1668 = vmatprep.subr.mxu0 0.0
    %1669 = vmatpush1.msra.mxu0 0.0
    %1670 = vmatprep.subr.mxu0 0.0
    %1671 = vmatpush1.msra.mxu0 0.0
    %1672 = vmatprep.subr.mxu0 0.0
    %1673 = vmatpush1.msra.mxu0 0.0
    %1674 = vmatprep.subr.mxu0 0.0
    %1675 = vmatpush1.msra.mxu0 0.0
    %1676 = vmatprep.subr.mxu0 0.0
    %1677 = vmatpush1.msra.mxu0 0.0
    %1678 = vmatprep.subr.mxu0 0.0
    %1679 = vmatpush1.msra.mxu0 0.0
    %1680 = vmatprep.subr.mxu0 0.0
    %1681 = vmatpush1.msra.mxu0 0.0
    %1682 = vmatprep.subr.mxu0 0.0
    %1683 = vmatpush1.msra.mxu0 0.0
    %1684 = vmatprep.subr.mxu0 0.0
    %1685 = vmatpush1.msra.mxu0 0.0
    %1686 = vmatprep.subr.mxu0 0.0
    %1687 = vmatpush1.msra.mxu0 0.0
    %1688 = vmatprep.subr.mxu0 0.0
    %1689 = vmatpush1.msra.mxu0 0.0
    %1690 = vmatprep.subr.mxu0 0.0
    %1691 = vmatpush1.msra.mxu0 0.0
    %1692 = vmatprep.subr.mxu0 0.0
    %1693 = vmatpush1.msra.mxu0 0.0
    %1694 = vmatprep.subr.mxu0 0.0
    %1695 = vmatpush1.msra.mxu0 0.0
    %1696 = vmatprep.subr.mxu0 0.0
    %1697 = vmatpush1.msra.mxu0 0.0
    %1698 = vmatprep.subr.mxu0 0.0
    %1699 = vmatpush1.msra.mxu0 0.0
    %1700 = vmatprep.subr.mxu0 0.0
    %1701 = vmatpush1.msra.mxu0 0.0
    %1702 = vmatprep.subr.mxu0 0.0
    %1703 = vmatpush1.msra.mxu0 0.0
    %1704 = vmatprep.subr.mxu0 0.0
    %1705 = vmatpush1.msra.mxu0 0.0
    %1706 = vmatprep.subr.mxu0 0.0
    %1707 = vmatpush1.msra.mxu0 0.0
    %1708 = vmatprep.subr.mxu0 0.0
    %1709 = vmatpush1.msra.mxu0 0.0
    %1710 = vmatprep.mubr.f32.mxu0 0.0
    %1711 = vmatmul.mubr.f32.gmra.mrb[0].mxu0 %v92
    %v1712 = vpop.f32.mrb[0].mxu0
    %v1713 = vadd.f32 0.0, %v1712
    %v1714 = vpop.f32.mrb[0].mxu0
    %1715 = vmatprep.mubr.f32.mxu0 0.0
    %1716 = vmatmul.mubr.f32.gmra.mrb[0].mxu0 %v95
    %v1717 = vpop.f32.mrb[0].mxu0
    %v1718 = vadd.f32 0.0, %v1717
    %v1719 = vpop.f32.mrb[0].mxu0
    %1720 = vmatprep.mubr.f32.mxu0 0.0
    %1721 = vmatmul.mubr.f32.gmra.mrb[0].mxu0 %v98
    %v1722 = vpop.f32.mrb[0].mxu0
    %v1723 = vadd.f32 0.0, %v1722
    %v1724 = vpop.f32.mrb[0].mxu0
    %1725 = vmatprep.mubr.f32.mxu0 0.0
    %1726 = vmatmul.mubr.f32.gmra.mrb[0].mxu0 %v101
    %v1727 = vpop.f32.mrb[0].mxu0
    %v1728 = vadd.f32 0.0, %v1727
    %v1729 = vpop.f32.mrb[0].mxu0
    %1730 = vmatprep.mubr.f32.mxu0 0.0
    %1731 = vmatmul.mubr.f32.gmra.mrb[0].mxu0 %v104
    %v1732 = vpop.f32.mrb[0].mxu0
    %v1733 = vadd.f32 0.0, %v1732
    %v1734 = vpop.f32.mrb[0].mxu0
    %1735 = vmatprep.mubr.f32.mxu0 0.0
    %1736 = vmatmul.mubr.f32.gmra.mrb[0].mxu0 %v107
    %v1737 = vpop.f32.mrb[0].mxu0
    %v1738 = vadd.f32 0.0, %v1737
    %v1739 = vpop.f32.mrb[0].mxu0
    %1740 = vmatprep.mubr.f32.mxu0 0.0
    %1741 = vmatmul.mubr.f32.gmra.mrb[0].mxu0 %v110
    %v1742 = vpop.f32.mrb[0].mxu0
    %v1743 = vadd.f32 0.0, %v1742
    %v1744 = vpop.f32.mrb[0].mxu0
    %1745 = vmatprep.mubr.f32.mxu0 0.0
    %1746 = vmatmul.mubr.f32.gmra.mrb[0].mxu0 %v113
    %v1747 = vpop.f32.mrb[0].mxu0
    %v1748 = vadd.f32 0.0, %v1747
    %v1749 = vpop.f32.mrb[0].mxu0
    %1750 = vmatprep.mubr.f32.mxu0 0.0
    %1751 = vmatmul.mubr.f32.gmra.mrb[0].mxu0 %v116
    %v1752 = vpop.f32.mrb[0].mxu0
    %v1753 = vadd.f32 0.0, %v1752
    %v1754 = vpop.f32.mrb[0].mxu0
    %1755 = vmatprep.mubr.f32.mxu0 0.0
    %1756 = vmatmul.mubr.f32.gmra.mrb[0].mxu0 %v119
    %v1757 = vpop.f32.mrb[0].mxu0
    %v1758 = vadd.f32 0.0, %v1757
    %v1759 = vpop.f32.mrb[0].mxu0
    %1760 = vmatprep.mubr.f32.mxu0 0.0
    %1761 = vmatmul.mubr.f32.gmra.mrb[0].mxu0 %v122
    %v1762 = vpop.f32.mrb[0].mxu0
    %v1763 = vadd.f32 0.0, %v1762
    %v1764 = vpop.f32.mrb[0].mxu0
    %1765 = vmatprep.mubr.f32.mxu0 0.0
    %1766 = vmatmul.mubr.f32.gmra.mrb[0].mxu0 %v125
    %v1767 = vpop.f32.mrb[0].mxu0
    %v1768 = vadd.f32 0.0, %v1767
    %v1769 = vpop.f32.mrb[0].mxu0
    %1770 = vmatprep.mubr.f32.mxu0 0.0
    %1771 = vmatmul.mubr.f32.gmra.mrb[0].mxu0 %v128
    %v1772 = vpop.f32.mrb[0].mxu0
    %v1773 = vadd.f32 0.0, %v1772
    %v1774 = vpop.f32.mrb[0].mxu0
    %1775 = vmatprep.mubr.f32.mxu0 0.0
    %1776 = vmatmul.mubr.f32.gmra.mrb[0].mxu0 %v131
    %v1777 = vpop.f32.mrb[0].mxu0
    %v1778 = vadd.f32 0.0, %v1777
    %v1779 = vpop.f32.mrb[0].mxu0
    %1780 = vmatprep.mubr.f32.mxu0 0.0
    %1781 = vmatmul.mubr.f32.gmra.mrb[0].mxu0 %v134
    %v1782 = vpop.f32.mrb[0].mxu0
    %v1783 = vadd.f32 0.0, %v1782
    %v1784 = vpop.f32.mrb[0].mxu0
    %1785 = vmatprep.mubr.f32.mxu0 0.0
    %1786 = vmatmul.mubr.f32.gmra.mrb[0].mxu0 %v137
    %v1787 = vpop.f32.mrb[0].mxu0
    %v1788 = vadd.f32 0.0, %v1787
    %v1789 = vpop.f32.mrb[0].mxu0
    %1790 = vmatprep.mubr.f32.mxu0 0.0
    %1791 = vmatmul.mubr.f32.gmra.mrb[0].mxu0 %v140
    %v1792 = vpop.f32.mrb[0].mxu0
    %v1793 = vadd.f32 0.0, %v1792
    %v1794 = vpop.f32.mrb[0].mxu0
    %1795 = vmatprep.mubr.f32.mxu0 0.0
    %1796 = vmatmul.mubr.f32.gmra.mrb[0].mxu0 %v143
    %v1797 = vpop.f32.mrb[0].mxu0
    %v1798 = vadd.f32 0.0, %v1797
    %v1799 = vpop.f32.mrb[0].mxu0
    %1800 = vmatprep.mubr.f32.mxu0 0.0
    %1801 = vmatmul.mubr.f32.gmra.mrb[0].mxu0 %v146
    %v1802 = vpop.f32.mrb[0].mxu0
    %v1803 = vadd.f32 0.0, %v1802
    %v1804 = vpop.f32.mrb[0].mxu0
    %1805 = vmatprep.mubr.f32.mxu0 0.0
    %1806 = vmatmul.mubr.f32.gmra.mrb[0].mxu0 %v149
    %v1807 = vpop.f32.mrb[0].mxu0
    %v1808 = vadd.f32 0.0, %v1807
    %v1809 = vpop.f32.mrb[0].mxu0
    %1810 = vmatprep.mubr.f32.mxu0 0.0
    %1811 = vmatmul.mubr.f32.gmra.mrb[0].mxu0 %v152
    %v1812 = vpop.f32.mrb[0].mxu0
    %v1813 = vadd.f32 0.0, %v1812
    %v1814 = vpop.f32.mrb[0].mxu0
    %1815 = vmatprep.mubr.f32.mxu0 0.0
    %1816 = vmatmul.mubr.f32.gmra.mrb[0].mxu0 %v155
    %v1817 = vpop.f32.mrb[0].mxu0
    %v1818 = vadd.f32 0.0, %v1817
    %v1819 = vpop.f32.mrb[0].mxu0
    %1820 = vmatprep.mubr.f32.mxu0 0.0
    %1821 = vmatmul.mubr.f32.gmra.mrb[0].mxu0 %v158
    %v1822 = vpop.f32.mrb[0].mxu0
    %v1823 = vadd.f32 0.0, %v1822
    %v1824 = vpop.f32.mrb[0].mxu0
    %1825 = vmatprep.mubr.f32.mxu0 0.0
    %1826 = vmatmul.mubr.f32.gmra.mrb[0].mxu0 %v161
    %v1827 = vpop.f32.mrb[0].mxu0
    %v1828 = vadd.f32 0.0, %v1827
    %v1829 = vpop.f32.mrb[0].mxu0
    %1830 = vmatprep.mubr.f32.mxu0 0.0
    %1831 = vmatmul.mubr.f32.gmra.mrb[0].mxu0 %v164
    %v1832 = vpop.f32.mrb[0].mxu0
    %v1833 = vadd.f32 0.0, %v1832
    %v1834 = vpop.f32.mrb[0].mxu0
    %1835 = vmatprep.mubr.f32.mxu0 0.0
    %1836 = vmatmul.mubr.f32.gmra.mrb[0].mxu0 %v167
    %v1837 = vpop.f32.mrb[0].mxu0
    %v1838 = vadd.f32 0.0, %v1837
    %v1839 = vpop.f32.mrb[0].mxu0
    %1840 = vmatprep.mubr.f32.mxu0 0.0
    %1841 = vmatmul.mubr.f32.gmra.mrb[0].mxu0 %v170
    %v1842 = vpop.f32.mrb[0].mxu0
    %v1843 = vadd.f32 0.0, %v1842
    %v1844 = vpop.f32.mrb[0].mxu0
    %1845 = vmatprep.mubr.f32.mxu0 0.0
    %1846 = vmatmul.mubr.f32.gmra.mrb[0].mxu0 %v173
    %v1847 = vpop.f32.mrb[0].mxu0
    %v1848 = vadd.f32 0.0, %v1847
    %v1849 = vpop.f32.mrb[0].mxu0
    %1850 = vmatprep.mubr.f32.mxu0 0.0
    %1851 = vmatmul.mubr.f32.gmra.mrb[0].mxu0 %v176
    %v1852 = vpop.f32.mrb[0].mxu0
    %v1853 = vadd.f32 0.0, %v1852
    %v1854 = vpop.f32.mrb[0].mxu0
    %1855 = vmatprep.mubr.f32.mxu0 0.0
    %1856 = vmatmul.mubr.f32.gmra.mrb[0].mxu0 %v179
    %v1857 = vpop.f32.mrb[0].mxu0
    %v1858 = vadd.f32 0.0, %v1857
    %v1859 = vpop.f32.mrb[0].mxu0
    %1860 = vmatprep.mubr.f32.mxu0 0.0
    %1861 = vmatmul.mubr.f32.gmra.mrb[0].mxu0 %v182
    %v1862 = vpop.f32.mrb[0].mxu0
    %v1863 = vadd.f32 0.0, %v1862
    %v1864 = vpop.f32.mrb[0].mxu0
    %1865 = vmatprep.mubr.f32.mxu0 0.0
    %1866 = vmatmul.mubr.f32.gmra.mrb[0].mxu0 %v185
    %v1867 = vpop.f32.mrb[0].mxu0
    %v1868 = vadd.f32 0.0, %v1867
    %v1869 = vpop.f32.mrb[0].mxu0
    %1870 = vdwg.mxu0
    %s1871 = scalar_lea.vmem [#allocation2], 256
    %v1872 = vld [vmem:[%s1871] sm:$0xff]
    %v1873 = vld [vmem:[%s1871 + $0x8] sm:$0xff]
    %v1874 = vld [vmem:[%s1871 + $0x10] sm:$0xff]
    %v1875 = vld [vmem:[%s1871 + $0x18] sm:$0xff]
    %v1876 = vld [vmem:[%s1871 + $0x20] sm:$0xff]
    %v1877 = vld [vmem:[%s1871 + $0x28] sm:$0xff]
    %v1878 = vld [vmem:[%s1871 + $0x30] sm:$0xff]
    %v1879 = vld [vmem:[%s1871 + $0x38] sm:$0xff]
    %v1880 = vunpack.c.l.bf16 %v1872
    %v1881 = vunpack.c.h.bf16 %v1872
    %v1882 = vunpack.c.l.bf16 %v1873
    %v1883 = vunpack.c.h.bf16 %v1873
    %v1884 = vunpack.c.l.bf16 %v1874
    %v1885 = vunpack.c.h.bf16 %v1874
    %v1886 = vunpack.c.l.bf16 %v1875
    %v1887 = vunpack.c.h.bf16 %v1875
    %v1888 = vunpack.c.l.bf16 %v1876
    %v1889 = vunpack.c.h.bf16 %v1876
    %v1890 = vunpack.c.l.bf16 %v1877
    %v1891 = vunpack.c.h.bf16 %v1877
    %v1892 = vunpack.c.l.bf16 %v1878
    %v1893 = vunpack.c.h.bf16 %v1878
    %v1894 = vunpack.c.l.bf16 %v1879
    %v1895 = vunpack.c.h.bf16 %v1879
    %1896 = vmatprep.subr.mxu0 0.0
    %1897 = vmatpush1.msra.mxu0 %v1713
    %1898 = vmatprep.subr.mxu0 0.0
    %1899 = vmatpush1.msra.mxu0 %v1718
    %1900 = vmatprep.subr.mxu0 0.0
    %1901 = vmatpush1.msra.mxu0 %v1723
    %1902 = vmatprep.subr.mxu0 0.0
    %1903 = vmatpush1.msra.mxu0 %v1728
    %1904 = vmatprep.subr.mxu0 0.0
    %1905 = vmatpush1.msra.mxu0 %v1733
    %1906 = vmatprep.subr.mxu0 0.0
    %1907 = vmatpush1.msra.mxu0 %v1738
    %1908 = vmatprep.subr.mxu0 0.0
    %1909 = vmatpush1.msra.mxu0 %v1743
    %1910 = vmatprep.subr.mxu0 0.0
    %1911 = vmatpush1.msra.mxu0 %v1748
    %1912 = vmatprep.subr.mxu0 0.0
    %1913 = vmatpush1.msra.mxu0 %v1753
    %1914 = vmatprep.subr.mxu0 0.0
    %1915 = vmatpush1.msra.mxu0 %v1758
    %1916 = vmatprep.subr.mxu0 0.0
    %1917 = vmatpush1.msra.mxu0 %v1763
    %1918 = vmatprep.subr.mxu0 0.0
    %1919 = vmatpush1.msra.mxu0 %v1768
    %1920 = vmatprep.subr.mxu0 0.0
    %1921 = vmatpush1.msra.mxu0 %v1773
    %1922 = vmatprep.subr.mxu0 0.0
    %1923 = vmatpush1.msra.mxu0 %v1778
    %1924 = vmatprep.subr.mxu0 0.0
    %1925 = vmatpush1.msra.mxu0 %v1783
    %1926 = vmatprep.subr.mxu0 0.0
    %1927 = vmatpush1.msra.mxu0 %v1788
    %1928 = vmatprep.subr.mxu0 0.0
    %1929 = vmatpush1.msra.mxu0 %v1793
    %1930 = vmatprep.subr.mxu0 0.0
    %1931 = vmatpush1.msra.mxu0 %v1798
    %1932 = vmatprep.subr.mxu0 0.0
    %1933 = vmatpush1.msra.mxu0 %v1803
    %1934 = vmatprep.subr.mxu0 0.0
    %1935 = vmatpush1.msra.mxu0 %v1808
    %1936 = vmatprep.subr.mxu0 0.0
    %1937 = vmatpush1.msra.mxu0 %v1813
    %1938 = vmatprep.subr.mxu0 0.0
    %1939 = vmatpush1.msra.mxu0 %v1818
    %1940 = vmatprep.subr.mxu0 0.0
    %1941 = vmatpush1.msra.mxu0 %v1823
    %1942 = vmatprep.subr.mxu0 0.0
    %1943 = vmatpush1.msra.mxu0 %v1828
    %1944 = vmatprep.subr.mxu0 0.0
    %1945 = vmatpush1.msra.mxu0 %v1833
    %1946 = vmatprep.subr.mxu0 0.0
    %1947 = vmatpush1.msra.mxu0 %v1838
    %1948 = vmatprep.subr.mxu0 0.0
    %1949 = vmatpush1.msra.mxu0 %v1843
    %1950 = vmatprep.subr.mxu0 0.0
    %1951 = vmatpush1.msra.mxu0 %v1848
    %1952 = vmatprep.subr.mxu0 0.0
    %1953 = vmatpush1.msra.mxu0 %v1853
    %1954 = vmatprep.subr.mxu0 0.0
    %1955 = vmatpush1.msra.mxu0 %v1858
    %1956 = vmatprep.subr.mxu0 0.0
    %1957 = vmatpush1.msra.mxu0 %v1863
    %1958 = vmatprep.subr.mxu0 0.0
    %1959 = vmatpush1.msra.mxu0 %v1868
    %1960 = vmatprep.mubr.f32.mxu0 %v1881
    %1961 = vmatmul.mubr.f32.gmra.mrb[0].mxu0 %v1880
    %v1962 = vpop.f32.mrb[0].mxu0
    %v1963 = vadd.f32 0.0, %v1962
    %v1964 = vpop.f32.mrb[0].mxu0
    %1965 = vmatprep.mubr.f32.mxu0 %v1883
    %1966 = vmatmul.mubr.f32.gmra.mrb[0].mxu0 %v1882
    %v1967 = vpop.f32.mrb[0].mxu0
    %v1968 = vadd.f32 0.0, %v1967
    %v1969 = vpop.f32.mrb[0].mxu0
    %1970 = vmatprep.mubr.f32.mxu0 %v1885
    %1971 = vmatmul.mubr.f32.gmra.mrb[0].mxu0 %v1884
    %v1972 = vpop.f32.mrb[0].mxu0
    %v1973 = vadd.f32 0.0, %v1972
    %v1974 = vpop.f32.mrb[0].mxu0
    %1975 = vmatprep.mubr.f32.mxu0 %v1887
    %1976 = vmatmul.mubr.f32.gmra.mrb[0].mxu0 %v1886
    %v1977 = vpop.f32.mrb[0].mxu0
    %v1978 = vadd.f32 0.0, %v1977
    %v1979 = vpop.f32.mrb[0].mxu0
    %1980 = vmatprep.mubr.f32.mxu0 %v1889
    %1981 = vmatmul.mubr.f32.gmra.mrb[0].mxu0 %v1888
    %v1982 = vpop.f32.mrb[0].mxu0
    %v1983 = vadd.f32 0.0, %v1982
    %v1984 = vpop.f32.mrb[0].mxu0
    %1985 = vmatprep.mubr.f32.mxu0 %v1891
    %1986 = vmatmul.mubr.f32.gmra.mrb[0].mxu0 %v1890
    %v1987 = vpop.f32.mrb[0].mxu0
    %v1988 = vadd.f32 0.0, %v1987
    %v1989 = vpop.f32.mrb[0].mxu0
    %1990 = vmatprep.mubr.f32.mxu0 %v1893
    %1991 = vmatmul.mubr.f32.gmra.mrb[0].mxu0 %v1892
    %v1992 = vpop.f32.mrb[0].mxu0
    %v1993 = vadd.f32 0.0, %v1992
    %v1994 = vpop.f32.mrb[0].mxu0
    %1995 = vmatprep.mubr.f32.mxu0 %v1895
    %1996 = vmatmul.mubr.f32.gmra.mrb[0].mxu0 %v1894
    %v1997 = vpop.f32.mrb[0].mxu0
    %v1998 = vadd.f32 0.0, %v1997
    %v1999 = vpop.f32.mrb[0].mxu0
    %2000 = vdwg.mxu0
    %v2001 = vadd.f32 %v1633, %v1963
    %v2002 = vadd.f32 %v1634, %v1968
    %v2003 = vadd.f32 %v1635, %v1973
    %v2004 = vadd.f32 %v1636, %v1978
    %v2005 = vadd.f32 %v1637, %v1983
    %v2006 = vadd.f32 %v1638, %v1988
    %v2007 = vadd.f32 %v1639, %v1993
    %v2008 = vadd.f32 %v1640, %v1998
    %s2009 = scalar_lea.vmem %s2, 20
    %v2010 = vld [vmem:[%s2009] sm:$0xf]
    %v2012 = vsel %vm187, %v2010, 0
    %2014 = vmatprep.subr.mxu0 0.0
    %2015 = vmatpush1.msra.mxu0 %v2012
    %2016 = vmatprep.subr.mxu0 0.0
    %2017 = vmatpush1.msra.mxu0 0.0
    %2018 = vmatprep.subr.mxu0 0.0
    %2019 = vmatpush1.msra.mxu0 0.0
    %2020 = vmatprep.subr.mxu0 0.0
    %2021 = vmatpush1.msra.mxu0 0.0
    %2022 = vmatprep.subr.mxu0 0.0
    %2023 = vmatpush1.msra.mxu0 0.0
    %2024 = vmatprep.subr.mxu0 0.0
    %2025 = vmatpush1.msra.mxu0 0.0
    %2026 = vmatprep.subr.mxu0 0.0
    %2027 = vmatpush1.msra.mxu0 0.0
    %2028 = vmatprep.subr.mxu0 0.0
    %2029 = vmatpush1.msra.mxu0 0.0
    %2030 = vmatprep.subr.mxu0 0.0
    %2031 = vmatpush1.msra.mxu0 0.0
    %2032 = vmatprep.subr.mxu0 0.0
    %2033 = vmatpush1.msra.mxu0 0.0
    %2034 = vmatprep.subr.mxu0 0.0
    %2035 = vmatpush1.msra.mxu0 0.0
    %2036 = vmatprep.subr.mxu0 0.0
    %2037 = vmatpush1.msra.mxu0 0.0
    %2038 = vmatprep.subr.mxu0 0.0
    %2039 = vmatpush1.msra.mxu0 0.0
    %2040 = vmatprep.subr.mxu0 0.0
    %2041 = vmatpush1.msra.mxu0 0.0
    %2042 = vmatprep.subr.mxu0 0.0
    %2043 = vmatpush1.msra.mxu0 0.0
    %2044 = vmatprep.subr.mxu0 0.0
    %2045 = vmatpush1.msra.mxu0 0.0
    %2046 = vmatprep.subr.mxu0 0.0
    %2047 = vmatpush1.msra.mxu0 0.0
    %2048 = vmatprep.subr.mxu0 0.0
    %2049 = vmatpush1.msra.mxu0 0.0
    %2050 = vmatprep.subr.mxu0 0.0
    %2051 = vmatpush1.msra.mxu0 0.0
    %2052 = vmatprep.subr.mxu0 0.0
    %2053 = vmatpush1.msra.mxu0 0.0
    %2054 = vmatprep.subr.mxu0 0.0
    %2055 = vmatpush1.msra.mxu0 0.0
    %2056 = vmatprep.subr.mxu0 0.0
    %2057 = vmatpush1.msra.mxu0 0.0
    %2058 = vmatprep.subr.mxu0 0.0
    %2059 = vmatpush1.msra.mxu0 0.0
    %2060 = vmatprep.subr.mxu0 0.0
    %2061 = vmatpush1.msra.mxu0 0.0
    %2062 = vmatprep.subr.mxu0 0.0
    %2063 = vmatpush1.msra.mxu0 0.0
    %2064 = vmatprep.subr.mxu0 0.0
    %2065 = vmatpush1.msra.mxu0 0.0
    %2066 = vmatprep.subr.mxu0 0.0
    %2067 = vmatpush1.msra.mxu0 0.0
    %2068 = vmatprep.subr.mxu0 0.0
    %2069 = vmatpush1.msra.mxu0 0.0
    %2070 = vmatprep.subr.mxu0 0.0
    %2071 = vmatpush1.msra.mxu0 0.0
    %2072 = vmatprep.subr.mxu0 0.0
    %2073 = vmatpush1.msra.mxu0 0.0
    %2074 = vmatprep.subr.mxu0 0.0
    %2075 = vmatpush1.msra.mxu0 0.0
    %2076 = vmatprep.subr.mxu0 0.0
    %2077 = vmatpush1.msra.mxu0 0.0
    %2078 = vmatprep.mubr.f32.mxu0 0.0
    %2079 = vmatmul.mubr.f32.gmra.mrb[0].mxu0 %v92
    %v2080 = vpop.f32.mrb[0].mxu0
    %v2081 = vadd.f32 0.0, %v2080
    %v2082 = vpop.f32.mrb[0].mxu0
    %2083 = vmatprep.mubr.f32.mxu0 0.0
    %2084 = vmatmul.mubr.f32.gmra.mrb[0].mxu0 %v95
    %v2085 = vpop.f32.mrb[0].mxu0
    %v2086 = vadd.f32 0.0, %v2085
    %v2087 = vpop.f32.mrb[0].mxu0
    %2088 = vmatprep.mubr.f32.mxu0 0.0
    %2089 = vmatmul.mubr.f32.gmra.mrb[0].mxu0 %v98
    %v2090 = vpop.f32.mrb[0].mxu0
    %v2091 = vadd.f32 0.0, %v2090
    %v2092 = vpop.f32.mrb[0].mxu0
    %2093 = vmatprep.mubr.f32.mxu0 0.0
    %2094 = vmatmul.mubr.f32.gmra.mrb[0].mxu0 %v101
    %v2095 = vpop.f32.mrb[0].mxu0
    %v2096 = vadd.f32 0.0, %v2095
    %v2097 = vpop.f32.mrb[0].mxu0
    %2098 = vmatprep.mubr.f32.mxu0 0.0
    %2099 = vmatmul.mubr.f32.gmra.mrb[0].mxu0 %v104
    %v2100 = vpop.f32.mrb[0].mxu0
    %v2101 = vadd.f32 0.0, %v2100
    %v2102 = vpop.f32.mrb[0].mxu0
    %2103 = vmatprep.mubr.f32.mxu0 0.0
    %2104 = vmatmul.mubr.f32.gmra.mrb[0].mxu0 %v107
    %v2105 = vpop.f32.mrb[0].mxu0
    %v2106 = vadd.f32 0.0, %v2105
    %v2107 = vpop.f32.mrb[0].mxu0
    %2108 = vmatprep.mubr.f32.mxu0 0.0
    %2109 = vmatmul.mubr.f32.gmra.mrb[0].mxu0 %v110
    %v2110 = vpop.f32.mrb[0].mxu0
    %v2111 = vadd.f32 0.0, %v2110
    %v2112 = vpop.f32.mrb[0].mxu0
    %2113 = vmatprep.mubr.f32.mxu0 0.0
    %2114 = vmatmul.mubr.f32.gmra.mrb[0].mxu0 %v113
    %v2115 = vpop.f32.mrb[0].mxu0
    %v2116 = vadd.f32 0.0, %v2115
    %v2117 = vpop.f32.mrb[0].mxu0
    %2118 = vmatprep.mubr.f32.mxu0 0.0
    %2119 = vmatmul.mubr.f32.gmra.mrb[0].mxu0 %v116
    %v2120 = vpop.f32.mrb[0].mxu0
    %v2121 = vadd.f32 0.0, %v2120
    %v2122 = vpop.f32.mrb[0].mxu0
    %2123 = vmatprep.mubr.f32.mxu0 0.0
    %2124 = vmatmul.mubr.f32.gmra.mrb[0].mxu0 %v119
    %v2125 = vpop.f32.mrb[0].mxu0
    %v2126 = vadd.f32 0.0, %v2125
    %v2127 = vpop.f32.mrb[0].mxu0
    %2128 = vmatprep.mubr.f32.mxu0 0.0
    %2129 = vmatmul.mubr.f32.gmra.mrb[0].mxu0 %v122
    %v2130 = vpop.f32.mrb[0].mxu0
    %v2131 = vadd.f32 0.0, %v2130
    %v2132 = vpop.f32.mrb[0].mxu0
    %2133 = vmatprep.mubr.f32.mxu0 0.0
    %2134 = vmatmul.mubr.f32.gmra.mrb[0].mxu0 %v125
    %v2135 = vpop.f32.mrb[0].mxu0
    %v2136 = vadd.f32 0.0, %v2135
    %v2137 = vpop.f32.mrb[0].mxu0
    %2138 = vmatprep.mubr.f32.mxu0 0.0
    %2139 = vmatmul.mubr.f32.gmra.mrb[0].mxu0 %v128
    %v2140 = vpop.f32.mrb[0].mxu0
    %v2141 = vadd.f32 0.0, %v2140
    %v2142 = vpop.f32.mrb[0].mxu0
    %2143 = vmatprep.mubr.f32.mxu0 0.0
    %2144 = vmatmul.mubr.f32.gmra.mrb[0].mxu0 %v131
    %v2145 = vpop.f32.mrb[0].mxu0
    %v2146 = vadd.f32 0.0, %v2145
    %v2147 = vpop.f32.mrb[0].mxu0
    %2148 = vmatprep.mubr.f32.mxu0 0.0
    %2149 = vmatmul.mubr.f32.gmra.mrb[0].mxu0 %v134
    %v2150 = vpop.f32.mrb[0].mxu0
    %v2151 = vadd.f32 0.0, %v2150
    %v2152 = vpop.f32.mrb[0].mxu0
    %2153 = vmatprep.mubr.f32.mxu0 0.0
    %2154 = vmatmul.mubr.f32.gmra.mrb[0].mxu0 %v137
    %v2155 = vpop.f32.mrb[0].mxu0
    %v2156 = vadd.f32 0.0, %v2155
    %v2157 = vpop.f32.mrb[0].mxu0
    %2158 = vmatprep.mubr.f32.mxu0 0.0
    %2159 = vmatmul.mubr.f32.gmra.mrb[0].mxu0 %v140
    %v2160 = vpop.f32.mrb[0].mxu0
    %v2161 = vadd.f32 0.0, %v2160
    %v2162 = vpop.f32.mrb[0].mxu0
    %2163 = vmatprep.mubr.f32.mxu0 0.0
    %2164 = vmatmul.mubr.f32.gmra.mrb[0].mxu0 %v143
    %v2165 = vpop.f32.mrb[0].mxu0
    %v2166 = vadd.f32 0.0, %v2165
    %v2167 = vpop.f32.mrb[0].mxu0
    %2168 = vmatprep.mubr.f32.mxu0 0.0
    %2169 = vmatmul.mubr.f32.gmra.mrb[0].mxu0 %v146
    %v2170 = vpop.f32.mrb[0].mxu0
    %v2171 = vadd.f32 0.0, %v2170
    %v2172 = vpop.f32.mrb[0].mxu0
    %2173 = vmatprep.mubr.f32.mxu0 0.0
    %2174 = vmatmul.mubr.f32.gmra.mrb[0].mxu0 %v149
    %v2175 = vpop.f32.mrb[0].mxu0
    %v2176 = vadd.f32 0.0, %v2175
    %v2177 = vpop.f32.mrb[0].mxu0
    %2178 = vmatprep.mubr.f32.mxu0 0.0
    %2179 = vmatmul.mubr.f32.gmra.mrb[0].mxu0 %v152
    %v2180 = vpop.f32.mrb[0].mxu0
    %v2181 = vadd.f32 0.0, %v2180
    %v2182 = vpop.f32.mrb[0].mxu0
    %2183 = vmatprep.mubr.f32.mxu0 0.0
    %2184 = vmatmul.mubr.f32.gmra.mrb[0].mxu0 %v155
    %v2185 = vpop.f32.mrb[0].mxu0
    %v2186 = vadd.f32 0.0, %v2185
    %v2187 = vpop.f32.mrb[0].mxu0
    %2188 = vmatprep.mubr.f32.mxu0 0.0
    %2189 = vmatmul.mubr.f32.gmra.mrb[0].mxu0 %v158
    %v2190 = vpop.f32.mrb[0].mxu0
    %v2191 = vadd.f32 0.0, %v2190
    %v2192 = vpop.f32.mrb[0].mxu0
    %2193 = vmatprep.mubr.f32.mxu0 0.0
    %2194 = vmatmul.mubr.f32.gmra.mrb[0].mxu0 %v161
    %v2195 = vpop.f32.mrb[0].mxu0
    %v2196 = vadd.f32 0.0, %v2195
    %v2197 = vpop.f32.mrb[0].mxu0
    %2198 = vmatprep.mubr.f32.mxu0 0.0
    %2199 = vmatmul.mubr.f32.gmra.mrb[0].mxu0 %v164
    %v2200 = vpop.f32.mrb[0].mxu0
    %v2201 = vadd.f32 0.0, %v2200
    %v2202 = vpop.f32.mrb[0].mxu0
    %2203 = vmatprep.mubr.f32.mxu0 0.0
    %2204 = vmatmul.mubr.f32.gmra.mrb[0].mxu0 %v167
    %v2205 = vpop.f32.mrb[0].mxu0
    %v2206 = vadd.f32 0.0, %v2205
    %v2207 = vpop.f32.mrb[0].mxu0
    %2208 = vmatprep.mubr.f32.mxu0 0.0
    %2209 = vmatmul.mubr.f32.gmra.mrb[0].mxu0 %v170
    %v2210 = vpop.f32.mrb[0].mxu0
    %v2211 = vadd.f32 0.0, %v2210
    %v2212 = vpop.f32.mrb[0].mxu0
    %2213 = vmatprep.mubr.f32.mxu0 0.0
    %2214 = vmatmul.mubr.f32.gmra.mrb[0].mxu0 %v173
    %v2215 = vpop.f32.mrb[0].mxu0
    %v2216 = vadd.f32 0.0, %v2215
    %v2217 = vpop.f32.mrb[0].mxu0
    %2218 = vmatprep.mubr.f32.mxu0 0.0
    %2219 = vmatmul.mubr.f32.gmra.mrb[0].mxu0 %v176
    %v2220 = vpop.f32.mrb[0].mxu0
    %v2221 = vadd.f32 0.0, %v2220
    %v2222 = vpop.f32.mrb[0].mxu0
    %2223 = vmatprep.mubr.f32.mxu0 0.0
    %2224 = vmatmul.mubr.f32.gmra.mrb[0].mxu0 %v179
    %v2225 = vpop.f32.mrb[0].mxu0
    %v2226 = vadd.f32 0.0, %v2225
    %v2227 = vpop.f32.mrb[0].mxu0
    %2228 = vmatprep.mubr.f32.mxu0 0.0
    %2229 = vmatmul.mubr.f32.gmra.mrb[0].mxu0 %v182
    %v2230 = vpop.f32.mrb[0].mxu0
    %v2231 = vadd.f32 0.0, %v2230
    %v2232 = vpop.f32.mrb[0].mxu0
    %2233 = vmatprep.mubr.f32.mxu0 0.0
    %2234 = vmatmul.mubr.f32.gmra.mrb[0].mxu0 %v185
    %v2235 = vpop.f32.mrb[0].mxu0
    %v2236 = vadd.f32 0.0, %v2235
    %v2237 = vpop.f32.mrb[0].mxu0
    %2238 = vdwg.mxu0
    %s2239 = scalar_lea.vmem [#allocation2], 320
    %v2240 = vld [vmem:[%s2239] sm:$0xff]
    %v2241 = vld [vmem:[%s2239 + $0x8] sm:$0xff]
    %v2242 = vld [vmem:[%s2239 + $0x10] sm:$0xff]
    %v2243 = vld [vmem:[%s2239 + $0x18] sm:$0xff]
    %v2244 = vld [vmem:[%s2239 + $0x20] sm:$0xff]
    %v2245 = vld [vmem:[%s2239 + $0x28] sm:$0xff]
    %v2246 = vld [vmem:[%s2239 + $0x30] sm:$0xff]
    %v2247 = vld [vmem:[%s2239 + $0x38] sm:$0xff]
    %v2248 = vunpack.c.l.bf16 %v2240
    %v2249 = vunpack.c.h.bf16 %v2240
    %v2250 = vunpack.c.l.bf16 %v2241
    %v2251 = vunpack.c.h.bf16 %v2241
    %v2252 = vunpack.c.l.bf16 %v2242
    %v2253 = vunpack.c.h.bf16 %v2242
    %v2254 = vunpack.c.l.bf16 %v2243
    %v2255 = vunpack.c.h.bf16 %v2243
    %v2256 = vunpack.c.l.bf16 %v2244
    %v2257 = vunpack.c.h.bf16 %v2244
    %v2258 = vunpack.c.l.bf16 %v2245
    %v2259 = vunpack.c.h.bf16 %v2245
    %v2260 = vunpack.c.l.bf16 %v2246
    %v2261 = vunpack.c.h.bf16 %v2246
    %v2262 = vunpack.c.l.bf16 %v2247
    %v2263 = vunpack.c.h.bf16 %v2247
    %2264 = vmatprep.subr.mxu0 0.0
    %2265 = vmatpush1.msra.mxu0 %v2081
    %2266 = vmatprep.subr.mxu0 0.0
    %2267 = vmatpush1.msra.mxu0 %v2086
    %2268 = vmatprep.subr.mxu0 0.0
    %2269 = vmatpush1.msra.mxu0 %v2091
    %2270 = vmatprep.subr.mxu0 0.0
    %2271 = vmatpush1.msra.mxu0 %v2096
    %2272 = vmatprep.subr.mxu0 0.0
    %2273 = vmatpush1.msra.mxu0 %v2101
    %2274 = vmatprep.subr.mxu0 0.0
    %2275 = vmatpush1.msra.mxu0 %v2106
    %2276 = vmatprep.subr.mxu0 0.0
    %2277 = vmatpush1.msra.mxu0 %v2111
    %2278 = vmatprep.subr.mxu0 0.0
    %2279 = vmatpush1.msra.mxu0 %v2116
    %2280 = vmatprep.subr.mxu0 0.0
    %2281 = vmatpush1.msra.mxu0 %v2121
    %2282 = vmatprep.subr.mxu0 0.0
    %2283 = vmatpush1.msra.mxu0 %v2126
    %2284 = vmatprep.subr.mxu0 0.0
    %2285 = vmatpush1.msra.mxu0 %v2131
    %2286 = vmatprep.subr.mxu0 0.0
    %2287 = vmatpush1.msra.mxu0 %v2136
    %2288 = vmatprep.subr.mxu0 0.0
    %2289 = vmatpush1.msra.mxu0 %v2141
    %2290 = vmatprep.subr.mxu0 0.0
    %2291 = vmatpush1.msra.mxu0 %v2146
    %2292 = vmatprep.subr.mxu0 0.0
    %2293 = vmatpush1.msra.mxu0 %v2151
    %2294 = vmatprep.subr.mxu0 0.0
    %2295 = vmatpush1.msra.mxu0 %v2156
    %2296 = vmatprep.subr.mxu0 0.0
    %2297 = vmatpush1.msra.mxu0 %v2161
    %2298 = vmatprep.subr.mxu0 0.0
    %2299 = vmatpush1.msra.mxu0 %v2166
    %2300 = vmatprep.subr.mxu0 0.0
    %2301 = vmatpush1.msra.mxu0 %v2171
    %2302 = vmatprep.subr.mxu0 0.0
    %2303 = vmatpush1.msra.mxu0 %v2176
    %2304 = vmatprep.subr.mxu0 0.0
    %2305 = vmatpush1.msra.mxu0 %v2181
    %2306 = vmatprep.subr.mxu0 0.0
    %2307 = vmatpush1.msra.mxu0 %v2186
    %2308 = vmatprep.subr.mxu0 0.0
    %2309 = vmatpush1.msra.mxu0 %v2191
    %2310 = vmatprep.subr.mxu0 0.0
    %2311 = vmatpush1.msra.mxu0 %v2196
    %2312 = vmatprep.subr.mxu0 0.0
    %2313 = vmatpush1.msra.mxu0 %v2201
    %2314 = vmatprep.subr.mxu0 0.0
    %2315 = vmatpush1.msra.mxu0 %v2206
    %2316 = vmatprep.subr.mxu0 0.0
    %2317 = vmatpush1.msra.mxu0 %v2211
    %2318 = vmatprep.subr.mxu0 0.0
    %2319 = vmatpush1.msra.mxu0 %v2216
    %2320 = vmatprep.subr.mxu0 0.0
    %2321 = vmatpush1.msra.mxu0 %v2221
    %2322 = vmatprep.subr.mxu0 0.0
    %2323 = vmatpush1.msra.mxu0 %v2226
    %2324 = vmatprep.subr.mxu0 0.0
    %2325 = vmatpush1.msra.mxu0 %v2231
    %2326 = vmatprep.subr.mxu0 0.0
    %2327 = vmatpush1.msra.mxu0 %v2236
    %2328 = vmatprep.mubr.f32.mxu0 %v2249
    %2329 = vmatmul.mubr.f32.gmra.mrb[0].mxu0 %v2248
    %v2330 = vpop.f32.mrb[0].mxu0
    %v2331 = vadd.f32 0.0, %v2330
    %v2332 = vpop.f32.mrb[0].mxu0
    %2333 = vmatprep.mubr.f32.mxu0 %v2251
    %2334 = vmatmul.mubr.f32.gmra.mrb[0].mxu0 %v2250
    %v2335 = vpop.f32.mrb[0].mxu0
    %v2336 = vadd.f32 0.0, %v2335
    %v2337 = vpop.f32.mrb[0].mxu0
    %2338 = vmatprep.mubr.f32.mxu0 %v2253
    %2339 = vmatmul.mubr.f32.gmra.mrb[0].mxu0 %v2252
    %v2340 = vpop.f32.mrb[0].mxu0
    %v2341 = vadd.f32 0.0, %v2340
    %v2342 = vpop.f32.mrb[0].mxu0
    %2343 = vmatprep.mubr.f32.mxu0 %v2255
    %2344 = vmatmul.mubr.f32.gmra.mrb[0].mxu0 %v2254
    %v2345 = vpop.f32.mrb[0].mxu0
    %v2346 = vadd.f32 0.0, %v2345
    %v2347 = vpop.f32.mrb[0].mxu0
    %2348 = vmatprep.mubr.f32.mxu0 %v2257
    %2349 = vmatmul.mubr.f32.gmra.mrb[0].mxu0 %v2256
    %v2350 = vpop.f32.mrb[0].mxu0
    %v2351 = vadd.f32 0.0, %v2350
    %v2352 = vpop.f32.mrb[0].mxu0
    %2353 = vmatprep.mubr.f32.mxu0 %v2259
    %2354 = vmatmul.mubr.f32.gmra.mrb[0].mxu0 %v2258
    %v2355 = vpop.f32.mrb[0].mxu0
    %v2356 = vadd.f32 0.0, %v2355
    %v2357 = vpop.f32.mrb[0].mxu0
    %2358 = vmatprep.mubr.f32.mxu0 %v2261
    %2359 = vmatmul.mubr.f32.gmra.mrb[0].mxu0 %v2260
    %v2360 = vpop.f32.mrb[0].mxu0
    %v2361 = vadd.f32 0.0, %v2360
    %v2362 = vpop.f32.mrb[0].mxu0
    %2363 = vmatprep.mubr.f32.mxu0 %v2263
    %2364 = vmatmul.mubr.f32.gmra.mrb[0].mxu0 %v2262
    %v2365 = vpop.f32.mrb[0].mxu0
    %v2366 = vadd.f32 0.0, %v2365
    %v2367 = vpop.f32.mrb[0].mxu0
    %2368 = vdwg.mxu0
    %v2369 = vadd.f32 %v2001, %v2331
    %v2370 = vadd.f32 %v2002, %v2336
    %v2371 = vadd.f32 %v2003, %v2341
    %v2372 = vadd.f32 %v2004, %v2346
    %v2373 = vadd.f32 %v2005, %v2351
    %v2374 = vadd.f32 %v2006, %v2356
    %v2375 = vadd.f32 %v2007, %v2361
    %v2376 = vadd.f32 %v2008, %v2366
    %s2377 = scalar_lea.vmem %s2, 24
    %v2378 = vld [vmem:[%s2377] sm:$0xf]
    %v2380 = vsel %vm187, %v2378, 0
    %2382 = vmatprep.subr.mxu0 0.0
    %2383 = vmatpush1.msra.mxu0 %v2380
    %2384 = vmatprep.subr.mxu0 0.0
    %2385 = vmatpush1.msra.mxu0 0.0
    %2386 = vmatprep.subr.mxu0 0.0
    %2387 = vmatpush1.msra.mxu0 0.0
    %2388 = vmatprep.subr.mxu0 0.0
    %2389 = vmatpush1.msra.mxu0 0.0
    %2390 = vmatprep.subr.mxu0 0.0
    %2391 = vmatpush1.msra.mxu0 0.0
    %2392 = vmatprep.subr.mxu0 0.0
    %2393 = vmatpush1.msra.mxu0 0.0
    %2394 = vmatprep.subr.mxu0 0.0
    %2395 = vmatpush1.msra.mxu0 0.0
    %2396 = vmatprep.subr.mxu0 0.0
    %2397 = vmatpush1.msra.mxu0 0.0
    %2398 = vmatprep.subr.mxu0 0.0
    %2399 = vmatpush1.msra.mxu0 0.0
    %2400 = vmatprep.subr.mxu0 0.0
    %2401 = vmatpush1.msra.mxu0 0.0
    %2402 = vmatprep.subr.mxu0 0.0
    %2403 = vmatpush1.msra.mxu0 0.0
    %2404 = vmatprep.subr.mxu0 0.0
    %2405 = vmatpush1.msra.mxu0 0.0
    %2406 = vmatprep.subr.mxu0 0.0
    %2407 = vmatpush1.msra.mxu0 0.0
    %2408 = vmatprep.subr.mxu0 0.0
    %2409 = vmatpush1.msra.mxu0 0.0
    %2410 = vmatprep.subr.mxu0 0.0
    %2411 = vmatpush1.msra.mxu0 0.0
    %2412 = vmatprep.subr.mxu0 0.0
    %2413 = vmatpush1.msra.mxu0 0.0
    %2414 = vmatprep.subr.mxu0 0.0
    %2415 = vmatpush1.msra.mxu0 0.0
    %2416 = vmatprep.subr.mxu0 0.0
    %2417 = vmatpush1.msra.mxu0 0.0
    %2418 = vmatprep.subr.mxu0 0.0
    %2419 = vmatpush1.msra.mxu0 0.0
    %2420 = vmatprep.subr.mxu0 0.0
    %2421 = vmatpush1.msra.mxu0 0.0
    %2422 = vmatprep.subr.mxu0 0.0
    %2423 = vmatpush1.msra.mxu0 0.0
    %2424 = vmatprep.subr.mxu0 0.0
    %2425 = vmatpush1.msra.mxu0 0.0
    %2426 = vmatprep.subr.mxu0 0.0
    %2427 = vmatpush1.msra.mxu0 0.0
    %2428 = vmatprep.subr.mxu0 0.0
    %2429 = vmatpush1.msra.mxu0 0.0
    %2430 = vmatprep.subr.mxu0 0.0
    %2431 = vmatpush1.msra.mxu0 0.0
    %2432 = vmatprep.subr.mxu0 0.0
    %2433 = vmatpush1.msra.mxu0 0.0
    %2434 = vmatprep.subr.mxu0 0.0
    %2435 = vmatpush1.msra.mxu0 0.0
    %2436 = vmatprep.subr.mxu0 0.0
    %2437 = vmatpush1.msra.mxu0 0.0
    %2438 = vmatprep.subr.mxu0 0.0
    %2439 = vmatpush1.msra.mxu0 0.0
    %2440 = vmatprep.subr.mxu0 0.0
    %2441 = vmatpush1.msra.mxu0 0.0
    %2442 = vmatprep.subr.mxu0 0.0
    %2443 = vmatpush1.msra.mxu0 0.0
    %2444 = vmatprep.subr.mxu0 0.0
    %2445 = vmatpush1.msra.mxu0 0.0
    %2446 = vmatprep.mubr.f32.mxu0 0.0
    %2447 = vmatmul.mubr.f32.gmra.mrb[0].mxu0 %v92
    %v2448 = vpop.f32.mrb[0].mxu0
    %v2449 = vadd.f32 0.0, %v2448
    %v2450 = vpop.f32.mrb[0].mxu0
    %2451 = vmatprep.mubr.f32.mxu0 0.0
    %2452 = vmatmul.mubr.f32.gmra.mrb[0].mxu0 %v95
    %v2453 = vpop.f32.mrb[0].mxu0
    %v2454 = vadd.f32 0.0, %v2453
    %v2455 = vpop.f32.mrb[0].mxu0
    %2456 = vmatprep.mubr.f32.mxu0 0.0
    %2457 = vmatmul.mubr.f32.gmra.mrb[0].mxu0 %v98
    %v2458 = vpop.f32.mrb[0].mxu0
    %v2459 = vadd.f32 0.0, %v2458
    %v2460 = vpop.f32.mrb[0].mxu0
    %2461 = vmatprep.mubr.f32.mxu0 0.0
    %2462 = vmatmul.mubr.f32.gmra.mrb[0].mxu0 %v101
    %v2463 = vpop.f32.mrb[0].mxu0
    %v2464 = vadd.f32 0.0, %v2463
    %v2465 = vpop.f32.mrb[0].mxu0
    %2466 = vmatprep.mubr.f32.mxu0 0.0
    %2467 = vmatmul.mubr.f32.gmra.mrb[0].mxu0 %v104
    %v2468 = vpop.f32.mrb[0].mxu0
    %v2469 = vadd.f32 0.0, %v2468
    %v2470 = vpop.f32.mrb[0].mxu0
    %2471 = vmatprep.mubr.f32.mxu0 0.0
    %2472 = vmatmul.mubr.f32.gmra.mrb[0].mxu0 %v107
    %v2473 = vpop.f32.mrb[0].mxu0
    %v2474 = vadd.f32 0.0, %v2473
    %v2475 = vpop.f32.mrb[0].mxu0
    %2476 = vmatprep.mubr.f32.mxu0 0.0
    %2477 = vmatmul.mubr.f32.gmra.mrb[0].mxu0 %v110
    %v2478 = vpop.f32.mrb[0].mxu0
    %v2479 = vadd.f32 0.0, %v2478
    %v2480 = vpop.f32.mrb[0].mxu0
    %2481 = vmatprep.mubr.f32.mxu0 0.0
    %2482 = vmatmul.mubr.f32.gmra.mrb[0].mxu0 %v113
    %v2483 = vpop.f32.mrb[0].mxu0
    %v2484 = vadd.f32 0.0, %v2483
    %v2485 = vpop.f32.mrb[0].mxu0
    %2486 = vmatprep.mubr.f32.mxu0 0.0
    %2487 = vmatmul.mubr.f32.gmra.mrb[0].mxu0 %v116
    %v2488 = vpop.f32.mrb[0].mxu0
    %v2489 = vadd.f32 0.0, %v2488
    %v2490 = vpop.f32.mrb[0].mxu0
    %2491 = vmatprep.mubr.f32.mxu0 0.0
    %2492 = vmatmul.mubr.f32.gmra.mrb[0].mxu0 %v119
    %v2493 = vpop.f32.mrb[0].mxu0
    %v2494 = vadd.f32 0.0, %v2493
    %v2495 = vpop.f32.mrb[0].mxu0
    %2496 = vmatprep.mubr.f32.mxu0 0.0
    %2497 = vmatmul.mubr.f32.gmra.mrb[0].mxu0 %v122
    %v2498 = vpop.f32.mrb[0].mxu0
    %v2499 = vadd.f32 0.0, %v2498
    %v2500 = vpop.f32.mrb[0].mxu0
    %2501 = vmatprep.mubr.f32.mxu0 0.0
    %2502 = vmatmul.mubr.f32.gmra.mrb[0].mxu0 %v125
    %v2503 = vpop.f32.mrb[0].mxu0
    %v2504 = vadd.f32 0.0, %v2503
    %v2505 = vpop.f32.mrb[0].mxu0
    %2506 = vmatprep.mubr.f32.mxu0 0.0
    %2507 = vmatmul.mubr.f32.gmra.mrb[0].mxu0 %v128
    %v2508 = vpop.f32.mrb[0].mxu0
    %v2509 = vadd.f32 0.0, %v2508
    %v2510 = vpop.f32.mrb[0].mxu0
    %2511 = vmatprep.mubr.f32.mxu0 0.0
    %2512 = vmatmul.mubr.f32.gmra.mrb[0].mxu0 %v131
    %v2513 = vpop.f32.mrb[0].mxu0
    %v2514 = vadd.f32 0.0, %v2513
    %v2515 = vpop.f32.mrb[0].mxu0
    %2516 = vmatprep.mubr.f32.mxu0 0.0
    %2517 = vmatmul.mubr.f32.gmra.mrb[0].mxu0 %v134
    %v2518 = vpop.f32.mrb[0].mxu0
    %v2519 = vadd.f32 0.0, %v2518
    %v2520 = vpop.f32.mrb[0].mxu0
    %2521 = vmatprep.mubr.f32.mxu0 0.0
    %2522 = vmatmul.mubr.f32.gmra.mrb[0].mxu0 %v137
    %v2523 = vpop.f32.mrb[0].mxu0
    %v2524 = vadd.f32 0.0, %v2523
    %v2525 = vpop.f32.mrb[0].mxu0
    %2526 = vmatprep.mubr.f32.mxu0 0.0
    %2527 = vmatmul.mubr.f32.gmra.mrb[0].mxu0 %v140
    %v2528 = vpop.f32.mrb[0].mxu0
    %v2529 = vadd.f32 0.0, %v2528
    %v2530 = vpop.f32.mrb[0].mxu0
    %2531 = vmatprep.mubr.f32.mxu0 0.0
    %2532 = vmatmul.mubr.f32.gmra.mrb[0].mxu0 %v143
    %v2533 = vpop.f32.mrb[0].mxu0
    %v2534 = vadd.f32 0.0, %v2533
    %v2535 = vpop.f32.mrb[0].mxu0
    %2536 = vmatprep.mubr.f32.mxu0 0.0
    %2537 = vmatmul.mubr.f32.gmra.mrb[0].mxu0 %v146
    %v2538 = vpop.f32.mrb[0].mxu0
    %v2539 = vadd.f32 0.0, %v2538
    %v2540 = vpop.f32.mrb[0].mxu0
    %2541 = vmatprep.mubr.f32.mxu0 0.0
    %2542 = vmatmul.mubr.f32.gmra.mrb[0].mxu0 %v149
    %v2543 = vpop.f32.mrb[0].mxu0
    %v2544 = vadd.f32 0.0, %v2543
    %v2545 = vpop.f32.mrb[0].mxu0
    %2546 = vmatprep.mubr.f32.mxu0 0.0
    %2547 = vmatmul.mubr.f32.gmra.mrb[0].mxu0 %v152
    %v2548 = vpop.f32.mrb[0].mxu0
    %v2549 = vadd.f32 0.0, %v2548
    %v2550 = vpop.f32.mrb[0].mxu0
    %2551 = vmatprep.mubr.f32.mxu0 0.0
    %2552 = vmatmul.mubr.f32.gmra.mrb[0].mxu0 %v155
    %v2553 = vpop.f32.mrb[0].mxu0
    %v2554 = vadd.f32 0.0, %v2553
    %v2555 = vpop.f32.mrb[0].mxu0
    %2556 = vmatprep.mubr.f32.mxu0 0.0
    %2557 = vmatmul.mubr.f32.gmra.mrb[0].mxu0 %v158
    %v2558 = vpop.f32.mrb[0].mxu0
    %v2559 = vadd.f32 0.0, %v2558
    %v2560 = vpop.f32.mrb[0].mxu0
    %2561 = vmatprep.mubr.f32.mxu0 0.0
    %2562 = vmatmul.mubr.f32.gmra.mrb[0].mxu0 %v161
    %v2563 = vpop.f32.mrb[0].mxu0
    %v2564 = vadd.f32 0.0, %v2563
    %v2565 = vpop.f32.mrb[0].mxu0
    %2566 = vmatprep.mubr.f32.mxu0 0.0
    %2567 = vmatmul.mubr.f32.gmra.mrb[0].mxu0 %v164
    %v2568 = vpop.f32.mrb[0].mxu0
    %v2569 = vadd.f32 0.0, %v2568
    %v2570 = vpop.f32.mrb[0].mxu0
    %2571 = vmatprep.mubr.f32.mxu0 0.0
    %2572 = vmatmul.mubr.f32.gmra.mrb[0].mxu0 %v167
    %v2573 = vpop.f32.mrb[0].mxu0
    %v2574 = vadd.f32 0.0, %v2573
    %v2575 = vpop.f32.mrb[0].mxu0
    %2576 = vmatprep.mubr.f32.mxu0 0.0
    %2577 = vmatmul.mubr.f32.gmra.mrb[0].mxu0 %v170
    %v2578 = vpop.f32.mrb[0].mxu0
    %v2579 = vadd.f32 0.0, %v2578
    %v2580 = vpop.f32.mrb[0].mxu0
    %2581 = vmatprep.mubr.f32.mxu0 0.0
    %2582 = vmatmul.mubr.f32.gmra.mrb[0].mxu0 %v173
    %v2583 = vpop.f32.mrb[0].mxu0
    %v2584 = vadd.f32 0.0, %v2583
    %v2585 = vpop.f32.mrb[0].mxu0
    %2586 = vmatprep.mubr.f32.mxu0 0.0
    %2587 = vmatmul.mubr.f32.gmra.mrb[0].mxu0 %v176
    %v2588 = vpop.f32.mrb[0].mxu0
    %v2589 = vadd.f32 0.0, %v2588
    %v2590 = vpop.f32.mrb[0].mxu0
    %2591 = vmatprep.mubr.f32.mxu0 0.0
    %2592 = vmatmul.mubr.f32.gmra.mrb[0].mxu0 %v179
    %v2593 = vpop.f32.mrb[0].mxu0
    %v2594 = vadd.f32 0.0, %v2593
    %v2595 = vpop.f32.mrb[0].mxu0
    %2596 = vmatprep.mubr.f32.mxu0 0.0
    %2597 = vmatmul.mubr.f32.gmra.mrb[0].mxu0 %v182
    %v2598 = vpop.f32.mrb[0].mxu0
    %v2599 = vadd.f32 0.0, %v2598
    %v2600 = vpop.f32.mrb[0].mxu0
    %2601 = vmatprep.mubr.f32.mxu0 0.0
    %2602 = vmatmul.mubr.f32.gmra.mrb[0].mxu0 %v185
    %v2603 = vpop.f32.mrb[0].mxu0
    %v2604 = vadd.f32 0.0, %v2603
    %v2605 = vpop.f32.mrb[0].mxu0
    %2606 = vdwg.mxu0
    %s2607 = scalar_lea.vmem [#allocation2], 384
    %v2608 = vld [vmem:[%s2607] sm:$0xff]
    %v2609 = vld [vmem:[%s2607 + $0x8] sm:$0xff]
    %v2610 = vld [vmem:[%s2607 + $0x10] sm:$0xff]
    %v2611 = vld [vmem:[%s2607 + $0x18] sm:$0xff]
    %v2612 = vld [vmem:[%s2607 + $0x20] sm:$0xff]
    %v2613 = vld [vmem:[%s2607 + $0x28] sm:$0xff]
    %v2614 = vld [vmem:[%s2607 + $0x30] sm:$0xff]
    %v2615 = vld [vmem:[%s2607 + $0x38] sm:$0xff]
    %v2616 = vunpack.c.l.bf16 %v2608
    %v2617 = vunpack.c.h.bf16 %v2608
    %v2618 = vunpack.c.l.bf16 %v2609
    %v2619 = vunpack.c.h.bf16 %v2609
    %v2620 = vunpack.c.l.bf16 %v2610
    %v2621 = vunpack.c.h.bf16 %v2610
    %v2622 = vunpack.c.l.bf16 %v2611
    %v2623 = vunpack.c.h.bf16 %v2611
    %v2624 = vunpack.c.l.bf16 %v2612
    %v2625 = vunpack.c.h.bf16 %v2612
    %v2626 = vunpack.c.l.bf16 %v2613
    %v2627 = vunpack.c.h.bf16 %v2613
    %v2628 = vunpack.c.l.bf16 %v2614
    %v2629 = vunpack.c.h.bf16 %v2614
    %v2630 = vunpack.c.l.bf16 %v2615
    %v2631 = vunpack.c.h.bf16 %v2615
    %2632 = vmatprep.subr.mxu0 0.0
    %2633 = vmatpush1.msra.mxu0 %v2449
    %2634 = vmatprep.subr.mxu0 0.0
    %2635 = vmatpush1.msra.mxu0 %v2454
    %2636 = vmatprep.subr.mxu0 0.0
    %2637 = vmatpush1.msra.mxu0 %v2459
    %2638 = vmatprep.subr.mxu0 0.0
    %2639 = vmatpush1.msra.mxu0 %v2464
    %2640 = vmatprep.subr.mxu0 0.0
    %2641 = vmatpush1.msra.mxu0 %v2469
    %2642 = vmatprep.subr.mxu0 0.0
    %2643 = vmatpush1.msra.mxu0 %v2474
    %2644 = vmatprep.subr.mxu0 0.0
    %2645 = vmatpush1.msra.mxu0 %v2479
    %2646 = vmatprep.subr.mxu0 0.0
    %2647 = vmatpush1.msra.mxu0 %v2484
    %2648 = vmatprep.subr.mxu0 0.0
    %2649 = vmatpush1.msra.mxu0 %v2489
    %2650 = vmatprep.subr.mxu0 0.0
    %2651 = vmatpush1.msra.mxu0 %v2494
    %2652 = vmatprep.subr.mxu0 0.0
    %2653 = vmatpush1.msra.mxu0 %v2499
    %2654 = vmatprep.subr.mxu0 0.0
    %2655 = vmatpush1.msra.mxu0 %v2504
    %2656 = vmatprep.subr.mxu0 0.0
    %2657 = vmatpush1.msra.mxu0 %v2509
    %2658 = vmatprep.subr.mxu0 0.0
    %2659 = vmatpush1.msra.mxu0 %v2514
    %2660 = vmatprep.subr.mxu0 0.0
    %2661 = vmatpush1.msra.mxu0 %v2519
    %2662 = vmatprep.subr.mxu0 0.0
    %2663 = vmatpush1.msra.mxu0 %v2524
    %2664 = vmatprep.subr.mxu0 0.0
    %2665 = vmatpush1.msra.mxu0 %v2529
    %2666 = vmatprep.subr.mxu0 0.0
    %2667 = vmatpush1.msra.mxu0 %v2534
    %2668 = vmatprep.subr.mxu0 0.0
    %2669 = vmatpush1.msra.mxu0 %v2539
    %2670 = vmatprep.subr.mxu0 0.0
    %2671 = vmatpush1.msra.mxu0 %v2544
    %2672 = vmatprep.subr.mxu0 0.0
    %2673 = vmatpush1.msra.mxu0 %v2549
    %2674 = vmatprep.subr.mxu0 0.0
    %2675 = vmatpush1.msra.mxu0 %v2554
    %2676 = vmatprep.subr.mxu0 0.0
    %2677 = vmatpush1.msra.mxu0 %v2559
    %2678 = vmatprep.subr.mxu0 0.0
    %2679 = vmatpush1.msra.mxu0 %v2564
    %2680 = vmatprep.subr.mxu0 0.0
    %2681 = vmatpush1.msra.mxu0 %v2569
    %2682 = vmatprep.subr.mxu0 0.0
    %2683 = vmatpush1.msra.mxu0 %v2574
    %2684 = vmatprep.subr.mxu0 0.0
    %2685 = vmatpush1.msra.mxu0 %v2579
    %2686 = vmatprep.subr.mxu0 0.0
    %2687 = vmatpush1.msra.mxu0 %v2584
    %2688 = vmatprep.subr.mxu0 0.0
    %2689 = vmatpush1.msra.mxu0 %v2589
    %2690 = vmatprep.subr.mxu0 0.0
    %2691 = vmatpush1.msra.mxu0 %v2594
    %2692 = vmatprep.subr.mxu0 0.0
    %2693 = vmatpush1.msra.mxu0 %v2599
    %2694 = vmatprep.subr.mxu0 0.0
    %2695 = vmatpush1.msra.mxu0 %v2604
    %2696 = vmatprep.mubr.f32.mxu0 %v2617
    %2697 = vmatmul.mubr.f32.gmra.mrb[0].mxu0 %v2616
    %v2698 = vpop.f32.mrb[0].mxu0
    %v2699 = vadd.f32 0.0, %v2698
    %v2700 = vpop.f32.mrb[0].mxu0
    %2701 = vmatprep.mubr.f32.mxu0 %v2619
    %2702 = vmatmul.mubr.f32.gmra.mrb[0].mxu0 %v2618
    %v2703 = vpop.f32.mrb[0].mxu0
    %v2704 = vadd.f32 0.0, %v2703
    %v2705 = vpop.f32.mrb[0].mxu0
    %2706 = vmatprep.mubr.f32.mxu0 %v2621
    %2707 = vmatmul.mubr.f32.gmra.mrb[0].mxu0 %v2620
    %v2708 = vpop.f32.mrb[0].mxu0
    %v2709 = vadd.f32 0.0, %v2708
    %v2710 = vpop.f32.mrb[0].mxu0
    %2711 = vmatprep.mubr.f32.mxu0 %v2623
    %2712 = vmatmul.mubr.f32.gmra.mrb[0].mxu0 %v2622
    %v2713 = vpop.f32.mrb[0].mxu0
    %v2714 = vadd.f32 0.0, %v2713
    %v2715 = vpop.f32.mrb[0].mxu0
    %2716 = vmatprep.mubr.f32.mxu0 %v2625
    %2717 = vmatmul.mubr.f32.gmra.mrb[0].mxu0 %v2624
    %v2718 = vpop.f32.mrb[0].mxu0
    %v2719 = vadd.f32 0.0, %v2718
    %v2720 = vpop.f32.mrb[0].mxu0
    %2721 = vmatprep.mubr.f32.mxu0 %v2627
    %2722 = vmatmul.mubr.f32.gmra.mrb[0].mxu0 %v2626
    %v2723 = vpop.f32.mrb[0].mxu0
    %v2724 = vadd.f32 0.0, %v2723
    %v2725 = vpop.f32.mrb[0].mxu0
    %2726 = vmatprep.mubr.f32.mxu0 %v2629
    %2727 = vmatmul.mubr.f32.gmra.mrb[0].mxu0 %v2628
    %v2728 = vpop.f32.mrb[0].mxu0
    %v2729 = vadd.f32 0.0, %v2728
    %v2730 = vpop.f32.mrb[0].mxu0
    %2731 = vmatprep.mubr.f32.mxu0 %v2631
    %2732 = vmatmul.mubr.f32.gmra.mrb[0].mxu0 %v2630
    %v2733 = vpop.f32.mrb[0].mxu0
    %v2734 = vadd.f32 0.0, %v2733
    %v2735 = vpop.f32.mrb[0].mxu0
    %2736 = vdwg.mxu0
    %v2737 = vadd.f32 %v2369, %v2699
    %v2738 = vadd.f32 %v2370, %v2704
    %v2739 = vadd.f32 %v2371, %v2709
    %v2740 = vadd.f32 %v2372, %v2714
    %v2741 = vadd.f32 %v2373, %v2719
    %v2742 = vadd.f32 %v2374, %v2724
    %v2743 = vadd.f32 %v2375, %v2729
    %v2744 = vadd.f32 %v2376, %v2734
    %s2745 = scalar_lea.vmem %s2, 28
    %v2746 = vld [vmem:[%s2745] sm:$0xf]
    %v2748 = vsel %vm187, %v2746, 0
    %2750 = vmatprep.subr.mxu0 0.0
    %2751 = vmatpush1.msra.mxu0 %v2748
    %2752 = vmatprep.subr.mxu0 0.0
    %2753 = vmatpush1.msra.mxu0 0.0
    %2754 = vmatprep.subr.mxu0 0.0
    %2755 = vmatpush1.msra.mxu0 0.0
    %2756 = vmatprep.subr.mxu0 0.0
    %2757 = vmatpush1.msra.mxu0 0.0
    %2758 = vmatprep.subr.mxu0 0.0
    %2759 = vmatpush1.msra.mxu0 0.0
    %2760 = vmatprep.subr.mxu0 0.0
    %2761 = vmatpush1.msra.mxu0 0.0
    %2762 = vmatprep.subr.mxu0 0.0
    %2763 = vmatpush1.msra.mxu0 0.0
    %2764 = vmatprep.subr.mxu0 0.0
    %2765 = vmatpush1.msra.mxu0 0.0
    %2766 = vmatprep.subr.mxu0 0.0
    %2767 = vmatpush1.msra.mxu0 0.0
    %2768 = vmatprep.subr.mxu0 0.0
    %2769 = vmatpush1.msra.mxu0 0.0
    %2770 = vmatprep.subr.mxu0 0.0
    %2771 = vmatpush1.msra.mxu0 0.0
    %2772 = vmatprep.subr.mxu0 0.0
    %2773 = vmatpush1.msra.mxu0 0.0
    %2774 = vmatprep.subr.mxu0 0.0
    %2775 = vmatpush1.msra.mxu0 0.0
    %2776 = vmatprep.subr.mxu0 0.0
    %2777 = vmatpush1.msra.mxu0 0.0
    %2778 = vmatprep.subr.mxu0 0.0
    %2779 = vmatpush1.msra.mxu0 0.0
    %2780 = vmatprep.subr.mxu0 0.0
    %2781 = vmatpush1.msra.mxu0 0.0
    %2782 = vmatprep.subr.mxu0 0.0
    %2783 = vmatpush1.msra.mxu0 0.0
    %2784 = vmatprep.subr.mxu0 0.0
    %2785 = vmatpush1.msra.mxu0 0.0
    %2786 = vmatprep.subr.mxu0 0.0
    %2787 = vmatpush1.msra.mxu0 0.0
    %2788 = vmatprep.subr.mxu0 0.0
    %2789 = vmatpush1.msra.mxu0 0.0
    %2790 = vmatprep.subr.mxu0 0.0
    %2791 = vmatpush1.msra.mxu0 0.0
    %2792 = vmatprep.subr.mxu0 0.0
    %2793 = vmatpush1.msra.mxu0 0.0
    %2794 = vmatprep.subr.mxu0 0.0
    %2795 = vmatpush1.msra.mxu0 0.0
    %2796 = vmatprep.subr.mxu0 0.0
    %2797 = vmatpush1.msra.mxu0 0.0
    %2798 = vmatprep.subr.mxu0 0.0
    %2799 = vmatpush1.msra.mxu0 0.0
    %2800 = vmatprep.subr.mxu0 0.0
    %2801 = vmatpush1.msra.mxu0 0.0
    %2802 = vmatprep.subr.mxu0 0.0
    %2803 = vmatpush1.msra.mxu0 0.0
    %2804 = vmatprep.subr.mxu0 0.0
    %2805 = vmatpush1.msra.mxu0 0.0
    %2806 = vmatprep.subr.mxu0 0.0
    %2807 = vmatpush1.msra.mxu0 0.0
    %2808 = vmatprep.subr.mxu0 0.0
    %2809 = vmatpush1.msra.mxu0 0.0
    %2810 = vmatprep.subr.mxu0 0.0
    %2811 = vmatpush1.msra.mxu0 0.0
    %2812 = vmatprep.subr.mxu0 0.0
    %2813 = vmatpush1.msra.mxu0 0.0
    %2814 = vmatprep.mubr.f32.mxu0 0.0
    %2815 = vmatmul.mubr.f32.gmra.mrb[0].mxu0 %v92
    %v2816 = vpop.f32.mrb[0].mxu0
    %v2817 = vadd.f32 0.0, %v2816
    %v2818 = vpop.f32.mrb[0].mxu0
    %2819 = vmatprep.mubr.f32.mxu0 0.0
    %2820 = vmatmul.mubr.f32.gmra.mrb[0].mxu0 %v95
    %v2821 = vpop.f32.mrb[0].mxu0
    %v2822 = vadd.f32 0.0, %v2821
    %v2823 = vpop.f32.mrb[0].mxu0
    %2824 = vmatprep.mubr.f32.mxu0 0.0
    %2825 = vmatmul.mubr.f32.gmra.mrb[0].mxu0 %v98
    %v2826 = vpop.f32.mrb[0].mxu0
    %v2827 = vadd.f32 0.0, %v2826
    %v2828 = vpop.f32.mrb[0].mxu0
    %2829 = vmatprep.mubr.f32.mxu0 0.0
    %2830 = vmatmul.mubr.f32.gmra.mrb[0].mxu0 %v101
    %v2831 = vpop.f32.mrb[0].mxu0
    %v2832 = vadd.f32 0.0, %v2831
    %v2833 = vpop.f32.mrb[0].mxu0
    %2834 = vmatprep.mubr.f32.mxu0 0.0
    %2835 = vmatmul.mubr.f32.gmra.mrb[0].mxu0 %v104
    %v2836 = vpop.f32.mrb[0].mxu0
    %v2837 = vadd.f32 0.0, %v2836
    %v2838 = vpop.f32.mrb[0].mxu0
    %2839 = vmatprep.mubr.f32.mxu0 0.0
    %2840 = vmatmul.mubr.f32.gmra.mrb[0].mxu0 %v107
    %v2841 = vpop.f32.mrb[0].mxu0
    %v2842 = vadd.f32 0.0, %v2841
    %v2843 = vpop.f32.mrb[0].mxu0
    %2844 = vmatprep.mubr.f32.mxu0 0.0
    %2845 = vmatmul.mubr.f32.gmra.mrb[0].mxu0 %v110
    %v2846 = vpop.f32.mrb[0].mxu0
    %v2847 = vadd.f32 0.0, %v2846
    %v2848 = vpop.f32.mrb[0].mxu0
    %2849 = vmatprep.mubr.f32.mxu0 0.0
    %2850 = vmatmul.mubr.f32.gmra.mrb[0].mxu0 %v113
    %v2851 = vpop.f32.mrb[0].mxu0
    %v2852 = vadd.f32 0.0, %v2851
    %v2853 = vpop.f32.mrb[0].mxu0
    %2854 = vmatprep.mubr.f32.mxu0 0.0
    %2855 = vmatmul.mubr.f32.gmra.mrb[0].mxu0 %v116
    %v2856 = vpop.f32.mrb[0].mxu0
    %v2857 = vadd.f32 0.0, %v2856
    %v2858 = vpop.f32.mrb[0].mxu0
    %2859 = vmatprep.mubr.f32.mxu0 0.0
    %2860 = vmatmul.mubr.f32.gmra.mrb[0].mxu0 %v119
    %v2861 = vpop.f32.mrb[0].mxu0
    %v2862 = vadd.f32 0.0, %v2861
    %v2863 = vpop.f32.mrb[0].mxu0
    %2864 = vmatprep.mubr.f32.mxu0 0.0
    %2865 = vmatmul.mubr.f32.gmra.mrb[0].mxu0 %v122
    %v2866 = vpop.f32.mrb[0].mxu0
    %v2867 = vadd.f32 0.0, %v2866
    %v2868 = vpop.f32.mrb[0].mxu0
    %2869 = vmatprep.mubr.f32.mxu0 0.0
    %2870 = vmatmul.mubr.f32.gmra.mrb[0].mxu0 %v125
    %v2871 = vpop.f32.mrb[0].mxu0
    %v2872 = vadd.f32 0.0, %v2871
    %v2873 = vpop.f32.mrb[0].mxu0
    %2874 = vmatprep.mubr.f32.mxu0 0.0
    %2875 = vmatmul.mubr.f32.gmra.mrb[0].mxu0 %v128
    %v2876 = vpop.f32.mrb[0].mxu0
    %v2877 = vadd.f32 0.0, %v2876
    %v2878 = vpop.f32.mrb[0].mxu0
    %2879 = vmatprep.mubr.f32.mxu0 0.0
    %2880 = vmatmul.mubr.f32.gmra.mrb[0].mxu0 %v131
    %v2881 = vpop.f32.mrb[0].mxu0
    %v2882 = vadd.f32 0.0, %v2881
    %v2883 = vpop.f32.mrb[0].mxu0
    %2884 = vmatprep.mubr.f32.mxu0 0.0
    %2885 = vmatmul.mubr.f32.gmra.mrb[0].mxu0 %v134
    %v2886 = vpop.f32.mrb[0].mxu0
    %v2887 = vadd.f32 0.0, %v2886
    %v2888 = vpop.f32.mrb[0].mxu0
    %2889 = vmatprep.mubr.f32.mxu0 0.0
    %2890 = vmatmul.mubr.f32.gmra.mrb[0].mxu0 %v137
    %v2891 = vpop.f32.mrb[0].mxu0
    %v2892 = vadd.f32 0.0, %v2891
    %v2893 = vpop.f32.mrb[0].mxu0
    %2894 = vmatprep.mubr.f32.mxu0 0.0
    %2895 = vmatmul.mubr.f32.gmra.mrb[0].mxu0 %v140
    %v2896 = vpop.f32.mrb[0].mxu0
    %v2897 = vadd.f32 0.0, %v2896
    %v2898 = vpop.f32.mrb[0].mxu0
    %2899 = vmatprep.mubr.f32.mxu0 0.0
    %2900 = vmatmul.mubr.f32.gmra.mrb[0].mxu0 %v143
    %v2901 = vpop.f32.mrb[0].mxu0
    %v2902 = vadd.f32 0.0, %v2901
    %v2903 = vpop.f32.mrb[0].mxu0
    %2904 = vmatprep.mubr.f32.mxu0 0.0
    %2905 = vmatmul.mubr.f32.gmra.mrb[0].mxu0 %v146
    %v2906 = vpop.f32.mrb[0].mxu0
    %v2907 = vadd.f32 0.0, %v2906
    %v2908 = vpop.f32.mrb[0].mxu0
    %2909 = vmatprep.mubr.f32.mxu0 0.0
    %2910 = vmatmul.mubr.f32.gmra.mrb[0].mxu0 %v149
    %v2911 = vpop.f32.mrb[0].mxu0
    %v2912 = vadd.f32 0.0, %v2911
    %v2913 = vpop.f32.mrb[0].mxu0
    %2914 = vmatprep.mubr.f32.mxu0 0.0
    %2915 = vmatmul.mubr.f32.gmra.mrb[0].mxu0 %v152
    %v2916 = vpop.f32.mrb[0].mxu0
    %v2917 = vadd.f32 0.0, %v2916
    %v2918 = vpop.f32.mrb[0].mxu0
    %2919 = vmatprep.mubr.f32.mxu0 0.0
    %2920 = vmatmul.mubr.f32.gmra.mrb[0].mxu0 %v155
    %v2921 = vpop.f32.mrb[0].mxu0
    %v2922 = vadd.f32 0.0, %v2921
    %v2923 = vpop.f32.mrb[0].mxu0
    %2924 = vmatprep.mubr.f32.mxu0 0.0
    %2925 = vmatmul.mubr.f32.gmra.mrb[0].mxu0 %v158
    %v2926 = vpop.f32.mrb[0].mxu0
    %v2927 = vadd.f32 0.0, %v2926
    %v2928 = vpop.f32.mrb[0].mxu0
    %2929 = vmatprep.mubr.f32.mxu0 0.0
    %2930 = vmatmul.mubr.f32.gmra.mrb[0].mxu0 %v161
    %v2931 = vpop.f32.mrb[0].mxu0
    %v2932 = vadd.f32 0.0, %v2931
    %v2933 = vpop.f32.mrb[0].mxu0
    %2934 = vmatprep.mubr.f32.mxu0 0.0
    %2935 = vmatmul.mubr.f32.gmra.mrb[0].mxu0 %v164
    %v2936 = vpop.f32.mrb[0].mxu0
    %v2937 = vadd.f32 0.0, %v2936
    %v2938 = vpop.f32.mrb[0].mxu0
    %2939 = vmatprep.mubr.f32.mxu0 0.0
    %2940 = vmatmul.mubr.f32.gmra.mrb[0].mxu0 %v167
    %v2941 = vpop.f32.mrb[0].mxu0
    %v2942 = vadd.f32 0.0, %v2941
    %v2943 = vpop.f32.mrb[0].mxu0
    %2944 = vmatprep.mubr.f32.mxu0 0.0
    %2945 = vmatmul.mubr.f32.gmra.mrb[0].mxu0 %v170
    %v2946 = vpop.f32.mrb[0].mxu0
    %v2947 = vadd.f32 0.0, %v2946
    %v2948 = vpop.f32.mrb[0].mxu0
    %2949 = vmatprep.mubr.f32.mxu0 0.0
    %2950 = vmatmul.mubr.f32.gmra.mrb[0].mxu0 %v173
    %v2951 = vpop.f32.mrb[0].mxu0
    %v2952 = vadd.f32 0.0, %v2951
    %v2953 = vpop.f32.mrb[0].mxu0
    %2954 = vmatprep.mubr.f32.mxu0 0.0
    %2955 = vmatmul.mubr.f32.gmra.mrb[0].mxu0 %v176
    %v2956 = vpop.f32.mrb[0].mxu0
    %v2957 = vadd.f32 0.0, %v2956
    %v2958 = vpop.f32.mrb[0].mxu0
    %2959 = vmatprep.mubr.f32.mxu0 0.0
    %2960 = vmatmul.mubr.f32.gmra.mrb[0].mxu0 %v179
    %v2961 = vpop.f32.mrb[0].mxu0
    %v2962 = vadd.f32 0.0, %v2961
    %v2963 = vpop.f32.mrb[0].mxu0
    %2964 = vmatprep.mubr.f32.mxu0 0.0
    %2965 = vmatmul.mubr.f32.gmra.mrb[0].mxu0 %v182
    %v2966 = vpop.f32.mrb[0].mxu0
    %v2967 = vadd.f32 0.0, %v2966
    %v2968 = vpop.f32.mrb[0].mxu0
    %2969 = vmatprep.mubr.f32.mxu0 0.0
    %2970 = vmatmul.mubr.f32.gmra.mrb[0].mxu0 %v185
    %v2971 = vpop.f32.mrb[0].mxu0
    %v2972 = vadd.f32 0.0, %v2971
    %v2973 = vpop.f32.mrb[0].mxu0
    %2974 = vdwg.mxu0
    %s2975 = scalar_lea.vmem [#allocation2], 448
    %v2976 = vld [vmem:[%s2975] sm:$0xff]
    %v2977 = vld [vmem:[%s2975 + $0x8] sm:$0xff]
    %v2978 = vld [vmem:[%s2975 + $0x10] sm:$0xff]
    %v2979 = vld [vmem:[%s2975 + $0x18] sm:$0xff]
    %v2980 = vld [vmem:[%s2975 + $0x20] sm:$0xff]
    %v2981 = vld [vmem:[%s2975 + $0x28] sm:$0xff]
    %v2982 = vld [vmem:[%s2975 + $0x30] sm:$0xff]
    %v2983 = vld [vmem:[%s2975 + $0x38] sm:$0xff]
    %v2984 = vunpack.c.l.bf16 %v2976
    %v2985 = vunpack.c.h.bf16 %v2976
    %v2986 = vunpack.c.l.bf16 %v2977
    %v2987 = vunpack.c.h.bf16 %v2977
    %v2988 = vunpack.c.l.bf16 %v2978
    %v2989 = vunpack.c.h.bf16 %v2978
    %v2990 = vunpack.c.l.bf16 %v2979
    %v2991 = vunpack.c.h.bf16 %v2979
    %v2992 = vunpack.c.l.bf16 %v2980
    %v2993 = vunpack.c.h.bf16 %v2980
    %v2994 = vunpack.c.l.bf16 %v2981
    %v2995 = vunpack.c.h.bf16 %v2981
    %v2996 = vunpack.c.l.bf16 %v2982
    %v2997 = vunpack.c.h.bf16 %v2982
    %v2998 = vunpack.c.l.bf16 %v2983
    %v2999 = vunpack.c.h.bf16 %v2983
    %3000 = vmatprep.subr.mxu0 0.0
    %3001 = vmatpush1.msra.mxu0 %v2817
    %3002 = vmatprep.subr.mxu0 0.0
    %3003 = vmatpush1.msra.mxu0 %v2822
    %3004 = vmatprep.subr.mxu0 0.0
    %3005 = vmatpush1.msra.mxu0 %v2827
    %3006 = vmatprep.subr.mxu0 0.0
    %3007 = vmatpush1.msra.mxu0 %v2832
    %3008 = vmatprep.subr.mxu0 0.0
    %3009 = vmatpush1.msra.mxu0 %v2837
    %3010 = vmatprep.subr.mxu0 0.0
    %3011 = vmatpush1.msra.mxu0 %v2842
    %3012 = vmatprep.subr.mxu0 0.0
    %3013 = vmatpush1.msra.mxu0 %v2847
    %3014 = vmatprep.subr.mxu0 0.0
    %3015 = vmatpush1.msra.mxu0 %v2852
    %3016 = vmatprep.subr.mxu0 0.0
    %3017 = vmatpush1.msra.mxu0 %v2857
    %3018 = vmatprep.subr.mxu0 0.0
    %3019 = vmatpush1.msra.mxu0 %v2862
    %3020 = vmatprep.subr.mxu0 0.0
    %3021 = vmatpush1.msra.mxu0 %v2867
    %3022 = vmatprep.subr.mxu0 0.0
    %3023 = vmatpush1.msra.mxu0 %v2872
    %3024 = vmatprep.subr.mxu0 0.0
    %3025 = vmatpush1.msra.mxu0 %v2877
    %3026 = vmatprep.subr.mxu0 0.0
    %3027 = vmatpush1.msra.mxu0 %v2882
    %3028 = vmatprep.subr.mxu0 0.0
    %3029 = vmatpush1.msra.mxu0 %v2887
    %3030 = vmatprep.subr.mxu0 0.0
    %3031 = vmatpush1.msra.mxu0 %v2892
    %3032 = vmatprep.subr.mxu0 0.0
    %3033 = vmatpush1.msra.mxu0 %v2897
    %3034 = vmatprep.subr.mxu0 0.0
    %3035 = vmatpush1.msra.mxu0 %v2902
    %3036 = vmatprep.subr.mxu0 0.0
    %3037 = vmatpush1.msra.mxu0 %v2907
    %3038 = vmatprep.subr.mxu0 0.0
    %3039 = vmatpush1.msra.mxu0 %v2912
    %3040 = vmatprep.subr.mxu0 0.0
    %3041 = vmatpush1.msra.mxu0 %v2917
    %3042 = vmatprep.subr.mxu0 0.0
    %3043 = vmatpush1.msra.mxu0 %v2922
    %3044 = vmatprep.subr.mxu0 0.0
    %3045 = vmatpush1.msra.mxu0 %v2927
    %3046 = vmatprep.subr.mxu0 0.0
    %3047 = vmatpush1.msra.mxu0 %v2932
    %3048 = vmatprep.subr.mxu0 0.0
    %3049 = vmatpush1.msra.mxu0 %v2937
    %3050 = vmatprep.subr.mxu0 0.0
    %3051 = vmatpush1.msra.mxu0 %v2942
    %3052 = vmatprep.subr.mxu0 0.0
    %3053 = vmatpush1.msra.mxu0 %v2947
    %3054 = vmatprep.subr.mxu0 0.0
    %3055 = vmatpush1.msra.mxu0 %v2952
    %3056 = vmatprep.subr.mxu0 0.0
    %3057 = vmatpush1.msra.mxu0 %v2957
    %3058 = vmatprep.subr.mxu0 0.0
    %3059 = vmatpush1.msra.mxu0 %v2962
    %3060 = vmatprep.subr.mxu0 0.0
    %3061 = vmatpush1.msra.mxu0 %v2967
    %3062 = vmatprep.subr.mxu0 0.0
    %3063 = vmatpush1.msra.mxu0 %v2972
    %3064 = vmatprep.mubr.f32.mxu0 %v2985
    %3065 = vmatmul.mubr.f32.gmra.mrb[0].mxu0 %v2984
    %v3066 = vpop.f32.mrb[0].mxu0
    %v3067 = vadd.f32 0.0, %v3066
    %v3068 = vpop.f32.mrb[0].mxu0
    %3069 = vmatprep.mubr.f32.mxu0 %v2987
    %3070 = vmatmul.mubr.f32.gmra.mrb[0].mxu0 %v2986
    %v3071 = vpop.f32.mrb[0].mxu0
    %v3072 = vadd.f32 0.0, %v3071
    %v3073 = vpop.f32.mrb[0].mxu0
    %3074 = vmatprep.mubr.f32.mxu0 %v2989
    %3075 = vmatmul.mubr.f32.gmra.mrb[0].mxu0 %v2988
    %v3076 = vpop.f32.mrb[0].mxu0
    %v3077 = vadd.f32 0.0, %v3076
    %v3078 = vpop.f32.mrb[0].mxu0
    %3079 = vmatprep.mubr.f32.mxu0 %v2991
    %3080 = vmatmul.mubr.f32.gmra.mrb[0].mxu0 %v2990
    %v3081 = vpop.f32.mrb[0].mxu0
    %v3082 = vadd.f32 0.0, %v3081
    %v3083 = vpop.f32.mrb[0].mxu0
    %3084 = vmatprep.mubr.f32.mxu0 %v2993
    %3085 = vmatmul.mubr.f32.gmra.mrb[0].mxu0 %v2992
    %v3086 = vpop.f32.mrb[0].mxu0
    %v3087 = vadd.f32 0.0, %v3086
    %v3088 = vpop.f32.mrb[0].mxu0
    %3089 = vmatprep.mubr.f32.mxu0 %v2995
    %3090 = vmatmul.mubr.f32.gmra.mrb[0].mxu0 %v2994
    %v3091 = vpop.f32.mrb[0].mxu0
    %v3092 = vadd.f32 0.0, %v3091
    %v3093 = vpop.f32.mrb[0].mxu0
    %3094 = vmatprep.mubr.f32.mxu0 %v2997
    %3095 = vmatmul.mubr.f32.gmra.mrb[0].mxu0 %v2996
    %v3096 = vpop.f32.mrb[0].mxu0
    %v3097 = vadd.f32 0.0, %v3096
    %v3098 = vpop.f32.mrb[0].mxu0
    %3099 = vmatprep.mubr.f32.mxu0 %v2999
    %3100 = vmatmul.mubr.f32.gmra.mrb[0].mxu0 %v2998
    %v3101 = vpop.f32.mrb[0].mxu0
    %v3102 = vadd.f32 0.0, %v3101
    %v3103 = vpop.f32.mrb[0].mxu0
    %3104 = vdwg.mxu0
    %v3105 = vadd.f32 %v2737, %v3067
    %v3106 = vadd.f32 %v2738, %v3072
    %v3107 = vadd.f32 %v2739, %v3077
    %v3108 = vadd.f32 %v2740, %v3082
    %v3109 = vadd.f32 %v2741, %v3087
    %v3110 = vadd.f32 %v2742, %v3092
    %v3111 = vadd.f32 %v2743, %v3097
    %v3112 = vadd.f32 %v2744, %v3102
    %s3113 = scalar_lea.vmem %s2, 32
    %v3114 = vld [vmem:[%s3113] sm:$0xf]
    %v3116 = vsel %vm187, %v3114, 0
    %3118 = vmatprep.subr.mxu0 0.0
    %3119 = vmatpush1.msra.mxu0 %v3116
    %3120 = vmatprep.subr.mxu0 0.0
    %3121 = vmatpush1.msra.mxu0 0.0
    %3122 = vmatprep.subr.mxu0 0.0
    %3123 = vmatpush1.msra.mxu0 0.0
    %3124 = vmatprep.subr.mxu0 0.0
    %3125 = vmatpush1.msra.mxu0 0.0
    %3126 = vmatprep.subr.mxu0 0.0
    %3127 = vmatpush1.msra.mxu0 0.0
    %3128 = vmatprep.subr.mxu0 0.0
    %3129 = vmatpush1.msra.mxu0 0.0
    %3130 = vmatprep.subr.mxu0 0.0
    %3131 = vmatpush1.msra.mxu0 0.0
    %3132 = vmatprep.subr.mxu0 0.0
    %3133 = vmatpush1.msra.mxu0 0.0
    %3134 = vmatprep.subr.mxu0 0.0
    %3135 = vmatpush1.msra.mxu0 0.0
    %3136 = vmatprep.subr.mxu0 0.0
    %3137 = vmatpush1.msra.mxu0 0.0
    %3138 = vmatprep.subr.mxu0 0.0
    %3139 = vmatpush1.msra.mxu0 0.0
    %3140 = vmatprep.subr.mxu0 0.0
    %3141 = vmatpush1.msra.mxu0 0.0
    %3142 = vmatprep.subr.mxu0 0.0
    %3143 = vmatpush1.msra.mxu0 0.0
    %3144 = vmatprep.subr.mxu0 0.0
    %3145 = vmatpush1.msra.mxu0 0.0
    %3146 = vmatprep.subr.mxu0 0.0
    %3147 = vmatpush1.msra.mxu0 0.0
    %3148 = vmatprep.subr.mxu0 0.0
    %3149 = vmatpush1.msra.mxu0 0.0
    %3150 = vmatprep.subr.mxu0 0.0
    %3151 = vmatpush1.msra.mxu0 0.0
    %3152 = vmatprep.subr.mxu0 0.0
    %3153 = vmatpush1.msra.mxu0 0.0
    %3154 = vmatprep.subr.mxu0 0.0
    %3155 = vmatpush1.msra.mxu0 0.0
    %3156 = vmatprep.subr.mxu0 0.0
    %3157 = vmatpush1.msra.mxu0 0.0
    %3158 = vmatprep.subr.mxu0 0.0
    %3159 = vmatpush1.msra.mxu0 0.0
    %3160 = vmatprep.subr.mxu0 0.0
    %3161 = vmatpush1.msra.mxu0 0.0
    %3162 = vmatprep.subr.mxu0 0.0
    %3163 = vmatpush1.msra.mxu0 0.0
    %3164 = vmatprep.subr.mxu0 0.0
    %3165 = vmatpush1.msra.mxu0 0.0
    %3166 = vmatprep.subr.mxu0 0.0
    %3167 = vmatpush1.msra.mxu0 0.0
    %3168 = vmatprep.subr.mxu0 0.0
    %3169 = vmatpush1.msra.mxu0 0.0
    %3170 = vmatprep.subr.mxu0 0.0
    %3171 = vmatpush1.msra.mxu0 0.0
    %3172 = vmatprep.subr.mxu0 0.0
    %3173 = vmatpush1.msra.mxu0 0.0
    %3174 = vmatprep.subr.mxu0 0.0
    %3175 = vmatpush1.msra.mxu0 0.0
    %3176 = vmatprep.subr.mxu0 0.0
    %3177 = vmatpush1.msra.mxu0 0.0
    %3178 = vmatprep.subr.mxu0 0.0
    %3179 = vmatpush1.msra.mxu0 0.0
    %3180 = vmatprep.subr.mxu0 0.0
    %3181 = vmatpush1.msra.mxu0 0.0
    %3182 = vmatprep.mubr.f32.mxu0 0.0
    %3183 = vmatmul.mubr.f32.gmra.mrb[0].mxu0 %v92
    %v3184 = vpop.f32.mrb[0].mxu0
    %v3185 = vadd.f32 0.0, %v3184
    %v3186 = vpop.f32.mrb[0].mxu0
    %3187 = vmatprep.mubr.f32.mxu0 0.0
    %3188 = vmatmul.mubr.f32.gmra.mrb[0].mxu0 %v95
    %v3189 = vpop.f32.mrb[0].mxu0
    %v3190 = vadd.f32 0.0, %v3189
    %v3191 = vpop.f32.mrb[0].mxu0
    %3192 = vmatprep.mubr.f32.mxu0 0.0
    %3193 = vmatmul.mubr.f32.gmra.mrb[0].mxu0 %v98
    %v3194 = vpop.f32.mrb[0].mxu0
    %v3195 = vadd.f32 0.0, %v3194
    %v3196 = vpop.f32.mrb[0].mxu0
    %3197 = vmatprep.mubr.f32.mxu0 0.0
    %3198 = vmatmul.mubr.f32.gmra.mrb[0].mxu0 %v101
    %v3199 = vpop.f32.mrb[0].mxu0
    %v3200 = vadd.f32 0.0, %v3199
    %v3201 = vpop.f32.mrb[0].mxu0
    %3202 = vmatprep.mubr.f32.mxu0 0.0
    %3203 = vmatmul.mubr.f32.gmra.mrb[0].mxu0 %v104
    %v3204 = vpop.f32.mrb[0].mxu0
    %v3205 = vadd.f32 0.0, %v3204
    %v3206 = vpop.f32.mrb[0].mxu0
    %3207 = vmatprep.mubr.f32.mxu0 0.0
    %3208 = vmatmul.mubr.f32.gmra.mrb[0].mxu0 %v107
    %v3209 = vpop.f32.mrb[0].mxu0
    %v3210 = vadd.f32 0.0, %v3209
    %v3211 = vpop.f32.mrb[0].mxu0
    %3212 = vmatprep.mubr.f32.mxu0 0.0
    %3213 = vmatmul.mubr.f32.gmra.mrb[0].mxu0 %v110
    %v3214 = vpop.f32.mrb[0].mxu0
    %v3215 = vadd.f32 0.0, %v3214
    %v3216 = vpop.f32.mrb[0].mxu0
    %3217 = vmatprep.mubr.f32.mxu0 0.0
    %3218 = vmatmul.mubr.f32.gmra.mrb[0].mxu0 %v113
    %v3219 = vpop.f32.mrb[0].mxu0
    %v3220 = vadd.f32 0.0, %v3219
    %v3221 = vpop.f32.mrb[0].mxu0
    %3222 = vmatprep.mubr.f32.mxu0 0.0
    %3223 = vmatmul.mubr.f32.gmra.mrb[0].mxu0 %v116
    %v3224 = vpop.f32.mrb[0].mxu0
    %v3225 = vadd.f32 0.0, %v3224
    %v3226 = vpop.f32.mrb[0].mxu0
    %3227 = vmatprep.mubr.f32.mxu0 0.0
    %3228 = vmatmul.mubr.f32.gmra.mrb[0].mxu0 %v119
    %v3229 = vpop.f32.mrb[0].mxu0
    %v3230 = vadd.f32 0.0, %v3229
    %v3231 = vpop.f32.mrb[0].mxu0
    %3232 = vmatprep.mubr.f32.mxu0 0.0
    %3233 = vmatmul.mubr.f32.gmra.mrb[0].mxu0 %v122
    %v3234 = vpop.f32.mrb[0].mxu0
    %v3235 = vadd.f32 0.0, %v3234
    %v3236 = vpop.f32.mrb[0].mxu0
    %3237 = vmatprep.mubr.f32.mxu0 0.0
    %3238 = vmatmul.mubr.f32.gmra.mrb[0].mxu0 %v125
    %v3239 = vpop.f32.mrb[0].mxu0
    %v3240 = vadd.f32 0.0, %v3239
    %v3241 = vpop.f32.mrb[0].mxu0
    %3242 = vmatprep.mubr.f32.mxu0 0.0
    %3243 = vmatmul.mubr.f32.gmra.mrb[0].mxu0 %v128
    %v3244 = vpop.f32.mrb[0].mxu0
    %v3245 = vadd.f32 0.0, %v3244
    %v3246 = vpop.f32.mrb[0].mxu0
    %3247 = vmatprep.mubr.f32.mxu0 0.0
    %3248 = vmatmul.mubr.f32.gmra.mrb[0].mxu0 %v131
    %v3249 = vpop.f32.mrb[0].mxu0
    %v3250 = vadd.f32 0.0, %v3249
    %v3251 = vpop.f32.mrb[0].mxu0
    %3252 = vmatprep.mubr.f32.mxu0 0.0
    %3253 = vmatmul.mubr.f32.gmra.mrb[0].mxu0 %v134
    %v3254 = vpop.f32.mrb[0].mxu0
    %v3255 = vadd.f32 0.0, %v3254
    %v3256 = vpop.f32.mrb[0].mxu0
    %3257 = vmatprep.mubr.f32.mxu0 0.0
    %3258 = vmatmul.mubr.f32.gmra.mrb[0].mxu0 %v137
    %v3259 = vpop.f32.mrb[0].mxu0
    %v3260 = vadd.f32 0.0, %v3259
    %v3261 = vpop.f32.mrb[0].mxu0
    %3262 = vmatprep.mubr.f32.mxu0 0.0
    %3263 = vmatmul.mubr.f32.gmra.mrb[0].mxu0 %v140
    %v3264 = vpop.f32.mrb[0].mxu0
    %v3265 = vadd.f32 0.0, %v3264
    %v3266 = vpop.f32.mrb[0].mxu0
    %3267 = vmatprep.mubr.f32.mxu0 0.0
    %3268 = vmatmul.mubr.f32.gmra.mrb[0].mxu0 %v143
    %v3269 = vpop.f32.mrb[0].mxu0
    %v3270 = vadd.f32 0.0, %v3269
    %v3271 = vpop.f32.mrb[0].mxu0
    %3272 = vmatprep.mubr.f32.mxu0 0.0
    %3273 = vmatmul.mubr.f32.gmra.mrb[0].mxu0 %v146
    %v3274 = vpop.f32.mrb[0].mxu0
    %v3275 = vadd.f32 0.0, %v3274
    %v3276 = vpop.f32.mrb[0].mxu0
    %3277 = vmatprep.mubr.f32.mxu0 0.0
    %3278 = vmatmul.mubr.f32.gmra.mrb[0].mxu0 %v149
    %v3279 = vpop.f32.mrb[0].mxu0
    %v3280 = vadd.f32 0.0, %v3279
    %v3281 = vpop.f32.mrb[0].mxu0
    %3282 = vmatprep.mubr.f32.mxu0 0.0
    %3283 = vmatmul.mubr.f32.gmra.mrb[0].mxu0 %v152
    %v3284 = vpop.f32.mrb[0].mxu0
    %v3285 = vadd.f32 0.0, %v3284
    %v3286 = vpop.f32.mrb[0].mxu0
    %3287 = vmatprep.mubr.f32.mxu0 0.0
    %3288 = vmatmul.mubr.f32.gmra.mrb[0].mxu0 %v155
    %v3289 = vpop.f32.mrb[0].mxu0
    %v3290 = vadd.f32 0.0, %v3289
    %v3291 = vpop.f32.mrb[0].mxu0
    %3292 = vmatprep.mubr.f32.mxu0 0.0
    %3293 = vmatmul.mubr.f32.gmra.mrb[0].mxu0 %v158
    %v3294 = vpop.f32.mrb[0].mxu0
    %v3295 = vadd.f32 0.0, %v3294
    %v3296 = vpop.f32.mrb[0].mxu0
    %3297 = vmatprep.mubr.f32.mxu0 0.0
    %3298 = vmatmul.mubr.f32.gmra.mrb[0].mxu0 %v161
    %v3299 = vpop.f32.mrb[0].mxu0
    %v3300 = vadd.f32 0.0, %v3299
    %v3301 = vpop.f32.mrb[0].mxu0
    %3302 = vmatprep.mubr.f32.mxu0 0.0
    %3303 = vmatmul.mubr.f32.gmra.mrb[0].mxu0 %v164
    %v3304 = vpop.f32.mrb[0].mxu0
    %v3305 = vadd.f32 0.0, %v3304
    %v3306 = vpop.f32.mrb[0].mxu0
    %3307 = vmatprep.mubr.f32.mxu0 0.0
    %3308 = vmatmul.mubr.f32.gmra.mrb[0].mxu0 %v167
    %v3309 = vpop.f32.mrb[0].mxu0
    %v3310 = vadd.f32 0.0, %v3309
    %v3311 = vpop.f32.mrb[0].mxu0
    %3312 = vmatprep.mubr.f32.mxu0 0.0
    %3313 = vmatmul.mubr.f32.gmra.mrb[0].mxu0 %v170
    %v3314 = vpop.f32.mrb[0].mxu0
    %v3315 = vadd.f32 0.0, %v3314
    %v3316 = vpop.f32.mrb[0].mxu0
    %3317 = vmatprep.mubr.f32.mxu0 0.0
    %3318 = vmatmul.mubr.f32.gmra.mrb[0].mxu0 %v173
    %v3319 = vpop.f32.mrb[0].mxu0
    %v3320 = vadd.f32 0.0, %v3319
    %v3321 = vpop.f32.mrb[0].mxu0
    %3322 = vmatprep.mubr.f32.mxu0 0.0
    %3323 = vmatmul.mubr.f32.gmra.mrb[0].mxu0 %v176
    %v3324 = vpop.f32.mrb[0].mxu0
    %v3325 = vadd.f32 0.0, %v3324
    %v3326 = vpop.f32.mrb[0].mxu0
    %3327 = vmatprep.mubr.f32.mxu0 0.0
    %3328 = vmatmul.mubr.f32.gmra.mrb[0].mxu0 %v179
    %v3329 = vpop.f32.mrb[0].mxu0
    %v3330 = vadd.f32 0.0, %v3329
    %v3331 = vpop.f32.mrb[0].mxu0
    %3332 = vmatprep.mubr.f32.mxu0 0.0
    %3333 = vmatmul.mubr.f32.gmra.mrb[0].mxu0 %v182
    %v3334 = vpop.f32.mrb[0].mxu0
    %v3335 = vadd.f32 0.0, %v3334
    %v3336 = vpop.f32.mrb[0].mxu0
    %3337 = vmatprep.mubr.f32.mxu0 0.0
    %3338 = vmatmul.mubr.f32.gmra.mrb[0].mxu0 %v185
    %v3339 = vpop.f32.mrb[0].mxu0
    %v3340 = vadd.f32 0.0, %v3339
    %v3341 = vpop.f32.mrb[0].mxu0
    %3342 = vdwg.mxu0
    %s3343 = scalar_lea.vmem [#allocation2], 512
    %v3344 = vld [vmem:[%s3343] sm:$0xff]
    %v3345 = vld [vmem:[%s3343 + $0x8] sm:$0xff]
    %v3346 = vld [vmem:[%s3343 + $0x10] sm:$0xff]
    %v3347 = vld [vmem:[%s3343 + $0x18] sm:$0xff]
    %v3348 = vld [vmem:[%s3343 + $0x20] sm:$0xff]
    %v3349 = vld [vmem:[%s3343 + $0x28] sm:$0xff]
    %v3350 = vld [vmem:[%s3343 + $0x30] sm:$0xff]
    %v3351 = vld [vmem:[%s3343 + $0x38] sm:$0xff]
    %v3352 = vunpack.c.l.bf16 %v3344
    %v3353 = vunpack.c.h.bf16 %v3344
    %v3354 = vunpack.c.l.bf16 %v3345
    %v3355 = vunpack.c.h.bf16 %v3345
    %v3356 = vunpack.c.l.bf16 %v3346
    %v3357 = vunpack.c.h.bf16 %v3346
    %v3358 = vunpack.c.l.bf16 %v3347
    %v3359 = vunpack.c.h.bf16 %v3347
    %v3360 = vunpack.c.l.bf16 %v3348
    %v3361 = vunpack.c.h.bf16 %v3348
    %v3362 = vunpack.c.l.bf16 %v3349
    %v3363 = vunpack.c.h.bf16 %v3349
    %v3364 = vunpack.c.l.bf16 %v3350
    %v3365 = vunpack.c.h.bf16 %v3350
    %v3366 = vunpack.c.l.bf16 %v3351
    %v3367 = vunpack.c.h.bf16 %v3351
    %3368 = vmatprep.subr.mxu0 0.0
    %3369 = vmatpush1.msra.mxu0 %v3185
    %3370 = vmatprep.subr.mxu0 0.0
    %3371 = vmatpush1.msra.mxu0 %v3190
    %3372 = vmatprep.subr.mxu0 0.0
    %3373 = vmatpush1.msra.mxu0 %v3195
    %3374 = vmatprep.subr.mxu0 0.0
    %3375 = vmatpush1.msra.mxu0 %v3200
    %3376 = vmatprep.subr.mxu0 0.0
    %3377 = vmatpush1.msra.mxu0 %v3205
    %3378 = vmatprep.subr.mxu0 0.0
    %3379 = vmatpush1.msra.mxu0 %v3210
    %3380 = vmatprep.subr.mxu0 0.0
    %3381 = vmatpush1.msra.mxu0 %v3215
    %3382 = vmatprep.subr.mxu0 0.0
    %3383 = vmatpush1.msra.mxu0 %v3220
    %3384 = vmatprep.subr.mxu0 0.0
    %3385 = vmatpush1.msra.mxu0 %v3225
    %3386 = vmatprep.subr.mxu0 0.0
    %3387 = vmatpush1.msra.mxu0 %v3230
    %3388 = vmatprep.subr.mxu0 0.0
    %3389 = vmatpush1.msra.mxu0 %v3235
    %3390 = vmatprep.subr.mxu0 0.0
    %3391 = vmatpush1.msra.mxu0 %v3240
    %3392 = vmatprep.subr.mxu0 0.0
    %3393 = vmatpush1.msra.mxu0 %v3245
    %3394 = vmatprep.subr.mxu0 0.0
    %3395 = vmatpush1.msra.mxu0 %v3250
    %3396 = vmatprep.subr.mxu0 0.0
    %3397 = vmatpush1.msra.mxu0 %v3255
    %3398 = vmatprep.subr.mxu0 0.0
    %3399 = vmatpush1.msra.mxu0 %v3260
    %3400 = vmatprep.subr.mxu0 0.0
    %3401 = vmatpush1.msra.mxu0 %v3265
    %3402 = vmatprep.subr.mxu0 0.0
    %3403 = vmatpush1.msra.mxu0 %v3270
    %3404 = vmatprep.subr.mxu0 0.0
    %3405 = vmatpush1.msra.mxu0 %v3275
    %3406 = vmatprep.subr.mxu0 0.0
    %3407 = vmatpush1.msra.mxu0 %v3280
    %3408 = vmatprep.subr.mxu0 0.0
    %3409 = vmatpush1.msra.mxu0 %v3285
    %3410 = vmatprep.subr.mxu0 0.0
    %3411 = vmatpush1.msra.mxu0 %v3290
    %3412 = vmatprep.subr.mxu0 0.0
    %3413 = vmatpush1.msra.mxu0 %v3295
    %3414 = vmatprep.subr.mxu0 0.0
    %3415 = vmatpush1.msra.mxu0 %v3300
    %3416 = vmatprep.subr.mxu0 0.0
    %3417 = vmatpush1.msra.mxu0 %v3305
    %3418 = vmatprep.subr.mxu0 0.0
    %3419 = vmatpush1.msra.mxu0 %v3310
    %3420 = vmatprep.subr.mxu0 0.0
    %3421 = vmatpush1.msra.mxu0 %v3315
    %3422 = vmatprep.subr.mxu0 0.0
    %3423 = vmatpush1.msra.mxu0 %v3320
    %3424 = vmatprep.subr.mxu0 0.0
    %3425 = vmatpush1.msra.mxu0 %v3325
    %3426 = vmatprep.subr.mxu0 0.0
    %3427 = vmatpush1.msra.mxu0 %v3330
    %3428 = vmatprep.subr.mxu0 0.0
    %3429 = vmatpush1.msra.mxu0 %v3335
    %3430 = vmatprep.subr.mxu0 0.0
    %3431 = vmatpush1.msra.mxu0 %v3340
    %3432 = vmatprep.mubr.f32.mxu0 %v3353
    %3433 = vmatmul.mubr.f32.gmra.mrb[0].mxu0 %v3352
    %v3434 = vpop.f32.mrb[0].mxu0
    %v3435 = vadd.f32 0.0, %v3434
    %v3436 = vpop.f32.mrb[0].mxu0
    %3437 = vmatprep.mubr.f32.mxu0 %v3355
    %3438 = vmatmul.mubr.f32.gmra.mrb[0].mxu0 %v3354
    %v3439 = vpop.f32.mrb[0].mxu0
    %v3440 = vadd.f32 0.0, %v3439
    %v3441 = vpop.f32.mrb[0].mxu0
    %3442 = vmatprep.mubr.f32.mxu0 %v3357
    %3443 = vmatmul.mubr.f32.gmra.mrb[0].mxu0 %v3356
    %v3444 = vpop.f32.mrb[0].mxu0
    %v3445 = vadd.f32 0.0, %v3444
    %v3446 = vpop.f32.mrb[0].mxu0
    %3447 = vmatprep.mubr.f32.mxu0 %v3359
    %3448 = vmatmul.mubr.f32.gmra.mrb[0].mxu0 %v3358
    %v3449 = vpop.f32.mrb[0].mxu0
    %v3450 = vadd.f32 0.0, %v3449
    %v3451 = vpop.f32.mrb[0].mxu0
    %3452 = vmatprep.mubr.f32.mxu0 %v3361
    %3453 = vmatmul.mubr.f32.gmra.mrb[0].mxu0 %v3360
    %v3454 = vpop.f32.mrb[0].mxu0
    %v3455 = vadd.f32 0.0, %v3454
    %v3456 = vpop.f32.mrb[0].mxu0
    %3457 = vmatprep.mubr.f32.mxu0 %v3363
    %3458 = vmatmul.mubr.f32.gmra.mrb[0].mxu0 %v3362
    %v3459 = vpop.f32.mrb[0].mxu0
    %v3460 = vadd.f32 0.0, %v3459
    %v3461 = vpop.f32.mrb[0].mxu0
    %3462 = vmatprep.mubr.f32.mxu0 %v3365
    %3463 = vmatmul.mubr.f32.gmra.mrb[0].mxu0 %v3364
    %v3464 = vpop.f32.mrb[0].mxu0
    %v3465 = vadd.f32 0.0, %v3464
    %v3466 = vpop.f32.mrb[0].mxu0
    %3467 = vmatprep.mubr.f32.mxu0 %v3367
    %3468 = vmatmul.mubr.f32.gmra.mrb[0].mxu0 %v3366
    %v3469 = vpop.f32.mrb[0].mxu0
    %v3470 = vadd.f32 0.0, %v3469
    %v3471 = vpop.f32.mrb[0].mxu0
    %3472 = vdwg.mxu0
    %v3473 = vadd.f32 %v3105, %v3435
    %v3474 = vadd.f32 %v3106, %v3440
    %v3475 = vadd.f32 %v3107, %v3445
    %v3476 = vadd.f32 %v3108, %v3450
    %v3477 = vadd.f32 %v3109, %v3455
    %v3478 = vadd.f32 %v3110, %v3460
    %v3479 = vadd.f32 %v3111, %v3465
    %v3480 = vadd.f32 %v3112, %v3470
    %s3481 = scalar_lea.vmem %s2, 36
    %v3482 = vld [vmem:[%s3481] sm:$0xf]
    %v3484 = vsel %vm187, %v3482, 0
    %3486 = vmatprep.subr.mxu0 0.0
    %3487 = vmatpush1.msra.mxu0 %v3484
    %3488 = vmatprep.subr.mxu0 0.0
    %3489 = vmatpush1.msra.mxu0 0.0
    %3490 = vmatprep.subr.mxu0 0.0
    %3491 = vmatpush1.msra.mxu0 0.0
    %3492 = vmatprep.subr.mxu0 0.0
    %3493 = vmatpush1.msra.mxu0 0.0
    %3494 = vmatprep.subr.mxu0 0.0
    %3495 = vmatpush1.msra.mxu0 0.0
    %3496 = vmatprep.subr.mxu0 0.0
    %3497 = vmatpush1.msra.mxu0 0.0
    %3498 = vmatprep.subr.mxu0 0.0
    %3499 = vmatpush1.msra.mxu0 0.0
    %3500 = vmatprep.subr.mxu0 0.0
    %3501 = vmatpush1.msra.mxu0 0.0
    %3502 = vmatprep.subr.mxu0 0.0
    %3503 = vmatpush1.msra.mxu0 0.0
    %3504 = vmatprep.subr.mxu0 0.0
    %3505 = vmatpush1.msra.mxu0 0.0
    %3506 = vmatprep.subr.mxu0 0.0
    %3507 = vmatpush1.msra.mxu0 0.0
    %3508 = vmatprep.subr.mxu0 0.0
    %3509 = vmatpush1.msra.mxu0 0.0
    %3510 = vmatprep.subr.mxu0 0.0
    %3511 = vmatpush1.msra.mxu0 0.0
    %3512 = vmatprep.subr.mxu0 0.0
    %3513 = vmatpush1.msra.mxu0 0.0
    %3514 = vmatprep.subr.mxu0 0.0
    %3515 = vmatpush1.msra.mxu0 0.0
    %3516 = vmatprep.subr.mxu0 0.0
    %3517 = vmatpush1.msra.mxu0 0.0
    %3518 = vmatprep.subr.mxu0 0.0
    %3519 = vmatpush1.msra.mxu0 0.0
    %3520 = vmatprep.subr.mxu0 0.0
    %3521 = vmatpush1.msra.mxu0 0.0
    %3522 = vmatprep.subr.mxu0 0.0
    %3523 = vmatpush1.msra.mxu0 0.0
    %3524 = vmatprep.subr.mxu0 0.0
    %3525 = vmatpush1.msra.mxu0 0.0
    %3526 = vmatprep.subr.mxu0 0.0
    %3527 = vmatpush1.msra.mxu0 0.0
    %3528 = vmatprep.subr.mxu0 0.0
    %3529 = vmatpush1.msra.mxu0 0.0
    %3530 = vmatprep.subr.mxu0 0.0
    %3531 = vmatpush1.msra.mxu0 0.0
    %3532 = vmatprep.subr.mxu0 0.0
    %3533 = vmatpush1.msra.mxu0 0.0
    %3534 = vmatprep.subr.mxu0 0.0
    %3535 = vmatpush1.msra.mxu0 0.0
    %3536 = vmatprep.subr.mxu0 0.0
    %3537 = vmatpush1.msra.mxu0 0.0
    %3538 = vmatprep.subr.mxu0 0.0
    %3539 = vmatpush1.msra.mxu0 0.0
    %3540 = vmatprep.subr.mxu0 0.0
    %3541 = vmatpush1.msra.mxu0 0.0
    %3542 = vmatprep.subr.mxu0 0.0
    %3543 = vmatpush1.msra.mxu0 0.0
    %3544 = vmatprep.subr.mxu0 0.0
    %3545 = vmatpush1.msra.mxu0 0.0
    %3546 = vmatprep.subr.mxu0 0.0
    %3547 = vmatpush1.msra.mxu0 0.0
    %3548 = vmatprep.subr.mxu0 0.0
    %3549 = vmatpush1.msra.mxu0 0.0
    %3550 = vmatprep.mubr.f32.mxu0 0.0
    %3551 = vmatmul.mubr.f32.gmra.mrb[0].mxu0 %v92
    %v3552 = vpop.f32.mrb[0].mxu0
    %v3553 = vadd.f32 0.0, %v3552
    %v3554 = vpop.f32.mrb[0].mxu0
    %3555 = vmatprep.mubr.f32.mxu0 0.0
    %3556 = vmatmul.mubr.f32.gmra.mrb[0].mxu0 %v95
    %v3557 = vpop.f32.mrb[0].mxu0
    %v3558 = vadd.f32 0.0, %v3557
    %v3559 = vpop.f32.mrb[0].mxu0
    %3560 = vmatprep.mubr.f32.mxu0 0.0
    %3561 = vmatmul.mubr.f32.gmra.mrb[0].mxu0 %v98
    %v3562 = vpop.f32.mrb[0].mxu0
    %v3563 = vadd.f32 0.0, %v3562
    %v3564 = vpop.f32.mrb[0].mxu0
    %3565 = vmatprep.mubr.f32.mxu0 0.0
    %3566 = vmatmul.mubr.f32.gmra.mrb[0].mxu0 %v101
    %v3567 = vpop.f32.mrb[0].mxu0
    %v3568 = vadd.f32 0.0, %v3567
    %v3569 = vpop.f32.mrb[0].mxu0
    %3570 = vmatprep.mubr.f32.mxu0 0.0
    %3571 = vmatmul.mubr.f32.gmra.mrb[0].mxu0 %v104
    %v3572 = vpop.f32.mrb[0].mxu0
    %v3573 = vadd.f32 0.0, %v3572
    %v3574 = vpop.f32.mrb[0].mxu0
    %3575 = vmatprep.mubr.f32.mxu0 0.0
    %3576 = vmatmul.mubr.f32.gmra.mrb[0].mxu0 %v107
    %v3577 = vpop.f32.mrb[0].mxu0
    %v3578 = vadd.f32 0.0, %v3577
    %v3579 = vpop.f32.mrb[0].mxu0
    %3580 = vmatprep.mubr.f32.mxu0 0.0
    %3581 = vmatmul.mubr.f32.gmra.mrb[0].mxu0 %v110
    %v3582 = vpop.f32.mrb[0].mxu0
    %v3583 = vadd.f32 0.0, %v3582
    %v3584 = vpop.f32.mrb[0].mxu0
    %3585 = vmatprep.mubr.f32.mxu0 0.0
    %3586 = vmatmul.mubr.f32.gmra.mrb[0].mxu0 %v113
    %v3587 = vpop.f32.mrb[0].mxu0
    %v3588 = vadd.f32 0.0, %v3587
    %v3589 = vpop.f32.mrb[0].mxu0
    %3590 = vmatprep.mubr.f32.mxu0 0.0
    %3591 = vmatmul.mubr.f32.gmra.mrb[0].mxu0 %v116
    %v3592 = vpop.f32.mrb[0].mxu0
    %v3593 = vadd.f32 0.0, %v3592
    %v3594 = vpop.f32.mrb[0].mxu0
    %3595 = vmatprep.mubr.f32.mxu0 0.0
    %3596 = vmatmul.mubr.f32.gmra.mrb[0].mxu0 %v119
    %v3597 = vpop.f32.mrb[0].mxu0
    %v3598 = vadd.f32 0.0, %v3597
    %v3599 = vpop.f32.mrb[0].mxu0
    %3600 = vmatprep.mubr.f32.mxu0 0.0
    %3601 = vmatmul.mubr.f32.gmra.mrb[0].mxu0 %v122
    %v3602 = vpop.f32.mrb[0].mxu0
    %v3603 = vadd.f32 0.0, %v3602
    %v3604 = vpop.f32.mrb[0].mxu0
    %3605 = vmatprep.mubr.f32.mxu0 0.0
    %3606 = vmatmul.mubr.f32.gmra.mrb[0].mxu0 %v125
    %v3607 = vpop.f32.mrb[0].mxu0
    %v3608 = vadd.f32 0.0, %v3607
    %v3609 = vpop.f32.mrb[0].mxu0
    %3610 = vmatprep.mubr.f32.mxu0 0.0
    %3611 = vmatmul.mubr.f32.gmra.mrb[0].mxu0 %v128
    %v3612 = vpop.f32.mrb[0].mxu0
    %v3613 = vadd.f32 0.0, %v3612
    %v3614 = vpop.f32.mrb[0].mxu0
    %3615 = vmatprep.mubr.f32.mxu0 0.0
    %3616 = vmatmul.mubr.f32.gmra.mrb[0].mxu0 %v131
    %v3617 = vpop.f32.mrb[0].mxu0
    %v3618 = vadd.f32 0.0, %v3617
    %v3619 = vpop.f32.mrb[0].mxu0
    %3620 = vmatprep.mubr.f32.mxu0 0.0
    %3621 = vmatmul.mubr.f32.gmra.mrb[0].mxu0 %v134
    %v3622 = vpop.f32.mrb[0].mxu0
    %v3623 = vadd.f32 0.0, %v3622
    %v3624 = vpop.f32.mrb[0].mxu0
    %3625 = vmatprep.mubr.f32.mxu0 0.0
    %3626 = vmatmul.mubr.f32.gmra.mrb[0].mxu0 %v137
    %v3627 = vpop.f32.mrb[0].mxu0
    %v3628 = vadd.f32 0.0, %v3627
    %v3629 = vpop.f32.mrb[0].mxu0
    %3630 = vmatprep.mubr.f32.mxu0 0.0
    %3631 = vmatmul.mubr.f32.gmra.mrb[0].mxu0 %v140
    %v3632 = vpop.f32.mrb[0].mxu0
    %v3633 = vadd.f32 0.0, %v3632
    %v3634 = vpop.f32.mrb[0].mxu0
    %3635 = vmatprep.mubr.f32.mxu0 0.0
    %3636 = vmatmul.mubr.f32.gmra.mrb[0].mxu0 %v143
    %v3637 = vpop.f32.mrb[0].mxu0
    %v3638 = vadd.f32 0.0, %v3637
    %v3639 = vpop.f32.mrb[0].mxu0
    %3640 = vmatprep.mubr.f32.mxu0 0.0
    %3641 = vmatmul.mubr.f32.gmra.mrb[0].mxu0 %v146
    %v3642 = vpop.f32.mrb[0].mxu0
    %v3643 = vadd.f32 0.0, %v3642
    %v3644 = vpop.f32.mrb[0].mxu0
    %3645 = vmatprep.mubr.f32.mxu0 0.0
    %3646 = vmatmul.mubr.f32.gmra.mrb[0].mxu0 %v149
    %v3647 = vpop.f32.mrb[0].mxu0
    %v3648 = vadd.f32 0.0, %v3647
    %v3649 = vpop.f32.mrb[0].mxu0
    %3650 = vmatprep.mubr.f32.mxu0 0.0
    %3651 = vmatmul.mubr.f32.gmra.mrb[0].mxu0 %v152
    %v3652 = vpop.f32.mrb[0].mxu0
    %v3653 = vadd.f32 0.0, %v3652
    %v3654 = vpop.f32.mrb[0].mxu0
    %3655 = vmatprep.mubr.f32.mxu0 0.0
    %3656 = vmatmul.mubr.f32.gmra.mrb[0].mxu0 %v155
    %v3657 = vpop.f32.mrb[0].mxu0
    %v3658 = vadd.f32 0.0, %v3657
    %v3659 = vpop.f32.mrb[0].mxu0
    %3660 = vmatprep.mubr.f32.mxu0 0.0
    %3661 = vmatmul.mubr.f32.gmra.mrb[0].mxu0 %v158
    %v3662 = vpop.f32.mrb[0].mxu0
    %v3663 = vadd.f32 0.0, %v3662
    %v3664 = vpop.f32.mrb[0].mxu0
    %3665 = vmatprep.mubr.f32.mxu0 0.0
    %3666 = vmatmul.mubr.f32.gmra.mrb[0].mxu0 %v161
    %v3667 = vpop.f32.mrb[0].mxu0
    %v3668 = vadd.f32 0.0, %v3667
    %v3669 = vpop.f32.mrb[0].mxu0
    %3670 = vmatprep.mubr.f32.mxu0 0.0
    %3671 = vmatmul.mubr.f32.gmra.mrb[0].mxu0 %v164
    %v3672 = vpop.f32.mrb[0].mxu0
    %v3673 = vadd.f32 0.0, %v3672
    %v3674 = vpop.f32.mrb[0].mxu0
    %3675 = vmatprep.mubr.f32.mxu0 0.0
    %3676 = vmatmul.mubr.f32.gmra.mrb[0].mxu0 %v167
    %v3677 = vpop.f32.mrb[0].mxu0
    %v3678 = vadd.f32 0.0, %v3677
    %v3679 = vpop.f32.mrb[0].mxu0
    %3680 = vmatprep.mubr.f32.mxu0 0.0
    %3681 = vmatmul.mubr.f32.gmra.mrb[0].mxu0 %v170
    %v3682 = vpop.f32.mrb[0].mxu0
    %v3683 = vadd.f32 0.0, %v3682
    %v3684 = vpop.f32.mrb[0].mxu0
    %3685 = vmatprep.mubr.f32.mxu0 0.0
    %3686 = vmatmul.mubr.f32.gmra.mrb[0].mxu0 %v173
    %v3687 = vpop.f32.mrb[0].mxu0
    %v3688 = vadd.f32 0.0, %v3687
    %v3689 = vpop.f32.mrb[0].mxu0
    %3690 = vmatprep.mubr.f32.mxu0 0.0
    %3691 = vmatmul.mubr.f32.gmra.mrb[0].mxu0 %v176
    %v3692 = vpop.f32.mrb[0].mxu0
    %v3693 = vadd.f32 0.0, %v3692
    %v3694 = vpop.f32.mrb[0].mxu0
    %3695 = vmatprep.mubr.f32.mxu0 0.0
    %3696 = vmatmul.mubr.f32.gmra.mrb[0].mxu0 %v179
    %v3697 = vpop.f32.mrb[0].mxu0
    %v3698 = vadd.f32 0.0, %v3697
    %v3699 = vpop.f32.mrb[0].mxu0
    %3700 = vmatprep.mubr.f32.mxu0 0.0
    %3701 = vmatmul.mubr.f32.gmra.mrb[0].mxu0 %v182
    %v3702 = vpop.f32.mrb[0].mxu0
    %v3703 = vadd.f32 0.0, %v3702
    %v3704 = vpop.f32.mrb[0].mxu0
    %3705 = vmatprep.mubr.f32.mxu0 0.0
    %3706 = vmatmul.mubr.f32.gmra.mrb[0].mxu0 %v185
    %v3707 = vpop.f32.mrb[0].mxu0
    %v3708 = vadd.f32 0.0, %v3707
    %v3709 = vpop.f32.mrb[0].mxu0
    %3710 = vdwg.mxu0
    %s3711 = scalar_lea.vmem [#allocation2], 576
    %v3712 = vld [vmem:[%s3711] sm:$0xff]
    %v3713 = vld [vmem:[%s3711 + $0x8] sm:$0xff]
    %v3714 = vld [vmem:[%s3711 + $0x10] sm:$0xff]
    %v3715 = vld [vmem:[%s3711 + $0x18] sm:$0xff]
    %v3716 = vld [vmem:[%s3711 + $0x20] sm:$0xff]
    %v3717 = vld [vmem:[%s3711 + $0x28] sm:$0xff]
    %v3718 = vld [vmem:[%s3711 + $0x30] sm:$0xff]
    %v3719 = vld [vmem:[%s3711 + $0x38] sm:$0xff]
    %v3720 = vunpack.c.l.bf16 %v3712
    %v3721 = vunpack.c.h.bf16 %v3712
    %v3722 = vunpack.c.l.bf16 %v3713
    %v3723 = vunpack.c.h.bf16 %v3713
    %v3724 = vunpack.c.l.bf16 %v3714
    %v3725 = vunpack.c.h.bf16 %v3714
    %v3726 = vunpack.c.l.bf16 %v3715
    %v3727 = vunpack.c.h.bf16 %v3715
    %v3728 = vunpack.c.l.bf16 %v3716
    %v3729 = vunpack.c.h.bf16 %v3716
    %v3730 = vunpack.c.l.bf16 %v3717
    %v3731 = vunpack.c.h.bf16 %v3717
    %v3732 = vunpack.c.l.bf16 %v3718
    %v3733 = vunpack.c.h.bf16 %v3718
    %v3734 = vunpack.c.l.bf16 %v3719
    %v3735 = vunpack.c.h.bf16 %v3719
    %3736 = vmatprep.subr.mxu0 0.0
    %3737 = vmatpush1.msra.mxu0 %v3553
    %3738 = vmatprep.subr.mxu0 0.0
    %3739 = vmatpush1.msra.mxu0 %v3558
    %3740 = vmatprep.subr.mxu0 0.0
    %3741 = vmatpush1.msra.mxu0 %v3563
    %3742 = vmatprep.subr.mxu0 0.0
    %3743 = vmatpush1.msra.mxu0 %v3568
    %3744 = vmatprep.subr.mxu0 0.0
    %3745 = vmatpush1.msra.mxu0 %v3573
    %3746 = vmatprep.subr.mxu0 0.0
    %3747 = vmatpush1.msra.mxu0 %v3578
    %3748 = vmatprep.subr.mxu0 0.0
    %3749 = vmatpush1.msra.mxu0 %v3583
    %3750 = vmatprep.subr.mxu0 0.0
    %3751 = vmatpush1.msra.mxu0 %v3588
    %3752 = vmatprep.subr.mxu0 0.0
    %3753 = vmatpush1.msra.mxu0 %v3593
    %3754 = vmatprep.subr.mxu0 0.0
    %3755 = vmatpush1.msra.mxu0 %v3598
    %3756 = vmatprep.subr.mxu0 0.0
    %3757 = vmatpush1.msra.mxu0 %v3603
    %3758 = vmatprep.subr.mxu0 0.0
    %3759 = vmatpush1.msra.mxu0 %v3608
    %3760 = vmatprep.subr.mxu0 0.0
    %3761 = vmatpush1.msra.mxu0 %v3613
    %3762 = vmatprep.subr.mxu0 0.0
    %3763 = vmatpush1.msra.mxu0 %v3618
    %3764 = vmatprep.subr.mxu0 0.0
    %3765 = vmatpush1.msra.mxu0 %v3623
    %3766 = vmatprep.subr.mxu0 0.0
    %3767 = vmatpush1.msra.mxu0 %v3628
    %3768 = vmatprep.subr.mxu0 0.0
    %3769 = vmatpush1.msra.mxu0 %v3633
    %3770 = vmatprep.subr.mxu0 0.0
    %3771 = vmatpush1.msra.mxu0 %v3638
    %3772 = vmatprep.subr.mxu0 0.0
    %3773 = vmatpush1.msra.mxu0 %v3643
    %3774 = vmatprep.subr.mxu0 0.0
    %3775 = vmatpush1.msra.mxu0 %v3648
    %3776 = vmatprep.subr.mxu0 0.0
    %3777 = vmatpush1.msra.mxu0 %v3653
    %3778 = vmatprep.subr.mxu0 0.0
    %3779 = vmatpush1.msra.mxu0 %v3658
    %3780 = vmatprep.subr.mxu0 0.0
    %3781 = vmatpush1.msra.mxu0 %v3663
    %3782 = vmatprep.subr.mxu0 0.0
    %3783 = vmatpush1.msra.mxu0 %v3668
    %3784 = vmatprep.subr.mxu0 0.0
    %3785 = vmatpush1.msra.mxu0 %v3673
    %3786 = vmatprep.subr.mxu0 0.0
    %3787 = vmatpush1.msra.mxu0 %v3678
    %3788 = vmatprep.subr.mxu0 0.0
    %3789 = vmatpush1.msra.mxu0 %v3683
    %3790 = vmatprep.subr.mxu0 0.0
    %3791 = vmatpush1.msra.mxu0 %v3688
    %3792 = vmatprep.subr.mxu0 0.0
    %3793 = vmatpush1.msra.mxu0 %v3693
    %3794 = vmatprep.subr.mxu0 0.0
    %3795 = vmatpush1.msra.mxu0 %v3698
    %3796 = vmatprep.subr.mxu0 0.0
    %3797 = vmatpush1.msra.mxu0 %v3703
    %3798 = vmatprep.subr.mxu0 0.0
    %3799 = vmatpush1.msra.mxu0 %v3708
    %3800 = vmatprep.mubr.f32.mxu0 %v3721
    %3801 = vmatmul.mubr.f32.gmra.mrb[0].mxu0 %v3720
    %v3802 = vpop.f32.mrb[0].mxu0
    %v3803 = vadd.f32 0.0, %v3802
    %v3804 = vpop.f32.mrb[0].mxu0
    %3805 = vmatprep.mubr.f32.mxu0 %v3723
    %3806 = vmatmul.mubr.f32.gmra.mrb[0].mxu0 %v3722
    %v3807 = vpop.f32.mrb[0].mxu0
    %v3808 = vadd.f32 0.0, %v3807
    %v3809 = vpop.f32.mrb[0].mxu0
    %3810 = vmatprep.mubr.f32.mxu0 %v3725
    %3811 = vmatmul.mubr.f32.gmra.mrb[0].mxu0 %v3724
    %v3812 = vpop.f32.mrb[0].mxu0
    %v3813 = vadd.f32 0.0, %v3812
    %v3814 = vpop.f32.mrb[0].mxu0
    %3815 = vmatprep.mubr.f32.mxu0 %v3727
    %3816 = vmatmul.mubr.f32.gmra.mrb[0].mxu0 %v3726
    %v3817 = vpop.f32.mrb[0].mxu0
    %v3818 = vadd.f32 0.0, %v3817
    %v3819 = vpop.f32.mrb[0].mxu0
    %3820 = vmatprep.mubr.f32.mxu0 %v3729
    %3821 = vmatmul.mubr.f32.gmra.mrb[0].mxu0 %v3728
    %v3822 = vpop.f32.mrb[0].mxu0
    %v3823 = vadd.f32 0.0, %v3822
    %v3824 = vpop.f32.mrb[0].mxu0
    %3825 = vmatprep.mubr.f32.mxu0 %v3731
    %3826 = vmatmul.mubr.f32.gmra.mrb[0].mxu0 %v3730
    %v3827 = vpop.f32.mrb[0].mxu0
    %v3828 = vadd.f32 0.0, %v3827
    %v3829 = vpop.f32.mrb[0].mxu0
    %3830 = vmatprep.mubr.f32.mxu0 %v3733
    %3831 = vmatmul.mubr.f32.gmra.mrb[0].mxu0 %v3732
    %v3832 = vpop.f32.mrb[0].mxu0
    %v3833 = vadd.f32 0.0, %v3832
    %v3834 = vpop.f32.mrb[0].mxu0
    %3835 = vmatprep.mubr.f32.mxu0 %v3735
    %3836 = vmatmul.mubr.f32.gmra.mrb[0].mxu0 %v3734
    %v3837 = vpop.f32.mrb[0].mxu0
    %v3838 = vadd.f32 0.0, %v3837
    %v3839 = vpop.f32.mrb[0].mxu0
    %3840 = vdwg.mxu0
    %v3841 = vadd.f32 %v3473, %v3803
    %v3842 = vadd.f32 %v3474, %v3808
    %v3843 = vadd.f32 %v3475, %v3813
    %v3844 = vadd.f32 %v3476, %v3818
    %v3845 = vadd.f32 %v3477, %v3823
    %v3846 = vadd.f32 %v3478, %v3828
    %v3847 = vadd.f32 %v3479, %v3833
    %v3848 = vadd.f32 %v3480, %v3838
    %s3849 = scalar_lea.vmem %s2, 40
    %v3850 = vld [vmem:[%s3849] sm:$0xf]
    %v3852 = vsel %vm187, %v3850, 0
    %3854 = vmatprep.subr.mxu0 0.0
    %3855 = vmatpush1.msra.mxu0 %v3852
    %3856 = vmatprep.subr.mxu0 0.0
    %3857 = vmatpush1.msra.mxu0 0.0
    %3858 = vmatprep.subr.mxu0 0.0
    %3859 = vmatpush1.msra.mxu0 0.0
    %3860 = vmatprep.subr.mxu0 0.0
    %3861 = vmatpush1.msra.mxu0 0.0
    %3862 = vmatprep.subr.mxu0 0.0
    %3863 = vmatpush1.msra.mxu0 0.0
    %3864 = vmatprep.subr.mxu0 0.0
    %3865 = vmatpush1.msra.mxu0 0.0
    %3866 = vmatprep.subr.mxu0 0.0
    %3867 = vmatpush1.msra.mxu0 0.0
    %3868 = vmatprep.subr.mxu0 0.0
    %3869 = vmatpush1.msra.mxu0 0.0
    %3870 = vmatprep.subr.mxu0 0.0
    %3871 = vmatpush1.msra.mxu0 0.0
    %3872 = vmatprep.subr.mxu0 0.0
    %3873 = vmatpush1.msra.mxu0 0.0
    %3874 = vmatprep.subr.mxu0 0.0
    %3875 = vmatpush1.msra.mxu0 0.0
    %3876 = vmatprep.subr.mxu0 0.0
    %3877 = vmatpush1.msra.mxu0 0.0
    %3878 = vmatprep.subr.mxu0 0.0
    %3879 = vmatpush1.msra.mxu0 0.0
    %3880 = vmatprep.subr.mxu0 0.0
    %3881 = vmatpush1.msra.mxu0 0.0
    %3882 = vmatprep.subr.mxu0 0.0
    %3883 = vmatpush1.msra.mxu0 0.0
    %3884 = vmatprep.subr.mxu0 0.0
    %3885 = vmatpush1.msra.mxu0 0.0
    %3886 = vmatprep.subr.mxu0 0.0
    %3887 = vmatpush1.msra.mxu0 0.0
    %3888 = vmatprep.subr.mxu0 0.0
    %3889 = vmatpush1.msra.mxu0 0.0
    %3890 = vmatprep.subr.mxu0 0.0
    %3891 = vmatpush1.msra.mxu0 0.0
    %3892 = vmatprep.subr.mxu0 0.0
    %3893 = vmatpush1.msra.mxu0 0.0
    %3894 = vmatprep.subr.mxu0 0.0
    %3895 = vmatpush1.msra.mxu0 0.0
    %3896 = vmatprep.subr.mxu0 0.0
    %3897 = vmatpush1.msra.mxu0 0.0
    %3898 = vmatprep.subr.mxu0 0.0
    %3899 = vmatpush1.msra.mxu0 0.0
    %3900 = vmatprep.subr.mxu0 0.0
    %3901 = vmatpush1.msra.mxu0 0.0
    %3902 = vmatprep.subr.mxu0 0.0
    %3903 = vmatpush1.msra.mxu0 0.0
    %3904 = vmatprep.subr.mxu0 0.0
    %3905 = vmatpush1.msra.mxu0 0.0
    %3906 = vmatprep.subr.mxu0 0.0
    %3907 = vmatpush1.msra.mxu0 0.0
    %3908 = vmatprep.subr.mxu0 0.0
    %3909 = vmatpush1.msra.mxu0 0.0
    %3910 = vmatprep.subr.mxu0 0.0
    %3911 = vmatpush1.msra.mxu0 0.0
    %3912 = vmatprep.subr.mxu0 0.0
    %3913 = vmatpush1.msra.mxu0 0.0
    %3914 = vmatprep.subr.mxu0 0.0
    %3915 = vmatpush1.msra.mxu0 0.0
    %3916 = vmatprep.subr.mxu0 0.0
    %3917 = vmatpush1.msra.mxu0 0.0
    %3918 = vmatprep.mubr.f32.mxu0 0.0
    %3919 = vmatmul.mubr.f32.gmra.mrb[0].mxu0 %v92
    %v3920 = vpop.f32.mrb[0].mxu0
    %v3921 = vadd.f32 0.0, %v3920
    %v3922 = vpop.f32.mrb[0].mxu0
    %3923 = vmatprep.mubr.f32.mxu0 0.0
    %3924 = vmatmul.mubr.f32.gmra.mrb[0].mxu0 %v95
    %v3925 = vpop.f32.mrb[0].mxu0
    %v3926 = vadd.f32 0.0, %v3925
    %v3927 = vpop.f32.mrb[0].mxu0
    %3928 = vmatprep.mubr.f32.mxu0 0.0
    %3929 = vmatmul.mubr.f32.gmra.mrb[0].mxu0 %v98
    %v3930 = vpop.f32.mrb[0].mxu0
    %v3931 = vadd.f32 0.0, %v3930
    %v3932 = vpop.f32.mrb[0].mxu0
    %3933 = vmatprep.mubr.f32.mxu0 0.0
    %3934 = vmatmul.mubr.f32.gmra.mrb[0].mxu0 %v101
    %v3935 = vpop.f32.mrb[0].mxu0
    %v3936 = vadd.f32 0.0, %v3935
    %v3937 = vpop.f32.mrb[0].mxu0
    %3938 = vmatprep.mubr.f32.mxu0 0.0
    %3939 = vmatmul.mubr.f32.gmra.mrb[0].mxu0 %v104
    %v3940 = vpop.f32.mrb[0].mxu0
    %v3941 = vadd.f32 0.0, %v3940
    %v3942 = vpop.f32.mrb[0].mxu0
    %3943 = vmatprep.mubr.f32.mxu0 0.0
    %3944 = vmatmul.mubr.f32.gmra.mrb[0].mxu0 %v107
    %v3945 = vpop.f32.mrb[0].mxu0
    %v3946 = vadd.f32 0.0, %v3945
    %v3947 = vpop.f32.mrb[0].mxu0
    %3948 = vmatprep.mubr.f32.mxu0 0.0
    %3949 = vmatmul.mubr.f32.gmra.mrb[0].mxu0 %v110
    %v3950 = vpop.f32.mrb[0].mxu0
    %v3951 = vadd.f32 0.0, %v3950
    %v3952 = vpop.f32.mrb[0].mxu0
    %3953 = vmatprep.mubr.f32.mxu0 0.0
    %3954 = vmatmul.mubr.f32.gmra.mrb[0].mxu0 %v113
    %v3955 = vpop.f32.mrb[0].mxu0
    %v3956 = vadd.f32 0.0, %v3955
    %v3957 = vpop.f32.mrb[0].mxu0
    %3958 = vmatprep.mubr.f32.mxu0 0.0
    %3959 = vmatmul.mubr.f32.gmra.mrb[0].mxu0 %v116
    %v3960 = vpop.f32.mrb[0].mxu0
    %v3961 = vadd.f32 0.0, %v3960
    %v3962 = vpop.f32.mrb[0].mxu0
    %3963 = vmatprep.mubr.f32.mxu0 0.0
    %3964 = vmatmul.mubr.f32.gmra.mrb[0].mxu0 %v119
    %v3965 = vpop.f32.mrb[0].mxu0
    %v3966 = vadd.f32 0.0, %v3965
    %v3967 = vpop.f32.mrb[0].mxu0
    %3968 = vmatprep.mubr.f32.mxu0 0.0
    %3969 = vmatmul.mubr.f32.gmra.mrb[0].mxu0 %v122
    %v3970 = vpop.f32.mrb[0].mxu0
    %v3971 = vadd.f32 0.0, %v3970
    %v3972 = vpop.f32.mrb[0].mxu0
    %3973 = vmatprep.mubr.f32.mxu0 0.0
    %3974 = vmatmul.mubr.f32.gmra.mrb[0].mxu0 %v125
    %v3975 = vpop.f32.mrb[0].mxu0
    %v3976 = vadd.f32 0.0, %v3975
    %v3977 = vpop.f32.mrb[0].mxu0
    %3978 = vmatprep.mubr.f32.mxu0 0.0
    %3979 = vmatmul.mubr.f32.gmra.mrb[0].mxu0 %v128
    %v3980 = vpop.f32.mrb[0].mxu0
    %v3981 = vadd.f32 0.0, %v3980
    %v3982 = vpop.f32.mrb[0].mxu0
    %3983 = vmatprep.mubr.f32.mxu0 0.0
    %3984 = vmatmul.mubr.f32.gmra.mrb[0].mxu0 %v131
    %v3985 = vpop.f32.mrb[0].mxu0
    %v3986 = vadd.f32 0.0, %v3985
    %v3987 = vpop.f32.mrb[0].mxu0
    %3988 = vmatprep.mubr.f32.mxu0 0.0
    %3989 = vmatmul.mubr.f32.gmra.mrb[0].mxu0 %v134
    %v3990 = vpop.f32.mrb[0].mxu0
    %v3991 = vadd.f32 0.0, %v3990
    %v3992 = vpop.f32.mrb[0].mxu0
    %3993 = vmatprep.mubr.f32.mxu0 0.0
    %3994 = vmatmul.mubr.f32.gmra.mrb[0].mxu0 %v137
    %v3995 = vpop.f32.mrb[0].mxu0
    %v3996 = vadd.f32 0.0, %v3995
    %v3997 = vpop.f32.mrb[0].mxu0
    %3998 = vmatprep.mubr.f32.mxu0 0.0
    %3999 = vmatmul.mubr.f32.gmra.mrb[0].mxu0 %v140
    %v4000 = vpop.f32.mrb[0].mxu0
    %v4001 = vadd.f32 0.0, %v4000
    %v4002 = vpop.f32.mrb[0].mxu0
    %4003 = vmatprep.mubr.f32.mxu0 0.0
    %4004 = vmatmul.mubr.f32.gmra.mrb[0].mxu0 %v143
    %v4005 = vpop.f32.mrb[0].mxu0
    %v4006 = vadd.f32 0.0, %v4005
    %v4007 = vpop.f32.mrb[0].mxu0
    %4008 = vmatprep.mubr.f32.mxu0 0.0
    %4009 = vmatmul.mubr.f32.gmra.mrb[0].mxu0 %v146
    %v4010 = vpop.f32.mrb[0].mxu0
    %v4011 = vadd.f32 0.0, %v4010
    %v4012 = vpop.f32.mrb[0].mxu0
    %4013 = vmatprep.mubr.f32.mxu0 0.0
    %4014 = vmatmul.mubr.f32.gmra.mrb[0].mxu0 %v149
    %v4015 = vpop.f32.mrb[0].mxu0
    %v4016 = vadd.f32 0.0, %v4015
    %v4017 = vpop.f32.mrb[0].mxu0
    %4018 = vmatprep.mubr.f32.mxu0 0.0
    %4019 = vmatmul.mubr.f32.gmra.mrb[0].mxu0 %v152
    %v4020 = vpop.f32.mrb[0].mxu0
    %v4021 = vadd.f32 0.0, %v4020
    %v4022 = vpop.f32.mrb[0].mxu0
    %4023 = vmatprep.mubr.f32.mxu0 0.0
    %4024 = vmatmul.mubr.f32.gmra.mrb[0].mxu0 %v155
    %v4025 = vpop.f32.mrb[0].mxu0
    %v4026 = vadd.f32 0.0, %v4025
    %v4027 = vpop.f32.mrb[0].mxu0
    %4028 = vmatprep.mubr.f32.mxu0 0.0
    %4029 = vmatmul.mubr.f32.gmra.mrb[0].mxu0 %v158
    %v4030 = vpop.f32.mrb[0].mxu0
    %v4031 = vadd.f32 0.0, %v4030
    %v4032 = vpop.f32.mrb[0].mxu0
    %4033 = vmatprep.mubr.f32.mxu0 0.0
    %4034 = vmatmul.mubr.f32.gmra.mrb[0].mxu0 %v161
    %v4035 = vpop.f32.mrb[0].mxu0
    %v4036 = vadd.f32 0.0, %v4035
    %v4037 = vpop.f32.mrb[0].mxu0
    %4038 = vmatprep.mubr.f32.mxu0 0.0
    %4039 = vmatmul.mubr.f32.gmra.mrb[0].mxu0 %v164
    %v4040 = vpop.f32.mrb[0].mxu0
    %v4041 = vadd.f32 0.0, %v4040
    %v4042 = vpop.f32.mrb[0].mxu0
    %4043 = vmatprep.mubr.f32.mxu0 0.0
    %4044 = vmatmul.mubr.f32.gmra.mrb[0].mxu0 %v167
    %v4045 = vpop.f32.mrb[0].mxu0
    %v4046 = vadd.f32 0.0, %v4045
    %v4047 = vpop.f32.mrb[0].mxu0
    %4048 = vmatprep.mubr.f32.mxu0 0.0
    %4049 = vmatmul.mubr.f32.gmra.mrb[0].mxu0 %v170
    %v4050 = vpop.f32.mrb[0].mxu0
    %v4051 = vadd.f32 0.0, %v4050
    %v4052 = vpop.f32.mrb[0].mxu0
    %4053 = vmatprep.mubr.f32.mxu0 0.0
    %4054 = vmatmul.mubr.f32.gmra.mrb[0].mxu0 %v173
    %v4055 = vpop.f32.mrb[0].mxu0
    %v4056 = vadd.f32 0.0, %v4055
    %v4057 = vpop.f32.mrb[0].mxu0
    %4058 = vmatprep.mubr.f32.mxu0 0.0
    %4059 = vmatmul.mubr.f32.gmra.mrb[0].mxu0 %v176
    %v4060 = vpop.f32.mrb[0].mxu0
    %v4061 = vadd.f32 0.0, %v4060
    %v4062 = vpop.f32.mrb[0].mxu0
    %4063 = vmatprep.mubr.f32.mxu0 0.0
    %4064 = vmatmul.mubr.f32.gmra.mrb[0].mxu0 %v179
    %v4065 = vpop.f32.mrb[0].mxu0
    %v4066 = vadd.f32 0.0, %v4065
    %v4067 = vpop.f32.mrb[0].mxu0
    %4068 = vmatprep.mubr.f32.mxu0 0.0
    %4069 = vmatmul.mubr.f32.gmra.mrb[0].mxu0 %v182
    %v4070 = vpop.f32.mrb[0].mxu0
    %v4071 = vadd.f32 0.0, %v4070
    %v4072 = vpop.f32.mrb[0].mxu0
    %4073 = vmatprep.mubr.f32.mxu0 0.0
    %4074 = vmatmul.mubr.f32.gmra.mrb[0].mxu0 %v185
    %v4075 = vpop.f32.mrb[0].mxu0
    %v4076 = vadd.f32 0.0, %v4075
    %v4077 = vpop.f32.mrb[0].mxu0
    %4078 = vdwg.mxu0
    %s4079 = scalar_lea.vmem [#allocation2], 640
    %v4080 = vld [vmem:[%s4079] sm:$0xff]
    %v4081 = vld [vmem:[%s4079 + $0x8] sm:$0xff]
    %v4082 = vld [vmem:[%s4079 + $0x10] sm:$0xff]
    %v4083 = vld [vmem:[%s4079 + $0x18] sm:$0xff]
    %v4084 = vld [vmem:[%s4079 + $0x20] sm:$0xff]
    %v4085 = vld [vmem:[%s4079 + $0x28] sm:$0xff]
    %v4086 = vld [vmem:[%s4079 + $0x30] sm:$0xff]
    %v4087 = vld [vmem:[%s4079 + $0x38] sm:$0xff]
    %v4088 = vunpack.c.l.bf16 %v4080
    %v4089 = vunpack.c.h.bf16 %v4080
    %v4090 = vunpack.c.l.bf16 %v4081
    %v4091 = vunpack.c.h.bf16 %v4081
    %v4092 = vunpack.c.l.bf16 %v4082
    %v4093 = vunpack.c.h.bf16 %v4082
    %v4094 = vunpack.c.l.bf16 %v4083
    %v4095 = vunpack.c.h.bf16 %v4083
    %v4096 = vunpack.c.l.bf16 %v4084
    %v4097 = vunpack.c.h.bf16 %v4084
    %v4098 = vunpack.c.l.bf16 %v4085
    %v4099 = vunpack.c.h.bf16 %v4085
    %v4100 = vunpack.c.l.bf16 %v4086
    %v4101 = vunpack.c.h.bf16 %v4086
    %v4102 = vunpack.c.l.bf16 %v4087
    %v4103 = vunpack.c.h.bf16 %v4087
    %4104 = vmatprep.subr.mxu0 0.0
    %4105 = vmatpush1.msra.mxu0 %v3921
    %4106 = vmatprep.subr.mxu0 0.0
    %4107 = vmatpush1.msra.mxu0 %v3926
    %4108 = vmatprep.subr.mxu0 0.0
    %4109 = vmatpush1.msra.mxu0 %v3931
    %4110 = vmatprep.subr.mxu0 0.0
    %4111 = vmatpush1.msra.mxu0 %v3936
    %4112 = vmatprep.subr.mxu0 0.0
    %4113 = vmatpush1.msra.mxu0 %v3941
    %4114 = vmatprep.subr.mxu0 0.0
    %4115 = vmatpush1.msra.mxu0 %v3946
    %4116 = vmatprep.subr.mxu0 0.0
    %4117 = vmatpush1.msra.mxu0 %v3951
    %4118 = vmatprep.subr.mxu0 0.0
    %4119 = vmatpush1.msra.mxu0 %v3956
    %4120 = vmatprep.subr.mxu0 0.0
    %4121 = vmatpush1.msra.mxu0 %v3961
    %4122 = vmatprep.subr.mxu0 0.0
    %4123 = vmatpush1.msra.mxu0 %v3966
    %4124 = vmatprep.subr.mxu0 0.0
    %4125 = vmatpush1.msra.mxu0 %v3971
    %4126 = vmatprep.subr.mxu0 0.0
    %4127 = vmatpush1.msra.mxu0 %v3976
    %4128 = vmatprep.subr.mxu0 0.0
    %4129 = vmatpush1.msra.mxu0 %v3981
    %4130 = vmatprep.subr.mxu0 0.0
    %4131 = vmatpush1.msra.mxu0 %v3986
    %4132 = vmatprep.subr.mxu0 0.0
    %4133 = vmatpush1.msra.mxu0 %v3991
    %4134 = vmatprep.subr.mxu0 0.0
    %4135 = vmatpush1.msra.mxu0 %v3996
    %4136 = vmatprep.subr.mxu0 0.0
    %4137 = vmatpush1.msra.mxu0 %v4001
    %4138 = vmatprep.subr.mxu0 0.0
    %4139 = vmatpush1.msra.mxu0 %v4006
    %4140 = vmatprep.subr.mxu0 0.0
    %4141 = vmatpush1.msra.mxu0 %v4011
    %4142 = vmatprep.subr.mxu0 0.0
    %4143 = vmatpush1.msra.mxu0 %v4016
    %4144 = vmatprep.subr.mxu0 0.0
    %4145 = vmatpush1.msra.mxu0 %v4021
    %4146 = vmatprep.subr.mxu0 0.0
    %4147 = vmatpush1.msra.mxu0 %v4026
    %4148 = vmatprep.subr.mxu0 0.0
    %4149 = vmatpush1.msra.mxu0 %v4031
    %4150 = vmatprep.subr.mxu0 0.0
    %4151 = vmatpush1.msra.mxu0 %v4036
    %4152 = vmatprep.subr.mxu0 0.0
    %4153 = vmatpush1.msra.mxu0 %v4041
    %4154 = vmatprep.subr.mxu0 0.0
    %4155 = vmatpush1.msra.mxu0 %v4046
    %4156 = vmatprep.subr.mxu0 0.0
    %4157 = vmatpush1.msra.mxu0 %v4051
    %4158 = vmatprep.subr.mxu0 0.0
    %4159 = vmatpush1.msra.mxu0 %v4056
    %4160 = vmatprep.subr.mxu0 0.0
    %4161 = vmatpush1.msra.mxu0 %v4061
    %4162 = vmatprep.subr.mxu0 0.0
    %4163 = vmatpush1.msra.mxu0 %v4066
    %4164 = vmatprep.subr.mxu0 0.0
    %4165 = vmatpush1.msra.mxu0 %v4071
    %4166 = vmatprep.subr.mxu0 0.0
    %4167 = vmatpush1.msra.mxu0 %v4076
    %4168 = vmatprep.mubr.f32.mxu0 %v4089
    %4169 = vmatmul.mubr.f32.gmra.mrb[0].mxu0 %v4088
    %v4170 = vpop.f32.mrb[0].mxu0
    %v4171 = vadd.f32 0.0, %v4170
    %v4172 = vpop.f32.mrb[0].mxu0
    %4173 = vmatprep.mubr.f32.mxu0 %v4091
    %4174 = vmatmul.mubr.f32.gmra.mrb[0].mxu0 %v4090
    %v4175 = vpop.f32.mrb[0].mxu0
    %v4176 = vadd.f32 0.0, %v4175
    %v4177 = vpop.f32.mrb[0].mxu0
    %4178 = vmatprep.mubr.f32.mxu0 %v4093
    %4179 = vmatmul.mubr.f32.gmra.mrb[0].mxu0 %v4092
    %v4180 = vpop.f32.mrb[0].mxu0
    %v4181 = vadd.f32 0.0, %v4180
    %v4182 = vpop.f32.mrb[0].mxu0
    %4183 = vmatprep.mubr.f32.mxu0 %v4095
    %4184 = vmatmul.mubr.f32.gmra.mrb[0].mxu0 %v4094
    %v4185 = vpop.f32.mrb[0].mxu0
    %v4186 = vadd.f32 0.0, %v4185
    %v4187 = vpop.f32.mrb[0].mxu0
    %4188 = vmatprep.mubr.f32.mxu0 %v4097
    %4189 = vmatmul.mubr.f32.gmra.mrb[0].mxu0 %v4096
    %v4190 = vpop.f32.mrb[0].mxu0
    %v4191 = vadd.f32 0.0, %v4190
    %v4192 = vpop.f32.mrb[0].mxu0
    %4193 = vmatprep.mubr.f32.mxu0 %v4099
    %4194 = vmatmul.mubr.f32.gmra.mrb[0].mxu0 %v4098
    %v4195 = vpop.f32.mrb[0].mxu0
    %v4196 = vadd.f32 0.0, %v4195
    %v4197 = vpop.f32.mrb[0].mxu0
    %4198 = vmatprep.mubr.f32.mxu0 %v4101
    %4199 = vmatmul.mubr.f32.gmra.mrb[0].mxu0 %v4100
    %v4200 = vpop.f32.mrb[0].mxu0
    %v4201 = vadd.f32 0.0, %v4200
    %v4202 = vpop.f32.mrb[0].mxu0
    %4203 = vmatprep.mubr.f32.mxu0 %v4103
    %4204 = vmatmul.mubr.f32.gmra.mrb[0].mxu0 %v4102
    %v4205 = vpop.f32.mrb[0].mxu0
    %v4206 = vadd.f32 0.0, %v4205
    %v4207 = vpop.f32.mrb[0].mxu0
    %4208 = vdwg.mxu0
    %v4209 = vadd.f32 %v3841, %v4171
    %v4210 = vadd.f32 %v3842, %v4176
    %v4211 = vadd.f32 %v3843, %v4181
    %v4212 = vadd.f32 %v3844, %v4186
    %v4213 = vadd.f32 %v3845, %v4191
    %v4214 = vadd.f32 %v3846, %v4196
    %v4215 = vadd.f32 %v3847, %v4201
    %v4216 = vadd.f32 %v3848, %v4206
    %s4217 = scalar_lea.vmem %s2, 44
    %v4218 = vld [vmem:[%s4217] sm:$0xf]
    %v4220 = vsel %vm187, %v4218, 0
    %4222 = vmatprep.subr.mxu0 0.0
    %4223 = vmatpush1.msra.mxu0 %v4220
    %4224 = vmatprep.subr.mxu0 0.0
    %4225 = vmatpush1.msra.mxu0 0.0
    %4226 = vmatprep.subr.mxu0 0.0
    %4227 = vmatpush1.msra.mxu0 0.0
    %4228 = vmatprep.subr.mxu0 0.0
    %4229 = vmatpush1.msra.mxu0 0.0
    %4230 = vmatprep.subr.mxu0 0.0
    %4231 = vmatpush1.msra.mxu0 0.0
    %4232 = vmatprep.subr.mxu0 0.0
    %4233 = vmatpush1.msra.mxu0 0.0
    %4234 = vmatprep.subr.mxu0 0.0
    %4235 = vmatpush1.msra.mxu0 0.0
    %4236 = vmatprep.subr.mxu0 0.0
    %4237 = vmatpush1.msra.mxu0 0.0
    %4238 = vmatprep.subr.mxu0 0.0
    %4239 = vmatpush1.msra.mxu0 0.0
    %4240 = vmatprep.subr.mxu0 0.0
    %4241 = vmatpush1.msra.mxu0 0.0
    %4242 = vmatprep.subr.mxu0 0.0
    %4243 = vmatpush1.msra.mxu0 0.0
    %4244 = vmatprep.subr.mxu0 0.0
    %4245 = vmatpush1.msra.mxu0 0.0
    %4246 = vmatprep.subr.mxu0 0.0
    %4247 = vmatpush1.msra.mxu0 0.0
    %4248 = vmatprep.subr.mxu0 0.0
    %4249 = vmatpush1.msra.mxu0 0.0
    %4250 = vmatprep.subr.mxu0 0.0
    %4251 = vmatpush1.msra.mxu0 0.0
    %4252 = vmatprep.subr.mxu0 0.0
    %4253 = vmatpush1.msra.mxu0 0.0
    %4254 = vmatprep.subr.mxu0 0.0
    %4255 = vmatpush1.msra.mxu0 0.0
    %4256 = vmatprep.subr.mxu0 0.0
    %4257 = vmatpush1.msra.mxu0 0.0
    %4258 = vmatprep.subr.mxu0 0.0
    %4259 = vmatpush1.msra.mxu0 0.0
    %4260 = vmatprep.subr.mxu0 0.0
    %4261 = vmatpush1.msra.mxu0 0.0
    %4262 = vmatprep.subr.mxu0 0.0
    %4263 = vmatpush1.msra.mxu0 0.0
    %4264 = vmatprep.subr.mxu0 0.0
    %4265 = vmatpush1.msra.mxu0 0.0
    %4266 = vmatprep.subr.mxu0 0.0
    %4267 = vmatpush1.msra.mxu0 0.0
    %4268 = vmatprep.subr.mxu0 0.0
    %4269 = vmatpush1.msra.mxu0 0.0
    %4270 = vmatprep.subr.mxu0 0.0
    %4271 = vmatpush1.msra.mxu0 0.0
    %4272 = vmatprep.subr.mxu0 0.0
    %4273 = vmatpush1.msra.mxu0 0.0
    %4274 = vmatprep.subr.mxu0 0.0
    %4275 = vmatpush1.msra.mxu0 0.0
    %4276 = vmatprep.subr.mxu0 0.0
    %4277 = vmatpush1.msra.mxu0 0.0
    %4278 = vmatprep.subr.mxu0 0.0
    %4279 = vmatpush1.msra.mxu0 0.0
    %4280 = vmatprep.subr.mxu0 0.0
    %4281 = vmatpush1.msra.mxu0 0.0
    %4282 = vmatprep.subr.mxu0 0.0
    %4283 = vmatpush1.msra.mxu0 0.0
    %4284 = vmatprep.subr.mxu0 0.0
    %4285 = vmatpush1.msra.mxu0 0.0
    %4286 = vmatprep.mubr.f32.mxu0 0.0
    %4287 = vmatmul.mubr.f32.gmra.mrb[0].mxu0 %v92
    %v4288 = vpop.f32.mrb[0].mxu0
    %v4289 = vadd.f32 0.0, %v4288
    %v4290 = vpop.f32.mrb[0].mxu0
    %4291 = vmatprep.mubr.f32.mxu0 0.0
    %4292 = vmatmul.mubr.f32.gmra.mrb[0].mxu0 %v95
    %v4293 = vpop.f32.mrb[0].mxu0
    %v4294 = vadd.f32 0.0, %v4293
    %v4295 = vpop.f32.mrb[0].mxu0
    %4296 = vmatprep.mubr.f32.mxu0 0.0
    %4297 = vmatmul.mubr.f32.gmra.mrb[0].mxu0 %v98
    %v4298 = vpop.f32.mrb[0].mxu0
    %v4299 = vadd.f32 0.0, %v4298
    %v4300 = vpop.f32.mrb[0].mxu0
    %4301 = vmatprep.mubr.f32.mxu0 0.0
    %4302 = vmatmul.mubr.f32.gmra.mrb[0].mxu0 %v101
    %v4303 = vpop.f32.mrb[0].mxu0
    %v4304 = vadd.f32 0.0, %v4303
    %v4305 = vpop.f32.mrb[0].mxu0
    %4306 = vmatprep.mubr.f32.mxu0 0.0
    %4307 = vmatmul.mubr.f32.gmra.mrb[0].mxu0 %v104
    %v4308 = vpop.f32.mrb[0].mxu0
    %v4309 = vadd.f32 0.0, %v4308
    %v4310 = vpop.f32.mrb[0].mxu0
    %4311 = vmatprep.mubr.f32.mxu0 0.0
    %4312 = vmatmul.mubr.f32.gmra.mrb[0].mxu0 %v107
    %v4313 = vpop.f32.mrb[0].mxu0
    %v4314 = vadd.f32 0.0, %v4313
    %v4315 = vpop.f32.mrb[0].mxu0
    %4316 = vmatprep.mubr.f32.mxu0 0.0
    %4317 = vmatmul.mubr.f32.gmra.mrb[0].mxu0 %v110
    %v4318 = vpop.f32.mrb[0].mxu0
    %v4319 = vadd.f32 0.0, %v4318
    %v4320 = vpop.f32.mrb[0].mxu0
    %4321 = vmatprep.mubr.f32.mxu0 0.0
    %4322 = vmatmul.mubr.f32.gmra.mrb[0].mxu0 %v113
    %v4323 = vpop.f32.mrb[0].mxu0
    %v4324 = vadd.f32 0.0, %v4323
    %v4325 = vpop.f32.mrb[0].mxu0
    %4326 = vmatprep.mubr.f32.mxu0 0.0
    %4327 = vmatmul.mubr.f32.gmra.mrb[0].mxu0 %v116
    %v4328 = vpop.f32.mrb[0].mxu0
    %v4329 = vadd.f32 0.0, %v4328
    %v4330 = vpop.f32.mrb[0].mxu0
    %4331 = vmatprep.mubr.f32.mxu0 0.0
    %4332 = vmatmul.mubr.f32.gmra.mrb[0].mxu0 %v119
    %v4333 = vpop.f32.mrb[0].mxu0
    %v4334 = vadd.f32 0.0, %v4333
    %v4335 = vpop.f32.mrb[0].mxu0
    %4336 = vmatprep.mubr.f32.mxu0 0.0
    %4337 = vmatmul.mubr.f32.gmra.mrb[0].mxu0 %v122
    %v4338 = vpop.f32.mrb[0].mxu0
    %v4339 = vadd.f32 0.0, %v4338
    %v4340 = vpop.f32.mrb[0].mxu0
    %4341 = vmatprep.mubr.f32.mxu0 0.0
    %4342 = vmatmul.mubr.f32.gmra.mrb[0].mxu0 %v125
    %v4343 = vpop.f32.mrb[0].mxu0
    %v4344 = vadd.f32 0.0, %v4343
    %v4345 = vpop.f32.mrb[0].mxu0
    %4346 = vmatprep.mubr.f32.mxu0 0.0
    %4347 = vmatmul.mubr.f32.gmra.mrb[0].mxu0 %v128
    %v4348 = vpop.f32.mrb[0].mxu0
    %v4349 = vadd.f32 0.0, %v4348
    %v4350 = vpop.f32.mrb[0].mxu0
    %4351 = vmatprep.mubr.f32.mxu0 0.0
    %4352 = vmatmul.mubr.f32.gmra.mrb[0].mxu0 %v131
    %v4353 = vpop.f32.mrb[0].mxu0
    %v4354 = vadd.f32 0.0, %v4353
    %v4355 = vpop.f32.mrb[0].mxu0
    %4356 = vmatprep.mubr.f32.mxu0 0.0
    %4357 = vmatmul.mubr.f32.gmra.mrb[0].mxu0 %v134
    %v4358 = vpop.f32.mrb[0].mxu0
    %v4359 = vadd.f32 0.0, %v4358
    %v4360 = vpop.f32.mrb[0].mxu0
    %4361 = vmatprep.mubr.f32.mxu0 0.0
    %4362 = vmatmul.mubr.f32.gmra.mrb[0].mxu0 %v137
    %v4363 = vpop.f32.mrb[0].mxu0
    %v4364 = vadd.f32 0.0, %v4363
    %v4365 = vpop.f32.mrb[0].mxu0
    %4366 = vmatprep.mubr.f32.mxu0 0.0
    %4367 = vmatmul.mubr.f32.gmra.mrb[0].mxu0 %v140
    %v4368 = vpop.f32.mrb[0].mxu0
    %v4369 = vadd.f32 0.0, %v4368
    %v4370 = vpop.f32.mrb[0].mxu0
    %4371 = vmatprep.mubr.f32.mxu0 0.0
    %4372 = vmatmul.mubr.f32.gmra.mrb[0].mxu0 %v143
    %v4373 = vpop.f32.mrb[0].mxu0
    %v4374 = vadd.f32 0.0, %v4373
    %v4375 = vpop.f32.mrb[0].mxu0
    %4376 = vmatprep.mubr.f32.mxu0 0.0
    %4377 = vmatmul.mubr.f32.gmra.mrb[0].mxu0 %v146
    %v4378 = vpop.f32.mrb[0].mxu0
    %v4379 = vadd.f32 0.0, %v4378
    %v4380 = vpop.f32.mrb[0].mxu0
    %4381 = vmatprep.mubr.f32.mxu0 0.0
    %4382 = vmatmul.mubr.f32.gmra.mrb[0].mxu0 %v149
    %v4383 = vpop.f32.mrb[0].mxu0
    %v4384 = vadd.f32 0.0, %v4383
    %v4385 = vpop.f32.mrb[0].mxu0
    %4386 = vmatprep.mubr.f32.mxu0 0.0
    %4387 = vmatmul.mubr.f32.gmra.mrb[0].mxu0 %v152
    %v4388 = vpop.f32.mrb[0].mxu0
    %v4389 = vadd.f32 0.0, %v4388
    %v4390 = vpop.f32.mrb[0].mxu0
    %4391 = vmatprep.mubr.f32.mxu0 0.0
    %4392 = vmatmul.mubr.f32.gmra.mrb[0].mxu0 %v155
    %v4393 = vpop.f32.mrb[0].mxu0
    %v4394 = vadd.f32 0.0, %v4393
    %v4395 = vpop.f32.mrb[0].mxu0
    %4396 = vmatprep.mubr.f32.mxu0 0.0
    %4397 = vmatmul.mubr.f32.gmra.mrb[0].mxu0 %v158
    %v4398 = vpop.f32.mrb[0].mxu0
    %v4399 = vadd.f32 0.0, %v4398
    %v4400 = vpop.f32.mrb[0].mxu0
    %4401 = vmatprep.mubr.f32.mxu0 0.0
    %4402 = vmatmul.mubr.f32.gmra.mrb[0].mxu0 %v161
    %v4403 = vpop.f32.mrb[0].mxu0
    %v4404 = vadd.f32 0.0, %v4403
    %v4405 = vpop.f32.mrb[0].mxu0
    %4406 = vmatprep.mubr.f32.mxu0 0.0
    %4407 = vmatmul.mubr.f32.gmra.mrb[0].mxu0 %v164
    %v4408 = vpop.f32.mrb[0].mxu0
    %v4409 = vadd.f32 0.0, %v4408
    %v4410 = vpop.f32.mrb[0].mxu0
    %4411 = vmatprep.mubr.f32.mxu0 0.0
    %4412 = vmatmul.mubr.f32.gmra.mrb[0].mxu0 %v167
    %v4413 = vpop.f32.mrb[0].mxu0
    %v4414 = vadd.f32 0.0, %v4413
    %v4415 = vpop.f32.mrb[0].mxu0
    %4416 = vmatprep.mubr.f32.mxu0 0.0
    %4417 = vmatmul.mubr.f32.gmra.mrb[0].mxu0 %v170
    %v4418 = vpop.f32.mrb[0].mxu0
    %v4419 = vadd.f32 0.0, %v4418
    %v4420 = vpop.f32.mrb[0].mxu0
    %4421 = vmatprep.mubr.f32.mxu0 0.0
    %4422 = vmatmul.mubr.f32.gmra.mrb[0].mxu0 %v173
    %v4423 = vpop.f32.mrb[0].mxu0
    %v4424 = vadd.f32 0.0, %v4423
    %v4425 = vpop.f32.mrb[0].mxu0
    %4426 = vmatprep.mubr.f32.mxu0 0.0
    %4427 = vmatmul.mubr.f32.gmra.mrb[0].mxu0 %v176
    %v4428 = vpop.f32.mrb[0].mxu0
    %v4429 = vadd.f32 0.0, %v4428
    %v4430 = vpop.f32.mrb[0].mxu0
    %4431 = vmatprep.mubr.f32.mxu0 0.0
    %4432 = vmatmul.mubr.f32.gmra.mrb[0].mxu0 %v179
    %v4433 = vpop.f32.mrb[0].mxu0
    %v4434 = vadd.f32 0.0, %v4433
    %v4435 = vpop.f32.mrb[0].mxu0
    %4436 = vmatprep.mubr.f32.mxu0 0.0
    %4437 = vmatmul.mubr.f32.gmra.mrb[0].mxu0 %v182
    %v4438 = vpop.f32.mrb[0].mxu0
    %v4439 = vadd.f32 0.0, %v4438
    %v4440 = vpop.f32.mrb[0].mxu0
    %4441 = vmatprep.mubr.f32.mxu0 0.0
    %4442 = vmatmul.mubr.f32.gmra.mrb[0].mxu0 %v185
    %v4443 = vpop.f32.mrb[0].mxu0
    %v4444 = vadd.f32 0.0, %v4443
    %v4445 = vpop.f32.mrb[0].mxu0
    %4446 = vdwg.mxu0
    %s4447 = scalar_lea.vmem [#allocation2], 704
    %v4448 = vld [vmem:[%s4447] sm:$0xff]
    %v4449 = vld [vmem:[%s4447 + $0x8] sm:$0xff]
    %v4450 = vld [vmem:[%s4447 + $0x10] sm:$0xff]
    %v4451 = vld [vmem:[%s4447 + $0x18] sm:$0xff]
    %v4452 = vld [vmem:[%s4447 + $0x20] sm:$0xff]
    %v4453 = vld [vmem:[%s4447 + $0x28] sm:$0xff]
    %v4454 = vld [vmem:[%s4447 + $0x30] sm:$0xff]
    %v4455 = vld [vmem:[%s4447 + $0x38] sm:$0xff]
    %v4456 = vunpack.c.l.bf16 %v4448
    %v4457 = vunpack.c.h.bf16 %v4448
    %v4458 = vunpack.c.l.bf16 %v4449
    %v4459 = vunpack.c.h.bf16 %v4449
    %v4460 = vunpack.c.l.bf16 %v4450
    %v4461 = vunpack.c.h.bf16 %v4450
    %v4462 = vunpack.c.l.bf16 %v4451
    %v4463 = vunpack.c.h.bf16 %v4451
    %v4464 = vunpack.c.l.bf16 %v4452
    %v4465 = vunpack.c.h.bf16 %v4452
    %v4466 = vunpack.c.l.bf16 %v4453
    %v4467 = vunpack.c.h.bf16 %v4453
    %v4468 = vunpack.c.l.bf16 %v4454
    %v4469 = vunpack.c.h.bf16 %v4454
    %v4470 = vunpack.c.l.bf16 %v4455
    %v4471 = vunpack.c.h.bf16 %v4455
    %4472 = vmatprep.subr.mxu0 0.0
    %4473 = vmatpush1.msra.mxu0 %v4289
    %4474 = vmatprep.subr.mxu0 0.0
    %4475 = vmatpush1.msra.mxu0 %v4294
    %4476 = vmatprep.subr.mxu0 0.0
    %4477 = vmatpush1.msra.mxu0 %v4299
    %4478 = vmatprep.subr.mxu0 0.0
    %4479 = vmatpush1.msra.mxu0 %v4304
    %4480 = vmatprep.subr.mxu0 0.0
    %4481 = vmatpush1.msra.mxu0 %v4309
    %4482 = vmatprep.subr.mxu0 0.0
    %4483 = vmatpush1.msra.mxu0 %v4314
    %4484 = vmatprep.subr.mxu0 0.0
    %4485 = vmatpush1.msra.mxu0 %v4319
    %4486 = vmatprep.subr.mxu0 0.0
    %4487 = vmatpush1.msra.mxu0 %v4324
    %4488 = vmatprep.subr.mxu0 0.0
    %4489 = vmatpush1.msra.mxu0 %v4329
    %4490 = vmatprep.subr.mxu0 0.0
    %4491 = vmatpush1.msra.mxu0 %v4334
    %4492 = vmatprep.subr.mxu0 0.0
    %4493 = vmatpush1.msra.mxu0 %v4339
    %4494 = vmatprep.subr.mxu0 0.0
    %4495 = vmatpush1.msra.mxu0 %v4344
    %4496 = vmatprep.subr.mxu0 0.0
    %4497 = vmatpush1.msra.mxu0 %v4349
    %4498 = vmatprep.subr.mxu0 0.0
    %4499 = vmatpush1.msra.mxu0 %v4354
    %4500 = vmatprep.subr.mxu0 0.0
    %4501 = vmatpush1.msra.mxu0 %v4359
    %4502 = vmatprep.subr.mxu0 0.0
    %4503 = vmatpush1.msra.mxu0 %v4364
    %4504 = vmatprep.subr.mxu0 0.0
    %4505 = vmatpush1.msra.mxu0 %v4369
    %4506 = vmatprep.subr.mxu0 0.0
    %4507 = vmatpush1.msra.mxu0 %v4374
    %4508 = vmatprep.subr.mxu0 0.0
    %4509 = vmatpush1.msra.mxu0 %v4379
    %4510 = vmatprep.subr.mxu0 0.0
    %4511 = vmatpush1.msra.mxu0 %v4384
    %4512 = vmatprep.subr.mxu0 0.0
    %4513 = vmatpush1.msra.mxu0 %v4389
    %4514 = vmatprep.subr.mxu0 0.0
    %4515 = vmatpush1.msra.mxu0 %v4394
    %4516 = vmatprep.subr.mxu0 0.0
    %4517 = vmatpush1.msra.mxu0 %v4399
    %4518 = vmatprep.subr.mxu0 0.0
    %4519 = vmatpush1.msra.mxu0 %v4404
    %4520 = vmatprep.subr.mxu0 0.0
    %4521 = vmatpush1.msra.mxu0 %v4409
    %4522 = vmatprep.subr.mxu0 0.0
    %4523 = vmatpush1.msra.mxu0 %v4414
    %4524 = vmatprep.subr.mxu0 0.0
    %4525 = vmatpush1.msra.mxu0 %v4419
    %4526 = vmatprep.subr.mxu0 0.0
    %4527 = vmatpush1.msra.mxu0 %v4424
    %4528 = vmatprep.subr.mxu0 0.0
    %4529 = vmatpush1.msra.mxu0 %v4429
    %4530 = vmatprep.subr.mxu0 0.0
    %4531 = vmatpush1.msra.mxu0 %v4434
    %4532 = vmatprep.subr.mxu0 0.0
    %4533 = vmatpush1.msra.mxu0 %v4439
    %4534 = vmatprep.subr.mxu0 0.0
    %4535 = vmatpush1.msra.mxu0 %v4444
    %4536 = vmatprep.mubr.f32.mxu0 %v4457
    %4537 = vmatmul.mubr.f32.gmra.mrb[0].mxu0 %v4456
    %v4538 = vpop.f32.mrb[0].mxu0
    %v4539 = vadd.f32 0.0, %v4538
    %v4540 = vpop.f32.mrb[0].mxu0
    %4541 = vmatprep.mubr.f32.mxu0 %v4459
    %4542 = vmatmul.mubr.f32.gmra.mrb[0].mxu0 %v4458
    %v4543 = vpop.f32.mrb[0].mxu0
    %v4544 = vadd.f32 0.0, %v4543
    %v4545 = vpop.f32.mrb[0].mxu0
    %4546 = vmatprep.mubr.f32.mxu0 %v4461
    %4547 = vmatmul.mubr.f32.gmra.mrb[0].mxu0 %v4460
    %v4548 = vpop.f32.mrb[0].mxu0
    %v4549 = vadd.f32 0.0, %v4548
    %v4550 = vpop.f32.mrb[0].mxu0
    %4551 = vmatprep.mubr.f32.mxu0 %v4463
    %4552 = vmatmul.mubr.f32.gmra.mrb[0].mxu0 %v4462
    %v4553 = vpop.f32.mrb[0].mxu0
    %v4554 = vadd.f32 0.0, %v4553
    %v4555 = vpop.f32.mrb[0].mxu0
    %4556 = vmatprep.mubr.f32.mxu0 %v4465
    %4557 = vmatmul.mubr.f32.gmra.mrb[0].mxu0 %v4464
    %v4558 = vpop.f32.mrb[0].mxu0
    %v4559 = vadd.f32 0.0, %v4558
    %v4560 = vpop.f32.mrb[0].mxu0
    %4561 = vmatprep.mubr.f32.mxu0 %v4467
    %4562 = vmatmul.mubr.f32.gmra.mrb[0].mxu0 %v4466
    %v4563 = vpop.f32.mrb[0].mxu0
    %v4564 = vadd.f32 0.0, %v4563
    %v4565 = vpop.f32.mrb[0].mxu0
    %4566 = vmatprep.mubr.f32.mxu0 %v4469
    %4567 = vmatmul.mubr.f32.gmra.mrb[0].mxu0 %v4468
    %v4568 = vpop.f32.mrb[0].mxu0
    %v4569 = vadd.f32 0.0, %v4568
    %v4570 = vpop.f32.mrb[0].mxu0
    %4571 = vmatprep.mubr.f32.mxu0 %v4471
    %4572 = vmatmul.mubr.f32.gmra.mrb[0].mxu0 %v4470
    %v4573 = vpop.f32.mrb[0].mxu0
    %v4574 = vadd.f32 0.0, %v4573
    %v4575 = vpop.f32.mrb[0].mxu0
    %4576 = vdwg.mxu0
    %v4577 = vadd.f32 %v4209, %v4539
    %v4578 = vadd.f32 %v4210, %v4544
    %v4579 = vadd.f32 %v4211, %v4549
    %v4580 = vadd.f32 %v4212, %v4554
    %v4581 = vadd.f32 %v4213, %v4559
    %v4582 = vadd.f32 %v4214, %v4564
    %v4583 = vadd.f32 %v4215, %v4569
    %v4584 = vadd.f32 %v4216, %v4574
    %s4585 = scalar_lea.vmem %s2, 48
    %v4586 = vld [vmem:[%s4585] sm:$0xf]
    %v4588 = vsel %vm187, %v4586, 0
    %4590 = vmatprep.subr.mxu0 0.0
    %4591 = vmatpush1.msra.mxu0 %v4588
    %4592 = vmatprep.subr.mxu0 0.0
    %4593 = vmatpush1.msra.mxu0 0.0
    %4594 = vmatprep.subr.mxu0 0.0
    %4595 = vmatpush1.msra.mxu0 0.0
    %4596 = vmatprep.subr.mxu0 0.0
    %4597 = vmatpush1.msra.mxu0 0.0
    %4598 = vmatprep.subr.mxu0 0.0
    %4599 = vmatpush1.msra.mxu0 0.0
    %4600 = vmatprep.subr.mxu0 0.0
    %4601 = vmatpush1.msra.mxu0 0.0
    %4602 = vmatprep.subr.mxu0 0.0
    %4603 = vmatpush1.msra.mxu0 0.0
    %4604 = vmatprep.subr.mxu0 0.0
    %4605 = vmatpush1.msra.mxu0 0.0
    %4606 = vmatprep.subr.mxu0 0.0
    %4607 = vmatpush1.msra.mxu0 0.0
    %4608 = vmatprep.subr.mxu0 0.0
    %4609 = vmatpush1.msra.mxu0 0.0
    %4610 = vmatprep.subr.mxu0 0.0
    %4611 = vmatpush1.msra.mxu0 0.0
    %4612 = vmatprep.subr.mxu0 0.0
    %4613 = vmatpush1.msra.mxu0 0.0
    %4614 = vmatprep.subr.mxu0 0.0
    %4615 = vmatpush1.msra.mxu0 0.0
    %4616 = vmatprep.subr.mxu0 0.0
    %4617 = vmatpush1.msra.mxu0 0.0
    %4618 = vmatprep.subr.mxu0 0.0
    %4619 = vmatpush1.msra.mxu0 0.0
    %4620 = vmatprep.subr.mxu0 0.0
    %4621 = vmatpush1.msra.mxu0 0.0
    %4622 = vmatprep.subr.mxu0 0.0
    %4623 = vmatpush1.msra.mxu0 0.0
    %4624 = vmatprep.subr.mxu0 0.0
    %4625 = vmatpush1.msra.mxu0 0.0
    %4626 = vmatprep.subr.mxu0 0.0
    %4627 = vmatpush1.msra.mxu0 0.0
    %4628 = vmatprep.subr.mxu0 0.0
    %4629 = vmatpush1.msra.mxu0 0.0
    %4630 = vmatprep.subr.mxu0 0.0
    %4631 = vmatpush1.msra.mxu0 0.0
    %4632 = vmatprep.subr.mxu0 0.0
    %4633 = vmatpush1.msra.mxu0 0.0
    %4634 = vmatprep.subr.mxu0 0.0
    %4635 = vmatpush1.msra.mxu0 0.0
    %4636 = vmatprep.subr.mxu0 0.0
    %4637 = vmatpush1.msra.mxu0 0.0
    %4638 = vmatprep.subr.mxu0 0.0
    %4639 = vmatpush1.msra.mxu0 0.0
    %4640 = vmatprep.subr.mxu0 0.0
    %4641 = vmatpush1.msra.mxu0 0.0
    %4642 = vmatprep.subr.mxu0 0.0
    %4643 = vmatpush1.msra.mxu0 0.0
    %4644 = vmatprep.subr.mxu0 0.0
    %4645 = vmatpush1.msra.mxu0 0.0
    %4646 = vmatprep.subr.mxu0 0.0
    %4647 = vmatpush1.msra.mxu0 0.0
    %4648 = vmatprep.subr.mxu0 0.0
    %4649 = vmatpush1.msra.mxu0 0.0
    %4650 = vmatprep.subr.mxu0 0.0
    %4651 = vmatpush1.msra.mxu0 0.0
    %4652 = vmatprep.subr.mxu0 0.0
    %4653 = vmatpush1.msra.mxu0 0.0
    %4654 = vmatprep.mubr.f32.mxu0 0.0
    %4655 = vmatmul.mubr.f32.gmra.mrb[0].mxu0 %v92
    %v4656 = vpop.f32.mrb[0].mxu0
    %v4657 = vadd.f32 0.0, %v4656
    %v4658 = vpop.f32.mrb[0].mxu0
    %4659 = vmatprep.mubr.f32.mxu0 0.0
    %4660 = vmatmul.mubr.f32.gmra.mrb[0].mxu0 %v95
    %v4661 = vpop.f32.mrb[0].mxu0
    %v4662 = vadd.f32 0.0, %v4661
    %v4663 = vpop.f32.mrb[0].mxu0
    %4664 = vmatprep.mubr.f32.mxu0 0.0
    %4665 = vmatmul.mubr.f32.gmra.mrb[0].mxu0 %v98
    %v4666 = vpop.f32.mrb[0].mxu0
    %v4667 = vadd.f32 0.0, %v4666
    %v4668 = vpop.f32.mrb[0].mxu0
    %4669 = vmatprep.mubr.f32.mxu0 0.0
    %4670 = vmatmul.mubr.f32.gmra.mrb[0].mxu0 %v101
    %v4671 = vpop.f32.mrb[0].mxu0
    %v4672 = vadd.f32 0.0, %v4671
    %v4673 = vpop.f32.mrb[0].mxu0
    %4674 = vmatprep.mubr.f32.mxu0 0.0
    %4675 = vmatmul.mubr.f32.gmra.mrb[0].mxu0 %v104
    %v4676 = vpop.f32.mrb[0].mxu0
    %v4677 = vadd.f32 0.0, %v4676
    %v4678 = vpop.f32.mrb[0].mxu0
    %4679 = vmatprep.mubr.f32.mxu0 0.0
    %4680 = vmatmul.mubr.f32.gmra.mrb[0].mxu0 %v107
    %v4681 = vpop.f32.mrb[0].mxu0
    %v4682 = vadd.f32 0.0, %v4681
    %v4683 = vpop.f32.mrb[0].mxu0
    %4684 = vmatprep.mubr.f32.mxu0 0.0
    %4685 = vmatmul.mubr.f32.gmra.mrb[0].mxu0 %v110
    %v4686 = vpop.f32.mrb[0].mxu0
    %v4687 = vadd.f32 0.0, %v4686
    %v4688 = vpop.f32.mrb[0].mxu0
    %4689 = vmatprep.mubr.f32.mxu0 0.0
    %4690 = vmatmul.mubr.f32.gmra.mrb[0].mxu0 %v113
    %v4691 = vpop.f32.mrb[0].mxu0
    %v4692 = vadd.f32 0.0, %v4691
    %v4693 = vpop.f32.mrb[0].mxu0
    %4694 = vmatprep.mubr.f32.mxu0 0.0
    %4695 = vmatmul.mubr.f32.gmra.mrb[0].mxu0 %v116
    %v4696 = vpop.f32.mrb[0].mxu0
    %v4697 = vadd.f32 0.0, %v4696
    %v4698 = vpop.f32.mrb[0].mxu0
    %4699 = vmatprep.mubr.f32.mxu0 0.0
    %4700 = vmatmul.mubr.f32.gmra.mrb[0].mxu0 %v119
    %v4701 = vpop.f32.mrb[0].mxu0
    %v4702 = vadd.f32 0.0, %v4701
    %v4703 = vpop.f32.mrb[0].mxu0
    %4704 = vmatprep.mubr.f32.mxu0 0.0
    %4705 = vmatmul.mubr.f32.gmra.mrb[0].mxu0 %v122
    %v4706 = vpop.f32.mrb[0].mxu0
    %v4707 = vadd.f32 0.0, %v4706
    %v4708 = vpop.f32.mrb[0].mxu0
    %4709 = vmatprep.mubr.f32.mxu0 0.0
    %4710 = vmatmul.mubr.f32.gmra.mrb[0].mxu0 %v125
    %v4711 = vpop.f32.mrb[0].mxu0
    %v4712 = vadd.f32 0.0, %v4711
    %v4713 = vpop.f32.mrb[0].mxu0
    %4714 = vmatprep.mubr.f32.mxu0 0.0
    %4715 = vmatmul.mubr.f32.gmra.mrb[0].mxu0 %v128
    %v4716 = vpop.f32.mrb[0].mxu0
    %v4717 = vadd.f32 0.0, %v4716
    %v4718 = vpop.f32.mrb[0].mxu0
    %4719 = vmatprep.mubr.f32.mxu0 0.0
    %4720 = vmatmul.mubr.f32.gmra.mrb[0].mxu0 %v131
    %v4721 = vpop.f32.mrb[0].mxu0
    %v4722 = vadd.f32 0.0, %v4721
    %v4723 = vpop.f32.mrb[0].mxu0
    %4724 = vmatprep.mubr.f32.mxu0 0.0
    %4725 = vmatmul.mubr.f32.gmra.mrb[0].mxu0 %v134
    %v4726 = vpop.f32.mrb[0].mxu0
    %v4727 = vadd.f32 0.0, %v4726
    %v4728 = vpop.f32.mrb[0].mxu0
    %4729 = vmatprep.mubr.f32.mxu0 0.0
    %4730 = vmatmul.mubr.f32.gmra.mrb[0].mxu0 %v137
    %v4731 = vpop.f32.mrb[0].mxu0
    %v4732 = vadd.f32 0.0, %v4731
    %v4733 = vpop.f32.mrb[0].mxu0
    %4734 = vmatprep.mubr.f32.mxu0 0.0
    %4735 = vmatmul.mubr.f32.gmra.mrb[0].mxu0 %v140
    %v4736 = vpop.f32.mrb[0].mxu0
    %v4737 = vadd.f32 0.0, %v4736
    %v4738 = vpop.f32.mrb[0].mxu0
    %4739 = vmatprep.mubr.f32.mxu0 0.0
    %4740 = vmatmul.mubr.f32.gmra.mrb[0].mxu0 %v143
    %v4741 = vpop.f32.mrb[0].mxu0
    %v4742 = vadd.f32 0.0, %v4741
    %v4743 = vpop.f32.mrb[0].mxu0
    %4744 = vmatprep.mubr.f32.mxu0 0.0
    %4745 = vmatmul.mubr.f32.gmra.mrb[0].mxu0 %v146
    %v4746 = vpop.f32.mrb[0].mxu0
    %v4747 = vadd.f32 0.0, %v4746
    %v4748 = vpop.f32.mrb[0].mxu0
    %4749 = vmatprep.mubr.f32.mxu0 0.0
    %4750 = vmatmul.mubr.f32.gmra.mrb[0].mxu0 %v149
    %v4751 = vpop.f32.mrb[0].mxu0
    %v4752 = vadd.f32 0.0, %v4751
    %v4753 = vpop.f32.mrb[0].mxu0
    %4754 = vmatprep.mubr.f32.mxu0 0.0
    %4755 = vmatmul.mubr.f32.gmra.mrb[0].mxu0 %v152
    %v4756 = vpop.f32.mrb[0].mxu0
    %v4757 = vadd.f32 0.0, %v4756
    %v4758 = vpop.f32.mrb[0].mxu0
    %4759 = vmatprep.mubr.f32.mxu0 0.0
    %4760 = vmatmul.mubr.f32.gmra.mrb[0].mxu0 %v155
    %v4761 = vpop.f32.mrb[0].mxu0
    %v4762 = vadd.f32 0.0, %v4761
    %v4763 = vpop.f32.mrb[0].mxu0
    %4764 = vmatprep.mubr.f32.mxu0 0.0
    %4765 = vmatmul.mubr.f32.gmra.mrb[0].mxu0 %v158
    %v4766 = vpop.f32.mrb[0].mxu0
    %v4767 = vadd.f32 0.0, %v4766
    %v4768 = vpop.f32.mrb[0].mxu0
    %4769 = vmatprep.mubr.f32.mxu0 0.0
    %4770 = vmatmul.mubr.f32.gmra.mrb[0].mxu0 %v161
    %v4771 = vpop.f32.mrb[0].mxu0
    %v4772 = vadd.f32 0.0, %v4771
    %v4773 = vpop.f32.mrb[0].mxu0
    %4774 = vmatprep.mubr.f32.mxu0 0.0
    %4775 = vmatmul.mubr.f32.gmra.mrb[0].mxu0 %v164
    %v4776 = vpop.f32.mrb[0].mxu0
    %v4777 = vadd.f32 0.0, %v4776
    %v4778 = vpop.f32.mrb[0].mxu0
    %4779 = vmatprep.mubr.f32.mxu0 0.0
    %4780 = vmatmul.mubr.f32.gmra.mrb[0].mxu0 %v167
    %v4781 = vpop.f32.mrb[0].mxu0
    %v4782 = vadd.f32 0.0, %v4781
    %v4783 = vpop.f32.mrb[0].mxu0
    %4784 = vmatprep.mubr.f32.mxu0 0.0
    %4785 = vmatmul.mubr.f32.gmra.mrb[0].mxu0 %v170
    %v4786 = vpop.f32.mrb[0].mxu0
    %v4787 = vadd.f32 0.0, %v4786
    %v4788 = vpop.f32.mrb[0].mxu0
    %4789 = vmatprep.mubr.f32.mxu0 0.0
    %4790 = vmatmul.mubr.f32.gmra.mrb[0].mxu0 %v173
    %v4791 = vpop.f32.mrb[0].mxu0
    %v4792 = vadd.f32 0.0, %v4791
    %v4793 = vpop.f32.mrb[0].mxu0
    %4794 = vmatprep.mubr.f32.mxu0 0.0
    %4795 = vmatmul.mubr.f32.gmra.mrb[0].mxu0 %v176
    %v4796 = vpop.f32.mrb[0].mxu0
    %v4797 = vadd.f32 0.0, %v4796
    %v4798 = vpop.f32.mrb[0].mxu0
    %4799 = vmatprep.mubr.f32.mxu0 0.0
    %4800 = vmatmul.mubr.f32.gmra.mrb[0].mxu0 %v179
    %v4801 = vpop.f32.mrb[0].mxu0
    %v4802 = vadd.f32 0.0, %v4801
    %v4803 = vpop.f32.mrb[0].mxu0
    %4804 = vmatprep.mubr.f32.mxu0 0.0
    %4805 = vmatmul.mubr.f32.gmra.mrb[0].mxu0 %v182
    %v4806 = vpop.f32.mrb[0].mxu0
    %v4807 = vadd.f32 0.0, %v4806
    %v4808 = vpop.f32.mrb[0].mxu0
    %4809 = vmatprep.mubr.f32.mxu0 0.0
    %4810 = vmatmul.mubr.f32.gmra.mrb[0].mxu0 %v185
    %v4811 = vpop.f32.mrb[0].mxu0
    %v4812 = vadd.f32 0.0, %v4811
    %v4813 = vpop.f32.mrb[0].mxu0
    %4814 = vdwg.mxu0
    %s4815 = scalar_lea.vmem [#allocation2], 768
    %v4816 = vld [vmem:[%s4815] sm:$0xff]
    %v4817 = vld [vmem:[%s4815 + $0x8] sm:$0xff]
    %v4818 = vld [vmem:[%s4815 + $0x10] sm:$0xff]
    %v4819 = vld [vmem:[%s4815 + $0x18] sm:$0xff]
    %v4820 = vld [vmem:[%s4815 + $0x20] sm:$0xff]
    %v4821 = vld [vmem:[%s4815 + $0x28] sm:$0xff]
    %v4822 = vld [vmem:[%s4815 + $0x30] sm:$0xff]
    %v4823 = vld [vmem:[%s4815 + $0x38] sm:$0xff]
    %v4824 = vunpack.c.l.bf16 %v4816
    %v4825 = vunpack.c.h.bf16 %v4816
    %v4826 = vunpack.c.l.bf16 %v4817
    %v4827 = vunpack.c.h.bf16 %v4817
    %v4828 = vunpack.c.l.bf16 %v4818
    %v4829 = vunpack.c.h.bf16 %v4818
    %v4830 = vunpack.c.l.bf16 %v4819
    %v4831 = vunpack.c.h.bf16 %v4819
    %v4832 = vunpack.c.l.bf16 %v4820
    %v4833 = vunpack.c.h.bf16 %v4820
    %v4834 = vunpack.c.l.bf16 %v4821
    %v4835 = vunpack.c.h.bf16 %v4821
    %v4836 = vunpack.c.l.bf16 %v4822
    %v4837 = vunpack.c.h.bf16 %v4822
    %v4838 = vunpack.c.l.bf16 %v4823
    %v4839 = vunpack.c.h.bf16 %v4823
    %4840 = vmatprep.subr.mxu0 0.0
    %4841 = vmatpush1.msra.mxu0 %v4657
    %4842 = vmatprep.subr.mxu0 0.0
    %4843 = vmatpush1.msra.mxu0 %v4662
    %4844 = vmatprep.subr.mxu0 0.0
    %4845 = vmatpush1.msra.mxu0 %v4667
    %4846 = vmatprep.subr.mxu0 0.0
    %4847 = vmatpush1.msra.mxu0 %v4672
    %4848 = vmatprep.subr.mxu0 0.0
    %4849 = vmatpush1.msra.mxu0 %v4677
    %4850 = vmatprep.subr.mxu0 0.0
    %4851 = vmatpush1.msra.mxu0 %v4682
    %4852 = vmatprep.subr.mxu0 0.0
    %4853 = vmatpush1.msra.mxu0 %v4687
    %4854 = vmatprep.subr.mxu0 0.0
    %4855 = vmatpush1.msra.mxu0 %v4692
    %4856 = vmatprep.subr.mxu0 0.0
    %4857 = vmatpush1.msra.mxu0 %v4697
    %4858 = vmatprep.subr.mxu0 0.0
    %4859 = vmatpush1.msra.mxu0 %v4702
    %4860 = vmatprep.subr.mxu0 0.0
    %4861 = vmatpush1.msra.mxu0 %v4707
    %4862 = vmatprep.subr.mxu0 0.0
    %4863 = vmatpush1.msra.mxu0 %v4712
    %4864 = vmatprep.subr.mxu0 0.0
    %4865 = vmatpush1.msra.mxu0 %v4717
    %4866 = vmatprep.subr.mxu0 0.0
    %4867 = vmatpush1.msra.mxu0 %v4722
    %4868 = vmatprep.subr.mxu0 0.0
    %4869 = vmatpush1.msra.mxu0 %v4727
    %4870 = vmatprep.subr.mxu0 0.0
    %4871 = vmatpush1.msra.mxu0 %v4732
    %4872 = vmatprep.subr.mxu0 0.0
    %4873 = vmatpush1.msra.mxu0 %v4737
    %4874 = vmatprep.subr.mxu0 0.0
    %4875 = vmatpush1.msra.mxu0 %v4742
    %4876 = vmatprep.subr.mxu0 0.0
    %4877 = vmatpush1.msra.mxu0 %v4747
    %4878 = vmatprep.subr.mxu0 0.0
    %4879 = vmatpush1.msra.mxu0 %v4752
    %4880 = vmatprep.subr.mxu0 0.0
    %4881 = vmatpush1.msra.mxu0 %v4757
    %4882 = vmatprep.subr.mxu0 0.0
    %4883 = vmatpush1.msra.mxu0 %v4762
    %4884 = vmatprep.subr.mxu0 0.0
    %4885 = vmatpush1.msra.mxu0 %v4767
    %4886 = vmatprep.subr.mxu0 0.0
    %4887 = vmatpush1.msra.mxu0 %v4772
    %4888 = vmatprep.subr.mxu0 0.0
    %4889 = vmatpush1.msra.mxu0 %v4777
    %4890 = vmatprep.subr.mxu0 0.0
    %4891 = vmatpush1.msra.mxu0 %v4782
    %4892 = vmatprep.subr.mxu0 0.0
    %4893 = vmatpush1.msra.mxu0 %v4787
    %4894 = vmatprep.subr.mxu0 0.0
    %4895 = vmatpush1.msra.mxu0 %v4792
    %4896 = vmatprep.subr.mxu0 0.0
    %4897 = vmatpush1.msra.mxu0 %v4797
    %4898 = vmatprep.subr.mxu0 0.0
    %4899 = vmatpush1.msra.mxu0 %v4802
    %4900 = vmatprep.subr.mxu0 0.0
    %4901 = vmatpush1.msra.mxu0 %v4807
    %4902 = vmatprep.subr.mxu0 0.0
    %4903 = vmatpush1.msra.mxu0 %v4812
    %4904 = vmatprep.mubr.f32.mxu0 %v4825
    %4905 = vmatmul.mubr.f32.gmra.mrb[0].mxu0 %v4824
    %v4906 = vpop.f32.mrb[0].mxu0
    %v4907 = vadd.f32 0.0, %v4906
    %v4908 = vpop.f32.mrb[0].mxu0
    %4909 = vmatprep.mubr.f32.mxu0 %v4827
    %4910 = vmatmul.mubr.f32.gmra.mrb[0].mxu0 %v4826
    %v4911 = vpop.f32.mrb[0].mxu0
    %v4912 = vadd.f32 0.0, %v4911
    %v4913 = vpop.f32.mrb[0].mxu0
    %4914 = vmatprep.mubr.f32.mxu0 %v4829
    %4915 = vmatmul.mubr.f32.gmra.mrb[0].mxu0 %v4828
    %v4916 = vpop.f32.mrb[0].mxu0
    %v4917 = vadd.f32 0.0, %v4916
    %v4918 = vpop.f32.mrb[0].mxu0
    %4919 = vmatprep.mubr.f32.mxu0 %v4831
    %4920 = vmatmul.mubr.f32.gmra.mrb[0].mxu0 %v4830
    %v4921 = vpop.f32.mrb[0].mxu0
    %v4922 = vadd.f32 0.0, %v4921
    %v4923 = vpop.f32.mrb[0].mxu0
    %4924 = vmatprep.mubr.f32.mxu0 %v4833
    %4925 = vmatmul.mubr.f32.gmra.mrb[0].mxu0 %v4832
    %v4926 = vpop.f32.mrb[0].mxu0
    %v4927 = vadd.f32 0.0, %v4926
    %v4928 = vpop.f32.mrb[0].mxu0
    %4929 = vmatprep.mubr.f32.mxu0 %v4835
    %4930 = vmatmul.mubr.f32.gmra.mrb[0].mxu0 %v4834
    %v4931 = vpop.f32.mrb[0].mxu0
    %v4932 = vadd.f32 0.0, %v4931
    %v4933 = vpop.f32.mrb[0].mxu0
    %4934 = vmatprep.mubr.f32.mxu0 %v4837
    %4935 = vmatmul.mubr.f32.gmra.mrb[0].mxu0 %v4836
    %v4936 = vpop.f32.mrb[0].mxu0
    %v4937 = vadd.f32 0.0, %v4936
    %v4938 = vpop.f32.mrb[0].mxu0
    %4939 = vmatprep.mubr.f32.mxu0 %v4839
    %4940 = vmatmul.mubr.f32.gmra.mrb[0].mxu0 %v4838
    %v4941 = vpop.f32.mrb[0].mxu0
    %v4942 = vadd.f32 0.0, %v4941
    %v4943 = vpop.f32.mrb[0].mxu0
    %4944 = vdwg.mxu0
    %v4945 = vadd.f32 %v4577, %v4907
    %v4946 = vadd.f32 %v4578, %v4912
    %v4947 = vadd.f32 %v4579, %v4917
    %v4948 = vadd.f32 %v4580, %v4922
    %v4949 = vadd.f32 %v4581, %v4927
    %v4950 = vadd.f32 %v4582, %v4932
    %v4951 = vadd.f32 %v4583, %v4937
    %v4952 = vadd.f32 %v4584, %v4942
    %s4953 = scalar_lea.vmem %s2, 52
    %v4954 = vld [vmem:[%s4953] sm:$0xf]
    %v4956 = vsel %vm187, %v4954, 0
    %4958 = vmatprep.subr.mxu0 0.0
    %4959 = vmatpush1.msra.mxu0 %v4956
    %4960 = vmatprep.subr.mxu0 0.0
    %4961 = vmatpush1.msra.mxu0 0.0
    %4962 = vmatprep.subr.mxu0 0.0
    %4963 = vmatpush1.msra.mxu0 0.0
    %4964 = vmatprep.subr.mxu0 0.0
    %4965 = vmatpush1.msra.mxu0 0.0
    %4966 = vmatprep.subr.mxu0 0.0
    %4967 = vmatpush1.msra.mxu0 0.0
    %4968 = vmatprep.subr.mxu0 0.0
    %4969 = vmatpush1.msra.mxu0 0.0
    %4970 = vmatprep.subr.mxu0 0.0
    %4971 = vmatpush1.msra.mxu0 0.0
    %4972 = vmatprep.subr.mxu0 0.0
    %4973 = vmatpush1.msra.mxu0 0.0
    %4974 = vmatprep.subr.mxu0 0.0
    %4975 = vmatpush1.msra.mxu0 0.0
    %4976 = vmatprep.subr.mxu0 0.0
    %4977 = vmatpush1.msra.mxu0 0.0
    %4978 = vmatprep.subr.mxu0 0.0
    %4979 = vmatpush1.msra.mxu0 0.0
    %4980 = vmatprep.subr.mxu0 0.0
    %4981 = vmatpush1.msra.mxu0 0.0
    %4982 = vmatprep.subr.mxu0 0.0
    %4983 = vmatpush1.msra.mxu0 0.0
    %4984 = vmatprep.subr.mxu0 0.0
    %4985 = vmatpush1.msra.mxu0 0.0
    %4986 = vmatprep.subr.mxu0 0.0
    %4987 = vmatpush1.msra.mxu0 0.0
    %4988 = vmatprep.subr.mxu0 0.0
    %4989 = vmatpush1.msra.mxu0 0.0
    %4990 = vmatprep.subr.mxu0 0.0
    %4991 = vmatpush1.msra.mxu0 0.0
    %4992 = vmatprep.subr.mxu0 0.0
    %4993 = vmatpush1.msra.mxu0 0.0
    %4994 = vmatprep.subr.mxu0 0.0
    %4995 = vmatpush1.msra.mxu0 0.0
    %4996 = vmatprep.subr.mxu0 0.0
    %4997 = vmatpush1.msra.mxu0 0.0
    %4998 = vmatprep.subr.mxu0 0.0
    %4999 = vmatpush1.msra.mxu0 0.0
    %5000 = vmatprep.subr.mxu0 0.0
    %5001 = vmatpush1.msra.mxu0 0.0
    %5002 = vmatprep.subr.mxu0 0.0
    %5003 = vmatpush1.msra.mxu0 0.0
    %5004 = vmatprep.subr.mxu0 0.0
    %5005 = vmatpush1.msra.mxu0 0.0
    %5006 = vmatprep.subr.mxu0 0.0
    %5007 = vmatpush1.msra.mxu0 0.0
    %5008 = vmatprep.subr.mxu0 0.0
    %5009 = vmatpush1.msra.mxu0 0.0
    %5010 = vmatprep.subr.mxu0 0.0
    %5011 = vmatpush1.msra.mxu0 0.0
    %5012 = vmatprep.subr.mxu0 0.0
    %5013 = vmatpush1.msra.mxu0 0.0
    %5014 = vmatprep.subr.mxu0 0.0
    %5015 = vmatpush1.msra.mxu0 0.0
    %5016 = vmatprep.subr.mxu0 0.0
    %5017 = vmatpush1.msra.mxu0 0.0
    %5018 = vmatprep.subr.mxu0 0.0
    %5019 = vmatpush1.msra.mxu0 0.0
    %5020 = vmatprep.subr.mxu0 0.0
    %5021 = vmatpush1.msra.mxu0 0.0
    %5022 = vmatprep.mubr.f32.mxu0 0.0
    %5023 = vmatmul.mubr.f32.gmra.mrb[0].mxu0 %v92
    %v5024 = vpop.f32.mrb[0].mxu0
    %v5025 = vadd.f32 0.0, %v5024
    %v5026 = vpop.f32.mrb[0].mxu0
    %5027 = vmatprep.mubr.f32.mxu0 0.0
    %5028 = vmatmul.mubr.f32.gmra.mrb[0].mxu0 %v95
    %v5029 = vpop.f32.mrb[0].mxu0
    %v5030 = vadd.f32 0.0, %v5029
    %v5031 = vpop.f32.mrb[0].mxu0
    %5032 = vmatprep.mubr.f32.mxu0 0.0
    %5033 = vmatmul.mubr.f32.gmra.mrb[0].mxu0 %v98
    %v5034 = vpop.f32.mrb[0].mxu0
    %v5035 = vadd.f32 0.0, %v5034
    %v5036 = vpop.f32.mrb[0].mxu0
    %5037 = vmatprep.mubr.f32.mxu0 0.0
    %5038 = vmatmul.mubr.f32.gmra.mrb[0].mxu0 %v101
    %v5039 = vpop.f32.mrb[0].mxu0
    %v5040 = vadd.f32 0.0, %v5039
    %v5041 = vpop.f32.mrb[0].mxu0
    %5042 = vmatprep.mubr.f32.mxu0 0.0
    %5043 = vmatmul.mubr.f32.gmra.mrb[0].mxu0 %v104
    %v5044 = vpop.f32.mrb[0].mxu0
    %v5045 = vadd.f32 0.0, %v5044
    %v5046 = vpop.f32.mrb[0].mxu0
    %5047 = vmatprep.mubr.f32.mxu0 0.0
    %5048 = vmatmul.mubr.f32.gmra.mrb[0].mxu0 %v107
    %v5049 = vpop.f32.mrb[0].mxu0
    %v5050 = vadd.f32 0.0, %v5049
    %v5051 = vpop.f32.mrb[0].mxu0
    %5052 = vmatprep.mubr.f32.mxu0 0.0
    %5053 = vmatmul.mubr.f32.gmra.mrb[0].mxu0 %v110
    %v5054 = vpop.f32.mrb[0].mxu0
    %v5055 = vadd.f32 0.0, %v5054
    %v5056 = vpop.f32.mrb[0].mxu0
    %5057 = vmatprep.mubr.f32.mxu0 0.0
    %5058 = vmatmul.mubr.f32.gmra.mrb[0].mxu0 %v113
    %v5059 = vpop.f32.mrb[0].mxu0
    %v5060 = vadd.f32 0.0, %v5059
    %v5061 = vpop.f32.mrb[0].mxu0
    %5062 = vmatprep.mubr.f32.mxu0 0.0
    %5063 = vmatmul.mubr.f32.gmra.mrb[0].mxu0 %v116
    %v5064 = vpop.f32.mrb[0].mxu0
    %v5065 = vadd.f32 0.0, %v5064
    %v5066 = vpop.f32.mrb[0].mxu0
    %5067 = vmatprep.mubr.f32.mxu0 0.0
    %5068 = vmatmul.mubr.f32.gmra.mrb[0].mxu0 %v119
    %v5069 = vpop.f32.mrb[0].mxu0
    %v5070 = vadd.f32 0.0, %v5069
    %v5071 = vpop.f32.mrb[0].mxu0
    %5072 = vmatprep.mubr.f32.mxu0 0.0
    %5073 = vmatmul.mubr.f32.gmra.mrb[0].mxu0 %v122
    %v5074 = vpop.f32.mrb[0].mxu0
    %v5075 = vadd.f32 0.0, %v5074
    %v5076 = vpop.f32.mrb[0].mxu0
    %5077 = vmatprep.mubr.f32.mxu0 0.0
    %5078 = vmatmul.mubr.f32.gmra.mrb[0].mxu0 %v125
    %v5079 = vpop.f32.mrb[0].mxu0
    %v5080 = vadd.f32 0.0, %v5079
    %v5081 = vpop.f32.mrb[0].mxu0
    %5082 = vmatprep.mubr.f32.mxu0 0.0
    %5083 = vmatmul.mubr.f32.gmra.mrb[0].mxu0 %v128
    %v5084 = vpop.f32.mrb[0].mxu0
    %v5085 = vadd.f32 0.0, %v5084
    %v5086 = vpop.f32.mrb[0].mxu0
    %5087 = vmatprep.mubr.f32.mxu0 0.0
    %5088 = vmatmul.mubr.f32.gmra.mrb[0].mxu0 %v131
    %v5089 = vpop.f32.mrb[0].mxu0
    %v5090 = vadd.f32 0.0, %v5089
    %v5091 = vpop.f32.mrb[0].mxu0
    %5092 = vmatprep.mubr.f32.mxu0 0.0
    %5093 = vmatmul.mubr.f32.gmra.mrb[0].mxu0 %v134
    %v5094 = vpop.f32.mrb[0].mxu0
    %v5095 = vadd.f32 0.0, %v5094
    %v5096 = vpop.f32.mrb[0].mxu0
    %5097 = vmatprep.mubr.f32.mxu0 0.0
    %5098 = vmatmul.mubr.f32.gmra.mrb[0].mxu0 %v137
    %v5099 = vpop.f32.mrb[0].mxu0
    %v5100 = vadd.f32 0.0, %v5099
    %v5101 = vpop.f32.mrb[0].mxu0
    %5102 = vmatprep.mubr.f32.mxu0 0.0
    %5103 = vmatmul.mubr.f32.gmra.mrb[0].mxu0 %v140
    %v5104 = vpop.f32.mrb[0].mxu0
    %v5105 = vadd.f32 0.0, %v5104
    %v5106 = vpop.f32.mrb[0].mxu0
    %5107 = vmatprep.mubr.f32.mxu0 0.0
    %5108 = vmatmul.mubr.f32.gmra.mrb[0].mxu0 %v143
    %v5109 = vpop.f32.mrb[0].mxu0
    %v5110 = vadd.f32 0.0, %v5109
    %v5111 = vpop.f32.mrb[0].mxu0
    %5112 = vmatprep.mubr.f32.mxu0 0.0
    %5113 = vmatmul.mubr.f32.gmra.mrb[0].mxu0 %v146
    %v5114 = vpop.f32.mrb[0].mxu0
    %v5115 = vadd.f32 0.0, %v5114
    %v5116 = vpop.f32.mrb[0].mxu0
    %5117 = vmatprep.mubr.f32.mxu0 0.0
    %5118 = vmatmul.mubr.f32.gmra.mrb[0].mxu0 %v149
    %v5119 = vpop.f32.mrb[0].mxu0
    %v5120 = vadd.f32 0.0, %v5119
    %v5121 = vpop.f32.mrb[0].mxu0
    %5122 = vmatprep.mubr.f32.mxu0 0.0
    %5123 = vmatmul.mubr.f32.gmra.mrb[0].mxu0 %v152
    %v5124 = vpop.f32.mrb[0].mxu0
    %v5125 = vadd.f32 0.0, %v5124
    %v5126 = vpop.f32.mrb[0].mxu0
    %5127 = vmatprep.mubr.f32.mxu0 0.0
    %5128 = vmatmul.mubr.f32.gmra.mrb[0].mxu0 %v155
    %v5129 = vpop.f32.mrb[0].mxu0
    %v5130 = vadd.f32 0.0, %v5129
    %v5131 = vpop.f32.mrb[0].mxu0
    %5132 = vmatprep.mubr.f32.mxu0 0.0
    %5133 = vmatmul.mubr.f32.gmra.mrb[0].mxu0 %v158
    %v5134 = vpop.f32.mrb[0].mxu0
    %v5135 = vadd.f32 0.0, %v5134
    %v5136 = vpop.f32.mrb[0].mxu0
    %5137 = vmatprep.mubr.f32.mxu0 0.0
    %5138 = vmatmul.mubr.f32.gmra.mrb[0].mxu0 %v161
    %v5139 = vpop.f32.mrb[0].mxu0
    %v5140 = vadd.f32 0.0, %v5139
    %v5141 = vpop.f32.mrb[0].mxu0
    %5142 = vmatprep.mubr.f32.mxu0 0.0
    %5143 = vmatmul.mubr.f32.gmra.mrb[0].mxu0 %v164
    %v5144 = vpop.f32.mrb[0].mxu0
    %v5145 = vadd.f32 0.0, %v5144
    %v5146 = vpop.f32.mrb[0].mxu0
    %5147 = vmatprep.mubr.f32.mxu0 0.0
    %5148 = vmatmul.mubr.f32.gmra.mrb[0].mxu0 %v167
    %v5149 = vpop.f32.mrb[0].mxu0
    %v5150 = vadd.f32 0.0, %v5149
    %v5151 = vpop.f32.mrb[0].mxu0
    %5152 = vmatprep.mubr.f32.mxu0 0.0
    %5153 = vmatmul.mubr.f32.gmra.mrb[0].mxu0 %v170
    %v5154 = vpop.f32.mrb[0].mxu0
    %v5155 = vadd.f32 0.0, %v5154
    %v5156 = vpop.f32.mrb[0].mxu0
    %5157 = vmatprep.mubr.f32.mxu0 0.0
    %5158 = vmatmul.mubr.f32.gmra.mrb[0].mxu0 %v173
    %v5159 = vpop.f32.mrb[0].mxu0
    %v5160 = vadd.f32 0.0, %v5159
    %v5161 = vpop.f32.mrb[0].mxu0
    %5162 = vmatprep.mubr.f32.mxu0 0.0
    %5163 = vmatmul.mubr.f32.gmra.mrb[0].mxu0 %v176
    %v5164 = vpop.f32.mrb[0].mxu0
    %v5165 = vadd.f32 0.0, %v5164
    %v5166 = vpop.f32.mrb[0].mxu0
    %5167 = vmatprep.mubr.f32.mxu0 0.0
    %5168 = vmatmul.mubr.f32.gmra.mrb[0].mxu0 %v179
    %v5169 = vpop.f32.mrb[0].mxu0
    %v5170 = vadd.f32 0.0, %v5169
    %v5171 = vpop.f32.mrb[0].mxu0
    %5172 = vmatprep.mubr.f32.mxu0 0.0
    %5173 = vmatmul.mubr.f32.gmra.mrb[0].mxu0 %v182
    %v5174 = vpop.f32.mrb[0].mxu0
    %v5175 = vadd.f32 0.0, %v5174
    %v5176 = vpop.f32.mrb[0].mxu0
    %5177 = vmatprep.mubr.f32.mxu0 0.0
    %5178 = vmatmul.mubr.f32.gmra.mrb[0].mxu0 %v185
    %v5179 = vpop.f32.mrb[0].mxu0
    %v5180 = vadd.f32 0.0, %v5179
    %v5181 = vpop.f32.mrb[0].mxu0
    %5182 = vdwg.mxu0
    %s5183 = scalar_lea.vmem [#allocation2], 832
    %v5184 = vld [vmem:[%s5183] sm:$0xff]
    %v5185 = vld [vmem:[%s5183 + $0x8] sm:$0xff]
    %v5186 = vld [vmem:[%s5183 + $0x10] sm:$0xff]
    %v5187 = vld [vmem:[%s5183 + $0x18] sm:$0xff]
    %v5188 = vld [vmem:[%s5183 + $0x20] sm:$0xff]
    %v5189 = vld [vmem:[%s5183 + $0x28] sm:$0xff]
    %v5190 = vld [vmem:[%s5183 + $0x30] sm:$0xff]
    %v5191 = vld [vmem:[%s5183 + $0x38] sm:$0xff]
    %v5192 = vunpack.c.l.bf16 %v5184
    %v5193 = vunpack.c.h.bf16 %v5184
    %v5194 = vunpack.c.l.bf16 %v5185
    %v5195 = vunpack.c.h.bf16 %v5185
    %v5196 = vunpack.c.l.bf16 %v5186
    %v5197 = vunpack.c.h.bf16 %v5186
    %v5198 = vunpack.c.l.bf16 %v5187
    %v5199 = vunpack.c.h.bf16 %v5187
    %v5200 = vunpack.c.l.bf16 %v5188
    %v5201 = vunpack.c.h.bf16 %v5188
    %v5202 = vunpack.c.l.bf16 %v5189
    %v5203 = vunpack.c.h.bf16 %v5189
    %v5204 = vunpack.c.l.bf16 %v5190
    %v5205 = vunpack.c.h.bf16 %v5190
    %v5206 = vunpack.c.l.bf16 %v5191
    %v5207 = vunpack.c.h.bf16 %v5191
    %5208 = vmatprep.subr.mxu0 0.0
    %5209 = vmatpush1.msra.mxu0 %v5025
    %5210 = vmatprep.subr.mxu0 0.0
    %5211 = vmatpush1.msra.mxu0 %v5030
    %5212 = vmatprep.subr.mxu0 0.0
    %5213 = vmatpush1.msra.mxu0 %v5035
    %5214 = vmatprep.subr.mxu0 0.0
    %5215 = vmatpush1.msra.mxu0 %v5040
    %5216 = vmatprep.subr.mxu0 0.0
    %5217 = vmatpush1.msra.mxu0 %v5045
    %5218 = vmatprep.subr.mxu0 0.0
    %5219 = vmatpush1.msra.mxu0 %v5050
    %5220 = vmatprep.subr.mxu0 0.0
    %5221 = vmatpush1.msra.mxu0 %v5055
    %5222 = vmatprep.subr.mxu0 0.0
    %5223 = vmatpush1.msra.mxu0 %v5060
    %5224 = vmatprep.subr.mxu0 0.0
    %5225 = vmatpush1.msra.mxu0 %v5065
    %5226 = vmatprep.subr.mxu0 0.0
    %5227 = vmatpush1.msra.mxu0 %v5070
    %5228 = vmatprep.subr.mxu0 0.0
    %5229 = vmatpush1.msra.mxu0 %v5075
    %5230 = vmatprep.subr.mxu0 0.0
    %5231 = vmatpush1.msra.mxu0 %v5080
    %5232 = vmatprep.subr.mxu0 0.0
    %5233 = vmatpush1.msra.mxu0 %v5085
    %5234 = vmatprep.subr.mxu0 0.0
    %5235 = vmatpush1.msra.mxu0 %v5090
    %5236 = vmatprep.subr.mxu0 0.0
    %5237 = vmatpush1.msra.mxu0 %v5095
    %5238 = vmatprep.subr.mxu0 0.0
    %5239 = vmatpush1.msra.mxu0 %v5100
    %5240 = vmatprep.subr.mxu0 0.0
    %5241 = vmatpush1.msra.mxu0 %v5105
    %5242 = vmatprep.subr.mxu0 0.0
    %5243 = vmatpush1.msra.mxu0 %v5110
    %5244 = vmatprep.subr.mxu0 0.0
    %5245 = vmatpush1.msra.mxu0 %v5115
    %5246 = vmatprep.subr.mxu0 0.0
    %5247 = vmatpush1.msra.mxu0 %v5120
    %5248 = vmatprep.subr.mxu0 0.0
    %5249 = vmatpush1.msra.mxu0 %v5125
    %5250 = vmatprep.subr.mxu0 0.0
    %5251 = vmatpush1.msra.mxu0 %v5130
    %5252 = vmatprep.subr.mxu0 0.0
    %5253 = vmatpush1.msra.mxu0 %v5135
    %5254 = vmatprep.subr.mxu0 0.0
    %5255 = vmatpush1.msra.mxu0 %v5140
    %5256 = vmatprep.subr.mxu0 0.0
    %5257 = vmatpush1.msra.mxu0 %v5145
    %5258 = vmatprep.subr.mxu0 0.0
    %5259 = vmatpush1.msra.mxu0 %v5150
    %5260 = vmatprep.subr.mxu0 0.0
    %5261 = vmatpush1.msra.mxu0 %v5155
    %5262 = vmatprep.subr.mxu0 0.0
    %5263 = vmatpush1.msra.mxu0 %v5160
    %5264 = vmatprep.subr.mxu0 0.0
    %5265 = vmatpush1.msra.mxu0 %v5165
    %5266 = vmatprep.subr.mxu0 0.0
    %5267 = vmatpush1.msra.mxu0 %v5170
    %5268 = vmatprep.subr.mxu0 0.0
    %5269 = vmatpush1.msra.mxu0 %v5175
    %5270 = vmatprep.subr.mxu0 0.0
    %5271 = vmatpush1.msra.mxu0 %v5180
    %5272 = vmatprep.mubr.f32.mxu0 %v5193
    %5273 = vmatmul.mubr.f32.gmra.mrb[0].mxu0 %v5192
    %v5274 = vpop.f32.mrb[0].mxu0
    %v5275 = vadd.f32 0.0, %v5274
    %v5276 = vpop.f32.mrb[0].mxu0
    %5277 = vmatprep.mubr.f32.mxu0 %v5195
    %5278 = vmatmul.mubr.f32.gmra.mrb[0].mxu0 %v5194
    %v5279 = vpop.f32.mrb[0].mxu0
    %v5280 = vadd.f32 0.0, %v5279
    %v5281 = vpop.f32.mrb[0].mxu0
    %5282 = vmatprep.mubr.f32.mxu0 %v5197
    %5283 = vmatmul.mubr.f32.gmra.mrb[0].mxu0 %v5196
    %v5284 = vpop.f32.mrb[0].mxu0
    %v5285 = vadd.f32 0.0, %v5284
    %v5286 = vpop.f32.mrb[0].mxu0
    %5287 = vmatprep.mubr.f32.mxu0 %v5199
    %5288 = vmatmul.mubr.f32.gmra.mrb[0].mxu0 %v5198
    %v5289 = vpop.f32.mrb[0].mxu0
    %v5290 = vadd.f32 0.0, %v5289
    %v5291 = vpop.f32.mrb[0].mxu0
    %5292 = vmatprep.mubr.f32.mxu0 %v5201
    %5293 = vmatmul.mubr.f32.gmra.mrb[0].mxu0 %v5200
    %v5294 = vpop.f32.mrb[0].mxu0
    %v5295 = vadd.f32 0.0, %v5294
    %v5296 = vpop.f32.mrb[0].mxu0
    %5297 = vmatprep.mubr.f32.mxu0 %v5203
    %5298 = vmatmul.mubr.f32.gmra.mrb[0].mxu0 %v5202
    %v5299 = vpop.f32.mrb[0].mxu0
    %v5300 = vadd.f32 0.0, %v5299
    %v5301 = vpop.f32.mrb[0].mxu0
    %5302 = vmatprep.mubr.f32.mxu0 %v5205
    %5303 = vmatmul.mubr.f32.gmra.mrb[0].mxu0 %v5204
    %v5304 = vpop.f32.mrb[0].mxu0
    %v5305 = vadd.f32 0.0, %v5304
    %v5306 = vpop.f32.mrb[0].mxu0
    %5307 = vmatprep.mubr.f32.mxu0 %v5207
    %5308 = vmatmul.mubr.f32.gmra.mrb[0].mxu0 %v5206
    %v5309 = vpop.f32.mrb[0].mxu0
    %v5310 = vadd.f32 0.0, %v5309
    %v5311 = vpop.f32.mrb[0].mxu0
    %5312 = vdwg.mxu0
    %v5313 = vadd.f32 %v4945, %v5275
    %v5314 = vadd.f32 %v4946, %v5280
    %v5315 = vadd.f32 %v4947, %v5285
    %v5316 = vadd.f32 %v4948, %v5290
    %v5317 = vadd.f32 %v4949, %v5295
    %v5318 = vadd.f32 %v4950, %v5300
    %v5319 = vadd.f32 %v4951, %v5305
    %v5320 = vadd.f32 %v4952, %v5310
    %s5321 = scalar_lea.vmem %s2, 56
    %v5322 = vld [vmem:[%s5321] sm:$0xf]
    %v5324 = vsel %vm187, %v5322, 0
    %5326 = vmatprep.subr.mxu0 0.0
    %5327 = vmatpush1.msra.mxu0 %v5324
    %5328 = vmatprep.subr.mxu0 0.0
    %5329 = vmatpush1.msra.mxu0 0.0
    %5330 = vmatprep.subr.mxu0 0.0
    %5331 = vmatpush1.msra.mxu0 0.0
    %5332 = vmatprep.subr.mxu0 0.0
    %5333 = vmatpush1.msra.mxu0 0.0
    %5334 = vmatprep.subr.mxu0 0.0
    %5335 = vmatpush1.msra.mxu0 0.0
    %5336 = vmatprep.subr.mxu0 0.0
    %5337 = vmatpush1.msra.mxu0 0.0
    %5338 = vmatprep.subr.mxu0 0.0
    %5339 = vmatpush1.msra.mxu0 0.0
    %5340 = vmatprep.subr.mxu0 0.0
    %5341 = vmatpush1.msra.mxu0 0.0
    %5342 = vmatprep.subr.mxu0 0.0
    %5343 = vmatpush1.msra.mxu0 0.0
    %5344 = vmatprep.subr.mxu0 0.0
    %5345 = vmatpush1.msra.mxu0 0.0
    %5346 = vmatprep.subr.mxu0 0.0
    %5347 = vmatpush1.msra.mxu0 0.0
    %5348 = vmatprep.subr.mxu0 0.0
    %5349 = vmatpush1.msra.mxu0 0.0
    %5350 = vmatprep.subr.mxu0 0.0
    %5351 = vmatpush1.msra.mxu0 0.0
    %5352 = vmatprep.subr.mxu0 0.0
    %5353 = vmatpush1.msra.mxu0 0.0
    %5354 = vmatprep.subr.mxu0 0.0
    %5355 = vmatpush1.msra.mxu0 0.0
    %5356 = vmatprep.subr.mxu0 0.0
    %5357 = vmatpush1.msra.mxu0 0.0
    %5358 = vmatprep.subr.mxu0 0.0
    %5359 = vmatpush1.msra.mxu0 0.0
    %5360 = vmatprep.subr.mxu0 0.0
    %5361 = vmatpush1.msra.mxu0 0.0
    %5362 = vmatprep.subr.mxu0 0.0
    %5363 = vmatpush1.msra.mxu0 0.0
    %5364 = vmatprep.subr.mxu0 0.0
    %5365 = vmatpush1.msra.mxu0 0.0
    %5366 = vmatprep.subr.mxu0 0.0
    %5367 = vmatpush1.msra.mxu0 0.0
    %5368 = vmatprep.subr.mxu0 0.0
    %5369 = vmatpush1.msra.mxu0 0.0
    %5370 = vmatprep.subr.mxu0 0.0
    %5371 = vmatpush1.msra.mxu0 0.0
    %5372 = vmatprep.subr.mxu0 0.0
    %5373 = vmatpush1.msra.mxu0 0.0
    %5374 = vmatprep.subr.mxu0 0.0
    %5375 = vmatpush1.msra.mxu0 0.0
    %5376 = vmatprep.subr.mxu0 0.0
    %5377 = vmatpush1.msra.mxu0 0.0
    %5378 = vmatprep.subr.mxu0 0.0
    %5379 = vmatpush1.msra.mxu0 0.0
    %5380 = vmatprep.subr.mxu0 0.0
    %5381 = vmatpush1.msra.mxu0 0.0
    %5382 = vmatprep.subr.mxu0 0.0
    %5383 = vmatpush1.msra.mxu0 0.0
    %5384 = vmatprep.subr.mxu0 0.0
    %5385 = vmatpush1.msra.mxu0 0.0
    %5386 = vmatprep.subr.mxu0 0.0
    %5387 = vmatpush1.msra.mxu0 0.0
    %5388 = vmatprep.subr.mxu0 0.0
    %5389 = vmatpush1.msra.mxu0 0.0
    %5390 = vmatprep.mubr.f32.mxu0 0.0
    %5391 = vmatmul.mubr.f32.gmra.mrb[0].mxu0 %v92
    %v5392 = vpop.f32.mrb[0].mxu0
    %v5393 = vadd.f32 0.0, %v5392
    %v5394 = vpop.f32.mrb[0].mxu0
    %5395 = vmatprep.mubr.f32.mxu0 0.0
    %5396 = vmatmul.mubr.f32.gmra.mrb[0].mxu0 %v95
    %v5397 = vpop.f32.mrb[0].mxu0
    %v5398 = vadd.f32 0.0, %v5397
    %v5399 = vpop.f32.mrb[0].mxu0
    %5400 = vmatprep.mubr.f32.mxu0 0.0
    %5401 = vmatmul.mubr.f32.gmra.mrb[0].mxu0 %v98
    %v5402 = vpop.f32.mrb[0].mxu0
    %v5403 = vadd.f32 0.0, %v5402
    %v5404 = vpop.f32.mrb[0].mxu0
    %5405 = vmatprep.mubr.f32.mxu0 0.0
    %5406 = vmatmul.mubr.f32.gmra.mrb[0].mxu0 %v101
    %v5407 = vpop.f32.mrb[0].mxu0
    %v5408 = vadd.f32 0.0, %v5407
    %v5409 = vpop.f32.mrb[0].mxu0
    %5410 = vmatprep.mubr.f32.mxu0 0.0
    %5411 = vmatmul.mubr.f32.gmra.mrb[0].mxu0 %v104
    %v5412 = vpop.f32.mrb[0].mxu0
    %v5413 = vadd.f32 0.0, %v5412
    %v5414 = vpop.f32.mrb[0].mxu0
    %5415 = vmatprep.mubr.f32.mxu0 0.0
    %5416 = vmatmul.mubr.f32.gmra.mrb[0].mxu0 %v107
    %v5417 = vpop.f32.mrb[0].mxu0
    %v5418 = vadd.f32 0.0, %v5417
    %v5419 = vpop.f32.mrb[0].mxu0
    %5420 = vmatprep.mubr.f32.mxu0 0.0
    %5421 = vmatmul.mubr.f32.gmra.mrb[0].mxu0 %v110
    %v5422 = vpop.f32.mrb[0].mxu0
    %v5423 = vadd.f32 0.0, %v5422
    %v5424 = vpop.f32.mrb[0].mxu0
    %5425 = vmatprep.mubr.f32.mxu0 0.0
    %5426 = vmatmul.mubr.f32.gmra.mrb[0].mxu0 %v113
    %v5427 = vpop.f32.mrb[0].mxu0
    %v5428 = vadd.f32 0.0, %v5427
    %v5429 = vpop.f32.mrb[0].mxu0
    %5430 = vmatprep.mubr.f32.mxu0 0.0
    %5431 = vmatmul.mubr.f32.gmra.mrb[0].mxu0 %v116
    %v5432 = vpop.f32.mrb[0].mxu0
    %v5433 = vadd.f32 0.0, %v5432
    %v5434 = vpop.f32.mrb[0].mxu0
    %5435 = vmatprep.mubr.f32.mxu0 0.0
    %5436 = vmatmul.mubr.f32.gmra.mrb[0].mxu0 %v119
    %v5437 = vpop.f32.mrb[0].mxu0
    %v5438 = vadd.f32 0.0, %v5437
    %v5439 = vpop.f32.mrb[0].mxu0
    %5440 = vmatprep.mubr.f32.mxu0 0.0
    %5441 = vmatmul.mubr.f32.gmra.mrb[0].mxu0 %v122
    %v5442 = vpop.f32.mrb[0].mxu0
    %v5443 = vadd.f32 0.0, %v5442
    %v5444 = vpop.f32.mrb[0].mxu0
    %5445 = vmatprep.mubr.f32.mxu0 0.0
    %5446 = vmatmul.mubr.f32.gmra.mrb[0].mxu0 %v125
    %v5447 = vpop.f32.mrb[0].mxu0
    %v5448 = vadd.f32 0.0, %v5447
    %v5449 = vpop.f32.mrb[0].mxu0
    %5450 = vmatprep.mubr.f32.mxu0 0.0
    %5451 = vmatmul.mubr.f32.gmra.mrb[0].mxu0 %v128
    %v5452 = vpop.f32.mrb[0].mxu0
    %v5453 = vadd.f32 0.0, %v5452
    %v5454 = vpop.f32.mrb[0].mxu0
    %5455 = vmatprep.mubr.f32.mxu0 0.0
    %5456 = vmatmul.mubr.f32.gmra.mrb[0].mxu0 %v131
    %v5457 = vpop.f32.mrb[0].mxu0
    %v5458 = vadd.f32 0.0, %v5457
    %v5459 = vpop.f32.mrb[0].mxu0
    %5460 = vmatprep.mubr.f32.mxu0 0.0
    %5461 = vmatmul.mubr.f32.gmra.mrb[0].mxu0 %v134
    %v5462 = vpop.f32.mrb[0].mxu0
    %v5463 = vadd.f32 0.0, %v5462
    %v5464 = vpop.f32.mrb[0].mxu0
    %5465 = vmatprep.mubr.f32.mxu0 0.0
    %5466 = vmatmul.mubr.f32.gmra.mrb[0].mxu0 %v137
    %v5467 = vpop.f32.mrb[0].mxu0
    %v5468 = vadd.f32 0.0, %v5467
    %v5469 = vpop.f32.mrb[0].mxu0
    %5470 = vmatprep.mubr.f32.mxu0 0.0
    %5471 = vmatmul.mubr.f32.gmra.mrb[0].mxu0 %v140
    %v5472 = vpop.f32.mrb[0].mxu0
    %v5473 = vadd.f32 0.0, %v5472
    %v5474 = vpop.f32.mrb[0].mxu0
    %5475 = vmatprep.mubr.f32.mxu0 0.0
    %5476 = vmatmul.mubr.f32.gmra.mrb[0].mxu0 %v143
    %v5477 = vpop.f32.mrb[0].mxu0
    %v5478 = vadd.f32 0.0, %v5477
    %v5479 = vpop.f32.mrb[0].mxu0
    %5480 = vmatprep.mubr.f32.mxu0 0.0
    %5481 = vmatmul.mubr.f32.gmra.mrb[0].mxu0 %v146
    %v5482 = vpop.f32.mrb[0].mxu0
    %v5483 = vadd.f32 0.0, %v5482
    %v5484 = vpop.f32.mrb[0].mxu0
    %5485 = vmatprep.mubr.f32.mxu0 0.0
    %5486 = vmatmul.mubr.f32.gmra.mrb[0].mxu0 %v149
    %v5487 = vpop.f32.mrb[0].mxu0
    %v5488 = vadd.f32 0.0, %v5487
    %v5489 = vpop.f32.mrb[0].mxu0
    %5490 = vmatprep.mubr.f32.mxu0 0.0
    %5491 = vmatmul.mubr.f32.gmra.mrb[0].mxu0 %v152
    %v5492 = vpop.f32.mrb[0].mxu0
    %v5493 = vadd.f32 0.0, %v5492
    %v5494 = vpop.f32.mrb[0].mxu0
    %5495 = vmatprep.mubr.f32.mxu0 0.0
    %5496 = vmatmul.mubr.f32.gmra.mrb[0].mxu0 %v155
    %v5497 = vpop.f32.mrb[0].mxu0
    %v5498 = vadd.f32 0.0, %v5497
    %v5499 = vpop.f32.mrb[0].mxu0
    %5500 = vmatprep.mubr.f32.mxu0 0.0
    %5501 = vmatmul.mubr.f32.gmra.mrb[0].mxu0 %v158
    %v5502 = vpop.f32.mrb[0].mxu0
    %v5503 = vadd.f32 0.0, %v5502
    %v5504 = vpop.f32.mrb[0].mxu0
    %5505 = vmatprep.mubr.f32.mxu0 0.0
    %5506 = vmatmul.mubr.f32.gmra.mrb[0].mxu0 %v161
    %v5507 = vpop.f32.mrb[0].mxu0
    %v5508 = vadd.f32 0.0, %v5507
    %v5509 = vpop.f32.mrb[0].mxu0
    %5510 = vmatprep.mubr.f32.mxu0 0.0
    %5511 = vmatmul.mubr.f32.gmra.mrb[0].mxu0 %v164
    %v5512 = vpop.f32.mrb[0].mxu0
    %v5513 = vadd.f32 0.0, %v5512
    %v5514 = vpop.f32.mrb[0].mxu0
    %5515 = vmatprep.mubr.f32.mxu0 0.0
    %5516 = vmatmul.mubr.f32.gmra.mrb[0].mxu0 %v167
    %v5517 = vpop.f32.mrb[0].mxu0
    %v5518 = vadd.f32 0.0, %v5517
    %v5519 = vpop.f32.mrb[0].mxu0
    %5520 = vmatprep.mubr.f32.mxu0 0.0
    %5521 = vmatmul.mubr.f32.gmra.mrb[0].mxu0 %v170
    %v5522 = vpop.f32.mrb[0].mxu0
    %v5523 = vadd.f32 0.0, %v5522
    %v5524 = vpop.f32.mrb[0].mxu0
    %5525 = vmatprep.mubr.f32.mxu0 0.0
    %5526 = vmatmul.mubr.f32.gmra.mrb[0].mxu0 %v173
    %v5527 = vpop.f32.mrb[0].mxu0
    %v5528 = vadd.f32 0.0, %v5527
    %v5529 = vpop.f32.mrb[0].mxu0
    %5530 = vmatprep.mubr.f32.mxu0 0.0
    %5531 = vmatmul.mubr.f32.gmra.mrb[0].mxu0 %v176
    %v5532 = vpop.f32.mrb[0].mxu0
    %v5533 = vadd.f32 0.0, %v5532
    %v5534 = vpop.f32.mrb[0].mxu0
    %5535 = vmatprep.mubr.f32.mxu0 0.0
    %5536 = vmatmul.mubr.f32.gmra.mrb[0].mxu0 %v179
    %v5537 = vpop.f32.mrb[0].mxu0
    %v5538 = vadd.f32 0.0, %v5537
    %v5539 = vpop.f32.mrb[0].mxu0
    %5540 = vmatprep.mubr.f32.mxu0 0.0
    %5541 = vmatmul.mubr.f32.gmra.mrb[0].mxu0 %v182
    %v5542 = vpop.f32.mrb[0].mxu0
    %v5543 = vadd.f32 0.0, %v5542
    %v5544 = vpop.f32.mrb[0].mxu0
    %5545 = vmatprep.mubr.f32.mxu0 0.0
    %5546 = vmatmul.mubr.f32.gmra.mrb[0].mxu0 %v185
    %v5547 = vpop.f32.mrb[0].mxu0
    %v5548 = vadd.f32 0.0, %v5547
    %v5549 = vpop.f32.mrb[0].mxu0
    %5550 = vdwg.mxu0
    %s5551 = scalar_lea.vmem [#allocation2], 896
    %v5552 = vld [vmem:[%s5551] sm:$0xff]
    %v5553 = vld [vmem:[%s5551 + $0x8] sm:$0xff]
    %v5554 = vld [vmem:[%s5551 + $0x10] sm:$0xff]
    %v5555 = vld [vmem:[%s5551 + $0x18] sm:$0xff]
    %v5556 = vld [vmem:[%s5551 + $0x20] sm:$0xff]
    %v5557 = vld [vmem:[%s5551 + $0x28] sm:$0xff]
    %v5558 = vld [vmem:[%s5551 + $0x30] sm:$0xff]
    %v5559 = vld [vmem:[%s5551 + $0x38] sm:$0xff]
    %v5560 = vunpack.c.l.bf16 %v5552
    %v5561 = vunpack.c.h.bf16 %v5552
    %v5562 = vunpack.c.l.bf16 %v5553
    %v5563 = vunpack.c.h.bf16 %v5553
    %v5564 = vunpack.c.l.bf16 %v5554
    %v5565 = vunpack.c.h.bf16 %v5554
    %v5566 = vunpack.c.l.bf16 %v5555
    %v5567 = vunpack.c.h.bf16 %v5555
    %v5568 = vunpack.c.l.bf16 %v5556
    %v5569 = vunpack.c.h.bf16 %v5556
    %v5570 = vunpack.c.l.bf16 %v5557
    %v5571 = vunpack.c.h.bf16 %v5557
    %v5572 = vunpack.c.l.bf16 %v5558
    %v5573 = vunpack.c.h.bf16 %v5558
    %v5574 = vunpack.c.l.bf16 %v5559
    %v5575 = vunpack.c.h.bf16 %v5559
    %5576 = vmatprep.subr.mxu0 0.0
    %5577 = vmatpush1.msra.mxu0 %v5393
    %5578 = vmatprep.subr.mxu0 0.0
    %5579 = vmatpush1.msra.mxu0 %v5398
    %5580 = vmatprep.subr.mxu0 0.0
    %5581 = vmatpush1.msra.mxu0 %v5403
    %5582 = vmatprep.subr.mxu0 0.0
    %5583 = vmatpush1.msra.mxu0 %v5408
    %5584 = vmatprep.subr.mxu0 0.0
    %5585 = vmatpush1.msra.mxu0 %v5413
    %5586 = vmatprep.subr.mxu0 0.0
    %5587 = vmatpush1.msra.mxu0 %v5418
    %5588 = vmatprep.subr.mxu0 0.0
    %5589 = vmatpush1.msra.mxu0 %v5423
    %5590 = vmatprep.subr.mxu0 0.0
    %5591 = vmatpush1.msra.mxu0 %v5428
    %5592 = vmatprep.subr.mxu0 0.0
    %5593 = vmatpush1.msra.mxu0 %v5433
    %5594 = vmatprep.subr.mxu0 0.0
    %5595 = vmatpush1.msra.mxu0 %v5438
    %5596 = vmatprep.subr.mxu0 0.0
    %5597 = vmatpush1.msra.mxu0 %v5443
    %5598 = vmatprep.subr.mxu0 0.0
    %5599 = vmatpush1.msra.mxu0 %v5448
    %5600 = vmatprep.subr.mxu0 0.0
    %5601 = vmatpush1.msra.mxu0 %v5453
    %5602 = vmatprep.subr.mxu0 0.0
    %5603 = vmatpush1.msra.mxu0 %v5458
    %5604 = vmatprep.subr.mxu0 0.0
    %5605 = vmatpush1.msra.mxu0 %v5463
    %5606 = vmatprep.subr.mxu0 0.0
    %5607 = vmatpush1.msra.mxu0 %v5468
    %5608 = vmatprep.subr.mxu0 0.0
    %5609 = vmatpush1.msra.mxu0 %v5473
    %5610 = vmatprep.subr.mxu0 0.0
    %5611 = vmatpush1.msra.mxu0 %v5478
    %5612 = vmatprep.subr.mxu0 0.0
    %5613 = vmatpush1.msra.mxu0 %v5483
    %5614 = vmatprep.subr.mxu0 0.0
    %5615 = vmatpush1.msra.mxu0 %v5488
    %5616 = vmatprep.subr.mxu0 0.0
    %5617 = vmatpush1.msra.mxu0 %v5493
    %5618 = vmatprep.subr.mxu0 0.0
    %5619 = vmatpush1.msra.mxu0 %v5498
    %5620 = vmatprep.subr.mxu0 0.0
    %5621 = vmatpush1.msra.mxu0 %v5503
    %5622 = vmatprep.subr.mxu0 0.0
    %5623 = vmatpush1.msra.mxu0 %v5508
    %5624 = vmatprep.subr.mxu0 0.0
    %5625 = vmatpush1.msra.mxu0 %v5513
    %5626 = vmatprep.subr.mxu0 0.0
    %5627 = vmatpush1.msra.mxu0 %v5518
    %5628 = vmatprep.subr.mxu0 0.0
    %5629 = vmatpush1.msra.mxu0 %v5523
    %5630 = vmatprep.subr.mxu0 0.0
    %5631 = vmatpush1.msra.mxu0 %v5528
    %5632 = vmatprep.subr.mxu0 0.0
    %5633 = vmatpush1.msra.mxu0 %v5533
    %5634 = vmatprep.subr.mxu0 0.0
    %5635 = vmatpush1.msra.mxu0 %v5538
    %5636 = vmatprep.subr.mxu0 0.0
    %5637 = vmatpush1.msra.mxu0 %v5543
    %5638 = vmatprep.subr.mxu0 0.0
    %5639 = vmatpush1.msra.mxu0 %v5548
    %5640 = vmatprep.mubr.f32.mxu0 %v5561
    %5641 = vmatmul.mubr.f32.gmra.mrb[0].mxu0 %v5560
    %v5642 = vpop.f32.mrb[0].mxu0
    %v5643 = vadd.f32 0.0, %v5642
    %v5644 = vpop.f32.mrb[0].mxu0
    %5645 = vmatprep.mubr.f32.mxu0 %v5563
    %5646 = vmatmul.mubr.f32.gmra.mrb[0].mxu0 %v5562
    %v5647 = vpop.f32.mrb[0].mxu0
    %v5648 = vadd.f32 0.0, %v5647
    %v5649 = vpop.f32.mrb[0].mxu0
    %5650 = vmatprep.mubr.f32.mxu0 %v5565
    %5651 = vmatmul.mubr.f32.gmra.mrb[0].mxu0 %v5564
    %v5652 = vpop.f32.mrb[0].mxu0
    %v5653 = vadd.f32 0.0, %v5652
    %v5654 = vpop.f32.mrb[0].mxu0
    %5655 = vmatprep.mubr.f32.mxu0 %v5567
    %5656 = vmatmul.mubr.f32.gmra.mrb[0].mxu0 %v5566
    %v5657 = vpop.f32.mrb[0].mxu0
    %v5658 = vadd.f32 0.0, %v5657
    %v5659 = vpop.f32.mrb[0].mxu0
    %5660 = vmatprep.mubr.f32.mxu0 %v5569
    %5661 = vmatmul.mubr.f32.gmra.mrb[0].mxu0 %v5568
    %v5662 = vpop.f32.mrb[0].mxu0
    %v5663 = vadd.f32 0.0, %v5662
    %v5664 = vpop.f32.mrb[0].mxu0
    %5665 = vmatprep.mubr.f32.mxu0 %v5571
    %5666 = vmatmul.mubr.f32.gmra.mrb[0].mxu0 %v5570
    %v5667 = vpop.f32.mrb[0].mxu0
    %v5668 = vadd.f32 0.0, %v5667
    %v5669 = vpop.f32.mrb[0].mxu0
    %5670 = vmatprep.mubr.f32.mxu0 %v5573
    %5671 = vmatmul.mubr.f32.gmra.mrb[0].mxu0 %v5572
    %v5672 = vpop.f32.mrb[0].mxu0
    %v5673 = vadd.f32 0.0, %v5672
    %v5674 = vpop.f32.mrb[0].mxu0
    %5675 = vmatprep.mubr.f32.mxu0 %v5575
    %5676 = vmatmul.mubr.f32.gmra.mrb[0].mxu0 %v5574
    %v5677 = vpop.f32.mrb[0].mxu0
    %v5678 = vadd.f32 0.0, %v5677
    %v5679 = vpop.f32.mrb[0].mxu0
    %5680 = vdwg.mxu0
    %v5681 = vadd.f32 %v5313, %v5643
    %v5682 = vadd.f32 %v5314, %v5648
    %v5683 = vadd.f32 %v5315, %v5653
    %v5684 = vadd.f32 %v5316, %v5658
    %v5685 = vadd.f32 %v5317, %v5663
    %v5686 = vadd.f32 %v5318, %v5668
    %v5687 = vadd.f32 %v5319, %v5673
    %v5688 = vadd.f32 %v5320, %v5678
    %s5689 = scalar_lea.vmem %s2, 60
    %v5690 = vld [vmem:[%s5689] sm:$0xf]
    %v5692 = vsel %vm187, %v5690, 0
    %5694 = vmatprep.subr.mxu0 0.0
    %5695 = vmatpush1.msra.mxu0 %v5692
    %5696 = vmatprep.subr.mxu0 0.0
    %5697 = vmatpush1.msra.mxu0 0.0
    %5698 = vmatprep.subr.mxu0 0.0
    %5699 = vmatpush1.msra.mxu0 0.0
    %5700 = vmatprep.subr.mxu0 0.0
    %5701 = vmatpush1.msra.mxu0 0.0
    %5702 = vmatprep.subr.mxu0 0.0
    %5703 = vmatpush1.msra.mxu0 0.0
    %5704 = vmatprep.subr.mxu0 0.0
    %5705 = vmatpush1.msra.mxu0 0.0
    %5706 = vmatprep.subr.mxu0 0.0
    %5707 = vmatpush1.msra.mxu0 0.0
    %5708 = vmatprep.subr.mxu0 0.0
    %5709 = vmatpush1.msra.mxu0 0.0
    %5710 = vmatprep.subr.mxu0 0.0
    %5711 = vmatpush1.msra.mxu0 0.0
    %5712 = vmatprep.subr.mxu0 0.0
    %5713 = vmatpush1.msra.mxu0 0.0
    %5714 = vmatprep.subr.mxu0 0.0
    %5715 = vmatpush1.msra.mxu0 0.0
    %5716 = vmatprep.subr.mxu0 0.0
    %5717 = vmatpush1.msra.mxu0 0.0
    %5718 = vmatprep.subr.mxu0 0.0
    %5719 = vmatpush1.msra.mxu0 0.0
    %5720 = vmatprep.subr.mxu0 0.0
    %5721 = vmatpush1.msra.mxu0 0.0
    %5722 = vmatprep.subr.mxu0 0.0
    %5723 = vmatpush1.msra.mxu0 0.0
    %5724 = vmatprep.subr.mxu0 0.0
    %5725 = vmatpush1.msra.mxu0 0.0
    %5726 = vmatprep.subr.mxu0 0.0
    %5727 = vmatpush1.msra.mxu0 0.0
    %5728 = vmatprep.subr.mxu0 0.0
    %5729 = vmatpush1.msra.mxu0 0.0
    %5730 = vmatprep.subr.mxu0 0.0
    %5731 = vmatpush1.msra.mxu0 0.0
    %5732 = vmatprep.subr.mxu0 0.0
    %5733 = vmatpush1.msra.mxu0 0.0
    %5734 = vmatprep.subr.mxu0 0.0
    %5735 = vmatpush1.msra.mxu0 0.0
    %5736 = vmatprep.subr.mxu0 0.0
    %5737 = vmatpush1.msra.mxu0 0.0
    %5738 = vmatprep.subr.mxu0 0.0
    %5739 = vmatpush1.msra.mxu0 0.0
    %5740 = vmatprep.subr.mxu0 0.0
    %5741 = vmatpush1.msra.mxu0 0.0
    %5742 = vmatprep.subr.mxu0 0.0
    %5743 = vmatpush1.msra.mxu0 0.0
    %5744 = vmatprep.subr.mxu0 0.0
    %5745 = vmatpush1.msra.mxu0 0.0
    %5746 = vmatprep.subr.mxu0 0.0
    %5747 = vmatpush1.msra.mxu0 0.0
    %5748 = vmatprep.subr.mxu0 0.0
    %5749 = vmatpush1.msra.mxu0 0.0
    %5750 = vmatprep.subr.mxu0 0.0
    %5751 = vmatpush1.msra.mxu0 0.0
    %5752 = vmatprep.subr.mxu0 0.0
    %5753 = vmatpush1.msra.mxu0 0.0
    %5754 = vmatprep.subr.mxu0 0.0
    %5755 = vmatpush1.msra.mxu0 0.0
    %5756 = vmatprep.subr.mxu0 0.0
    %5757 = vmatpush1.msra.mxu0 0.0
    %5758 = vmatprep.mubr.f32.mxu0 0.0
    %5759 = vmatmul.mubr.f32.gmra.mrb[0].mxu0 %v92
    %v5760 = vpop.f32.mrb[0].mxu0
    %v5761 = vadd.f32 0.0, %v5760
    %v5762 = vpop.f32.mrb[0].mxu0
    %5763 = vmatprep.mubr.f32.mxu0 0.0
    %5764 = vmatmul.mubr.f32.gmra.mrb[0].mxu0 %v95
    %v5765 = vpop.f32.mrb[0].mxu0
    %v5766 = vadd.f32 0.0, %v5765
    %v5767 = vpop.f32.mrb[0].mxu0
    %5768 = vmatprep.mubr.f32.mxu0 0.0
    %5769 = vmatmul.mubr.f32.gmra.mrb[0].mxu0 %v98
    %v5770 = vpop.f32.mrb[0].mxu0
    %v5771 = vadd.f32 0.0, %v5770
    %v5772 = vpop.f32.mrb[0].mxu0
    %5773 = vmatprep.mubr.f32.mxu0 0.0
    %5774 = vmatmul.mubr.f32.gmra.mrb[0].mxu0 %v101
    %v5775 = vpop.f32.mrb[0].mxu0
    %v5776 = vadd.f32 0.0, %v5775
    %v5777 = vpop.f32.mrb[0].mxu0
    %5778 = vmatprep.mubr.f32.mxu0 0.0
    %5779 = vmatmul.mubr.f32.gmra.mrb[0].mxu0 %v104
    %v5780 = vpop.f32.mrb[0].mxu0
    %v5781 = vadd.f32 0.0, %v5780
    %v5782 = vpop.f32.mrb[0].mxu0
    %5783 = vmatprep.mubr.f32.mxu0 0.0
    %5784 = vmatmul.mubr.f32.gmra.mrb[0].mxu0 %v107
    %v5785 = vpop.f32.mrb[0].mxu0
    %v5786 = vadd.f32 0.0, %v5785
    %v5787 = vpop.f32.mrb[0].mxu0
    %5788 = vmatprep.mubr.f32.mxu0 0.0
    %5789 = vmatmul.mubr.f32.gmra.mrb[0].mxu0 %v110
    %v5790 = vpop.f32.mrb[0].mxu0
    %v5791 = vadd.f32 0.0, %v5790
    %v5792 = vpop.f32.mrb[0].mxu0
    %5793 = vmatprep.mubr.f32.mxu0 0.0
    %5794 = vmatmul.mubr.f32.gmra.mrb[0].mxu0 %v113
    %v5795 = vpop.f32.mrb[0].mxu0
    %v5796 = vadd.f32 0.0, %v5795
    %v5797 = vpop.f32.mrb[0].mxu0
    %5798 = vmatprep.mubr.f32.mxu0 0.0
    %5799 = vmatmul.mubr.f32.gmra.mrb[0].mxu0 %v116
    %v5800 = vpop.f32.mrb[0].mxu0
    %v5801 = vadd.f32 0.0, %v5800
    %v5802 = vpop.f32.mrb[0].mxu0
    %5803 = vmatprep.mubr.f32.mxu0 0.0
    %5804 = vmatmul.mubr.f32.gmra.mrb[0].mxu0 %v119
    %v5805 = vpop.f32.mrb[0].mxu0
    %v5806 = vadd.f32 0.0, %v5805
    %v5807 = vpop.f32.mrb[0].mxu0
    %5808 = vmatprep.mubr.f32.mxu0 0.0
    %5809 = vmatmul.mubr.f32.gmra.mrb[0].mxu0 %v122
    %v5810 = vpop.f32.mrb[0].mxu0
    %v5811 = vadd.f32 0.0, %v5810
    %v5812 = vpop.f32.mrb[0].mxu0
    %5813 = vmatprep.mubr.f32.mxu0 0.0
    %5814 = vmatmul.mubr.f32.gmra.mrb[0].mxu0 %v125
    %v5815 = vpop.f32.mrb[0].mxu0
    %v5816 = vadd.f32 0.0, %v5815
    %v5817 = vpop.f32.mrb[0].mxu0
    %5818 = vmatprep.mubr.f32.mxu0 0.0
    %5819 = vmatmul.mubr.f32.gmra.mrb[0].mxu0 %v128
    %v5820 = vpop.f32.mrb[0].mxu0
    %v5821 = vadd.f32 0.0, %v5820
    %v5822 = vpop.f32.mrb[0].mxu0
    %5823 = vmatprep.mubr.f32.mxu0 0.0
    %5824 = vmatmul.mubr.f32.gmra.mrb[0].mxu0 %v131
    %v5825 = vpop.f32.mrb[0].mxu0
    %v5826 = vadd.f32 0.0, %v5825
    %v5827 = vpop.f32.mrb[0].mxu0
    %5828 = vmatprep.mubr.f32.mxu0 0.0
    %5829 = vmatmul.mubr.f32.gmra.mrb[0].mxu0 %v134
    %v5830 = vpop.f32.mrb[0].mxu0
    %v5831 = vadd.f32 0.0, %v5830
    %v5832 = vpop.f32.mrb[0].mxu0
    %5833 = vmatprep.mubr.f32.mxu0 0.0
    %5834 = vmatmul.mubr.f32.gmra.mrb[0].mxu0 %v137
    %v5835 = vpop.f32.mrb[0].mxu0
    %v5836 = vadd.f32 0.0, %v5835
    %v5837 = vpop.f32.mrb[0].mxu0
    %5838 = vmatprep.mubr.f32.mxu0 0.0
    %5839 = vmatmul.mubr.f32.gmra.mrb[0].mxu0 %v140
    %v5840 = vpop.f32.mrb[0].mxu0
    %v5841 = vadd.f32 0.0, %v5840
    %v5842 = vpop.f32.mrb[0].mxu0
    %5843 = vmatprep.mubr.f32.mxu0 0.0
    %5844 = vmatmul.mubr.f32.gmra.mrb[0].mxu0 %v143
    %v5845 = vpop.f32.mrb[0].mxu0
    %v5846 = vadd.f32 0.0, %v5845
    %v5847 = vpop.f32.mrb[0].mxu0
    %5848 = vmatprep.mubr.f32.mxu0 0.0
    %5849 = vmatmul.mubr.f32.gmra.mrb[0].mxu0 %v146
    %v5850 = vpop.f32.mrb[0].mxu0
    %v5851 = vadd.f32 0.0, %v5850
    %v5852 = vpop.f32.mrb[0].mxu0
    %5853 = vmatprep.mubr.f32.mxu0 0.0
    %5854 = vmatmul.mubr.f32.gmra.mrb[0].mxu0 %v149
    %v5855 = vpop.f32.mrb[0].mxu0
    %v5856 = vadd.f32 0.0, %v5855
    %v5857 = vpop.f32.mrb[0].mxu0
    %5858 = vmatprep.mubr.f32.mxu0 0.0
    %5859 = vmatmul.mubr.f32.gmra.mrb[0].mxu0 %v152
    %v5860 = vpop.f32.mrb[0].mxu0
    %v5861 = vadd.f32 0.0, %v5860
    %v5862 = vpop.f32.mrb[0].mxu0
    %5863 = vmatprep.mubr.f32.mxu0 0.0
    %5864 = vmatmul.mubr.f32.gmra.mrb[0].mxu0 %v155
    %v5865 = vpop.f32.mrb[0].mxu0
    %v5866 = vadd.f32 0.0, %v5865
    %v5867 = vpop.f32.mrb[0].mxu0
    %5868 = vmatprep.mubr.f32.mxu0 0.0
    %5869 = vmatmul.mubr.f32.gmra.mrb[0].mxu0 %v158
    %v5870 = vpop.f32.mrb[0].mxu0
    %v5871 = vadd.f32 0.0, %v5870
    %v5872 = vpop.f32.mrb[0].mxu0
    %5873 = vmatprep.mubr.f32.mxu0 0.0
    %5874 = vmatmul.mubr.f32.gmra.mrb[0].mxu0 %v161
    %v5875 = vpop.f32.mrb[0].mxu0
    %v5876 = vadd.f32 0.0, %v5875
    %v5877 = vpop.f32.mrb[0].mxu0
    %5878 = vmatprep.mubr.f32.mxu0 0.0
    %5879 = vmatmul.mubr.f32.gmra.mrb[0].mxu0 %v164
    %v5880 = vpop.f32.mrb[0].mxu0
    %v5881 = vadd.f32 0.0, %v5880
    %v5882 = vpop.f32.mrb[0].mxu0
    %5883 = vmatprep.mubr.f32.mxu0 0.0
    %5884 = vmatmul.mubr.f32.gmra.mrb[0].mxu0 %v167
    %v5885 = vpop.f32.mrb[0].mxu0
    %v5886 = vadd.f32 0.0, %v5885
    %v5887 = vpop.f32.mrb[0].mxu0
    %5888 = vmatprep.mubr.f32.mxu0 0.0
    %5889 = vmatmul.mubr.f32.gmra.mrb[0].mxu0 %v170
    %v5890 = vpop.f32.mrb[0].mxu0
    %v5891 = vadd.f32 0.0, %v5890
    %v5892 = vpop.f32.mrb[0].mxu0
    %5893 = vmatprep.mubr.f32.mxu0 0.0
    %5894 = vmatmul.mubr.f32.gmra.mrb[0].mxu0 %v173
    %v5895 = vpop.f32.mrb[0].mxu0
    %v5896 = vadd.f32 0.0, %v5895
    %v5897 = vpop.f32.mrb[0].mxu0
    %5898 = vmatprep.mubr.f32.mxu0 0.0
    %5899 = vmatmul.mubr.f32.gmra.mrb[0].mxu0 %v176
    %v5900 = vpop.f32.mrb[0].mxu0
    %v5901 = vadd.f32 0.0, %v5900
    %v5902 = vpop.f32.mrb[0].mxu0
    %5903 = vmatprep.mubr.f32.mxu0 0.0
    %5904 = vmatmul.mubr.f32.gmra.mrb[0].mxu0 %v179
    %v5905 = vpop.f32.mrb[0].mxu0
    %v5906 = vadd.f32 0.0, %v5905
    %v5907 = vpop.f32.mrb[0].mxu0
    %5908 = vmatprep.mubr.f32.mxu0 0.0
    %5909 = vmatmul.mubr.f32.gmra.mrb[0].mxu0 %v182
    %v5910 = vpop.f32.mrb[0].mxu0
    %v5911 = vadd.f32 0.0, %v5910
    %v5912 = vpop.f32.mrb[0].mxu0
    %5913 = vmatprep.mubr.f32.mxu0 0.0
    %5914 = vmatmul.mubr.f32.gmra.mrb[0].mxu0 %v185
    %v5915 = vpop.f32.mrb[0].mxu0
    %v5916 = vadd.f32 0.0, %v5915
    %v5917 = vpop.f32.mrb[0].mxu0
    %5918 = vdwg.mxu0
    %s5919 = scalar_lea.vmem [#allocation2], 960
    %v5920 = vld [vmem:[%s5919] sm:$0xff]
    %v5921 = vld [vmem:[%s5919 + $0x8] sm:$0xff]
    %v5922 = vld [vmem:[%s5919 + $0x10] sm:$0xff]
    %v5923 = vld [vmem:[%s5919 + $0x18] sm:$0xff]
    %v5924 = vld [vmem:[%s5919 + $0x20] sm:$0xff]
    %v5925 = vld [vmem:[%s5919 + $0x28] sm:$0xff]
    %v5926 = vld [vmem:[%s5919 + $0x30] sm:$0xff]
    %v5927 = vld [vmem:[%s5919 + $0x38] sm:$0xff]
    %v5928 = vunpack.c.l.bf16 %v5920
    %v5929 = vunpack.c.h.bf16 %v5920
    %v5930 = vunpack.c.l.bf16 %v5921
    %v5931 = vunpack.c.h.bf16 %v5921
    %v5932 = vunpack.c.l.bf16 %v5922
    %v5933 = vunpack.c.h.bf16 %v5922
    %v5934 = vunpack.c.l.bf16 %v5923
    %v5935 = vunpack.c.h.bf16 %v5923
    %v5936 = vunpack.c.l.bf16 %v5924
    %v5937 = vunpack.c.h.bf16 %v5924
    %v5938 = vunpack.c.l.bf16 %v5925
    %v5939 = vunpack.c.h.bf16 %v5925
    %v5940 = vunpack.c.l.bf16 %v5926
    %v5941 = vunpack.c.h.bf16 %v5926
    %v5942 = vunpack.c.l.bf16 %v5927
    %v5943 = vunpack.c.h.bf16 %v5927
    %5944 = vmatprep.subr.mxu0 0.0
    %5945 = vmatpush1.msra.mxu0 %v5761
    %5946 = vmatprep.subr.mxu0 0.0
    %5947 = vmatpush1.msra.mxu0 %v5766
    %5948 = vmatprep.subr.mxu0 0.0
    %5949 = vmatpush1.msra.mxu0 %v5771
    %5950 = vmatprep.subr.mxu0 0.0
    %5951 = vmatpush1.msra.mxu0 %v5776
    %5952 = vmatprep.subr.mxu0 0.0
    %5953 = vmatpush1.msra.mxu0 %v5781
    %5954 = vmatprep.subr.mxu0 0.0
    %5955 = vmatpush1.msra.mxu0 %v5786
    %5956 = vmatprep.subr.mxu0 0.0
    %5957 = vmatpush1.msra.mxu0 %v5791
    %5958 = vmatprep.subr.mxu0 0.0
    %5959 = vmatpush1.msra.mxu0 %v5796
    %5960 = vmatprep.subr.mxu0 0.0
    %5961 = vmatpush1.msra.mxu0 %v5801
    %5962 = vmatprep.subr.mxu0 0.0
    %5963 = vmatpush1.msra.mxu0 %v5806
    %5964 = vmatprep.subr.mxu0 0.0
    %5965 = vmatpush1.msra.mxu0 %v5811
    %5966 = vmatprep.subr.mxu0 0.0
    %5967 = vmatpush1.msra.mxu0 %v5816
    %5968 = vmatprep.subr.mxu0 0.0
    %5969 = vmatpush1.msra.mxu0 %v5821
    %5970 = vmatprep.subr.mxu0 0.0
    %5971 = vmatpush1.msra.mxu0 %v5826
    %5972 = vmatprep.subr.mxu0 0.0
    %5973 = vmatpush1.msra.mxu0 %v5831
    %5974 = vmatprep.subr.mxu0 0.0
    %5975 = vmatpush1.msra.mxu0 %v5836
    %5976 = vmatprep.subr.mxu0 0.0
    %5977 = vmatpush1.msra.mxu0 %v5841
    %5978 = vmatprep.subr.mxu0 0.0
    %5979 = vmatpush1.msra.mxu0 %v5846
    %5980 = vmatprep.subr.mxu0 0.0
    %5981 = vmatpush1.msra.mxu0 %v5851
    %5982 = vmatprep.subr.mxu0 0.0
    %5983 = vmatpush1.msra.mxu0 %v5856
    %5984 = vmatprep.subr.mxu0 0.0
    %5985 = vmatpush1.msra.mxu0 %v5861
    %5986 = vmatprep.subr.mxu0 0.0
    %5987 = vmatpush1.msra.mxu0 %v5866
    %5988 = vmatprep.subr.mxu0 0.0
    %5989 = vmatpush1.msra.mxu0 %v5871
    %5990 = vmatprep.subr.mxu0 0.0
    %5991 = vmatpush1.msra.mxu0 %v5876
    %5992 = vmatprep.subr.mxu0 0.0
    %5993 = vmatpush1.msra.mxu0 %v5881
    %5994 = vmatprep.subr.mxu0 0.0
    %5995 = vmatpush1.msra.mxu0 %v5886
    %5996 = vmatprep.subr.mxu0 0.0
    %5997 = vmatpush1.msra.mxu0 %v5891
    %5998 = vmatprep.subr.mxu0 0.0
    %5999 = vmatpush1.msra.mxu0 %v5896
    %6000 = vmatprep.subr.mxu0 0.0
    %6001 = vmatpush1.msra.mxu0 %v5901
    %6002 = vmatprep.subr.mxu0 0.0
    %6003 = vmatpush1.msra.mxu0 %v5906
    %6004 = vmatprep.subr.mxu0 0.0
    %6005 = vmatpush1.msra.mxu0 %v5911
    %6006 = vmatprep.subr.mxu0 0.0
    %6007 = vmatpush1.msra.mxu0 %v5916
    %6008 = vmatprep.mubr.f32.mxu0 %v5929
    %6009 = vmatmul.mubr.f32.gmra.mrb[0].mxu0 %v5928
    %v6010 = vpop.f32.mrb[0].mxu0
    %v6011 = vadd.f32 0.0, %v6010
    %v6012 = vpop.f32.mrb[0].mxu0
    %6013 = vmatprep.mubr.f32.mxu0 %v5931
    %6014 = vmatmul.mubr.f32.gmra.mrb[0].mxu0 %v5930
    %v6015 = vpop.f32.mrb[0].mxu0
    %v6016 = vadd.f32 0.0, %v6015
    %v6017 = vpop.f32.mrb[0].mxu0
    %6018 = vmatprep.mubr.f32.mxu0 %v5933
    %6019 = vmatmul.mubr.f32.gmra.mrb[0].mxu0 %v5932
    %v6020 = vpop.f32.mrb[0].mxu0
    %v6021 = vadd.f32 0.0, %v6020
    %v6022 = vpop.f32.mrb[0].mxu0
    %6023 = vmatprep.mubr.f32.mxu0 %v5935
    %6024 = vmatmul.mubr.f32.gmra.mrb[0].mxu0 %v5934
    %v6025 = vpop.f32.mrb[0].mxu0
    %v6026 = vadd.f32 0.0, %v6025
    %v6027 = vpop.f32.mrb[0].mxu0
    %6028 = vmatprep.mubr.f32.mxu0 %v5937
    %6029 = vmatmul.mubr.f32.gmra.mrb[0].mxu0 %v5936
    %v6030 = vpop.f32.mrb[0].mxu0
    %v6031 = vadd.f32 0.0, %v6030
    %v6032 = vpop.f32.mrb[0].mxu0
    %6033 = vmatprep.mubr.f32.mxu0 %v5939
    %6034 = vmatmul.mubr.f32.gmra.mrb[0].mxu0 %v5938
    %v6035 = vpop.f32.mrb[0].mxu0
    %v6036 = vadd.f32 0.0, %v6035
    %v6037 = vpop.f32.mrb[0].mxu0
    %6038 = vmatprep.mubr.f32.mxu0 %v5941
    %6039 = vmatmul.mubr.f32.gmra.mrb[0].mxu0 %v5940
    %v6040 = vpop.f32.mrb[0].mxu0
    %v6041 = vadd.f32 0.0, %v6040
    %v6042 = vpop.f32.mrb[0].mxu0
    %6043 = vmatprep.mubr.f32.mxu0 %v5943
    %6044 = vmatmul.mubr.f32.gmra.mrb[0].mxu0 %v5942
    %v6045 = vpop.f32.mrb[0].mxu0
    %v6046 = vadd.f32 0.0, %v6045
    %v6047 = vpop.f32.mrb[0].mxu0
    %6048 = vdwg.mxu0
    %v6049 = vadd.f32 %v5681, %v6011
    %v6050 = vadd.f32 %v5682, %v6016
    %v6051 = vadd.f32 %v5683, %v6021
    %v6052 = vadd.f32 %v5684, %v6026
    %v6053 = vadd.f32 %v5685, %v6031
    %v6054 = vadd.f32 %v5686, %v6036
    %v6055 = vadd.f32 %v5687, %v6041
    %v6056 = vadd.f32 %v5688, %v6046
    %v6057 = vld [vmem:[%s3] sm:$0x1]
    %v6059 = vlaneseq
    %v6060 = vshrl.u32 %v6059, 7
    %v6061 = vsub.s32 0, %v6060
    %v6062 = vrot.slane %v6057, %v6061
    %v6064 = vadd.f32 %v6049, %v6062
    %v6065 = vadd.f32 %v6050, %v6062
    %v6066 = vadd.f32 %v6051, %v6062
    %v6067 = vadd.f32 %v6052, %v6062
    %v6068 = vadd.f32 %v6053, %v6062
    %v6069 = vadd.f32 %v6054, %v6062
    %v6070 = vadd.f32 %v6055, %v6062
    %v6071 = vadd.f32 %v6056, %v6062
    %vm6072 = vcmp.gt.f32.partialorder %v6064, 0.0
    %vm6073 = vcmp.gt.f32.partialorder %v6065, 0.0
    %vm6074 = vcmp.gt.f32.partialorder %v6066, 0.0
    %vm6075 = vcmp.gt.f32.partialorder %v6067, 0.0
    %vm6076 = vcmp.gt.f32.partialorder %v6068, 0.0
    %vm6077 = vcmp.gt.f32.partialorder %v6069, 0.0
    %vm6078 = vcmp.gt.f32.partialorder %v6070, 0.0
    %vm6079 = vcmp.gt.f32.partialorder %v6071, 0.0
    %v6080 = vmul.f32 %v6064, 0.2
    %v6081 = vmul.f32 %v6065, 0.2
    %v6082 = vmul.f32 %v6066, 0.2
    %v6083 = vmul.f32 %v6067, 0.2
    %v6084 = vmul.f32 %v6068, 0.2
    %v6085 = vmul.f32 %v6069, 0.2
    %v6086 = vmul.f32 %v6070, 0.2
    %v6087 = vmul.f32 %v6071, 0.2
    %v6088 = vsel %vm6072, %v6064, %v6080
    %v6089 = vsel %vm6073, %v6065, %v6081
    %v6090 = vsel %vm6074, %v6066, %v6082
    %v6091 = vsel %vm6075, %v6067, %v6083
    %v6092 = vsel %vm6076, %v6068, %v6084
    %v6093 = vsel %vm6077, %v6069, %v6085
    %v6094 = vsel %vm6078, %v6070, %v6086
    %v6095 = vsel %vm6079, %v6071, %v6087
    %v6096 = vld [vmem:[%s4] sm:$0xf]
    %v6097 = vld [vmem:[%s4 + $0x4] sm:$0xf]
    %v6098 = vld [vmem:[%s4 + $0x8] sm:$0xf]
    %v6099 = vld [vmem:[%s4 + $0xc] sm:$0xf]
    %v6100 = vld [vmem:[%s4 + $0x10] sm:$0xf]
    %v6101 = vld [vmem:[%s4 + $0x14] sm:$0xf]
    %v6102 = vld [vmem:[%s4 + $0x18] sm:$0xf]
    %v6103 = vld [vmem:[%s4 + $0x1c] sm:$0xf]
    %v6104 = vld [vmem:[%s4 + $0x20] sm:$0xf]
    %v6105 = vld [vmem:[%s4 + $0x24] sm:$0xf]
    %v6106 = vld [vmem:[%s4 + $0x28] sm:$0xf]
    %v6107 = vld [vmem:[%s4 + $0x2c] sm:$0xf]
    %v6108 = vld [vmem:[%s4 + $0x30] sm:$0xf]
    %v6109 = vld [vmem:[%s4 + $0x34] sm:$0xf]
    %v6110 = vld [vmem:[%s4 + $0x38] sm:$0xf]
    %v6111 = vld [vmem:[%s4 + $0x3c] sm:$0xf]
    %v6112 = vld [vmem:[%s4 + $0x40] sm:$0xf]
    %v6113 = vld [vmem:[%s4 + $0x44] sm:$0xf]
    %v6114 = vld [vmem:[%s4 + $0x48] sm:$0xf]
    %v6115 = vld [vmem:[%s4 + $0x4c] sm:$0xf]
    %v6116 = vld [vmem:[%s4 + $0x50] sm:$0xf]
    %v6117 = vld [vmem:[%s4 + $0x54] sm:$0xf]
    %v6118 = vld [vmem:[%s4 + $0x58] sm:$0xf]
    %v6119 = vld [vmem:[%s4 + $0x5c] sm:$0xf]
    %v6120 = vld [vmem:[%s4 + $0x60] sm:$0xf]
    %v6121 = vld [vmem:[%s4 + $0x64] sm:$0xf]
    %v6122 = vld [vmem:[%s4 + $0x68] sm:$0xf]
    %v6123 = vld [vmem:[%s4 + $0x6c] sm:$0xf]
    %v6124 = vld [vmem:[%s4 + $0x70] sm:$0xf]
    %v6125 = vld [vmem:[%s4 + $0x74] sm:$0xf]
    %v6126 = vld [vmem:[%s4 + $0x78] sm:$0xf]
    %v6127 = vld [vmem:[%s4 + $0x7c] sm:$0xf]
    %v6128 = vunpack.c.l.bf16 %v6096
    %v6129 = vunpack.c.l.bf16 %v6097
    %v6130 = vunpack.c.l.bf16 %v6098
    %v6131 = vunpack.c.l.bf16 %v6099
    %v6132 = vunpack.c.l.bf16 %v6100
    %v6133 = vunpack.c.l.bf16 %v6101
    %v6134 = vunpack.c.l.bf16 %v6102
    %v6135 = vunpack.c.l.bf16 %v6103
    %v6136 = vunpack.c.l.bf16 %v6104
    %v6137 = vunpack.c.l.bf16 %v6105
    %v6138 = vunpack.c.l.bf16 %v6106
    %v6139 = vunpack.c.l.bf16 %v6107
    %v6140 = vunpack.c.l.bf16 %v6108
    %v6141 = vunpack.c.l.bf16 %v6109
    %v6142 = vunpack.c.l.bf16 %v6110
    %v6143 = vunpack.c.l.bf16 %v6111
    %v6144 = vunpack.c.l.bf16 %v6112
    %v6145 = vunpack.c.l.bf16 %v6113
    %v6146 = vunpack.c.l.bf16 %v6114
    %v6147 = vunpack.c.l.bf16 %v6115
    %v6148 = vunpack.c.l.bf16 %v6116
    %v6149 = vunpack.c.l.bf16 %v6117
    %v6150 = vunpack.c.l.bf16 %v6118
    %v6151 = vunpack.c.l.bf16 %v6119
    %v6152 = vunpack.c.l.bf16 %v6120
    %v6153 = vunpack.c.l.bf16 %v6121
    %v6154 = vunpack.c.l.bf16 %v6122
    %v6155 = vunpack.c.l.bf16 %v6123
    %v6156 = vunpack.c.l.bf16 %v6124
    %v6157 = vunpack.c.l.bf16 %v6125
    %v6158 = vunpack.c.l.bf16 %v6126
    %v6159 = vunpack.c.l.bf16 %v6127
    %vm6160 = vcmask 523264
    %v6162 = vsel %vm6160, %v6128, 0
    %v6165 = vsel %vm6160, %v6129, 0
    %v6168 = vsel %vm6160, %v6130, 0
    %v6171 = vsel %vm6160, %v6131, 0
    %v6174 = vsel %vm6160, %v6132, 0
    %v6177 = vsel %vm6160, %v6133, 0
    %v6180 = vsel %vm6160, %v6134, 0
    %v6183 = vsel %vm6160, %v6135, 0
    %v6186 = vsel %vm6160, %v6136, 0
    %v6189 = vsel %vm6160, %v6137, 0
    %v6192 = vsel %vm6160, %v6138, 0
    %v6195 = vsel %vm6160, %v6139, 0
    %v6198 = vsel %vm6160, %v6140, 0
    %v6201 = vsel %vm6160, %v6141, 0
    %v6204 = vsel %vm6160, %v6142, 0
    %v6207 = vsel %vm6160, %v6143, 0
    %v6210 = vsel %vm6160, %v6144, 0
    %v6213 = vsel %vm6160, %v6145, 0
    %v6216 = vsel %vm6160, %v6146, 0
    %v6219 = vsel %vm6160, %v6147, 0
    %v6222 = vsel %vm6160, %v6148, 0
    %v6225 = vsel %vm6160, %v6149, 0
    %v6228 = vsel %vm6160, %v6150, 0
    %v6231 = vsel %vm6160, %v6151, 0
    %v6234 = vsel %vm6160, %v6152, 0
    %v6237 = vsel %vm6160, %v6153, 0
    %v6240 = vsel %vm6160, %v6154, 0
    %v6243 = vsel %vm6160, %v6155, 0
    %v6246 = vsel %vm6160, %v6156, 0
    %v6249 = vsel %vm6160, %v6157, 0
    %v6252 = vsel %vm6160, %v6158, 0
    %v6255 = vsel %vm6160, %v6159, 0
    %6257 = vmatprep.subr.mxu0 0.0
    %6258 = vmatpush1.msra.mxu0 %v6088
    %6259 = vmatprep.subr.mxu0 0.0
    %6260 = vmatpush1.msra.mxu0 %v6089
    %6261 = vmatprep.subr.mxu0 0.0
    %6262 = vmatpush1.msra.mxu0 %v6090
    %6263 = vmatprep.subr.mxu0 0.0
    %6264 = vmatpush1.msra.mxu0 %v6091
    %6265 = vmatprep.subr.mxu0 0.0
    %6266 = vmatpush1.msra.mxu0 %v6092
    %6267 = vmatprep.subr.mxu0 0.0
    %6268 = vmatpush1.msra.mxu0 %v6093
    %6269 = vmatprep.subr.mxu0 0.0
    %6270 = vmatpush1.msra.mxu0 %v6094
    %6271 = vmatprep.subr.mxu0 0.0
    %6272 = vmatpush1.msra.mxu0 %v6095
    %6273 = vmatprep.subr.mxu0 0.0
    %6274 = vmatpush1.msra.mxu0 0.0
    %6275 = vmatprep.subr.mxu0 0.0
    %6276 = vmatpush1.msra.mxu0 0.0
    %6277 = vmatprep.subr.mxu0 0.0
    %6278 = vmatpush1.msra.mxu0 0.0
    %6279 = vmatprep.subr.mxu0 0.0
    %6280 = vmatpush1.msra.mxu0 0.0
    %6281 = vmatprep.subr.mxu0 0.0
    %6282 = vmatpush1.msra.mxu0 0.0
    %6283 = vmatprep.subr.mxu0 0.0
    %6284 = vmatpush1.msra.mxu0 0.0
    %6285 = vmatprep.subr.mxu0 0.0
    %6286 = vmatpush1.msra.mxu0 0.0
    %6287 = vmatprep.subr.mxu0 0.0
    %6288 = vmatpush1.msra.mxu0 0.0
    %6289 = vmatprep.subr.mxu0 0.0
    %6290 = vmatpush1.msra.mxu0 0.0
    %6291 = vmatprep.subr.mxu0 0.0
    %6292 = vmatpush1.msra.mxu0 0.0
    %6293 = vmatprep.subr.mxu0 0.0
    %6294 = vmatpush1.msra.mxu0 0.0
    %6295 = vmatprep.subr.mxu0 0.0
    %6296 = vmatpush1.msra.mxu0 0.0
    %6297 = vmatprep.subr.mxu0 0.0
    %6298 = vmatpush1.msra.mxu0 0.0
    %6299 = vmatprep.subr.mxu0 0.0
    %6300 = vmatpush1.msra.mxu0 0.0
    %6301 = vmatprep.subr.mxu0 0.0
    %6302 = vmatpush1.msra.mxu0 0.0
    %6303 = vmatprep.subr.mxu0 0.0
    %6304 = vmatpush1.msra.mxu0 0.0
    %6305 = vmatprep.subr.mxu0 0.0
    %6306 = vmatpush1.msra.mxu0 0.0
    %6307 = vmatprep.subr.mxu0 0.0
    %6308 = vmatpush1.msra.mxu0 0.0
    %6309 = vmatprep.subr.mxu0 0.0
    %6310 = vmatpush1.msra.mxu0 0.0
    %6311 = vmatprep.subr.mxu0 0.0
    %6312 = vmatpush1.msra.mxu0 0.0
    %6313 = vmatprep.subr.mxu0 0.0
    %6314 = vmatpush1.msra.mxu0 0.0
    %6315 = vmatprep.subr.mxu0 0.0
    %6316 = vmatpush1.msra.mxu0 0.0
    %6317 = vmatprep.subr.mxu0 0.0
    %6318 = vmatpush1.msra.mxu0 0.0
    %6319 = vmatprep.subr.mxu0 0.0
    %6320 = vmatpush1.msra.mxu0 0.0
    %6321 = vmatprep.mubr.f32.mxu0 0.0
    %6322 = vmatmul.mubr.f32.gmra.mrb[0].mxu0 %v6162
    %v6323 = vpop.f32.mrb[0].mxu0
    %v6324 = vadd.f32 0.0, %v6323
    %v6325 = vpop.f32.mrb[0].mxu0
    %6326 = vmatprep.mubr.f32.mxu0 0.0
    %6327 = vmatmul.mubr.f32.gmra.mrb[0].mxu0 %v6165
    %v6328 = vpop.f32.mrb[0].mxu0
    %v6329 = vadd.f32 0.0, %v6328
    %v6330 = vpop.f32.mrb[0].mxu0
    %6331 = vmatprep.mubr.f32.mxu0 0.0
    %6332 = vmatmul.mubr.f32.gmra.mrb[0].mxu0 %v6168
    %v6333 = vpop.f32.mrb[0].mxu0
    %v6334 = vadd.f32 0.0, %v6333
    %v6335 = vpop.f32.mrb[0].mxu0
    %6336 = vmatprep.mubr.f32.mxu0 0.0
    %6337 = vmatmul.mubr.f32.gmra.mrb[0].mxu0 %v6171
    %v6338 = vpop.f32.mrb[0].mxu0
    %v6339 = vadd.f32 0.0, %v6338
    %v6340 = vpop.f32.mrb[0].mxu0
    %6341 = vmatprep.mubr.f32.mxu0 0.0
    %6342 = vmatmul.mubr.f32.gmra.mrb[0].mxu0 %v6174
    %v6343 = vpop.f32.mrb[0].mxu0
    %v6344 = vadd.f32 0.0, %v6343
    %v6345 = vpop.f32.mrb[0].mxu0
    %6346 = vmatprep.mubr.f32.mxu0 0.0
    %6347 = vmatmul.mubr.f32.gmra.mrb[0].mxu0 %v6177
    %v6348 = vpop.f32.mrb[0].mxu0
    %v6349 = vadd.f32 0.0, %v6348
    %v6350 = vpop.f32.mrb[0].mxu0
    %6351 = vmatprep.mubr.f32.mxu0 0.0
    %6352 = vmatmul.mubr.f32.gmra.mrb[0].mxu0 %v6180
    %v6353 = vpop.f32.mrb[0].mxu0
    %v6354 = vadd.f32 0.0, %v6353
    %v6355 = vpop.f32.mrb[0].mxu0
    %6356 = vmatprep.mubr.f32.mxu0 0.0
    %6357 = vmatmul.mubr.f32.gmra.mrb[0].mxu0 %v6183
    %v6358 = vpop.f32.mrb[0].mxu0
    %v6359 = vadd.f32 0.0, %v6358
    %v6360 = vpop.f32.mrb[0].mxu0
    %6361 = vmatprep.mubr.f32.mxu0 0.0
    %6362 = vmatmul.mubr.f32.gmra.mrb[0].mxu0 %v6186
    %v6363 = vpop.f32.mrb[0].mxu0
    %v6364 = vadd.f32 0.0, %v6363
    %v6365 = vpop.f32.mrb[0].mxu0
    %6366 = vmatprep.mubr.f32.mxu0 0.0
    %6367 = vmatmul.mubr.f32.gmra.mrb[0].mxu0 %v6189
    %v6368 = vpop.f32.mrb[0].mxu0
    %v6369 = vadd.f32 0.0, %v6368
    %v6370 = vpop.f32.mrb[0].mxu0
    %6371 = vmatprep.mubr.f32.mxu0 0.0
    %6372 = vmatmul.mubr.f32.gmra.mrb[0].mxu0 %v6192
    %v6373 = vpop.f32.mrb[0].mxu0
    %v6374 = vadd.f32 0.0, %v6373
    %v6375 = vpop.f32.mrb[0].mxu0
    %6376 = vmatprep.mubr.f32.mxu0 0.0
    %6377 = vmatmul.mubr.f32.gmra.mrb[0].mxu0 %v6195
    %v6378 = vpop.f32.mrb[0].mxu0
    %v6379 = vadd.f32 0.0, %v6378
    %v6380 = vpop.f32.mrb[0].mxu0
    %6381 = vmatprep.mubr.f32.mxu0 0.0
    %6382 = vmatmul.mubr.f32.gmra.mrb[0].mxu0 %v6198
    %v6383 = vpop.f32.mrb[0].mxu0
    %v6384 = vadd.f32 0.0, %v6383
    %v6385 = vpop.f32.mrb[0].mxu0
    %6386 = vmatprep.mubr.f32.mxu0 0.0
    %6387 = vmatmul.mubr.f32.gmra.mrb[0].mxu0 %v6201
    %v6388 = vpop.f32.mrb[0].mxu0
    %v6389 = vadd.f32 0.0, %v6388
    %v6390 = vpop.f32.mrb[0].mxu0
    %6391 = vmatprep.mubr.f32.mxu0 0.0
    %6392 = vmatmul.mubr.f32.gmra.mrb[0].mxu0 %v6204
    %v6393 = vpop.f32.mrb[0].mxu0
    %v6394 = vadd.f32 0.0, %v6393
    %v6395 = vpop.f32.mrb[0].mxu0
    %6396 = vmatprep.mubr.f32.mxu0 0.0
    %6397 = vmatmul.mubr.f32.gmra.mrb[0].mxu0 %v6207
    %v6398 = vpop.f32.mrb[0].mxu0
    %v6399 = vadd.f32 0.0, %v6398
    %v6400 = vpop.f32.mrb[0].mxu0
    %6401 = vmatprep.mubr.f32.mxu0 0.0
    %6402 = vmatmul.mubr.f32.gmra.mrb[0].mxu0 %v6210
    %v6403 = vpop.f32.mrb[0].mxu0
    %v6404 = vadd.f32 0.0, %v6403
    %v6405 = vpop.f32.mrb[0].mxu0
    %6406 = vmatprep.mubr.f32.mxu0 0.0
    %6407 = vmatmul.mubr.f32.gmra.mrb[0].mxu0 %v6213
    %v6408 = vpop.f32.mrb[0].mxu0
    %v6409 = vadd.f32 0.0, %v6408
    %v6410 = vpop.f32.mrb[0].mxu0
    %6411 = vmatprep.mubr.f32.mxu0 0.0
    %6412 = vmatmul.mubr.f32.gmra.mrb[0].mxu0 %v6216
    %v6413 = vpop.f32.mrb[0].mxu0
    %v6414 = vadd.f32 0.0, %v6413
    %v6415 = vpop.f32.mrb[0].mxu0
    %6416 = vmatprep.mubr.f32.mxu0 0.0
    %6417 = vmatmul.mubr.f32.gmra.mrb[0].mxu0 %v6219
    %v6418 = vpop.f32.mrb[0].mxu0
    %v6419 = vadd.f32 0.0, %v6418
    %v6420 = vpop.f32.mrb[0].mxu0
    %6421 = vmatprep.mubr.f32.mxu0 0.0
    %6422 = vmatmul.mubr.f32.gmra.mrb[0].mxu0 %v6222
    %v6423 = vpop.f32.mrb[0].mxu0
    %v6424 = vadd.f32 0.0, %v6423
    %v6425 = vpop.f32.mrb[0].mxu0
    %6426 = vmatprep.mubr.f32.mxu0 0.0
    %6427 = vmatmul.mubr.f32.gmra.mrb[0].mxu0 %v6225
    %v6428 = vpop.f32.mrb[0].mxu0
    %v6429 = vadd.f32 0.0, %v6428
    %v6430 = vpop.f32.mrb[0].mxu0
    %6431 = vmatprep.mubr.f32.mxu0 0.0
    %6432 = vmatmul.mubr.f32.gmra.mrb[0].mxu0 %v6228
    %v6433 = vpop.f32.mrb[0].mxu0
    %v6434 = vadd.f32 0.0, %v6433
    %v6435 = vpop.f32.mrb[0].mxu0
    %6436 = vmatprep.mubr.f32.mxu0 0.0
    %6437 = vmatmul.mubr.f32.gmra.mrb[0].mxu0 %v6231
    %v6438 = vpop.f32.mrb[0].mxu0
    %v6439 = vadd.f32 0.0, %v6438
    %v6440 = vpop.f32.mrb[0].mxu0
    %6441 = vmatprep.mubr.f32.mxu0 0.0
    %6442 = vmatmul.mubr.f32.gmra.mrb[0].mxu0 %v6234
    %v6443 = vpop.f32.mrb[0].mxu0
    %v6444 = vadd.f32 0.0, %v6443
    %v6445 = vpop.f32.mrb[0].mxu0
    %6446 = vmatprep.mubr.f32.mxu0 0.0
    %6447 = vmatmul.mubr.f32.gmra.mrb[0].mxu0 %v6237
    %v6448 = vpop.f32.mrb[0].mxu0
    %v6449 = vadd.f32 0.0, %v6448
    %v6450 = vpop.f32.mrb[0].mxu0
    %6451 = vmatprep.mubr.f32.mxu0 0.0
    %6452 = vmatmul.mubr.f32.gmra.mrb[0].mxu0 %v6240
    %v6453 = vpop.f32.mrb[0].mxu0
    %v6454 = vadd.f32 0.0, %v6453
    %v6455 = vpop.f32.mrb[0].mxu0
    %6456 = vmatprep.mubr.f32.mxu0 0.0
    %6457 = vmatmul.mubr.f32.gmra.mrb[0].mxu0 %v6243
    %v6458 = vpop.f32.mrb[0].mxu0
    %v6459 = vadd.f32 0.0, %v6458
    %v6460 = vpop.f32.mrb[0].mxu0
    %6461 = vmatprep.mubr.f32.mxu0 0.0
    %6462 = vmatmul.mubr.f32.gmra.mrb[0].mxu0 %v6246
    %v6463 = vpop.f32.mrb[0].mxu0
    %v6464 = vadd.f32 0.0, %v6463
    %v6465 = vpop.f32.mrb[0].mxu0
    %6466 = vmatprep.mubr.f32.mxu0 0.0
    %6467 = vmatmul.mubr.f32.gmra.mrb[0].mxu0 %v6249
    %v6468 = vpop.f32.mrb[0].mxu0
    %v6469 = vadd.f32 0.0, %v6468
    %v6470 = vpop.f32.mrb[0].mxu0
    %6471 = vmatprep.mubr.f32.mxu0 0.0
    %6472 = vmatmul.mubr.f32.gmra.mrb[0].mxu0 %v6252
    %v6473 = vpop.f32.mrb[0].mxu0
    %v6474 = vadd.f32 0.0, %v6473
    %v6475 = vpop.f32.mrb[0].mxu0
    %6476 = vmatprep.mubr.f32.mxu0 0.0
    %6477 = vmatmul.mubr.f32.gmra.mrb[0].mxu0 %v6255
    %v6478 = vpop.f32.mrb[0].mxu0
    %v6479 = vadd.f32 0.0, %v6478
    %v6480 = vpop.f32.mrb[0].mxu0
    %6481 = vdwg.mxu0
    %v6482 = vlaneseq
    %v6483 = vshrl.u32 %v6482, 7
    %v6484 = vadd.s32 %v6483, 8
    %v6485 = vadd.s32 %v6483, 16
    %v6486 = vadd.s32 %v6483, 24
    %v6487 = vadd.s32 %v6483, 32
    %v6488 = vadd.s32 %v6483, 40
    %v6489 = vadd.s32 %v6483, 48
    %v6490 = vadd.s32 %v6483, 56
    %v6491 = vadd.s32 %v6483, 64
    %v6492 = vadd.s32 %v6483, 72
    %v6493 = vadd.s32 %v6483, 80
    %v6494 = vadd.s32 %v6483, 88
    %v6495 = vadd.s32 %v6483, 96
    %v6496 = vadd.s32 %v6483, 104
    %v6497 = vadd.s32 %v6483, 112
    %v6498 = vadd.s32 %v6483, 120
    %v6499 = vlaneseq
    %v6500 = vand.u32 %v6499, 127
    %vm6501 = vcmp.eq.s32.totalorder %v6483, %v6500
    %vm6502 = vcmp.eq.s32.totalorder %v6484, %v6500
    %vm6503 = vcmp.eq.s32.totalorder %v6485, %v6500
    %vm6504 = vcmp.eq.s32.totalorder %v6486, %v6500
    %vm6505 = vcmp.eq.s32.totalorder %v6487, %v6500
    %vm6506 = vcmp.eq.s32.totalorder %v6488, %v6500
    %vm6507 = vcmp.eq.s32.totalorder %v6489, %v6500
    %vm6508 = vcmp.eq.s32.totalorder %v6490, %v6500
    %vm6509 = vcmp.eq.s32.totalorder %v6491, %v6500
    %vm6510 = vcmp.eq.s32.totalorder %v6492, %v6500
    %vm6511 = vcmp.eq.s32.totalorder %v6493, %v6500
    %vm6512 = vcmp.eq.s32.totalorder %v6494, %v6500
    %vm6513 = vcmp.eq.s32.totalorder %v6495, %v6500
    %vm6514 = vcmp.eq.s32.totalorder %v6496, %v6500
    %vm6515 = vcmp.eq.s32.totalorder %v6497, %v6500
    %vm6516 = vcmp.eq.s32.totalorder %v6498, %v6500
    %v6517 = vsel %vm6501, 1, 0
    %v6518 = vsel %vm6502, 1, 0
    %v6519 = vsel %vm6503, 1, 0
    %v6520 = vsel %vm6504, 1, 0
    %v6521 = vsel %vm6505, 1, 0
    %v6522 = vsel %vm6506, 1, 0
    %v6523 = vsel %vm6507, 1, 0
    %v6524 = vsel %vm6508, 1, 0
    %v6525 = vsel %vm6509, 1, 0
    %v6526 = vsel %vm6510, 1, 0
    %v6527 = vsel %vm6511, 1, 0
    %v6528 = vsel %vm6512, 1, 0
    %v6529 = vsel %vm6513, 1, 0
    %v6530 = vsel %vm6514, 1, 0
    %v6531 = vsel %vm6515, 1, 0
    %v6532 = vsel %vm6516, 1, 0
    %v6533 = vcvt.s32.f32 %v6517
    %v6534 = vcvt.s32.f32 %v6518
    %v6535 = vcvt.s32.f32 %v6519
    %v6536 = vcvt.s32.f32 %v6520
    %v6537 = vcvt.s32.f32 %v6521
    %v6538 = vcvt.s32.f32 %v6522
    %v6539 = vcvt.s32.f32 %v6523
    %v6540 = vcvt.s32.f32 %v6524
    %v6541 = vcvt.s32.f32 %v6525
    %v6542 = vcvt.s32.f32 %v6526
    %v6543 = vcvt.s32.f32 %v6527
    %v6544 = vcvt.s32.f32 %v6528
    %v6545 = vcvt.s32.f32 %v6529
    %v6546 = vcvt.s32.f32 %v6530
    %v6547 = vcvt.s32.f32 %v6531
    %v6548 = vcvt.s32.f32 %v6532
    %6549 = vmatprep.subr.mxu0 0.0
    %6550 = vmatpush1.msra.mxu0 %v6533
    %6551 = vmatprep.subr.mxu0 0.0
    %6552 = vmatpush1.msra.mxu0 %v6534
    %6553 = vmatprep.subr.mxu0 0.0
    %6554 = vmatpush1.msra.mxu0 %v6535
    %6555 = vmatprep.subr.mxu0 0.0
    %6556 = vmatpush1.msra.mxu0 %v6536
    %6557 = vmatprep.subr.mxu0 0.0
    %6558 = vmatpush1.msra.mxu0 %v6537
    %6559 = vmatprep.subr.mxu0 0.0
    %6560 = vmatpush1.msra.mxu0 %v6538
    %6561 = vmatprep.subr.mxu0 0.0
    %6562 = vmatpush1.msra.mxu0 %v6539
    %6563 = vmatprep.subr.mxu0 0.0
    %6564 = vmatpush1.msra.mxu0 %v6540
    %6565 = vmatprep.subr.mxu0 0.0
    %6566 = vmatpush1.msra.mxu0 %v6541
    %6567 = vmatprep.subr.mxu0 0.0
    %6568 = vmatpush1.msra.mxu0 %v6542
    %6569 = vmatprep.subr.mxu0 0.0
    %6570 = vmatpush1.msra.mxu0 %v6543
    %6571 = vmatprep.subr.mxu0 0.0
    %6572 = vmatpush1.msra.mxu0 %v6544
    %6573 = vmatprep.subr.mxu0 0.0
    %6574 = vmatpush1.msra.mxu0 %v6545
    %6575 = vmatprep.subr.mxu0 0.0
    %6576 = vmatpush1.msra.mxu0 %v6546
    %6577 = vmatprep.subr.mxu0 0.0
    %6578 = vmatpush1.msra.mxu0 %v6547
    %6579 = vmatprep.subr.mxu0 0.0
    %6580 = vmatpush1.msra.mxu0 %v6548
    %6581 = vmatprep.subr.mxu0 0.0
    %6582 = vmatpush1.msra.mxu0 0.0
    %6583 = vmatprep.subr.mxu0 0.0
    %6584 = vmatpush1.msra.mxu0 0.0
    %6585 = vmatprep.subr.mxu0 0.0
    %6586 = vmatpush1.msra.mxu0 0.0
    %6587 = vmatprep.subr.mxu0 0.0
    %6588 = vmatpush1.msra.mxu0 0.0
    %6589 = vmatprep.subr.mxu0 0.0
    %6590 = vmatpush1.msra.mxu0 0.0
    %6591 = vmatprep.subr.mxu0 0.0
    %6592 = vmatpush1.msra.mxu0 0.0
    %6593 = vmatprep.subr.mxu0 0.0
    %6594 = vmatpush1.msra.mxu0 0.0
    %6595 = vmatprep.subr.mxu0 0.0
    %6596 = vmatpush1.msra.mxu0 0.0
    %6597 = vmatprep.subr.mxu0 0.0
    %6598 = vmatpush1.msra.mxu0 0.0
    %6599 = vmatprep.subr.mxu0 0.0
    %6600 = vmatpush1.msra.mxu0 0.0
    %6601 = vmatprep.subr.mxu0 0.0
    %6602 = vmatpush1.msra.mxu0 0.0
    %6603 = vmatprep.subr.mxu0 0.0
    %6604 = vmatpush1.msra.mxu0 0.0
    %6605 = vmatprep.subr.mxu0 0.0
    %6606 = vmatpush1.msra.mxu0 0.0
    %6607 = vmatprep.subr.mxu0 0.0
    %6608 = vmatpush1.msra.mxu0 0.0
    %6609 = vmatprep.subr.mxu0 0.0
    %6610 = vmatpush1.msra.mxu0 0.0
    %6611 = vmatprep.subr.mxu0 0.0
    %6612 = vmatpush1.msra.mxu0 0.0
    %6613 = vmatprep.mubr.f32.mxu0 0.0
    %6614 = vmatmul.mubr.f32.gmra.mrb[0].mxu0 %v6324
    %v6615 = vpop.f32.mrb[0].mxu0
    %v6616 = vadd.f32 0.0, %v6615
    %v6617 = vpop.f32.mrb[0].mxu0
    %6618 = vmatprep.mubr.f32.mxu0 0.0
    %6619 = vmatmul.mubr.f32.gmra.mrb[0].mxu0 %v6329
    %v6620 = vpop.f32.mrb[0].mxu0
    %v6621 = vadd.f32 0.0, %v6620
    %v6622 = vpop.f32.mrb[0].mxu0
    %6623 = vmatprep.mubr.f32.mxu0 0.0
    %6624 = vmatmul.mubr.f32.gmra.mrb[0].mxu0 %v6334
    %v6625 = vpop.f32.mrb[0].mxu0
    %v6626 = vadd.f32 0.0, %v6625
    %v6627 = vpop.f32.mrb[0].mxu0
    %6628 = vmatprep.mubr.f32.mxu0 0.0
    %6629 = vmatmul.mubr.f32.gmra.mrb[0].mxu0 %v6339
    %v6630 = vpop.f32.mrb[0].mxu0
    %v6631 = vadd.f32 0.0, %v6630
    %v6632 = vpop.f32.mrb[0].mxu0
    %6633 = vmatprep.mubr.f32.mxu0 0.0
    %6634 = vmatmul.mubr.f32.gmra.mrb[0].mxu0 %v6344
    %v6635 = vpop.f32.mrb[0].mxu0
    %v6636 = vadd.f32 0.0, %v6635
    %v6637 = vpop.f32.mrb[0].mxu0
    %6638 = vmatprep.mubr.f32.mxu0 0.0
    %6639 = vmatmul.mubr.f32.gmra.mrb[0].mxu0 %v6349
    %v6640 = vpop.f32.mrb[0].mxu0
    %v6641 = vadd.f32 0.0, %v6640
    %v6642 = vpop.f32.mrb[0].mxu0
    %6643 = vmatprep.mubr.f32.mxu0 0.0
    %6644 = vmatmul.mubr.f32.gmra.mrb[0].mxu0 %v6354
    %v6645 = vpop.f32.mrb[0].mxu0
    %v6646 = vadd.f32 0.0, %v6645
    %v6647 = vpop.f32.mrb[0].mxu0
    %6648 = vmatprep.mubr.f32.mxu0 0.0
    %6649 = vmatmul.mubr.f32.gmra.mrb[0].mxu0 %v6359
    %v6650 = vpop.f32.mrb[0].mxu0
    %v6651 = vadd.f32 0.0, %v6650
    %v6652 = vpop.f32.mrb[0].mxu0
    %6653 = vmatprep.mubr.f32.mxu0 0.0
    %6654 = vmatmul.mubr.f32.gmra.mrb[0].mxu0 %v6364
    %v6655 = vpop.f32.mrb[0].mxu0
    %v6656 = vadd.f32 0.0, %v6655
    %v6657 = vpop.f32.mrb[0].mxu0
    %6658 = vmatprep.mubr.f32.mxu0 0.0
    %6659 = vmatmul.mubr.f32.gmra.mrb[0].mxu0 %v6369
    %v6660 = vpop.f32.mrb[0].mxu0
    %v6661 = vadd.f32 0.0, %v6660
    %v6662 = vpop.f32.mrb[0].mxu0
    %6663 = vmatprep.mubr.f32.mxu0 0.0
    %6664 = vmatmul.mubr.f32.gmra.mrb[0].mxu0 %v6374
    %v6665 = vpop.f32.mrb[0].mxu0
    %v6666 = vadd.f32 0.0, %v6665
    %v6667 = vpop.f32.mrb[0].mxu0
    %6668 = vmatprep.mubr.f32.mxu0 0.0
    %6669 = vmatmul.mubr.f32.gmra.mrb[0].mxu0 %v6379
    %v6670 = vpop.f32.mrb[0].mxu0
    %v6671 = vadd.f32 0.0, %v6670
    %v6672 = vpop.f32.mrb[0].mxu0
    %6673 = vmatprep.mubr.f32.mxu0 0.0
    %6674 = vmatmul.mubr.f32.gmra.mrb[0].mxu0 %v6384
    %v6675 = vpop.f32.mrb[0].mxu0
    %v6676 = vadd.f32 0.0, %v6675
    %v6677 = vpop.f32.mrb[0].mxu0
    %6678 = vmatprep.mubr.f32.mxu0 0.0
    %6679 = vmatmul.mubr.f32.gmra.mrb[0].mxu0 %v6389
    %v6680 = vpop.f32.mrb[0].mxu0
    %v6681 = vadd.f32 0.0, %v6680
    %v6682 = vpop.f32.mrb[0].mxu0
    %6683 = vmatprep.mubr.f32.mxu0 0.0
    %6684 = vmatmul.mubr.f32.gmra.mrb[0].mxu0 %v6394
    %v6685 = vpop.f32.mrb[0].mxu0
    %v6686 = vadd.f32 0.0, %v6685
    %v6687 = vpop.f32.mrb[0].mxu0
    %6688 = vmatprep.mubr.f32.mxu0 0.0
    %6689 = vmatmul.mubr.f32.gmra.mrb[0].mxu0 %v6399
    %v6690 = vpop.f32.mrb[0].mxu0
    %v6691 = vadd.f32 0.0, %v6690
    %v6692 = vpop.f32.mrb[0].mxu0
    %6693 = vmatprep.mubr.f32.mxu0 0.0
    %6694 = vmatmul.mubr.f32.gmra.mrb[0].mxu0 %v6404
    %v6695 = vpop.f32.mrb[0].mxu0
    %v6696 = vadd.f32 0.0, %v6695
    %v6697 = vpop.f32.mrb[0].mxu0
    %6698 = vmatprep.mubr.f32.mxu0 0.0
    %6699 = vmatmul.mubr.f32.gmra.mrb[0].mxu0 %v6409
    %v6700 = vpop.f32.mrb[0].mxu0
    %v6701 = vadd.f32 0.0, %v6700
    %v6702 = vpop.f32.mrb[0].mxu0
    %6703 = vmatprep.mubr.f32.mxu0 0.0
    %6704 = vmatmul.mubr.f32.gmra.mrb[0].mxu0 %v6414
    %v6705 = vpop.f32.mrb[0].mxu0
    %v6706 = vadd.f32 0.0, %v6705
    %v6707 = vpop.f32.mrb[0].mxu0
    %6708 = vmatprep.mubr.f32.mxu0 0.0
    %6709 = vmatmul.mubr.f32.gmra.mrb[0].mxu0 %v6419
    %v6710 = vpop.f32.mrb[0].mxu0
    %v6711 = vadd.f32 0.0, %v6710
    %v6712 = vpop.f32.mrb[0].mxu0
    %6713 = vmatprep.mubr.f32.mxu0 0.0
    %6714 = vmatmul.mubr.f32.gmra.mrb[0].mxu0 %v6424
    %v6715 = vpop.f32.mrb[0].mxu0
    %v6716 = vadd.f32 0.0, %v6715
    %v6717 = vpop.f32.mrb[0].mxu0
    %6718 = vmatprep.mubr.f32.mxu0 0.0
    %6719 = vmatmul.mubr.f32.gmra.mrb[0].mxu0 %v6429
    %v6720 = vpop.f32.mrb[0].mxu0
    %v6721 = vadd.f32 0.0, %v6720
    %v6722 = vpop.f32.mrb[0].mxu0
    %6723 = vmatprep.mubr.f32.mxu0 0.0
    %6724 = vmatmul.mubr.f32.gmra.mrb[0].mxu0 %v6434
    %v6725 = vpop.f32.mrb[0].mxu0
    %v6726 = vadd.f32 0.0, %v6725
    %v6727 = vpop.f32.mrb[0].mxu0
    %6728 = vmatprep.mubr.f32.mxu0 0.0
    %6729 = vmatmul.mubr.f32.gmra.mrb[0].mxu0 %v6439
    %v6730 = vpop.f32.mrb[0].mxu0
    %v6731 = vadd.f32 0.0, %v6730
    %v6732 = vpop.f32.mrb[0].mxu0
    %6733 = vmatprep.mubr.f32.mxu0 0.0
    %6734 = vmatmul.mubr.f32.gmra.mrb[0].mxu0 %v6444
    %v6735 = vpop.f32.mrb[0].mxu0
    %v6736 = vadd.f32 0.0, %v6735
    %v6737 = vpop.f32.mrb[0].mxu0
    %6738 = vmatprep.mubr.f32.mxu0 0.0
    %6739 = vmatmul.mubr.f32.gmra.mrb[0].mxu0 %v6449
    %v6740 = vpop.f32.mrb[0].mxu0
    %v6741 = vadd.f32 0.0, %v6740
    %v6742 = vpop.f32.mrb[0].mxu0
    %6743 = vmatprep.mubr.f32.mxu0 0.0
    %6744 = vmatmul.mubr.f32.gmra.mrb[0].mxu0 %v6454
    %v6745 = vpop.f32.mrb[0].mxu0
    %v6746 = vadd.f32 0.0, %v6745
    %v6747 = vpop.f32.mrb[0].mxu0
    %6748 = vmatprep.mubr.f32.mxu0 0.0
    %6749 = vmatmul.mubr.f32.gmra.mrb[0].mxu0 %v6459
    %v6750 = vpop.f32.mrb[0].mxu0
    %v6751 = vadd.f32 0.0, %v6750
    %v6752 = vpop.f32.mrb[0].mxu0
    %6753 = vmatprep.mubr.f32.mxu0 0.0
    %6754 = vmatmul.mubr.f32.gmra.mrb[0].mxu0 %v6464
    %v6755 = vpop.f32.mrb[0].mxu0
    %v6756 = vadd.f32 0.0, %v6755
    %v6757 = vpop.f32.mrb[0].mxu0
    %6758 = vmatprep.mubr.f32.mxu0 0.0
    %6759 = vmatmul.mubr.f32.gmra.mrb[0].mxu0 %v6469
    %v6760 = vpop.f32.mrb[0].mxu0
    %v6761 = vadd.f32 0.0, %v6760
    %v6762 = vpop.f32.mrb[0].mxu0
    %6763 = vmatprep.mubr.f32.mxu0 0.0
    %6764 = vmatmul.mubr.f32.gmra.mrb[0].mxu0 %v6474
    %v6765 = vpop.f32.mrb[0].mxu0
    %v6766 = vadd.f32 0.0, %v6765
    %v6767 = vpop.f32.mrb[0].mxu0
    %6768 = vmatprep.mubr.f32.mxu0 0.0
    %6769 = vmatmul.mubr.f32.gmra.mrb[0].mxu0 %v6479
    %v6770 = vpop.f32.mrb[0].mxu0
    %v6771 = vadd.f32 0.0, %v6770
    %v6772 = vpop.f32.mrb[0].mxu0
    %6773 = vdwg.mxu0
    %v6774 = vld [vmem:[#allocation4] sm:$0xff]
    %v6775 = vld [vmem:[#allocation4 + $0x8] sm:$0xff]
    %v6776 = vld [vmem:[#allocation4 + $0x10] sm:$0xff]
    %v6777 = vld [vmem:[#allocation4 + $0x18] sm:$0xff]
    %v6778 = vld [vmem:[#allocation4 + $0x20] sm:$0xff]
    %v6779 = vld [vmem:[#allocation4 + $0x28] sm:$0xff]
    %v6780 = vld [vmem:[#allocation4 + $0x30] sm:$0xff]
    %v6781 = vld [vmem:[#allocation4 + $0x38] sm:$0xff]
    %s6782 = scalar_lea.vmem [#allocation4], 64
    %v6783 = vld [vmem:[%s6782] sm:$0xff]
    %v6784 = vld [vmem:[%s6782 + $0x8] sm:$0xff]
    %v6785 = vld [vmem:[%s6782 + $0x10] sm:$0xff]
    %v6786 = vld [vmem:[%s6782 + $0x18] sm:$0xff]
    %v6787 = vld [vmem:[%s6782 + $0x20] sm:$0xff]
    %v6788 = vld [vmem:[%s6782 + $0x28] sm:$0xff]
    %v6789 = vld [vmem:[%s6782 + $0x30] sm:$0xff]
    %v6790 = vld [vmem:[%s6782 + $0x38] sm:$0xff]
    %v6792 = vsel %vm6160, %v6626, 0
    %v6795 = vsel %vm6160, %v6631, 0
    %6797 = vmatprep.subr.mxu0 0.0
    %6798 = vmatpush1.msra.mxu0 %v6783
    %6799 = vmatprep.subr.mxu0 0.0
    %6800 = vmatpush1.msra.mxu0 %v6784
    %6801 = vmatprep.subr.mxu0 0.0
    %6802 = vmatpush1.msra.mxu0 %v6785
    %6803 = vmatprep.subr.mxu0 0.0
    %6804 = vmatpush1.msra.mxu0 %v6786
    %6805 = vmatprep.subr.mxu0 0.0
    %6806 = vmatpush1.msra.mxu0 %v6787
    %6807 = vmatprep.subr.mxu0 0.0
    %6808 = vmatpush1.msra.mxu0 %v6788
    %6809 = vmatprep.subr.mxu0 0.0
    %6810 = vmatpush1.msra.mxu0 %v6789
    %6811 = vmatprep.subr.mxu0 0.0
    %6812 = vmatpush1.msra.mxu0 %v6790
    %6813 = vmatprep.subr.mxu0 0.0
    %6814 = vmatpush1.msra.mxu0 0.0
    %6815 = vmatprep.subr.mxu0 0.0
    %6816 = vmatpush1.msra.mxu0 0.0
    %6817 = vmatprep.subr.mxu0 0.0
    %6818 = vmatpush1.msra.mxu0 0.0
    %6819 = vmatprep.subr.mxu0 0.0
    %6820 = vmatpush1.msra.mxu0 0.0
    %6821 = vmatprep.subr.mxu0 0.0
    %6822 = vmatpush1.msra.mxu0 0.0
    %6823 = vmatprep.subr.mxu0 0.0
    %6824 = vmatpush1.msra.mxu0 0.0
    %6825 = vmatprep.subr.mxu0 0.0
    %6826 = vmatpush1.msra.mxu0 0.0
    %6827 = vmatprep.subr.mxu0 0.0
    %6828 = vmatpush1.msra.mxu0 0.0
    %6829 = vmatprep.subr.mxu0 0.0
    %6830 = vmatpush1.msra.mxu0 0.0
    %6831 = vmatprep.subr.mxu0 0.0
    %6832 = vmatpush1.msra.mxu0 0.0
    %6833 = vmatprep.subr.mxu0 0.0
    %6834 = vmatpush1.msra.mxu0 0.0
    %6835 = vmatprep.subr.mxu0 0.0
    %6836 = vmatpush1.msra.mxu0 0.0
    %6837 = vmatprep.subr.mxu0 0.0
    %6838 = vmatpush1.msra.mxu0 0.0
    %6839 = vmatprep.subr.mxu0 0.0
    %6840 = vmatpush1.msra.mxu0 0.0
    %6841 = vmatprep.subr.mxu0 0.0
    %6842 = vmatpush1.msra.mxu0 0.0
    %6843 = vmatprep.subr.mxu0 0.0
    %6844 = vmatpush1.msra.mxu0 0.0
    %6845 = vmatprep.subr.mxu0 0.0
    %6846 = vmatpush1.msra.mxu0 0.0
    %6847 = vmatprep.subr.mxu0 0.0
    %6848 = vmatpush1.msra.mxu0 0.0
    %6849 = vmatprep.subr.mxu0 0.0
    %6850 = vmatpush1.msra.mxu0 0.0
    %6851 = vmatprep.subr.mxu0 0.0
    %6852 = vmatpush1.msra.mxu0 0.0
    %6853 = vmatprep.subr.mxu0 0.0
    %6854 = vmatpush1.msra.mxu0 0.0
    %6855 = vmatprep.subr.mxu0 0.0
    %6856 = vmatpush1.msra.mxu0 0.0
    %6857 = vmatprep.subr.mxu0 0.0
    %6858 = vmatpush1.msra.mxu0 0.0
    %6859 = vmatprep.subr.mxu0 0.0
    %6860 = vmatpush1.msra.mxu0 0.0
    %6861 = vmatprep.mubr.f32.mxu0 0.0
    %6862 = vmatmul.mubr.f32.gmra.mrb[0].mxu0 %v6792
    %v6863 = vpop.f32.mrb[0].mxu0
    %v6864 = vadd.f32 0.0, %v6863
    %v6865 = vpop.f32.mrb[0].mxu0
    %6866 = vmatprep.mubr.f32.mxu0 0.0
    %6867 = vmatmul.mubr.f32.gmra.mrb[0].mxu0 %v6795
    %v6868 = vpop.f32.mrb[0].mxu0
    %v6869 = vadd.f32 0.0, %v6868
    %v6870 = vpop.f32.mrb[0].mxu0
    %6871 = vdwg.mxu0
    %v6873 = vsel %vm6160, %v6616, 0
    %v6876 = vsel %vm6160, %v6621, 0
    %6878 = vmatprep.subr.mxu0 0.0
    %6879 = vmatpush1.msra.mxu0 %v6774
    %6880 = vmatprep.subr.mxu0 0.0
    %6881 = vmatpush1.msra.mxu0 %v6775
    %6882 = vmatprep.subr.mxu0 0.0
    %6883 = vmatpush1.msra.mxu0 %v6776
    %6884 = vmatprep.subr.mxu0 0.0
    %6885 = vmatpush1.msra.mxu0 %v6777
    %6886 = vmatprep.subr.mxu0 0.0
    %6887 = vmatpush1.msra.mxu0 %v6778
    %6888 = vmatprep.subr.mxu0 0.0
    %6889 = vmatpush1.msra.mxu0 %v6779
    %6890 = vmatprep.subr.mxu0 0.0
    %6891 = vmatpush1.msra.mxu0 %v6780
    %6892 = vmatprep.subr.mxu0 0.0
    %6893 = vmatpush1.msra.mxu0 %v6781
    %6894 = vmatprep.subr.mxu0 0.0
    %6895 = vmatpush1.msra.mxu0 0.0
    %6896 = vmatprep.subr.mxu0 0.0
    %6897 = vmatpush1.msra.mxu0 0.0
    %6898 = vmatprep.subr.mxu0 0.0
    %6899 = vmatpush1.msra.mxu0 0.0
    %6900 = vmatprep.subr.mxu0 0.0
    %6901 = vmatpush1.msra.mxu0 0.0
    %6902 = vmatprep.subr.mxu0 0.0
    %6903 = vmatpush1.msra.mxu0 0.0
    %6904 = vmatprep.subr.mxu0 0.0
    %6905 = vmatpush1.msra.mxu0 0.0
    %6906 = vmatprep.subr.mxu0 0.0
    %6907 = vmatpush1.msra.mxu0 0.0
    %6908 = vmatprep.subr.mxu0 0.0
    %6909 = vmatpush1.msra.mxu0 0.0
    %6910 = vmatprep.subr.mxu0 0.0
    %6911 = vmatpush1.msra.mxu0 0.0
    %6912 = vmatprep.subr.mxu0 0.0
    %6913 = vmatpush1.msra.mxu0 0.0
    %6914 = vmatprep.subr.mxu0 0.0
    %6915 = vmatpush1.msra.mxu0 0.0
    %6916 = vmatprep.subr.mxu0 0.0
    %6917 = vmatpush1.msra.mxu0 0.0
    %6918 = vmatprep.subr.mxu0 0.0
    %6919 = vmatpush1.msra.mxu0 0.0
    %6920 = vmatprep.subr.mxu0 0.0
    %6921 = vmatpush1.msra.mxu0 0.0
    %6922 = vmatprep.subr.mxu0 0.0
    %6923 = vmatpush1.msra.mxu0 0.0
    %6924 = vmatprep.subr.mxu0 0.0
    %6925 = vmatpush1.msra.mxu0 0.0
    %6926 = vmatprep.subr.mxu0 0.0
    %6927 = vmatpush1.msra.mxu0 0.0
    %6928 = vmatprep.subr.mxu0 0.0
    %6929 = vmatpush1.msra.mxu0 0.0
    %6930 = vmatprep.subr.mxu0 0.0
    %6931 = vmatpush1.msra.mxu0 0.0
    %6932 = vmatprep.subr.mxu0 0.0
    %6933 = vmatpush1.msra.mxu0 0.0
    %6934 = vmatprep.subr.mxu0 0.0
    %6935 = vmatpush1.msra.mxu0 0.0
    %6936 = vmatprep.subr.mxu0 0.0
    %6937 = vmatpush1.msra.mxu0 0.0
    %6938 = vmatprep.subr.mxu0 0.0
    %6939 = vmatpush1.msra.mxu0 0.0
    %6940 = vmatprep.subr.mxu0 0.0
    %6941 = vmatpush1.msra.mxu0 0.0
    %6942 = vmatprep.mubr.f32.mxu0 0.0
    %6943 = vmatmul.mubr.f32.gmra.mrb[0].mxu0 %v6873
    %v6944 = vpop.f32.mrb[0].mxu0
    %v6945 = vadd.f32 %v6864, %v6944
    %v6946 = vpop.f32.mrb[0].mxu0
    %6947 = vmatprep.mubr.f32.mxu0 0.0
    %6948 = vmatmul.mubr.f32.gmra.mrb[0].mxu0 %v6876
    %v6949 = vpop.f32.mrb[0].mxu0
    %v6950 = vadd.f32 %v6869, %v6949
    %v6951 = vpop.f32.mrb[0].mxu0
    %6952 = vdwg.mxu0
    %s6953 = scalar_lea.vmem [#allocation4], 128
    %v6954 = vld [vmem:[%s6953] sm:$0xff]
    %v6955 = vld [vmem:[%s6953 + $0x8] sm:$0xff]
    %v6956 = vld [vmem:[%s6953 + $0x10] sm:$0xff]
    %v6957 = vld [vmem:[%s6953 + $0x18] sm:$0xff]
    %v6958 = vld [vmem:[%s6953 + $0x20] sm:$0xff]
    %v6959 = vld [vmem:[%s6953 + $0x28] sm:$0xff]
    %v6960 = vld [vmem:[%s6953 + $0x30] sm:$0xff]
    %v6961 = vld [vmem:[%s6953 + $0x38] sm:$0xff]
    %v6963 = vsel %vm6160, %v6636, 0
    %v6966 = vsel %vm6160, %v6641, 0
    %6968 = vmatprep.subr.mxu0 0.0
    %6969 = vmatpush1.msra.mxu0 %v6954
    %6970 = vmatprep.subr.mxu0 0.0
    %6971 = vmatpush1.msra.mxu0 %v6955
    %6972 = vmatprep.subr.mxu0 0.0
    %6973 = vmatpush1.msra.mxu0 %v6956
    %6974 = vmatprep.subr.mxu0 0.0
    %6975 = vmatpush1.msra.mxu0 %v6957
    %6976 = vmatprep.subr.mxu0 0.0
    %6977 = vmatpush1.msra.mxu0 %v6958
    %6978 = vmatprep.subr.mxu0 0.0
    %6979 = vmatpush1.msra.mxu0 %v6959
    %6980 = vmatprep.subr.mxu0 0.0
    %6981 = vmatpush1.msra.mxu0 %v6960
    %6982 = vmatprep.subr.mxu0 0.0
    %6983 = vmatpush1.msra.mxu0 %v6961
    %6984 = vmatprep.subr.mxu0 0.0
    %6985 = vmatpush1.msra.mxu0 0.0
    %6986 = vmatprep.subr.mxu0 0.0
    %6987 = vmatpush1.msra.mxu0 0.0
    %6988 = vmatprep.subr.mxu0 0.0
    %6989 = vmatpush1.msra.mxu0 0.0
    %6990 = vmatprep.subr.mxu0 0.0
    %6991 = vmatpush1.msra.mxu0 0.0
    %6992 = vmatprep.subr.mxu0 0.0
    %6993 = vmatpush1.msra.mxu0 0.0
    %6994 = vmatprep.subr.mxu0 0.0
    %6995 = vmatpush1.msra.mxu0 0.0
    %6996 = vmatprep.subr.mxu0 0.0
    %6997 = vmatpush1.msra.mxu0 0.0
    %6998 = vmatprep.subr.mxu0 0.0
    %6999 = vmatpush1.msra.mxu0 0.0
    %7000 = vmatprep.subr.mxu0 0.0
    %7001 = vmatpush1.msra.mxu0 0.0
    %7002 = vmatprep.subr.mxu0 0.0
    %7003 = vmatpush1.msra.mxu0 0.0
    %7004 = vmatprep.subr.mxu0 0.0
    %7005 = vmatpush1.msra.mxu0 0.0
    %7006 = vmatprep.subr.mxu0 0.0
    %7007 = vmatpush1.msra.mxu0 0.0
    %7008 = vmatprep.subr.mxu0 0.0
    %7009 = vmatpush1.msra.mxu0 0.0
    %7010 = vmatprep.subr.mxu0 0.0
    %7011 = vmatpush1.msra.mxu0 0.0
    %7012 = vmatprep.subr.mxu0 0.0
    %7013 = vmatpush1.msra.mxu0 0.0
    %7014 = vmatprep.subr.mxu0 0.0
    %7015 = vmatpush1.msra.mxu0 0.0
    %7016 = vmatprep.subr.mxu0 0.0
    %7017 = vmatpush1.msra.mxu0 0.0
    %7018 = vmatprep.subr.mxu0 0.0
    %7019 = vmatpush1.msra.mxu0 0.0
    %7020 = vmatprep.subr.mxu0 0.0
    %7021 = vmatpush1.msra.mxu0 0.0
    %7022 = vmatprep.subr.mxu0 0.0
    %7023 = vmatpush1.msra.mxu0 0.0
    %7024 = vmatprep.subr.mxu0 0.0
    %7025 = vmatpush1.msra.mxu0 0.0
    %7026 = vmatprep.subr.mxu0 0.0
    %7027 = vmatpush1.msra.mxu0 0.0
    %7028 = vmatprep.subr.mxu0 0.0
    %7029 = vmatpush1.msra.mxu0 0.0
    %7030 = vmatprep.subr.mxu0 0.0
    %7031 = vmatpush1.msra.mxu0 0.0
    %7032 = vmatprep.mubr.f32.mxu0 0.0
    %7033 = vmatmul.mubr.f32.gmra.mrb[0].mxu0 %v6963
    %v7034 = vpop.f32.mrb[0].mxu0
    %v7035 = vadd.f32 0.0, %v7034
    %v7036 = vpop.f32.mrb[0].mxu0
    %7037 = vmatprep.mubr.f32.mxu0 0.0
    %7038 = vmatmul.mubr.f32.gmra.mrb[0].mxu0 %v6966
    %v7039 = vpop.f32.mrb[0].mxu0
    %v7040 = vadd.f32 0.0, %v7039
    %v7041 = vpop.f32.mrb[0].mxu0
    %7042 = vdwg.mxu0
    %v7043 = vadd.f32 %v6945, %v7035
    %v7044 = vadd.f32 %v6950, %v7040
    %s7045 = scalar_lea.vmem [#allocation4], 192
    %v7046 = vld [vmem:[%s7045] sm:$0xff]
    %v7047 = vld [vmem:[%s7045 + $0x8] sm:$0xff]
    %v7048 = vld [vmem:[%s7045 + $0x10] sm:$0xff]
    %v7049 = vld [vmem:[%s7045 + $0x18] sm:$0xff]
    %v7050 = vld [vmem:[%s7045 + $0x20] sm:$0xff]
    %v7051 = vld [vmem:[%s7045 + $0x28] sm:$0xff]
    %v7052 = vld [vmem:[%s7045 + $0x30] sm:$0xff]
    %v7053 = vld [vmem:[%s7045 + $0x38] sm:$0xff]
    %v7055 = vsel %vm6160, %v6646, 0
    %v7058 = vsel %vm6160, %v6651, 0
    %7060 = vmatprep.subr.mxu0 0.0
    %7061 = vmatpush1.msra.mxu0 %v7046
    %7062 = vmatprep.subr.mxu0 0.0
    %7063 = vmatpush1.msra.mxu0 %v7047
    %7064 = vmatprep.subr.mxu0 0.0
    %7065 = vmatpush1.msra.mxu0 %v7048
    %7066 = vmatprep.subr.mxu0 0.0
    %7067 = vmatpush1.msra.mxu0 %v7049
    %7068 = vmatprep.subr.mxu0 0.0
    %7069 = vmatpush1.msra.mxu0 %v7050
    %7070 = vmatprep.subr.mxu0 0.0
    %7071 = vmatpush1.msra.mxu0 %v7051
    %7072 = vmatprep.subr.mxu0 0.0
    %7073 = vmatpush1.msra.mxu0 %v7052
    %7074 = vmatprep.subr.mxu0 0.0
    %7075 = vmatpush1.msra.mxu0 %v7053
    %7076 = vmatprep.subr.mxu0 0.0
    %7077 = vmatpush1.msra.mxu0 0.0
    %7078 = vmatprep.subr.mxu0 0.0
    %7079 = vmatpush1.msra.mxu0 0.0
    %7080 = vmatprep.subr.mxu0 0.0
    %7081 = vmatpush1.msra.mxu0 0.0
    %7082 = vmatprep.subr.mxu0 0.0
    %7083 = vmatpush1.msra.mxu0 0.0
    %7084 = vmatprep.subr.mxu0 0.0
    %7085 = vmatpush1.msra.mxu0 0.0
    %7086 = vmatprep.subr.mxu0 0.0
    %7087 = vmatpush1.msra.mxu0 0.0
    %7088 = vmatprep.subr.mxu0 0.0
    %7089 = vmatpush1.msra.mxu0 0.0
    %7090 = vmatprep.subr.mxu0 0.0
    %7091 = vmatpush1.msra.mxu0 0.0
    %7092 = vmatprep.subr.mxu0 0.0
    %7093 = vmatpush1.msra.mxu0 0.0
    %7094 = vmatprep.subr.mxu0 0.0
    %7095 = vmatpush1.msra.mxu0 0.0
    %7096 = vmatprep.subr.mxu0 0.0
    %7097 = vmatpush1.msra.mxu0 0.0
    %7098 = vmatprep.subr.mxu0 0.0
    %7099 = vmatpush1.msra.mxu0 0.0
    %7100 = vmatprep.subr.mxu0 0.0
    %7101 = vmatpush1.msra.mxu0 0.0
    %7102 = vmatprep.subr.mxu0 0.0
    %7103 = vmatpush1.msra.mxu0 0.0
    %7104 = vmatprep.subr.mxu0 0.0
    %7105 = vmatpush1.msra.mxu0 0.0
    %7106 = vmatprep.subr.mxu0 0.0
    %7107 = vmatpush1.msra.mxu0 0.0
    %7108 = vmatprep.subr.mxu0 0.0
    %7109 = vmatpush1.msra.mxu0 0.0
    %7110 = vmatprep.subr.mxu0 0.0
    %7111 = vmatpush1.msra.mxu0 0.0
    %7112 = vmatprep.subr.mxu0 0.0
    %7113 = vmatpush1.msra.mxu0 0.0
    %7114 = vmatprep.subr.mxu0 0.0
    %7115 = vmatpush1.msra.mxu0 0.0
    %7116 = vmatprep.subr.mxu0 0.0
    %7117 = vmatpush1.msra.mxu0 0.0
    %7118 = vmatprep.subr.mxu0 0.0
    %7119 = vmatpush1.msra.mxu0 0.0
    %7120 = vmatprep.subr.mxu0 0.0
    %7121 = vmatpush1.msra.mxu0 0.0
    %7122 = vmatprep.subr.mxu0 0.0
    %7123 = vmatpush1.msra.mxu0 0.0
    %7124 = vmatprep.mubr.f32.mxu0 0.0
    %7125 = vmatmul.mubr.f32.gmra.mrb[0].mxu0 %v7055
    %v7126 = vpop.f32.mrb[0].mxu0
    %v7127 = vadd.f32 0.0, %v7126
    %v7128 = vpop.f32.mrb[0].mxu0
    %7129 = vmatprep.mubr.f32.mxu0 0.0
    %7130 = vmatmul.mubr.f32.gmra.mrb[0].mxu0 %v7058
    %v7131 = vpop.f32.mrb[0].mxu0
    %v7132 = vadd.f32 0.0, %v7131
    %v7133 = vpop.f32.mrb[0].mxu0
    %7134 = vdwg.mxu0
    %v7135 = vadd.f32 %v7043, %v7127
    %v7136 = vadd.f32 %v7044, %v7132
    %s7137 = scalar_lea.vmem [#allocation4], 256
    %v7138 = vld [vmem:[%s7137] sm:$0xff]
    %v7139 = vld [vmem:[%s7137 + $0x8] sm:$0xff]
    %v7140 = vld [vmem:[%s7137 + $0x10] sm:$0xff]
    %v7141 = vld [vmem:[%s7137 + $0x18] sm:$0xff]
    %v7142 = vld [vmem:[%s7137 + $0x20] sm:$0xff]
    %v7143 = vld [vmem:[%s7137 + $0x28] sm:$0xff]
    %v7144 = vld [vmem:[%s7137 + $0x30] sm:$0xff]
    %v7145 = vld [vmem:[%s7137 + $0x38] sm:$0xff]
    %v7147 = vsel %vm6160, %v6656, 0
    %v7150 = vsel %vm6160, %v6661, 0
    %7152 = vmatprep.subr.mxu0 0.0
    %7153 = vmatpush1.msra.mxu0 %v7138
    %7154 = vmatprep.subr.mxu0 0.0
    %7155 = vmatpush1.msra.mxu0 %v7139
    %7156 = vmatprep.subr.mxu0 0.0
    %7157 = vmatpush1.msra.mxu0 %v7140
    %7158 = vmatprep.subr.mxu0 0.0
    %7159 = vmatpush1.msra.mxu0 %v7141
    %7160 = vmatprep.subr.mxu0 0.0
    %7161 = vmatpush1.msra.mxu0 %v7142
    %7162 = vmatprep.subr.mxu0 0.0
    %7163 = vmatpush1.msra.mxu0 %v7143
    %7164 = vmatprep.subr.mxu0 0.0
    %7165 = vmatpush1.msra.mxu0 %v7144
    %7166 = vmatprep.subr.mxu0 0.0
    %7167 = vmatpush1.msra.mxu0 %v7145
    %7168 = vmatprep.subr.mxu0 0.0
    %7169 = vmatpush1.msra.mxu0 0.0
    %7170 = vmatprep.subr.mxu0 0.0
    %7171 = vmatpush1.msra.mxu0 0.0
    %7172 = vmatprep.subr.mxu0 0.0
    %7173 = vmatpush1.msra.mxu0 0.0
    %7174 = vmatprep.subr.mxu0 0.0
    %7175 = vmatpush1.msra.mxu0 0.0
    %7176 = vmatprep.subr.mxu0 0.0
    %7177 = vmatpush1.msra.mxu0 0.0
    %7178 = vmatprep.subr.mxu0 0.0
    %7179 = vmatpush1.msra.mxu0 0.0
    %7180 = vmatprep.subr.mxu0 0.0
    %7181 = vmatpush1.msra.mxu0 0.0
    %7182 = vmatprep.subr.mxu0 0.0
    %7183 = vmatpush1.msra.mxu0 0.0
    %7184 = vmatprep.subr.mxu0 0.0
    %7185 = vmatpush1.msra.mxu0 0.0
    %7186 = vmatprep.subr.mxu0 0.0
    %7187 = vmatpush1.msra.mxu0 0.0
    %7188 = vmatprep.subr.mxu0 0.0
    %7189 = vmatpush1.msra.mxu0 0.0
    %7190 = vmatprep.subr.mxu0 0.0
    %7191 = vmatpush1.msra.mxu0 0.0
    %7192 = vmatprep.subr.mxu0 0.0
    %7193 = vmatpush1.msra.mxu0 0.0
    %7194 = vmatprep.subr.mxu0 0.0
    %7195 = vmatpush1.msra.mxu0 0.0
    %7196 = vmatprep.subr.mxu0 0.0
    %7197 = vmatpush1.msra.mxu0 0.0
    %7198 = vmatprep.subr.mxu0 0.0
    %7199 = vmatpush1.msra.mxu0 0.0
    %7200 = vmatprep.subr.mxu0 0.0
    %7201 = vmatpush1.msra.mxu0 0.0
    %7202 = vmatprep.subr.mxu0 0.0
    %7203 = vmatpush1.msra.mxu0 0.0
    %7204 = vmatprep.subr.mxu0 0.0
    %7205 = vmatpush1.msra.mxu0 0.0
    %7206 = vmatprep.subr.mxu0 0.0
    %7207 = vmatpush1.msra.mxu0 0.0
    %7208 = vmatprep.subr.mxu0 0.0
    %7209 = vmatpush1.msra.mxu0 0.0
    %7210 = vmatprep.subr.mxu0 0.0
    %7211 = vmatpush1.msra.mxu0 0.0
    %7212 = vmatprep.subr.mxu0 0.0
    %7213 = vmatpush1.msra.mxu0 0.0
    %7214 = vmatprep.subr.mxu0 0.0
    %7215 = vmatpush1.msra.mxu0 0.0
    %7216 = vmatprep.mubr.f32.mxu0 0.0
    %7217 = vmatmul.mubr.f32.gmra.mrb[0].mxu0 %v7147
    %v7218 = vpop.f32.mrb[0].mxu0
    %v7219 = vadd.f32 0.0, %v7218
    %v7220 = vpop.f32.mrb[0].mxu0
    %7221 = vmatprep.mubr.f32.mxu0 0.0
    %7222 = vmatmul.mubr.f32.gmra.mrb[0].mxu0 %v7150
    %v7223 = vpop.f32.mrb[0].mxu0
    %v7224 = vadd.f32 0.0, %v7223
    %v7225 = vpop.f32.mrb[0].mxu0
    %7226 = vdwg.mxu0
    %v7227 = vadd.f32 %v7135, %v7219
    %v7228 = vadd.f32 %v7136, %v7224
    %s7229 = scalar_lea.vmem [#allocation4], 320
    %v7230 = vld [vmem:[%s7229] sm:$0xff]
    %v7231 = vld [vmem:[%s7229 + $0x8] sm:$0xff]
    %v7232 = vld [vmem:[%s7229 + $0x10] sm:$0xff]
    %v7233 = vld [vmem:[%s7229 + $0x18] sm:$0xff]
    %v7234 = vld [vmem:[%s7229 + $0x20] sm:$0xff]
    %v7235 = vld [vmem:[%s7229 + $0x28] sm:$0xff]
    %v7236 = vld [vmem:[%s7229 + $0x30] sm:$0xff]
    %v7237 = vld [vmem:[%s7229 + $0x38] sm:$0xff]
    %v7239 = vsel %vm6160, %v6666, 0
    %v7242 = vsel %vm6160, %v6671, 0
    %7244 = vmatprep.subr.mxu0 0.0
    %7245 = vmatpush1.msra.mxu0 %v7230
    %7246 = vmatprep.subr.mxu0 0.0
    %7247 = vmatpush1.msra.mxu0 %v7231
    %7248 = vmatprep.subr.mxu0 0.0
    %7249 = vmatpush1.msra.mxu0 %v7232
    %7250 = vmatprep.subr.mxu0 0.0
    %7251 = vmatpush1.msra.mxu0 %v7233
    %7252 = vmatprep.subr.mxu0 0.0
    %7253 = vmatpush1.msra.mxu0 %v7234
    %7254 = vmatprep.subr.mxu0 0.0
    %7255 = vmatpush1.msra.mxu0 %v7235
    %7256 = vmatprep.subr.mxu0 0.0
    %7257 = vmatpush1.msra.mxu0 %v7236
    %7258 = vmatprep.subr.mxu0 0.0
    %7259 = vmatpush1.msra.mxu0 %v7237
    %7260 = vmatprep.subr.mxu0 0.0
    %7261 = vmatpush1.msra.mxu0 0.0
    %7262 = vmatprep.subr.mxu0 0.0
    %7263 = vmatpush1.msra.mxu0 0.0
    %7264 = vmatprep.subr.mxu0 0.0
    %7265 = vmatpush1.msra.mxu0 0.0
    %7266 = vmatprep.subr.mxu0 0.0
    %7267 = vmatpush1.msra.mxu0 0.0
    %7268 = vmatprep.subr.mxu0 0.0
    %7269 = vmatpush1.msra.mxu0 0.0
    %7270 = vmatprep.subr.mxu0 0.0
    %7271 = vmatpush1.msra.mxu0 0.0
    %7272 = vmatprep.subr.mxu0 0.0
    %7273 = vmatpush1.msra.mxu0 0.0
    %7274 = vmatprep.subr.mxu0 0.0
    %7275 = vmatpush1.msra.mxu0 0.0
    %7276 = vmatprep.subr.mxu0 0.0
    %7277 = vmatpush1.msra.mxu0 0.0
    %7278 = vmatprep.subr.mxu0 0.0
    %7279 = vmatpush1.msra.mxu0 0.0
    %7280 = vmatprep.subr.mxu0 0.0
    %7281 = vmatpush1.msra.mxu0 0.0
    %7282 = vmatprep.subr.mxu0 0.0
    %7283 = vmatpush1.msra.mxu0 0.0
    %7284 = vmatprep.subr.mxu0 0.0
    %7285 = vmatpush1.msra.mxu0 0.0
    %7286 = vmatprep.subr.mxu0 0.0
    %7287 = vmatpush1.msra.mxu0 0.0
    %7288 = vmatprep.subr.mxu0 0.0
    %7289 = vmatpush1.msra.mxu0 0.0
    %7290 = vmatprep.subr.mxu0 0.0
    %7291 = vmatpush1.msra.mxu0 0.0
    %7292 = vmatprep.subr.mxu0 0.0
    %7293 = vmatpush1.msra.mxu0 0.0
    %7294 = vmatprep.subr.mxu0 0.0
    %7295 = vmatpush1.msra.mxu0 0.0
    %7296 = vmatprep.subr.mxu0 0.0
    %7297 = vmatpush1.msra.mxu0 0.0
    %7298 = vmatprep.subr.mxu0 0.0
    %7299 = vmatpush1.msra.mxu0 0.0
    %7300 = vmatprep.subr.mxu0 0.0
    %7301 = vmatpush1.msra.mxu0 0.0
    %7302 = vmatprep.subr.mxu0 0.0
    %7303 = vmatpush1.msra.mxu0 0.0
    %7304 = vmatprep.subr.mxu0 0.0
    %7305 = vmatpush1.msra.mxu0 0.0
    %7306 = vmatprep.subr.mxu0 0.0
    %7307 = vmatpush1.msra.mxu0 0.0
    %7308 = vmatprep.mubr.f32.mxu0 0.0
    %7309 = vmatmul.mubr.f32.gmra.mrb[0].mxu0 %v7239
    %v7310 = vpop.f32.mrb[0].mxu0
    %v7311 = vadd.f32 0.0, %v7310
    %v7312 = vpop.f32.mrb[0].mxu0
    %7313 = vmatprep.mubr.f32.mxu0 0.0
    %7314 = vmatmul.mubr.f32.gmra.mrb[0].mxu0 %v7242
    %v7315 = vpop.f32.mrb[0].mxu0
    %v7316 = vadd.f32 0.0, %v7315
    %v7317 = vpop.f32.mrb[0].mxu0
    %7318 = vdwg.mxu0
    %v7319 = vadd.f32 %v7227, %v7311
    %v7320 = vadd.f32 %v7228, %v7316
    %s7321 = scalar_lea.vmem [#allocation4], 384
    %v7322 = vld [vmem:[%s7321] sm:$0xff]
    %v7323 = vld [vmem:[%s7321 + $0x8] sm:$0xff]
    %v7324 = vld [vmem:[%s7321 + $0x10] sm:$0xff]
    %v7325 = vld [vmem:[%s7321 + $0x18] sm:$0xff]
    %v7326 = vld [vmem:[%s7321 + $0x20] sm:$0xff]
    %v7327 = vld [vmem:[%s7321 + $0x28] sm:$0xff]
    %v7328 = vld [vmem:[%s7321 + $0x30] sm:$0xff]
    %v7329 = vld [vmem:[%s7321 + $0x38] sm:$0xff]
    %v7331 = vsel %vm6160, %v6676, 0
    %v7334 = vsel %vm6160, %v6681, 0
    %7336 = vmatprep.subr.mxu0 0.0
    %7337 = vmatpush1.msra.mxu0 %v7322
    %7338 = vmatprep.subr.mxu0 0.0
    %7339 = vmatpush1.msra.mxu0 %v7323
    %7340 = vmatprep.subr.mxu0 0.0
    %7341 = vmatpush1.msra.mxu0 %v7324
    %7342 = vmatprep.subr.mxu0 0.0
    %7343 = vmatpush1.msra.mxu0 %v7325
    %7344 = vmatprep.subr.mxu0 0.0
    %7345 = vmatpush1.msra.mxu0 %v7326
    %7346 = vmatprep.subr.mxu0 0.0
    %7347 = vmatpush1.msra.mxu0 %v7327
    %7348 = vmatprep.subr.mxu0 0.0
    %7349 = vmatpush1.msra.mxu0 %v7328
    %7350 = vmatprep.subr.mxu0 0.0
    %7351 = vmatpush1.msra.mxu0 %v7329
    %7352 = vmatprep.subr.mxu0 0.0
    %7353 = vmatpush1.msra.mxu0 0.0
    %7354 = vmatprep.subr.mxu0 0.0
    %7355 = vmatpush1.msra.mxu0 0.0
    %7356 = vmatprep.subr.mxu0 0.0
    %7357 = vmatpush1.msra.mxu0 0.0
    %7358 = vmatprep.subr.mxu0 0.0
    %7359 = vmatpush1.msra.mxu0 0.0
    %7360 = vmatprep.subr.mxu0 0.0
    %7361 = vmatpush1.msra.mxu0 0.0
    %7362 = vmatprep.subr.mxu0 0.0
    %7363 = vmatpush1.msra.mxu0 0.0
    %7364 = vmatprep.subr.mxu0 0.0
    %7365 = vmatpush1.msra.mxu0 0.0
    %7366 = vmatprep.subr.mxu0 0.0
    %7367 = vmatpush1.msra.mxu0 0.0
    %7368 = vmatprep.subr.mxu0 0.0
    %7369 = vmatpush1.msra.mxu0 0.0
    %7370 = vmatprep.subr.mxu0 0.0
    %7371 = vmatpush1.msra.mxu0 0.0
    %7372 = vmatprep.subr.mxu0 0.0
    %7373 = vmatpush1.msra.mxu0 0.0
    %7374 = vmatprep.subr.mxu0 0.0
    %7375 = vmatpush1.msra.mxu0 0.0
    %7376 = vmatprep.subr.mxu0 0.0
    %7377 = vmatpush1.msra.mxu0 0.0
    %7378 = vmatprep.subr.mxu0 0.0
    %7379 = vmatpush1.msra.mxu0 0.0
    %7380 = vmatprep.subr.mxu0 0.0
    %7381 = vmatpush1.msra.mxu0 0.0
    %7382 = vmatprep.subr.mxu0 0.0
    %7383 = vmatpush1.msra.mxu0 0.0
    %7384 = vmatprep.subr.mxu0 0.0
    %7385 = vmatpush1.msra.mxu0 0.0
    %7386 = vmatprep.subr.mxu0 0.0
    %7387 = vmatpush1.msra.mxu0 0.0
    %7388 = vmatprep.subr.mxu0 0.0
    %7389 = vmatpush1.msra.mxu0 0.0
    %7390 = vmatprep.subr.mxu0 0.0
    %7391 = vmatpush1.msra.mxu0 0.0
    %7392 = vmatprep.subr.mxu0 0.0
    %7393 = vmatpush1.msra.mxu0 0.0
    %7394 = vmatprep.subr.mxu0 0.0
    %7395 = vmatpush1.msra.mxu0 0.0
    %7396 = vmatprep.subr.mxu0 0.0
    %7397 = vmatpush1.msra.mxu0 0.0
    %7398 = vmatprep.subr.mxu0 0.0
    %7399 = vmatpush1.msra.mxu0 0.0
    %7400 = vmatprep.mubr.f32.mxu0 0.0
    %7401 = vmatmul.mubr.f32.gmra.mrb[0].mxu0 %v7331
    %v7402 = vpop.f32.mrb[0].mxu0
    %v7403 = vadd.f32 0.0, %v7402
    %v7404 = vpop.f32.mrb[0].mxu0
    %7405 = vmatprep.mubr.f32.mxu0 0.0
    %7406 = vmatmul.mubr.f32.gmra.mrb[0].mxu0 %v7334
    %v7407 = vpop.f32.mrb[0].mxu0
    %v7408 = vadd.f32 0.0, %v7407
    %v7409 = vpop.f32.mrb[0].mxu0
    %7410 = vdwg.mxu0
    %v7411 = vadd.f32 %v7319, %v7403
    %v7412 = vadd.f32 %v7320, %v7408
    %s7413 = scalar_lea.vmem [#allocation4], 448
    %v7414 = vld [vmem:[%s7413] sm:$0xff]
    %v7415 = vld [vmem:[%s7413 + $0x8] sm:$0xff]
    %v7416 = vld [vmem:[%s7413 + $0x10] sm:$0xff]
    %v7417 = vld [vmem:[%s7413 + $0x18] sm:$0xff]
    %v7418 = vld [vmem:[%s7413 + $0x20] sm:$0xff]
    %v7419 = vld [vmem:[%s7413 + $0x28] sm:$0xff]
    %v7420 = vld [vmem:[%s7413 + $0x30] sm:$0xff]
    %v7421 = vld [vmem:[%s7413 + $0x38] sm:$0xff]
    %v7423 = vsel %vm6160, %v6686, 0
    %v7426 = vsel %vm6160, %v6691, 0
    %7428 = vmatprep.subr.mxu0 0.0
    %7429 = vmatpush1.msra.mxu0 %v7414
    %7430 = vmatprep.subr.mxu0 0.0
    %7431 = vmatpush1.msra.mxu0 %v7415
    %7432 = vmatprep.subr.mxu0 0.0
    %7433 = vmatpush1.msra.mxu0 %v7416
    %7434 = vmatprep.subr.mxu0 0.0
    %7435 = vmatpush1.msra.mxu0 %v7417
    %7436 = vmatprep.subr.mxu0 0.0
    %7437 = vmatpush1.msra.mxu0 %v7418
    %7438 = vmatprep.subr.mxu0 0.0
    %7439 = vmatpush1.msra.mxu0 %v7419
    %7440 = vmatprep.subr.mxu0 0.0
    %7441 = vmatpush1.msra.mxu0 %v7420
    %7442 = vmatprep.subr.mxu0 0.0
    %7443 = vmatpush1.msra.mxu0 %v7421
    %7444 = vmatprep.subr.mxu0 0.0
    %7445 = vmatpush1.msra.mxu0 0.0
    %7446 = vmatprep.subr.mxu0 0.0
    %7447 = vmatpush1.msra.mxu0 0.0
    %7448 = vmatprep.subr.mxu0 0.0
    %7449 = vmatpush1.msra.mxu0 0.0
    %7450 = vmatprep.subr.mxu0 0.0
    %7451 = vmatpush1.msra.mxu0 0.0
    %7452 = vmatprep.subr.mxu0 0.0
    %7453 = vmatpush1.msra.mxu0 0.0
    %7454 = vmatprep.subr.mxu0 0.0
    %7455 = vmatpush1.msra.mxu0 0.0
    %7456 = vmatprep.subr.mxu0 0.0
    %7457 = vmatpush1.msra.mxu0 0.0
    %7458 = vmatprep.subr.mxu0 0.0
    %7459 = vmatpush1.msra.mxu0 0.0
    %7460 = vmatprep.subr.mxu0 0.0
    %7461 = vmatpush1.msra.mxu0 0.0
    %7462 = vmatprep.subr.mxu0 0.0
    %7463 = vmatpush1.msra.mxu0 0.0
    %7464 = vmatprep.subr.mxu0 0.0
    %7465 = vmatpush1.msra.mxu0 0.0
    %7466 = vmatprep.subr.mxu0 0.0
    %7467 = vmatpush1.msra.mxu0 0.0
    %7468 = vmatprep.subr.mxu0 0.0
    %7469 = vmatpush1.msra.mxu0 0.0
    %7470 = vmatprep.subr.mxu0 0.0
    %7471 = vmatpush1.msra.mxu0 0.0
    %7472 = vmatprep.subr.mxu0 0.0
    %7473 = vmatpush1.msra.mxu0 0.0
    %7474 = vmatprep.subr.mxu0 0.0
    %7475 = vmatpush1.msra.mxu0 0.0
    %7476 = vmatprep.subr.mxu0 0.0
    %7477 = vmatpush1.msra.mxu0 0.0
    %7478 = vmatprep.subr.mxu0 0.0
    %7479 = vmatpush1.msra.mxu0 0.0
    %7480 = vmatprep.subr.mxu0 0.0
    %7481 = vmatpush1.msra.mxu0 0.0
    %7482 = vmatprep.subr.mxu0 0.0
    %7483 = vmatpush1.msra.mxu0 0.0
    %7484 = vmatprep.subr.mxu0 0.0
    %7485 = vmatpush1.msra.mxu0 0.0
    %7486 = vmatprep.subr.mxu0 0.0
    %7487 = vmatpush1.msra.mxu0 0.0
    %7488 = vmatprep.subr.mxu0 0.0
    %7489 = vmatpush1.msra.mxu0 0.0
    %7490 = vmatprep.subr.mxu0 0.0
    %7491 = vmatpush1.msra.mxu0 0.0
    %7492 = vmatprep.mubr.f32.mxu0 0.0
    %7493 = vmatmul.mubr.f32.gmra.mrb[0].mxu0 %v7423
    %v7494 = vpop.f32.mrb[0].mxu0
    %v7495 = vadd.f32 0.0, %v7494
    %v7496 = vpop.f32.mrb[0].mxu0
    %7497 = vmatprep.mubr.f32.mxu0 0.0
    %7498 = vmatmul.mubr.f32.gmra.mrb[0].mxu0 %v7426
    %v7499 = vpop.f32.mrb[0].mxu0
    %v7500 = vadd.f32 0.0, %v7499
    %v7501 = vpop.f32.mrb[0].mxu0
    %7502 = vdwg.mxu0
    %v7503 = vadd.f32 %v7411, %v7495
    %v7504 = vadd.f32 %v7412, %v7500
    %s7505 = scalar_lea.vmem [#allocation4], 512
    %v7506 = vld [vmem:[%s7505] sm:$0xff]
    %v7507 = vld [vmem:[%s7505 + $0x8] sm:$0xff]
    %v7508 = vld [vmem:[%s7505 + $0x10] sm:$0xff]
    %v7509 = vld [vmem:[%s7505 + $0x18] sm:$0xff]
    %v7510 = vld [vmem:[%s7505 + $0x20] sm:$0xff]
    %v7511 = vld [vmem:[%s7505 + $0x28] sm:$0xff]
    %v7512 = vld [vmem:[%s7505 + $0x30] sm:$0xff]
    %v7513 = vld [vmem:[%s7505 + $0x38] sm:$0xff]
    %v7515 = vsel %vm6160, %v6696, 0
    %v7518 = vsel %vm6160, %v6701, 0
    %7520 = vmatprep.subr.mxu0 0.0
    %7521 = vmatpush1.msra.mxu0 %v7506
    %7522 = vmatprep.subr.mxu0 0.0
    %7523 = vmatpush1.msra.mxu0 %v7507
    %7524 = vmatprep.subr.mxu0 0.0
    %7525 = vmatpush1.msra.mxu0 %v7508
    %7526 = vmatprep.subr.mxu0 0.0
    %7527 = vmatpush1.msra.mxu0 %v7509
    %7528 = vmatprep.subr.mxu0 0.0
    %7529 = vmatpush1.msra.mxu0 %v7510
    %7530 = vmatprep.subr.mxu0 0.0
    %7531 = vmatpush1.msra.mxu0 %v7511
    %7532 = vmatprep.subr.mxu0 0.0
    %7533 = vmatpush1.msra.mxu0 %v7512
    %7534 = vmatprep.subr.mxu0 0.0
    %7535 = vmatpush1.msra.mxu0 %v7513
    %7536 = vmatprep.subr.mxu0 0.0
    %7537 = vmatpush1.msra.mxu0 0.0
    %7538 = vmatprep.subr.mxu0 0.0
    %7539 = vmatpush1.msra.mxu0 0.0
    %7540 = vmatprep.subr.mxu0 0.0
    %7541 = vmatpush1.msra.mxu0 0.0
    %7542 = vmatprep.subr.mxu0 0.0
    %7543 = vmatpush1.msra.mxu0 0.0
    %7544 = vmatprep.subr.mxu0 0.0
    %7545 = vmatpush1.msra.mxu0 0.0
    %7546 = vmatprep.subr.mxu0 0.0
    %7547 = vmatpush1.msra.mxu0 0.0
    %7548 = vmatprep.subr.mxu0 0.0
    %7549 = vmatpush1.msra.mxu0 0.0
    %7550 = vmatprep.subr.mxu0 0.0
    %7551 = vmatpush1.msra.mxu0 0.0
    %7552 = vmatprep.subr.mxu0 0.0
    %7553 = vmatpush1.msra.mxu0 0.0
    %7554 = vmatprep.subr.mxu0 0.0
    %7555 = vmatpush1.msra.mxu0 0.0
    %7556 = vmatprep.subr.mxu0 0.0
    %7557 = vmatpush1.msra.mxu0 0.0
    %7558 = vmatprep.subr.mxu0 0.0
    %7559 = vmatpush1.msra.mxu0 0.0
    %7560 = vmatprep.subr.mxu0 0.0
    %7561 = vmatpush1.msra.mxu0 0.0
    %7562 = vmatprep.subr.mxu0 0.0
    %7563 = vmatpush1.msra.mxu0 0.0
    %7564 = vmatprep.subr.mxu0 0.0
    %7565 = vmatpush1.msra.mxu0 0.0
    %7566 = vmatprep.subr.mxu0 0.0
    %7567 = vmatpush1.msra.mxu0 0.0
    %7568 = vmatprep.subr.mxu0 0.0
    %7569 = vmatpush1.msra.mxu0 0.0
    %7570 = vmatprep.subr.mxu0 0.0
    %7571 = vmatpush1.msra.mxu0 0.0
    %7572 = vmatprep.subr.mxu0 0.0
    %7573 = vmatpush1.msra.mxu0 0.0
    %7574 = vmatprep.subr.mxu0 0.0
    %7575 = vmatpush1.msra.mxu0 0.0
    %7576 = vmatprep.subr.mxu0 0.0
    %7577 = vmatpush1.msra.mxu0 0.0
    %7578 = vmatprep.subr.mxu0 0.0
    %7579 = vmatpush1.msra.mxu0 0.0
    %7580 = vmatprep.subr.mxu0 0.0
    %7581 = vmatpush1.msra.mxu0 0.0
    %7582 = vmatprep.subr.mxu0 0.0
    %7583 = vmatpush1.msra.mxu0 0.0
    %7584 = vmatprep.mubr.f32.mxu0 0.0
    %7585 = vmatmul.mubr.f32.gmra.mrb[0].mxu0 %v7515
    %v7586 = vpop.f32.mrb[0].mxu0
    %v7587 = vadd.f32 0.0, %v7586
    %v7588 = vpop.f32.mrb[0].mxu0
    %7589 = vmatprep.mubr.f32.mxu0 0.0
    %7590 = vmatmul.mubr.f32.gmra.mrb[0].mxu0 %v7518
    %v7591 = vpop.f32.mrb[0].mxu0
    %v7592 = vadd.f32 0.0, %v7591
    %v7593 = vpop.f32.mrb[0].mxu0
    %7594 = vdwg.mxu0
    %v7595 = vadd.f32 %v7503, %v7587
    %v7596 = vadd.f32 %v7504, %v7592
    %s7597 = scalar_lea.vmem [#allocation4], 576
    %v7598 = vld [vmem:[%s7597] sm:$0xff]
    %v7599 = vld [vmem:[%s7597 + $0x8] sm:$0xff]
    %v7600 = vld [vmem:[%s7597 + $0x10] sm:$0xff]
    %v7601 = vld [vmem:[%s7597 + $0x18] sm:$0xff]
    %v7602 = vld [vmem:[%s7597 + $0x20] sm:$0xff]
    %v7603 = vld [vmem:[%s7597 + $0x28] sm:$0xff]
    %v7604 = vld [vmem:[%s7597 + $0x30] sm:$0xff]
    %v7605 = vld [vmem:[%s7597 + $0x38] sm:$0xff]
    %v7607 = vsel %vm6160, %v6706, 0
    %v7610 = vsel %vm6160, %v6711, 0
    %7612 = vmatprep.subr.mxu0 0.0
    %7613 = vmatpush1.msra.mxu0 %v7598
    %7614 = vmatprep.subr.mxu0 0.0
    %7615 = vmatpush1.msra.mxu0 %v7599
    %7616 = vmatprep.subr.mxu0 0.0
    %7617 = vmatpush1.msra.mxu0 %v7600
    %7618 = vmatprep.subr.mxu0 0.0
    %7619 = vmatpush1.msra.mxu0 %v7601
    %7620 = vmatprep.subr.mxu0 0.0
    %7621 = vmatpush1.msra.mxu0 %v7602
    %7622 = vmatprep.subr.mxu0 0.0
    %7623 = vmatpush1.msra.mxu0 %v7603
    %7624 = vmatprep.subr.mxu0 0.0
    %7625 = vmatpush1.msra.mxu0 %v7604
    %7626 = vmatprep.subr.mxu0 0.0
    %7627 = vmatpush1.msra.mxu0 %v7605
    %7628 = vmatprep.subr.mxu0 0.0
    %7629 = vmatpush1.msra.mxu0 0.0
    %7630 = vmatprep.subr.mxu0 0.0
    %7631 = vmatpush1.msra.mxu0 0.0
    %7632 = vmatprep.subr.mxu0 0.0
    %7633 = vmatpush1.msra.mxu0 0.0
    %7634 = vmatprep.subr.mxu0 0.0
    %7635 = vmatpush1.msra.mxu0 0.0
    %7636 = vmatprep.subr.mxu0 0.0
    %7637 = vmatpush1.msra.mxu0 0.0
    %7638 = vmatprep.subr.mxu0 0.0
    %7639 = vmatpush1.msra.mxu0 0.0
    %7640 = vmatprep.subr.mxu0 0.0
    %7641 = vmatpush1.msra.mxu0 0.0
    %7642 = vmatprep.subr.mxu0 0.0
    %7643 = vmatpush1.msra.mxu0 0.0
    %7644 = vmatprep.subr.mxu0 0.0
    %7645 = vmatpush1.msra.mxu0 0.0
    %7646 = vmatprep.subr.mxu0 0.0
    %7647 = vmatpush1.msra.mxu0 0.0
    %7648 = vmatprep.subr.mxu0 0.0
    %7649 = vmatpush1.msra.mxu0 0.0
    %7650 = vmatprep.subr.mxu0 0.0
    %7651 = vmatpush1.msra.mxu0 0.0
    %7652 = vmatprep.subr.mxu0 0.0
    %7653 = vmatpush1.msra.mxu0 0.0
    %7654 = vmatprep.subr.mxu0 0.0
    %7655 = vmatpush1.msra.mxu0 0.0
    %7656 = vmatprep.subr.mxu0 0.0
    %7657 = vmatpush1.msra.mxu0 0.0
    %7658 = vmatprep.subr.mxu0 0.0
    %7659 = vmatpush1.msra.mxu0 0.0
    %7660 = vmatprep.subr.mxu0 0.0
    %7661 = vmatpush1.msra.mxu0 0.0
    %7662 = vmatprep.subr.mxu0 0.0
    %7663 = vmatpush1.msra.mxu0 0.0
    %7664 = vmatprep.subr.mxu0 0.0
    %7665 = vmatpush1.msra.mxu0 0.0
    %7666 = vmatprep.subr.mxu0 0.0
    %7667 = vmatpush1.msra.mxu0 0.0
    %7668 = vmatprep.subr.mxu0 0.0
    %7669 = vmatpush1.msra.mxu0 0.0
    %7670 = vmatprep.subr.mxu0 0.0
    %7671 = vmatpush1.msra.mxu0 0.0
    %7672 = vmatprep.subr.mxu0 0.0
    %7673 = vmatpush1.msra.mxu0 0.0
    %7674 = vmatprep.subr.mxu0 0.0
    %7675 = vmatpush1.msra.mxu0 0.0
    %7676 = vmatprep.mubr.f32.mxu0 0.0
    %7677 = vmatmul.mubr.f32.gmra.mrb[0].mxu0 %v7607
    %v7678 = vpop.f32.mrb[0].mxu0
    %v7679 = vadd.f32 0.0, %v7678
    %v7680 = vpop.f32.mrb[0].mxu0
    %7681 = vmatprep.mubr.f32.mxu0 0.0
    %7682 = vmatmul.mubr.f32.gmra.mrb[0].mxu0 %v7610
    %v7683 = vpop.f32.mrb[0].mxu0
    %v7684 = vadd.f32 0.0, %v7683
    %v7685 = vpop.f32.mrb[0].mxu0
    %7686 = vdwg.mxu0
    %v7687 = vadd.f32 %v7595, %v7679
    %v7688 = vadd.f32 %v7596, %v7684
    %s7689 = scalar_lea.vmem [#allocation4], 640
    %v7690 = vld [vmem:[%s7689] sm:$0xff]
    %v7691 = vld [vmem:[%s7689 + $0x8] sm:$0xff]
    %v7692 = vld [vmem:[%s7689 + $0x10] sm:$0xff]
    %v7693 = vld [vmem:[%s7689 + $0x18] sm:$0xff]
    %v7694 = vld [vmem:[%s7689 + $0x20] sm:$0xff]
    %v7695 = vld [vmem:[%s7689 + $0x28] sm:$0xff]
    %v7696 = vld [vmem:[%s7689 + $0x30] sm:$0xff]
    %v7697 = vld [vmem:[%s7689 + $0x38] sm:$0xff]
    %v7699 = vsel %vm6160, %v6716, 0
    %v7702 = vsel %vm6160, %v6721, 0
    %7704 = vmatprep.subr.mxu0 0.0
    %7705 = vmatpush1.msra.mxu0 %v7690
    %7706 = vmatprep.subr.mxu0 0.0
    %7707 = vmatpush1.msra.mxu0 %v7691
    %7708 = vmatprep.subr.mxu0 0.0
    %7709 = vmatpush1.msra.mxu0 %v7692
    %7710 = vmatprep.subr.mxu0 0.0
    %7711 = vmatpush1.msra.mxu0 %v7693
    %7712 = vmatprep.subr.mxu0 0.0
    %7713 = vmatpush1.msra.mxu0 %v7694
    %7714 = vmatprep.subr.mxu0 0.0
    %7715 = vmatpush1.msra.mxu0 %v7695
    %7716 = vmatprep.subr.mxu0 0.0
    %7717 = vmatpush1.msra.mxu0 %v7696
    %7718 = vmatprep.subr.mxu0 0.0
    %7719 = vmatpush1.msra.mxu0 %v7697
    %7720 = vmatprep.subr.mxu0 0.0
    %7721 = vmatpush1.msra.mxu0 0.0
    %7722 = vmatprep.subr.mxu0 0.0
    %7723 = vmatpush1.msra.mxu0 0.0
    %7724 = vmatprep.subr.mxu0 0.0
    %7725 = vmatpush1.msra.mxu0 0.0
    %7726 = vmatprep.subr.mxu0 0.0
    %7727 = vmatpush1.msra.mxu0 0.0
    %7728 = vmatprep.subr.mxu0 0.0
    %7729 = vmatpush1.msra.mxu0 0.0
    %7730 = vmatprep.subr.mxu0 0.0
    %7731 = vmatpush1.msra.mxu0 0.0
    %7732 = vmatprep.subr.mxu0 0.0
    %7733 = vmatpush1.msra.mxu0 0.0
    %7734 = vmatprep.subr.mxu0 0.0
    %7735 = vmatpush1.msra.mxu0 0.0
    %7736 = vmatprep.subr.mxu0 0.0
    %7737 = vmatpush1.msra.mxu0 0.0
    %7738 = vmatprep.subr.mxu0 0.0
    %7739 = vmatpush1.msra.mxu0 0.0
    %7740 = vmatprep.subr.mxu0 0.0
    %7741 = vmatpush1.msra.mxu0 0.0
    %7742 = vmatprep.subr.mxu0 0.0
    %7743 = vmatpush1.msra.mxu0 0.0
    %7744 = vmatprep.subr.mxu0 0.0
    %7745 = vmatpush1.msra.mxu0 0.0
    %7746 = vmatprep.subr.mxu0 0.0
    %7747 = vmatpush1.msra.mxu0 0.0
    %7748 = vmatprep.subr.mxu0 0.0
    %7749 = vmatpush1.msra.mxu0 0.0
    %7750 = vmatprep.subr.mxu0 0.0
    %7751 = vmatpush1.msra.mxu0 0.0
    %7752 = vmatprep.subr.mxu0 0.0
    %7753 = vmatpush1.msra.mxu0 0.0
    %7754 = vmatprep.subr.mxu0 0.0
    %7755 = vmatpush1.msra.mxu0 0.0
    %7756 = vmatprep.subr.mxu0 0.0
    %7757 = vmatpush1.msra.mxu0 0.0
    %7758 = vmatprep.subr.mxu0 0.0
    %7759 = vmatpush1.msra.mxu0 0.0
    %7760 = vmatprep.subr.mxu0 0.0
    %7761 = vmatpush1.msra.mxu0 0.0
    %7762 = vmatprep.subr.mxu0 0.0
    %7763 = vmatpush1.msra.mxu0 0.0
    %7764 = vmatprep.subr.mxu0 0.0
    %7765 = vmatpush1.msra.mxu0 0.0
    %7766 = vmatprep.subr.mxu0 0.0
    %7767 = vmatpush1.msra.mxu0 0.0
    %7768 = vmatprep.mubr.f32.mxu0 0.0
    %7769 = vmatmul.mubr.f32.gmra.mrb[0].mxu0 %v7699
    %v7770 = vpop.f32.mrb[0].mxu0
    %v7771 = vadd.f32 0.0, %v7770
    %v7772 = vpop.f32.mrb[0].mxu0
    %7773 = vmatprep.mubr.f32.mxu0 0.0
    %7774 = vmatmul.mubr.f32.gmra.mrb[0].mxu0 %v7702
    %v7775 = vpop.f32.mrb[0].mxu0
    %v7776 = vadd.f32 0.0, %v7775
    %v7777 = vpop.f32.mrb[0].mxu0
    %7778 = vdwg.mxu0
    %v7779 = vadd.f32 %v7687, %v7771
    %v7780 = vadd.f32 %v7688, %v7776
    %s7781 = scalar_lea.vmem [#allocation4], 704
    %v7782 = vld [vmem:[%s7781] sm:$0xff]
    %v7783 = vld [vmem:[%s7781 + $0x8] sm:$0xff]
    %v7784 = vld [vmem:[%s7781 + $0x10] sm:$0xff]
    %v7785 = vld [vmem:[%s7781 + $0x18] sm:$0xff]
    %v7786 = vld [vmem:[%s7781 + $0x20] sm:$0xff]
    %v7787 = vld [vmem:[%s7781 + $0x28] sm:$0xff]
    %v7788 = vld [vmem:[%s7781 + $0x30] sm:$0xff]
    %v7789 = vld [vmem:[%s7781 + $0x38] sm:$0xff]
    %v7791 = vsel %vm6160, %v6726, 0
    %v7794 = vsel %vm6160, %v6731, 0
    %7796 = vmatprep.subr.mxu0 0.0
    %7797 = vmatpush1.msra.mxu0 %v7782
    %7798 = vmatprep.subr.mxu0 0.0
    %7799 = vmatpush1.msra.mxu0 %v7783
    %7800 = vmatprep.subr.mxu0 0.0
    %7801 = vmatpush1.msra.mxu0 %v7784
    %7802 = vmatprep.subr.mxu0 0.0
    %7803 = vmatpush1.msra.mxu0 %v7785
    %7804 = vmatprep.subr.mxu0 0.0
    %7805 = vmatpush1.msra.mxu0 %v7786
    %7806 = vmatprep.subr.mxu0 0.0
    %7807 = vmatpush1.msra.mxu0 %v7787
    %7808 = vmatprep.subr.mxu0 0.0
    %7809 = vmatpush1.msra.mxu0 %v7788
    %7810 = vmatprep.subr.mxu0 0.0
    %7811 = vmatpush1.msra.mxu0 %v7789
    %7812 = vmatprep.subr.mxu0 0.0
    %7813 = vmatpush1.msra.mxu0 0.0
    %7814 = vmatprep.subr.mxu0 0.0
    %7815 = vmatpush1.msra.mxu0 0.0
    %7816 = vmatprep.subr.mxu0 0.0
    %7817 = vmatpush1.msra.mxu0 0.0
    %7818 = vmatprep.subr.mxu0 0.0
    %7819 = vmatpush1.msra.mxu0 0.0
    %7820 = vmatprep.subr.mxu0 0.0
    %7821 = vmatpush1.msra.mxu0 0.0
    %7822 = vmatprep.subr.mxu0 0.0
    %7823 = vmatpush1.msra.mxu0 0.0
    %7824 = vmatprep.subr.mxu0 0.0
    %7825 = vmatpush1.msra.mxu0 0.0
    %7826 = vmatprep.subr.mxu0 0.0
    %7827 = vmatpush1.msra.mxu0 0.0
    %7828 = vmatprep.subr.mxu0 0.0
    %7829 = vmatpush1.msra.mxu0 0.0
    %7830 = vmatprep.subr.mxu0 0.0
    %7831 = vmatpush1.msra.mxu0 0.0
    %7832 = vmatprep.subr.mxu0 0.0
    %7833 = vmatpush1.msra.mxu0 0.0
    %7834 = vmatprep.subr.mxu0 0.0
    %7835 = vmatpush1.msra.mxu0 0.0
    %7836 = vmatprep.subr.mxu0 0.0
    %7837 = vmatpush1.msra.mxu0 0.0
    %7838 = vmatprep.subr.mxu0 0.0
    %7839 = vmatpush1.msra.mxu0 0.0
    %7840 = vmatprep.subr.mxu0 0.0
    %7841 = vmatpush1.msra.mxu0 0.0
    %7842 = vmatprep.subr.mxu0 0.0
    %7843 = vmatpush1.msra.mxu0 0.0
    %7844 = vmatprep.subr.mxu0 0.0
    %7845 = vmatpush1.msra.mxu0 0.0
    %7846 = vmatprep.subr.mxu0 0.0
    %7847 = vmatpush1.msra.mxu0 0.0
    %7848 = vmatprep.subr.mxu0 0.0
    %7849 = vmatpush1.msra.mxu0 0.0
    %7850 = vmatprep.subr.mxu0 0.0
    %7851 = vmatpush1.msra.mxu0 0.0
    %7852 = vmatprep.subr.mxu0 0.0
    %7853 = vmatpush1.msra.mxu0 0.0
    %7854 = vmatprep.subr.mxu0 0.0
    %7855 = vmatpush1.msra.mxu0 0.0
    %7856 = vmatprep.subr.mxu0 0.0
    %7857 = vmatpush1.msra.mxu0 0.0
    %7858 = vmatprep.subr.mxu0 0.0
    %7859 = vmatpush1.msra.mxu0 0.0
    %7860 = vmatprep.mubr.f32.mxu0 0.0
    %7861 = vmatmul.mubr.f32.gmra.mrb[0].mxu0 %v7791
    %v7862 = vpop.f32.mrb[0].mxu0
    %v7863 = vadd.f32 0.0, %v7862
    %v7864 = vpop.f32.mrb[0].mxu0
    %7865 = vmatprep.mubr.f32.mxu0 0.0
    %7866 = vmatmul.mubr.f32.gmra.mrb[0].mxu0 %v7794
    %v7867 = vpop.f32.mrb[0].mxu0
    %v7868 = vadd.f32 0.0, %v7867
    %v7869 = vpop.f32.mrb[0].mxu0
    %7870 = vdwg.mxu0
    %v7871 = vadd.f32 %v7779, %v7863
    %v7872 = vadd.f32 %v7780, %v7868
    %s7873 = scalar_lea.vmem [#allocation4], 768
    %v7874 = vld [vmem:[%s7873] sm:$0xff]
    %v7875 = vld [vmem:[%s7873 + $0x8] sm:$0xff]
    %v7876 = vld [vmem:[%s7873 + $0x10] sm:$0xff]
    %v7877 = vld [vmem:[%s7873 + $0x18] sm:$0xff]
    %v7878 = vld [vmem:[%s7873 + $0x20] sm:$0xff]
    %v7879 = vld [vmem:[%s7873 + $0x28] sm:$0xff]
    %v7880 = vld [vmem:[%s7873 + $0x30] sm:$0xff]
    %v7881 = vld [vmem:[%s7873 + $0x38] sm:$0xff]
    %v7883 = vsel %vm6160, %v6736, 0
    %v7886 = vsel %vm6160, %v6741, 0
    %7888 = vmatprep.subr.mxu0 0.0
    %7889 = vmatpush1.msra.mxu0 %v7874
    %7890 = vmatprep.subr.mxu0 0.0
    %7891 = vmatpush1.msra.mxu0 %v7875
    %7892 = vmatprep.subr.mxu0 0.0
    %7893 = vmatpush1.msra.mxu0 %v7876
    %7894 = vmatprep.subr.mxu0 0.0
    %7895 = vmatpush1.msra.mxu0 %v7877
    %7896 = vmatprep.subr.mxu0 0.0
    %7897 = vmatpush1.msra.mxu0 %v7878
    %7898 = vmatprep.subr.mxu0 0.0
    %7899 = vmatpush1.msra.mxu0 %v7879
    %7900 = vmatprep.subr.mxu0 0.0
    %7901 = vmatpush1.msra.mxu0 %v7880
    %7902 = vmatprep.subr.mxu0 0.0
    %7903 = vmatpush1.msra.mxu0 %v7881
    %7904 = vmatprep.subr.mxu0 0.0
    %7905 = vmatpush1.msra.mxu0 0.0
    %7906 = vmatprep.subr.mxu0 0.0
    %7907 = vmatpush1.msra.mxu0 0.0
    %7908 = vmatprep.subr.mxu0 0.0
    %7909 = vmatpush1.msra.mxu0 0.0
    %7910 = vmatprep.subr.mxu0 0.0
    %7911 = vmatpush1.msra.mxu0 0.0
    %7912 = vmatprep.subr.mxu0 0.0
    %7913 = vmatpush1.msra.mxu0 0.0
    %7914 = vmatprep.subr.mxu0 0.0
    %7915 = vmatpush1.msra.mxu0 0.0
    %7916 = vmatprep.subr.mxu0 0.0
    %7917 = vmatpush1.msra.mxu0 0.0
    %7918 = vmatprep.subr.mxu0 0.0
    %7919 = vmatpush1.msra.mxu0 0.0
    %7920 = vmatprep.subr.mxu0 0.0
    %7921 = vmatpush1.msra.mxu0 0.0
    %7922 = vmatprep.subr.mxu0 0.0
    %7923 = vmatpush1.msra.mxu0 0.0
    %7924 = vmatprep.subr.mxu0 0.0
    %7925 = vmatpush1.msra.mxu0 0.0
    %7926 = vmatprep.subr.mxu0 0.0
    %7927 = vmatpush1.msra.mxu0 0.0
    %7928 = vmatprep.subr.mxu0 0.0
    %7929 = vmatpush1.msra.mxu0 0.0
    %7930 = vmatprep.subr.mxu0 0.0
    %7931 = vmatpush1.msra.mxu0 0.0
    %7932 = vmatprep.subr.mxu0 0.0
    %7933 = vmatpush1.msra.mxu0 0.0
    %7934 = vmatprep.subr.mxu0 0.0
    %7935 = vmatpush1.msra.mxu0 0.0
    %7936 = vmatprep.subr.mxu0 0.0
    %7937 = vmatpush1.msra.mxu0 0.0
    %7938 = vmatprep.subr.mxu0 0.0
    %7939 = vmatpush1.msra.mxu0 0.0
    %7940 = vmatprep.subr.mxu0 0.0
    %7941 = vmatpush1.msra.mxu0 0.0
    %7942 = vmatprep.subr.mxu0 0.0
    %7943 = vmatpush1.msra.mxu0 0.0
    %7944 = vmatprep.subr.mxu0 0.0
    %7945 = vmatpush1.msra.mxu0 0.0
    %7946 = vmatprep.subr.mxu0 0.0
    %7947 = vmatpush1.msra.mxu0 0.0
    %7948 = vmatprep.subr.mxu0 0.0
    %7949 = vmatpush1.msra.mxu0 0.0
    %7950 = vmatprep.subr.mxu0 0.0
    %7951 = vmatpush1.msra.mxu0 0.0
    %7952 = vmatprep.mubr.f32.mxu0 0.0
    %7953 = vmatmul.mubr.f32.gmra.mrb[0].mxu0 %v7883
    %v7954 = vpop.f32.mrb[0].mxu0
    %v7955 = vadd.f32 0.0, %v7954
    %v7956 = vpop.f32.mrb[0].mxu0
    %7957 = vmatprep.mubr.f32.mxu0 0.0
    %7958 = vmatmul.mubr.f32.gmra.mrb[0].mxu0 %v7886
    %v7959 = vpop.f32.mrb[0].mxu0
    %v7960 = vadd.f32 0.0, %v7959
    %v7961 = vpop.f32.mrb[0].mxu0
    %7962 = vdwg.mxu0
    %v7963 = vadd.f32 %v7871, %v7955
    %v7964 = vadd.f32 %v7872, %v7960
    %s7965 = scalar_lea.vmem [#allocation4], 832
    %v7966 = vld [vmem:[%s7965] sm:$0xff]
    %v7967 = vld [vmem:[%s7965 + $0x8] sm:$0xff]
    %v7968 = vld [vmem:[%s7965 + $0x10] sm:$0xff]
    %v7969 = vld [vmem:[%s7965 + $0x18] sm:$0xff]
    %v7970 = vld [vmem:[%s7965 + $0x20] sm:$0xff]
    %v7971 = vld [vmem:[%s7965 + $0x28] sm:$0xff]
    %v7972 = vld [vmem:[%s7965 + $0x30] sm:$0xff]
    %v7973 = vld [vmem:[%s7965 + $0x38] sm:$0xff]
    %v7975 = vsel %vm6160, %v6746, 0
    %v7978 = vsel %vm6160, %v6751, 0
    %7980 = vmatprep.subr.mxu0 0.0
    %7981 = vmatpush1.msra.mxu0 %v7966
    %7982 = vmatprep.subr.mxu0 0.0
    %7983 = vmatpush1.msra.mxu0 %v7967
    %7984 = vmatprep.subr.mxu0 0.0
    %7985 = vmatpush1.msra.mxu0 %v7968
    %7986 = vmatprep.subr.mxu0 0.0
    %7987 = vmatpush1.msra.mxu0 %v7969
    %7988 = vmatprep.subr.mxu0 0.0
    %7989 = vmatpush1.msra.mxu0 %v7970
    %7990 = vmatprep.subr.mxu0 0.0
    %7991 = vmatpush1.msra.mxu0 %v7971
    %7992 = vmatprep.subr.mxu0 0.0
    %7993 = vmatpush1.msra.mxu0 %v7972
    %7994 = vmatprep.subr.mxu0 0.0
    %7995 = vmatpush1.msra.mxu0 %v7973
    %7996 = vmatprep.subr.mxu0 0.0
    %7997 = vmatpush1.msra.mxu0 0.0
    %7998 = vmatprep.subr.mxu0 0.0
    %7999 = vmatpush1.msra.mxu0 0.0
    %8000 = vmatprep.subr.mxu0 0.0
    %8001 = vmatpush1.msra.mxu0 0.0
    %8002 = vmatprep.subr.mxu0 0.0
    %8003 = vmatpush1.msra.mxu0 0.0
    %8004 = vmatprep.subr.mxu0 0.0
    %8005 = vmatpush1.msra.mxu0 0.0
    %8006 = vmatprep.subr.mxu0 0.0
    %8007 = vmatpush1.msra.mxu0 0.0
    %8008 = vmatprep.subr.mxu0 0.0
    %8009 = vmatpush1.msra.mxu0 0.0
    %8010 = vmatprep.subr.mxu0 0.0
    %8011 = vmatpush1.msra.mxu0 0.0
    %8012 = vmatprep.subr.mxu0 0.0
    %8013 = vmatpush1.msra.mxu0 0.0
    %8014 = vmatprep.subr.mxu0 0.0
    %8015 = vmatpush1.msra.mxu0 0.0
    %8016 = vmatprep.subr.mxu0 0.0
    %8017 = vmatpush1.msra.mxu0 0.0
    %8018 = vmatprep.subr.mxu0 0.0
    %8019 = vmatpush1.msra.mxu0 0.0
    %8020 = vmatprep.subr.mxu0 0.0
    %8021 = vmatpush1.msra.mxu0 0.0
    %8022 = vmatprep.subr.mxu0 0.0
    %8023 = vmatpush1.msra.mxu0 0.0
    %8024 = vmatprep.subr.mxu0 0.0
    %8025 = vmatpush1.msra.mxu0 0.0
    %8026 = vmatprep.subr.mxu0 0.0
    %8027 = vmatpush1.msra.mxu0 0.0
    %8028 = vmatprep.subr.mxu0 0.0
    %8029 = vmatpush1.msra.mxu0 0.0
    %8030 = vmatprep.subr.mxu0 0.0
    %8031 = vmatpush1.msra.mxu0 0.0
    %8032 = vmatprep.subr.mxu0 0.0
    %8033 = vmatpush1.msra.mxu0 0.0
    %8034 = vmatprep.subr.mxu0 0.0
    %8035 = vmatpush1.msra.mxu0 0.0
    %8036 = vmatprep.subr.mxu0 0.0
    %8037 = vmatpush1.msra.mxu0 0.0
    %8038 = vmatprep.subr.mxu0 0.0
    %8039 = vmatpush1.msra.mxu0 0.0
    %8040 = vmatprep.subr.mxu0 0.0
    %8041 = vmatpush1.msra.mxu0 0.0
    %8042 = vmatprep.subr.mxu0 0.0
    %8043 = vmatpush1.msra.mxu0 0.0
    %8044 = vmatprep.mubr.f32.mxu0 0.0
    %8045 = vmatmul.mubr.f32.gmra.mrb[0].mxu0 %v7975
    %v8046 = vpop.f32.mrb[0].mxu0
    %v8047 = vadd.f32 0.0, %v8046
    %v8048 = vpop.f32.mrb[0].mxu0
    %8049 = vmatprep.mubr.f32.mxu0 0.0
    %8050 = vmatmul.mubr.f32.gmra.mrb[0].mxu0 %v7978
    %v8051 = vpop.f32.mrb[0].mxu0
    %v8052 = vadd.f32 0.0, %v8051
    %v8053 = vpop.f32.mrb[0].mxu0
    %8054 = vdwg.mxu0
    %v8055 = vadd.f32 %v7963, %v8047
    %v8056 = vadd.f32 %v7964, %v8052
    %s8057 = scalar_lea.vmem [#allocation4], 896
    %v8058 = vld [vmem:[%s8057] sm:$0xff]
    %v8059 = vld [vmem:[%s8057 + $0x8] sm:$0xff]
    %v8060 = vld [vmem:[%s8057 + $0x10] sm:$0xff]
    %v8061 = vld [vmem:[%s8057 + $0x18] sm:$0xff]
    %v8062 = vld [vmem:[%s8057 + $0x20] sm:$0xff]
    %v8063 = vld [vmem:[%s8057 + $0x28] sm:$0xff]
    %v8064 = vld [vmem:[%s8057 + $0x30] sm:$0xff]
    %v8065 = vld [vmem:[%s8057 + $0x38] sm:$0xff]
    %v8067 = vsel %vm6160, %v6756, 0
    %v8070 = vsel %vm6160, %v6761, 0
    %8072 = vmatprep.subr.mxu0 0.0
    %8073 = vmatpush1.msra.mxu0 %v8058
    %8074 = vmatprep.subr.mxu0 0.0
    %8075 = vmatpush1.msra.mxu0 %v8059
    %8076 = vmatprep.subr.mxu0 0.0
    %8077 = vmatpush1.msra.mxu0 %v8060
    %8078 = vmatprep.subr.mxu0 0.0
    %8079 = vmatpush1.msra.mxu0 %v8061
    %8080 = vmatprep.subr.mxu0 0.0
    %8081 = vmatpush1.msra.mxu0 %v8062
    %8082 = vmatprep.subr.mxu0 0.0
    %8083 = vmatpush1.msra.mxu0 %v8063
    %8084 = vmatprep.subr.mxu0 0.0
    %8085 = vmatpush1.msra.mxu0 %v8064
    %8086 = vmatprep.subr.mxu0 0.0
    %8087 = vmatpush1.msra.mxu0 %v8065
    %8088 = vmatprep.subr.mxu0 0.0
    %8089 = vmatpush1.msra.mxu0 0.0
    %8090 = vmatprep.subr.mxu0 0.0
    %8091 = vmatpush1.msra.mxu0 0.0
    %8092 = vmatprep.subr.mxu0 0.0
    %8093 = vmatpush1.msra.mxu0 0.0
    %8094 = vmatprep.subr.mxu0 0.0
    %8095 = vmatpush1.msra.mxu0 0.0
    %8096 = vmatprep.subr.mxu0 0.0
    %8097 = vmatpush1.msra.mxu0 0.0
    %8098 = vmatprep.subr.mxu0 0.0
    %8099 = vmatpush1.msra.mxu0 0.0
    %8100 = vmatprep.subr.mxu0 0.0
    %8101 = vmatpush1.msra.mxu0 0.0
    %8102 = vmatprep.subr.mxu0 0.0
    %8103 = vmatpush1.msra.mxu0 0.0
    %8104 = vmatprep.subr.mxu0 0.0
    %8105 = vmatpush1.msra.mxu0 0.0
    %8106 = vmatprep.subr.mxu0 0.0
    %8107 = vmatpush1.msra.mxu0 0.0
    %8108 = vmatprep.subr.mxu0 0.0
    %8109 = vmatpush1.msra.mxu0 0.0
    %8110 = vmatprep.subr.mxu0 0.0
    %8111 = vmatpush1.msra.mxu0 0.0
    %8112 = vmatprep.subr.mxu0 0.0
    %8113 = vmatpush1.msra.mxu0 0.0
    %8114 = vmatprep.subr.mxu0 0.0
    %8115 = vmatpush1.msra.mxu0 0.0
    %8116 = vmatprep.subr.mxu0 0.0
    %8117 = vmatpush1.msra.mxu0 0.0
    %8118 = vmatprep.subr.mxu0 0.0
    %8119 = vmatpush1.msra.mxu0 0.0
    %8120 = vmatprep.subr.mxu0 0.0
    %8121 = vmatpush1.msra.mxu0 0.0
    %8122 = vmatprep.subr.mxu0 0.0
    %8123 = vmatpush1.msra.mxu0 0.0
    %8124 = vmatprep.subr.mxu0 0.0
    %8125 = vmatpush1.msra.mxu0 0.0
    %8126 = vmatprep.subr.mxu0 0.0
    %8127 = vmatpush1.msra.mxu0 0.0
    %8128 = vmatprep.subr.mxu0 0.0
    %8129 = vmatpush1.msra.mxu0 0.0
    %8130 = vmatprep.subr.mxu0 0.0
    %8131 = vmatpush1.msra.mxu0 0.0
    %8132 = vmatprep.subr.mxu0 0.0
    %8133 = vmatpush1.msra.mxu0 0.0
    %8134 = vmatprep.subr.mxu0 0.0
    %8135 = vmatpush1.msra.mxu0 0.0
    %8136 = vmatprep.mubr.f32.mxu0 0.0
    %8137 = vmatmul.mubr.f32.gmra.mrb[0].mxu0 %v8067
    %v8138 = vpop.f32.mrb[0].mxu0
    %v8139 = vadd.f32 0.0, %v8138
    %v8140 = vpop.f32.mrb[0].mxu0
    %8141 = vmatprep.mubr.f32.mxu0 0.0
    %8142 = vmatmul.mubr.f32.gmra.mrb[0].mxu0 %v8070
    %v8143 = vpop.f32.mrb[0].mxu0
    %v8144 = vadd.f32 0.0, %v8143
    %v8145 = vpop.f32.mrb[0].mxu0
    %8146 = vdwg.mxu0
    %v8147 = vadd.f32 %v8055, %v8139
    %v8148 = vadd.f32 %v8056, %v8144
    %s8149 = scalar_lea.vmem [#allocation4], 960
    %v8150 = vld [vmem:[%s8149] sm:$0xff]
    %v8151 = vld [vmem:[%s8149 + $0x8] sm:$0xff]
    %v8152 = vld [vmem:[%s8149 + $0x10] sm:$0xff]
    %v8153 = vld [vmem:[%s8149 + $0x18] sm:$0xff]
    %v8154 = vld [vmem:[%s8149 + $0x20] sm:$0xff]
    %v8155 = vld [vmem:[%s8149 + $0x28] sm:$0xff]
    %v8156 = vld [vmem:[%s8149 + $0x30] sm:$0xff]
    %v8157 = vld [vmem:[%s8149 + $0x38] sm:$0xff]
    %v8159 = vsel %vm6160, %v6766, 0
    %v8162 = vsel %vm6160, %v6771, 0
    %8164 = vmatprep.subr.mxu0 0.0
    %8165 = vmatpush1.msra.mxu0 %v8150
    %8166 = vmatprep.subr.mxu0 0.0
    %8167 = vmatpush1.msra.mxu0 %v8151
    %8168 = vmatprep.subr.mxu0 0.0
    %8169 = vmatpush1.msra.mxu0 %v8152
    %8170 = vmatprep.subr.mxu0 0.0
    %8171 = vmatpush1.msra.mxu0 %v8153
    %8172 = vmatprep.subr.mxu0 0.0
    %8173 = vmatpush1.msra.mxu0 %v8154
    %8174 = vmatprep.subr.mxu0 0.0
    %8175 = vmatpush1.msra.mxu0 %v8155
    %8176 = vmatprep.subr.mxu0 0.0
    %8177 = vmatpush1.msra.mxu0 %v8156
    %8178 = vmatprep.subr.mxu0 0.0
    %8179 = vmatpush1.msra.mxu0 %v8157
    %8180 = vmatprep.subr.mxu0 0.0
    %8181 = vmatpush1.msra.mxu0 0.0
    %8182 = vmatprep.subr.mxu0 0.0
    %8183 = vmatpush1.msra.mxu0 0.0
    %8184 = vmatprep.subr.mxu0 0.0
    %8185 = vmatpush1.msra.mxu0 0.0
    %8186 = vmatprep.subr.mxu0 0.0
    %8187 = vmatpush1.msra.mxu0 0.0
    %8188 = vmatprep.subr.mxu0 0.0
    %8189 = vmatpush1.msra.mxu0 0.0
    %8190 = vmatprep.subr.mxu0 0.0
    %8191 = vmatpush1.msra.mxu0 0.0
    %8192 = vmatprep.subr.mxu0 0.0
    %8193 = vmatpush1.msra.mxu0 0.0
    %8194 = vmatprep.subr.mxu0 0.0
    %8195 = vmatpush1.msra.mxu0 0.0
    %8196 = vmatprep.subr.mxu0 0.0
    %8197 = vmatpush1.msra.mxu0 0.0
    %8198 = vmatprep.subr.mxu0 0.0
    %8199 = vmatpush1.msra.mxu0 0.0
    %8200 = vmatprep.subr.mxu0 0.0
    %8201 = vmatpush1.msra.mxu0 0.0
    %8202 = vmatprep.subr.mxu0 0.0
    %8203 = vmatpush1.msra.mxu0 0.0
    %8204 = vmatprep.subr.mxu0 0.0
    %8205 = vmatpush1.msra.mxu0 0.0
    %8206 = vmatprep.subr.mxu0 0.0
    %8207 = vmatpush1.msra.mxu0 0.0
    %8208 = vmatprep.subr.mxu0 0.0
    %8209 = vmatpush1.msra.mxu0 0.0
    %8210 = vmatprep.subr.mxu0 0.0
    %8211 = vmatpush1.msra.mxu0 0.0
    %8212 = vmatprep.subr.mxu0 0.0
    %8213 = vmatpush1.msra.mxu0 0.0
    %8214 = vmatprep.subr.mxu0 0.0
    %8215 = vmatpush1.msra.mxu0 0.0
    %8216 = vmatprep.subr.mxu0 0.0
    %8217 = vmatpush1.msra.mxu0 0.0
    %8218 = vmatprep.subr.mxu0 0.0
    %8219 = vmatpush1.msra.mxu0 0.0
    %8220 = vmatprep.subr.mxu0 0.0
    %8221 = vmatpush1.msra.mxu0 0.0
    %8222 = vmatprep.subr.mxu0 0.0
    %8223 = vmatpush1.msra.mxu0 0.0
    %8224 = vmatprep.subr.mxu0 0.0
    %8225 = vmatpush1.msra.mxu0 0.0
    %8226 = vmatprep.subr.mxu0 0.0
    %8227 = vmatpush1.msra.mxu0 0.0
    %8228 = vmatprep.mubr.f32.mxu0 0.0
    %8229 = vmatmul.mubr.f32.gmra.mrb[0].mxu0 %v8159
    %v8230 = vpop.f32.mrb[0].mxu0
    %v8231 = vadd.f32 0.0, %v8230
    %v8232 = vpop.f32.mrb[0].mxu0
    %8233 = vmatprep.mubr.f32.mxu0 0.0
    %8234 = vmatmul.mubr.f32.gmra.mrb[0].mxu0 %v8162
    %v8235 = vpop.f32.mrb[0].mxu0
    %v8236 = vadd.f32 0.0, %v8235
    %v8237 = vpop.f32.mrb[0].mxu0
    %8238 = vdwg.mxu0
    %v8239 = vadd.f32 %v8147, %v8231
    %v8240 = vadd.f32 %v8148, %v8236
    %v8241 = vadd.s32 %v6500, 64
    %vm8242 = vcmp.eq.s32.totalorder %v6483, %v8241
    %vm8243 = vcmp.eq.s32.totalorder %v6484, %v8241
    %vm8244 = vcmp.eq.s32.totalorder %v6485, %v8241
    %vm8245 = vcmp.eq.s32.totalorder %v6486, %v8241
    %vm8246 = vcmp.eq.s32.totalorder %v6487, %v8241
    %vm8247 = vcmp.eq.s32.totalorder %v6488, %v8241
    %vm8248 = vcmp.eq.s32.totalorder %v6489, %v8241
    %vm8249 = vcmp.eq.s32.totalorder %v6490, %v8241
    %vm8250 = vcmp.eq.s32.totalorder %v6491, %v8241
    %vm8251 = vcmp.eq.s32.totalorder %v6492, %v8241
    %vm8252 = vcmp.eq.s32.totalorder %v6493, %v8241
    %vm8253 = vcmp.eq.s32.totalorder %v6494, %v8241
    %vm8254 = vcmp.eq.s32.totalorder %v6495, %v8241
    %vm8255 = vcmp.eq.s32.totalorder %v6496, %v8241
    %vm8256 = vcmp.eq.s32.totalorder %v6497, %v8241
    %vm8257 = vcmp.eq.s32.totalorder %v6498, %v8241
    %v8258 = vsel %vm8242, 1, 0
    %v8259 = vsel %vm8243, 1, 0
    %v8260 = vsel %vm8244, 1, 0
    %v8261 = vsel %vm8245, 1, 0
    %v8262 = vsel %vm8246, 1, 0
    %v8263 = vsel %vm8247, 1, 0
    %v8264 = vsel %vm8248, 1, 0
    %v8265 = vsel %vm8249, 1, 0
    %v8266 = vsel %vm8250, 1, 0
    %v8267 = vsel %vm8251, 1, 0
    %v8268 = vsel %vm8252, 1, 0
    %v8269 = vsel %vm8253, 1, 0
    %v8270 = vsel %vm8254, 1, 0
    %v8271 = vsel %vm8255, 1, 0
    %v8272 = vsel %vm8256, 1, 0
    %v8273 = vsel %vm8257, 1, 0
    %v8274 = vcvt.s32.f32 %v8258
    %v8275 = vcvt.s32.f32 %v8259
    %v8276 = vcvt.s32.f32 %v8260
    %v8277 = vcvt.s32.f32 %v8261
    %v8278 = vcvt.s32.f32 %v8262
    %v8279 = vcvt.s32.f32 %v8263
    %v8280 = vcvt.s32.f32 %v8264
    %v8281 = vcvt.s32.f32 %v8265
    %v8282 = vcvt.s32.f32 %v8266
    %v8283 = vcvt.s32.f32 %v8267
    %v8284 = vcvt.s32.f32 %v8268
    %v8285 = vcvt.s32.f32 %v8269
    %v8286 = vcvt.s32.f32 %v8270
    %v8287 = vcvt.s32.f32 %v8271
    %v8288 = vcvt.s32.f32 %v8272
    %v8289 = vcvt.s32.f32 %v8273
    %8290 = vmatprep.subr.mxu0 0.0
    %8291 = vmatpush1.msra.mxu0 %v8274
    %8292 = vmatprep.subr.mxu0 0.0
    %8293 = vmatpush1.msra.mxu0 %v8275
    %8294 = vmatprep.subr.mxu0 0.0
    %8295 = vmatpush1.msra.mxu0 %v8276
    %8296 = vmatprep.subr.mxu0 0.0
    %8297 = vmatpush1.msra.mxu0 %v8277
    %8298 = vmatprep.subr.mxu0 0.0
    %8299 = vmatpush1.msra.mxu0 %v8278
    %8300 = vmatprep.subr.mxu0 0.0
    %8301 = vmatpush1.msra.mxu0 %v8279
    %8302 = vmatprep.subr.mxu0 0.0
    %8303 = vmatpush1.msra.mxu0 %v8280
    %8304 = vmatprep.subr.mxu0 0.0
    %8305 = vmatpush1.msra.mxu0 %v8281
    %8306 = vmatprep.subr.mxu0 0.0
    %8307 = vmatpush1.msra.mxu0 %v8282
    %8308 = vmatprep.subr.mxu0 0.0
    %8309 = vmatpush1.msra.mxu0 %v8283
    %8310 = vmatprep.subr.mxu0 0.0
    %8311 = vmatpush1.msra.mxu0 %v8284
    %8312 = vmatprep.subr.mxu0 0.0
    %8313 = vmatpush1.msra.mxu0 %v8285
    %8314 = vmatprep.subr.mxu0 0.0
    %8315 = vmatpush1.msra.mxu0 %v8286
    %8316 = vmatprep.subr.mxu0 0.0
    %8317 = vmatpush1.msra.mxu0 %v8287
    %8318 = vmatprep.subr.mxu0 0.0
    %8319 = vmatpush1.msra.mxu0 %v8288
    %8320 = vmatprep.subr.mxu0 0.0
    %8321 = vmatpush1.msra.mxu0 %v8289
    %8322 = vmatprep.subr.mxu0 0.0
    %8323 = vmatpush1.msra.mxu0 0.0
    %8324 = vmatprep.subr.mxu0 0.0
    %8325 = vmatpush1.msra.mxu0 0.0
    %8326 = vmatprep.subr.mxu0 0.0
    %8327 = vmatpush1.msra.mxu0 0.0
    %8328 = vmatprep.subr.mxu0 0.0
    %8329 = vmatpush1.msra.mxu0 0.0
    %8330 = vmatprep.subr.mxu0 0.0
    %8331 = vmatpush1.msra.mxu0 0.0
    %8332 = vmatprep.subr.mxu0 0.0
    %8333 = vmatpush1.msra.mxu0 0.0
    %8334 = vmatprep.subr.mxu0 0.0
    %8335 = vmatpush1.msra.mxu0 0.0
    %8336 = vmatprep.subr.mxu0 0.0
    %8337 = vmatpush1.msra.mxu0 0.0
    %8338 = vmatprep.subr.mxu0 0.0
    %8339 = vmatpush1.msra.mxu0 0.0
    %8340 = vmatprep.subr.mxu0 0.0
    %8341 = vmatpush1.msra.mxu0 0.0
    %8342 = vmatprep.subr.mxu0 0.0
    %8343 = vmatpush1.msra.mxu0 0.0
    %8344 = vmatprep.subr.mxu0 0.0
    %8345 = vmatpush1.msra.mxu0 0.0
    %8346 = vmatprep.subr.mxu0 0.0
    %8347 = vmatpush1.msra.mxu0 0.0
    %8348 = vmatprep.subr.mxu0 0.0
    %8349 = vmatpush1.msra.mxu0 0.0
    %8350 = vmatprep.subr.mxu0 0.0
    %8351 = vmatpush1.msra.mxu0 0.0
    %8352 = vmatprep.subr.mxu0 0.0
    %8353 = vmatpush1.msra.mxu0 0.0
    %8354 = vmatprep.mubr.f32.mxu0 0.0
    %8355 = vmatmul.mubr.f32.gmra.mrb[0].mxu0 %v6324
    %v8356 = vpop.f32.mrb[0].mxu0
    %v8357 = vadd.f32 0.0, %v8356
    %v8358 = vpop.f32.mrb[0].mxu0
    %8359 = vmatprep.mubr.f32.mxu0 0.0
    %8360 = vmatmul.mubr.f32.gmra.mrb[0].mxu0 %v6329
    %v8361 = vpop.f32.mrb[0].mxu0
    %v8362 = vadd.f32 0.0, %v8361
    %v8363 = vpop.f32.mrb[0].mxu0
    %8364 = vmatprep.mubr.f32.mxu0 0.0
    %8365 = vmatmul.mubr.f32.gmra.mrb[0].mxu0 %v6334
    %v8366 = vpop.f32.mrb[0].mxu0
    %v8367 = vadd.f32 0.0, %v8366
    %v8368 = vpop.f32.mrb[0].mxu0
    %8369 = vmatprep.mubr.f32.mxu0 0.0
    %8370 = vmatmul.mubr.f32.gmra.mrb[0].mxu0 %v6339
    %v8371 = vpop.f32.mrb[0].mxu0
    %v8372 = vadd.f32 0.0, %v8371
    %v8373 = vpop.f32.mrb[0].mxu0
    %8374 = vmatprep.mubr.f32.mxu0 0.0
    %8375 = vmatmul.mubr.f32.gmra.mrb[0].mxu0 %v6344
    %v8376 = vpop.f32.mrb[0].mxu0
    %v8377 = vadd.f32 0.0, %v8376
    %v8378 = vpop.f32.mrb[0].mxu0
    %8379 = vmatprep.mubr.f32.mxu0 0.0
    %8380 = vmatmul.mubr.f32.gmra.mrb[0].mxu0 %v6349
    %v8381 = vpop.f32.mrb[0].mxu0
    %v8382 = vadd.f32 0.0, %v8381
    %v8383 = vpop.f32.mrb[0].mxu0
    %8384 = vmatprep.mubr.f32.mxu0 0.0
    %8385 = vmatmul.mubr.f32.gmra.mrb[0].mxu0 %v6354
    %v8386 = vpop.f32.mrb[0].mxu0
    %v8387 = vadd.f32 0.0, %v8386
    %v8388 = vpop.f32.mrb[0].mxu0
    %8389 = vmatprep.mubr.f32.mxu0 0.0
    %8390 = vmatmul.mubr.f32.gmra.mrb[0].mxu0 %v6359
    %v8391 = vpop.f32.mrb[0].mxu0
    %v8392 = vadd.f32 0.0, %v8391
    %v8393 = vpop.f32.mrb[0].mxu0
    %8394 = vmatprep.mubr.f32.mxu0 0.0
    %8395 = vmatmul.mubr.f32.gmra.mrb[0].mxu0 %v6364
    %v8396 = vpop.f32.mrb[0].mxu0
    %v8397 = vadd.f32 0.0, %v8396
    %v8398 = vpop.f32.mrb[0].mxu0
    %8399 = vmatprep.mubr.f32.mxu0 0.0
    %8400 = vmatmul.mubr.f32.gmra.mrb[0].mxu0 %v6369
    %v8401 = vpop.f32.mrb[0].mxu0
    %v8402 = vadd.f32 0.0, %v8401
    %v8403 = vpop.f32.mrb[0].mxu0
    %8404 = vmatprep.mubr.f32.mxu0 0.0
    %8405 = vmatmul.mubr.f32.gmra.mrb[0].mxu0 %v6374
    %v8406 = vpop.f32.mrb[0].mxu0
    %v8407 = vadd.f32 0.0, %v8406
    %v8408 = vpop.f32.mrb[0].mxu0
    %8409 = vmatprep.mubr.f32.mxu0 0.0
    %8410 = vmatmul.mubr.f32.gmra.mrb[0].mxu0 %v6379
    %v8411 = vpop.f32.mrb[0].mxu0
    %v8412 = vadd.f32 0.0, %v8411
    %v8413 = vpop.f32.mrb[0].mxu0
    %8414 = vmatprep.mubr.f32.mxu0 0.0
    %8415 = vmatmul.mubr.f32.gmra.mrb[0].mxu0 %v6384
    %v8416 = vpop.f32.mrb[0].mxu0
    %v8417 = vadd.f32 0.0, %v8416
    %v8418 = vpop.f32.mrb[0].mxu0
    %8419 = vmatprep.mubr.f32.mxu0 0.0
    %8420 = vmatmul.mubr.f32.gmra.mrb[0].mxu0 %v6389
    %v8421 = vpop.f32.mrb[0].mxu0
    %v8422 = vadd.f32 0.0, %v8421
    %v8423 = vpop.f32.mrb[0].mxu0
    %8424 = vmatprep.mubr.f32.mxu0 0.0
    %8425 = vmatmul.mubr.f32.gmra.mrb[0].mxu0 %v6394
    %v8426 = vpop.f32.mrb[0].mxu0
    %v8427 = vadd.f32 0.0, %v8426
    %v8428 = vpop.f32.mrb[0].mxu0
    %8429 = vmatprep.mubr.f32.mxu0 0.0
    %8430 = vmatmul.mubr.f32.gmra.mrb[0].mxu0 %v6399
    %v8431 = vpop.f32.mrb[0].mxu0
    %v8432 = vadd.f32 0.0, %v8431
    %v8433 = vpop.f32.mrb[0].mxu0
    %8434 = vmatprep.mubr.f32.mxu0 0.0
    %8435 = vmatmul.mubr.f32.gmra.mrb[0].mxu0 %v6404
    %v8436 = vpop.f32.mrb[0].mxu0
    %v8437 = vadd.f32 0.0, %v8436
    %v8438 = vpop.f32.mrb[0].mxu0
    %8439 = vmatprep.mubr.f32.mxu0 0.0
    %8440 = vmatmul.mubr.f32.gmra.mrb[0].mxu0 %v6409
    %v8441 = vpop.f32.mrb[0].mxu0
    %v8442 = vadd.f32 0.0, %v8441
    %v8443 = vpop.f32.mrb[0].mxu0
    %8444 = vmatprep.mubr.f32.mxu0 0.0
    %8445 = vmatmul.mubr.f32.gmra.mrb[0].mxu0 %v6414
    %v8446 = vpop.f32.mrb[0].mxu0
    %v8447 = vadd.f32 0.0, %v8446
    %v8448 = vpop.f32.mrb[0].mxu0
    %8449 = vmatprep.mubr.f32.mxu0 0.0
    %8450 = vmatmul.mubr.f32.gmra.mrb[0].mxu0 %v6419
    %v8451 = vpop.f32.mrb[0].mxu0
    %v8452 = vadd.f32 0.0, %v8451
    %v8453 = vpop.f32.mrb[0].mxu0
    %8454 = vmatprep.mubr.f32.mxu0 0.0
    %8455 = vmatmul.mubr.f32.gmra.mrb[0].mxu0 %v6424
    %v8456 = vpop.f32.mrb[0].mxu0
    %v8457 = vadd.f32 0.0, %v8456
    %v8458 = vpop.f32.mrb[0].mxu0
    %8459 = vmatprep.mubr.f32.mxu0 0.0
    %8460 = vmatmul.mubr.f32.gmra.mrb[0].mxu0 %v6429
    %v8461 = vpop.f32.mrb[0].mxu0
    %v8462 = vadd.f32 0.0, %v8461
    %v8463 = vpop.f32.mrb[0].mxu0
    %8464 = vmatprep.mubr.f32.mxu0 0.0
    %8465 = vmatmul.mubr.f32.gmra.mrb[0].mxu0 %v6434
    %v8466 = vpop.f32.mrb[0].mxu0
    %v8467 = vadd.f32 0.0, %v8466
    %v8468 = vpop.f32.mrb[0].mxu0
    %8469 = vmatprep.mubr.f32.mxu0 0.0
    %8470 = vmatmul.mubr.f32.gmra.mrb[0].mxu0 %v6439
    %v8471 = vpop.f32.mrb[0].mxu0
    %v8472 = vadd.f32 0.0, %v8471
    %v8473 = vpop.f32.mrb[0].mxu0
    %8474 = vmatprep.mubr.f32.mxu0 0.0
    %8475 = vmatmul.mubr.f32.gmra.mrb[0].mxu0 %v6444
    %v8476 = vpop.f32.mrb[0].mxu0
    %v8477 = vadd.f32 0.0, %v8476
    %v8478 = vpop.f32.mrb[0].mxu0
    %8479 = vmatprep.mubr.f32.mxu0 0.0
    %8480 = vmatmul.mubr.f32.gmra.mrb[0].mxu0 %v6449
    %v8481 = vpop.f32.mrb[0].mxu0
    %v8482 = vadd.f32 0.0, %v8481
    %v8483 = vpop.f32.mrb[0].mxu0
    %8484 = vmatprep.mubr.f32.mxu0 0.0
    %8485 = vmatmul.mubr.f32.gmra.mrb[0].mxu0 %v6454
    %v8486 = vpop.f32.mrb[0].mxu0
    %v8487 = vadd.f32 0.0, %v8486
    %v8488 = vpop.f32.mrb[0].mxu0
    %8489 = vmatprep.mubr.f32.mxu0 0.0
    %8490 = vmatmul.mubr.f32.gmra.mrb[0].mxu0 %v6459
    %v8491 = vpop.f32.mrb[0].mxu0
    %v8492 = vadd.f32 0.0, %v8491
    %v8493 = vpop.f32.mrb[0].mxu0
    %8494 = vmatprep.mubr.f32.mxu0 0.0
    %8495 = vmatmul.mubr.f32.gmra.mrb[0].mxu0 %v6464
    %v8496 = vpop.f32.mrb[0].mxu0
    %v8497 = vadd.f32 0.0, %v8496
    %v8498 = vpop.f32.mrb[0].mxu0
    %8499 = vmatprep.mubr.f32.mxu0 0.0
    %8500 = vmatmul.mubr.f32.gmra.mrb[0].mxu0 %v6469
    %v8501 = vpop.f32.mrb[0].mxu0
    %v8502 = vadd.f32 0.0, %v8501
    %v8503 = vpop.f32.mrb[0].mxu0
    %8504 = vmatprep.mubr.f32.mxu0 0.0
    %8505 = vmatmul.mubr.f32.gmra.mrb[0].mxu0 %v6474
    %v8506 = vpop.f32.mrb[0].mxu0
    %v8507 = vadd.f32 0.0, %v8506
    %v8508 = vpop.f32.mrb[0].mxu0
    %8509 = vmatprep.mubr.f32.mxu0 0.0
    %8510 = vmatmul.mubr.f32.gmra.mrb[0].mxu0 %v6479
    %v8511 = vpop.f32.mrb[0].mxu0
    %v8512 = vadd.f32 0.0, %v8511
    %v8513 = vpop.f32.mrb[0].mxu0
    %8514 = vdwg.mxu0
    %v8516 = vsel %vm6160, %v8367, 0
    %v8519 = vsel %vm6160, %v8372, 0
    %8521 = vmatprep.subr.mxu0 0.0
    %8522 = vmatpush1.msra.mxu0 %v6783
    %8523 = vmatprep.subr.mxu0 0.0
    %8524 = vmatpush1.msra.mxu0 %v6784
    %8525 = vmatprep.subr.mxu0 0.0
    %8526 = vmatpush1.msra.mxu0 %v6785
    %8527 = vmatprep.subr.mxu0 0.0
    %8528 = vmatpush1.msra.mxu0 %v6786
    %8529 = vmatprep.subr.mxu0 0.0
    %8530 = vmatpush1.msra.mxu0 %v6787
    %8531 = vmatprep.subr.mxu0 0.0
    %8532 = vmatpush1.msra.mxu0 %v6788
    %8533 = vmatprep.subr.mxu0 0.0
    %8534 = vmatpush1.msra.mxu0 %v6789
    %8535 = vmatprep.subr.mxu0 0.0
    %8536 = vmatpush1.msra.mxu0 %v6790
    %8537 = vmatprep.subr.mxu0 0.0
    %8538 = vmatpush1.msra.mxu0 0.0
    %8539 = vmatprep.subr.mxu0 0.0
    %8540 = vmatpush1.msra.mxu0 0.0
    %8541 = vmatprep.subr.mxu0 0.0
    %8542 = vmatpush1.msra.mxu0 0.0
    %8543 = vmatprep.subr.mxu0 0.0
    %8544 = vmatpush1.msra.mxu0 0.0
    %8545 = vmatprep.subr.mxu0 0.0
    %8546 = vmatpush1.msra.mxu0 0.0
    %8547 = vmatprep.subr.mxu0 0.0
    %8548 = vmatpush1.msra.mxu0 0.0
    %8549 = vmatprep.subr.mxu0 0.0
    %8550 = vmatpush1.msra.mxu0 0.0
    %8551 = vmatprep.subr.mxu0 0.0
    %8552 = vmatpush1.msra.mxu0 0.0
    %8553 = vmatprep.subr.mxu0 0.0
    %8554 = vmatpush1.msra.mxu0 0.0
    %8555 = vmatprep.subr.mxu0 0.0
    %8556 = vmatpush1.msra.mxu0 0.0
    %8557 = vmatprep.subr.mxu0 0.0
    %8558 = vmatpush1.msra.mxu0 0.0
    %8559 = vmatprep.subr.mxu0 0.0
    %8560 = vmatpush1.msra.mxu0 0.0
    %8561 = vmatprep.subr.mxu0 0.0
    %8562 = vmatpush1.msra.mxu0 0.0
    %8563 = vmatprep.subr.mxu0 0.0
    %8564 = vmatpush1.msra.mxu0 0.0
    %8565 = vmatprep.subr.mxu0 0.0
    %8566 = vmatpush1.msra.mxu0 0.0
    %8567 = vmatprep.subr.mxu0 0.0
    %8568 = vmatpush1.msra.mxu0 0.0
    %8569 = vmatprep.subr.mxu0 0.0
    %8570 = vmatpush1.msra.mxu0 0.0
    %8571 = vmatprep.subr.mxu0 0.0
    %8572 = vmatpush1.msra.mxu0 0.0
    %8573 = vmatprep.subr.mxu0 0.0
    %8574 = vmatpush1.msra.mxu0 0.0
    %8575 = vmatprep.subr.mxu0 0.0
    %8576 = vmatpush1.msra.mxu0 0.0
    %8577 = vmatprep.subr.mxu0 0.0
    %8578 = vmatpush1.msra.mxu0 0.0
    %8579 = vmatprep.subr.mxu0 0.0
    %8580 = vmatpush1.msra.mxu0 0.0
    %8581 = vmatprep.subr.mxu0 0.0
    %8582 = vmatpush1.msra.mxu0 0.0
    %8583 = vmatprep.subr.mxu0 0.0
    %8584 = vmatpush1.msra.mxu0 0.0
    %8585 = vmatprep.mubr.f32.mxu0 0.0
    %8586 = vmatmul.mubr.f32.gmra.mrb[0].mxu0 %v8516
    %v8587 = vpop.f32.mrb[0].mxu0
    %v8588 = vadd.f32 0.0, %v8587
    %v8589 = vpop.f32.mrb[0].mxu0
    %8590 = vmatprep.mubr.f32.mxu0 0.0
    %8591 = vmatmul.mubr.f32.gmra.mrb[0].mxu0 %v8519
    %v8592 = vpop.f32.mrb[0].mxu0
    %v8593 = vadd.f32 0.0, %v8592
    %v8594 = vpop.f32.mrb[0].mxu0
    %8595 = vdwg.mxu0
    %v8597 = vsel %vm6160, %v8357, 0
    %v8600 = vsel %vm6160, %v8362, 0
    %8602 = vmatprep.subr.mxu0 0.0
    %8603 = vmatpush1.msra.mxu0 %v6774
    %8604 = vmatprep.subr.mxu0 0.0
    %8605 = vmatpush1.msra.mxu0 %v6775
    %8606 = vmatprep.subr.mxu0 0.0
    %8607 = vmatpush1.msra.mxu0 %v6776
    %8608 = vmatprep.subr.mxu0 0.0
    %8609 = vmatpush1.msra.mxu0 %v6777
    %8610 = vmatprep.subr.mxu0 0.0
    %8611 = vmatpush1.msra.mxu0 %v6778
    %8612 = vmatprep.subr.mxu0 0.0
    %8613 = vmatpush1.msra.mxu0 %v6779
    %8614 = vmatprep.subr.mxu0 0.0
    %8615 = vmatpush1.msra.mxu0 %v6780
    %8616 = vmatprep.subr.mxu0 0.0
    %8617 = vmatpush1.msra.mxu0 %v6781
    %8618 = vmatprep.subr.mxu0 0.0
    %8619 = vmatpush1.msra.mxu0 0.0
    %8620 = vmatprep.subr.mxu0 0.0
    %8621 = vmatpush1.msra.mxu0 0.0
    %8622 = vmatprep.subr.mxu0 0.0
    %8623 = vmatpush1.msra.mxu0 0.0
    %8624 = vmatprep.subr.mxu0 0.0
    %8625 = vmatpush1.msra.mxu0 0.0
    %8626 = vmatprep.subr.mxu0 0.0
    %8627 = vmatpush1.msra.mxu0 0.0
    %8628 = vmatprep.subr.mxu0 0.0
    %8629 = vmatpush1.msra.mxu0 0.0
    %8630 = vmatprep.subr.mxu0 0.0
    %8631 = vmatpush1.msra.mxu0 0.0
    %8632 = vmatprep.subr.mxu0 0.0
    %8633 = vmatpush1.msra.mxu0 0.0
    %8634 = vmatprep.subr.mxu0 0.0
    %8635 = vmatpush1.msra.mxu0 0.0
    %8636 = vmatprep.subr.mxu0 0.0
    %8637 = vmatpush1.msra.mxu0 0.0
    %8638 = vmatprep.subr.mxu0 0.0
    %8639 = vmatpush1.msra.mxu0 0.0
    %8640 = vmatprep.subr.mxu0 0.0
    %8641 = vmatpush1.msra.mxu0 0.0
    %8642 = vmatprep.subr.mxu0 0.0
    %8643 = vmatpush1.msra.mxu0 0.0
    %8644 = vmatprep.subr.mxu0 0.0
    %8645 = vmatpush1.msra.mxu0 0.0
    %8646 = vmatprep.subr.mxu0 0.0
    %8647 = vmatpush1.msra.mxu0 0.0
    %8648 = vmatprep.subr.mxu0 0.0
    %8649 = vmatpush1.msra.mxu0 0.0
    %8650 = vmatprep.subr.mxu0 0.0
    %8651 = vmatpush1.msra.mxu0 0.0
    %8652 = vmatprep.subr.mxu0 0.0
    %8653 = vmatpush1.msra.mxu0 0.0
    %8654 = vmatprep.subr.mxu0 0.0
    %8655 = vmatpush1.msra.mxu0 0.0
    %8656 = vmatprep.subr.mxu0 0.0
    %8657 = vmatpush1.msra.mxu0 0.0
    %8658 = vmatprep.subr.mxu0 0.0
    %8659 = vmatpush1.msra.mxu0 0.0
    %8660 = vmatprep.subr.mxu0 0.0
    %8661 = vmatpush1.msra.mxu0 0.0
    %8662 = vmatprep.subr.mxu0 0.0
    %8663 = vmatpush1.msra.mxu0 0.0
    %8664 = vmatprep.subr.mxu0 0.0
    %8665 = vmatpush1.msra.mxu0 0.0
    %8666 = vmatprep.mubr.f32.mxu0 0.0
    %8667 = vmatmul.mubr.f32.gmra.mrb[0].mxu0 %v8597
    %v8668 = vpop.f32.mrb[0].mxu0
    %v8669 = vadd.f32 %v8588, %v8668
    %v8670 = vpop.f32.mrb[0].mxu0
    %8671 = vmatprep.mubr.f32.mxu0 0.0
    %8672 = vmatmul.mubr.f32.gmra.mrb[0].mxu0 %v8600
    %v8673 = vpop.f32.mrb[0].mxu0
    %v8674 = vadd.f32 %v8593, %v8673
    %v8675 = vpop.f32.mrb[0].mxu0
    %8676 = vdwg.mxu0
    %v8678 = vsel %vm6160, %v8377, 0
    %v8681 = vsel %vm6160, %v8382, 0
    %8683 = vmatprep.subr.mxu0 0.0
    %8684 = vmatpush1.msra.mxu0 %v6954
    %8685 = vmatprep.subr.mxu0 0.0
    %8686 = vmatpush1.msra.mxu0 %v6955
    %8687 = vmatprep.subr.mxu0 0.0
    %8688 = vmatpush1.msra.mxu0 %v6956
    %8689 = vmatprep.subr.mxu0 0.0
    %8690 = vmatpush1.msra.mxu0 %v6957
    %8691 = vmatprep.subr.mxu0 0.0
    %8692 = vmatpush1.msra.mxu0 %v6958
    %8693 = vmatprep.subr.mxu0 0.0
    %8694 = vmatpush1.msra.mxu0 %v6959
    %8695 = vmatprep.subr.mxu0 0.0
    %8696 = vmatpush1.msra.mxu0 %v6960
    %8697 = vmatprep.subr.mxu0 0.0
    %8698 = vmatpush1.msra.mxu0 %v6961
    %8699 = vmatprep.subr.mxu0 0.0
    %8700 = vmatpush1.msra.mxu0 0.0
    %8701 = vmatprep.subr.mxu0 0.0
    %8702 = vmatpush1.msra.mxu0 0.0
    %8703 = vmatprep.subr.mxu0 0.0
    %8704 = vmatpush1.msra.mxu0 0.0
    %8705 = vmatprep.subr.mxu0 0.0
    %8706 = vmatpush1.msra.mxu0 0.0
    %8707 = vmatprep.subr.mxu0 0.0
    %8708 = vmatpush1.msra.mxu0 0.0
    %8709 = vmatprep.subr.mxu0 0.0
    %8710 = vmatpush1.msra.mxu0 0.0
    %8711 = vmatprep.subr.mxu0 0.0
    %8712 = vmatpush1.msra.mxu0 0.0
    %8713 = vmatprep.subr.mxu0 0.0
    %8714 = vmatpush1.msra.mxu0 0.0
    %8715 = vmatprep.subr.mxu0 0.0
    %8716 = vmatpush1.msra.mxu0 0.0
    %8717 = vmatprep.subr.mxu0 0.0
    %8718 = vmatpush1.msra.mxu0 0.0
    %8719 = vmatprep.subr.mxu0 0.0
    %8720 = vmatpush1.msra.mxu0 0.0
    %8721 = vmatprep.subr.mxu0 0.0
    %8722 = vmatpush1.msra.mxu0 0.0
    %8723 = vmatprep.subr.mxu0 0.0
    %8724 = vmatpush1.msra.mxu0 0.0
    %8725 = vmatprep.subr.mxu0 0.0
    %8726 = vmatpush1.msra.mxu0 0.0
    %8727 = vmatprep.subr.mxu0 0.0
    %8728 = vmatpush1.msra.mxu0 0.0
    %8729 = vmatprep.subr.mxu0 0.0
    %8730 = vmatpush1.msra.mxu0 0.0
    %8731 = vmatprep.subr.mxu0 0.0
    %8732 = vmatpush1.msra.mxu0 0.0
    %8733 = vmatprep.subr.mxu0 0.0
    %8734 = vmatpush1.msra.mxu0 0.0
    %8735 = vmatprep.subr.mxu0 0.0
    %8736 = vmatpush1.msra.mxu0 0.0
    %8737 = vmatprep.subr.mxu0 0.0
    %8738 = vmatpush1.msra.mxu0 0.0
    %8739 = vmatprep.subr.mxu0 0.0
    %8740 = vmatpush1.msra.mxu0 0.0
    %8741 = vmatprep.subr.mxu0 0.0
    %8742 = vmatpush1.msra.mxu0 0.0
    %8743 = vmatprep.subr.mxu0 0.0
    %8744 = vmatpush1.msra.mxu0 0.0
    %8745 = vmatprep.subr.mxu0 0.0
    %8746 = vmatpush1.msra.mxu0 0.0
    %8747 = vmatprep.mubr.f32.mxu0 0.0
    %8748 = vmatmul.mubr.f32.gmra.mrb[0].mxu0 %v8678
    %v8749 = vpop.f32.mrb[0].mxu0
    %v8750 = vadd.f32 0.0, %v8749
    %v8751 = vpop.f32.mrb[0].mxu0
    %8752 = vmatprep.mubr.f32.mxu0 0.0
    %8753 = vmatmul.mubr.f32.gmra.mrb[0].mxu0 %v8681
    %v8754 = vpop.f32.mrb[0].mxu0
    %v8755 = vadd.f32 0.0, %v8754
    %v8756 = vpop.f32.mrb[0].mxu0
    %8757 = vdwg.mxu0
    %v8758 = vadd.f32 %v8669, %v8750
    %v8759 = vadd.f32 %v8674, %v8755
    %v8761 = vsel %vm6160, %v8387, 0
    %v8764 = vsel %vm6160, %v8392, 0
    %8766 = vmatprep.subr.mxu0 0.0
    %8767 = vmatpush1.msra.mxu0 %v7046
    %8768 = vmatprep.subr.mxu0 0.0
    %8769 = vmatpush1.msra.mxu0 %v7047
    %8770 = vmatprep.subr.mxu0 0.0
    %8771 = vmatpush1.msra.mxu0 %v7048
    %8772 = vmatprep.subr.mxu0 0.0
    %8773 = vmatpush1.msra.mxu0 %v7049
    %8774 = vmatprep.subr.mxu0 0.0
    %8775 = vmatpush1.msra.mxu0 %v7050
    %8776 = vmatprep.subr.mxu0 0.0
    %8777 = vmatpush1.msra.mxu0 %v7051
    %8778 = vmatprep.subr.mxu0 0.0
    %8779 = vmatpush1.msra.mxu0 %v7052
    %8780 = vmatprep.subr.mxu0 0.0
    %8781 = vmatpush1.msra.mxu0 %v7053
    %8782 = vmatprep.subr.mxu0 0.0
    %8783 = vmatpush1.msra.mxu0 0.0
    %8784 = vmatprep.subr.mxu0 0.0
    %8785 = vmatpush1.msra.mxu0 0.0
    %8786 = vmatprep.subr.mxu0 0.0
    %8787 = vmatpush1.msra.mxu0 0.0
    %8788 = vmatprep.subr.mxu0 0.0
    %8789 = vmatpush1.msra.mxu0 0.0
    %8790 = vmatprep.subr.mxu0 0.0
    %8791 = vmatpush1.msra.mxu0 0.0
    %8792 = vmatprep.subr.mxu0 0.0
    %8793 = vmatpush1.msra.mxu0 0.0
    %8794 = vmatprep.subr.mxu0 0.0
    %8795 = vmatpush1.msra.mxu0 0.0
    %8796 = vmatprep.subr.mxu0 0.0
    %8797 = vmatpush1.msra.mxu0 0.0
    %8798 = vmatprep.subr.mxu0 0.0
    %8799 = vmatpush1.msra.mxu0 0.0
    %8800 = vmatprep.subr.mxu0 0.0
    %8801 = vmatpush1.msra.mxu0 0.0
    %8802 = vmatprep.subr.mxu0 0.0
    %8803 = vmatpush1.msra.mxu0 0.0
    %8804 = vmatprep.subr.mxu0 0.0
    %8805 = vmatpush1.msra.mxu0 0.0
    %8806 = vmatprep.subr.mxu0 0.0
    %8807 = vmatpush1.msra.mxu0 0.0
    %8808 = vmatprep.subr.mxu0 0.0
    %8809 = vmatpush1.msra.mxu0 0.0
    %8810 = vmatprep.subr.mxu0 0.0
    %8811 = vmatpush1.msra.mxu0 0.0
    %8812 = vmatprep.subr.mxu0 0.0
    %8813 = vmatpush1.msra.mxu0 0.0
    %8814 = vmatprep.subr.mxu0 0.0
    %8815 = vmatpush1.msra.mxu0 0.0
    %8816 = vmatprep.subr.mxu0 0.0
    %8817 = vmatpush1.msra.mxu0 0.0
    %8818 = vmatprep.subr.mxu0 0.0
    %8819 = vmatpush1.msra.mxu0 0.0
    %8820 = vmatprep.subr.mxu0 0.0
    %8821 = vmatpush1.msra.mxu0 0.0
    %8822 = vmatprep.subr.mxu0 0.0
    %8823 = vmatpush1.msra.mxu0 0.0
    %8824 = vmatprep.subr.mxu0 0.0
    %8825 = vmatpush1.msra.mxu0 0.0
    %8826 = vmatprep.subr.mxu0 0.0
    %8827 = vmatpush1.msra.mxu0 0.0
    %8828 = vmatprep.subr.mxu0 0.0
    %8829 = vmatpush1.msra.mxu0 0.0
    %8830 = vmatprep.mubr.f32.mxu0 0.0
    %8831 = vmatmul.mubr.f32.gmra.mrb[0].mxu0 %v8761
    %v8832 = vpop.f32.mrb[0].mxu0
    %v8833 = vadd.f32 0.0, %v8832
    %v8834 = vpop.f32.mrb[0].mxu0
    %8835 = vmatprep.mubr.f32.mxu0 0.0
    %8836 = vmatmul.mubr.f32.gmra.mrb[0].mxu0 %v8764
    %v8837 = vpop.f32.mrb[0].mxu0
    %v8838 = vadd.f32 0.0, %v8837
    %v8839 = vpop.f32.mrb[0].mxu0
    %8840 = vdwg.mxu0
    %v8841 = vadd.f32 %v8758, %v8833
    %v8842 = vadd.f32 %v8759, %v8838
    %v8844 = vsel %vm6160, %v8397, 0
    %v8847 = vsel %vm6160, %v8402, 0
    %8849 = vmatprep.subr.mxu0 0.0
    %8850 = vmatpush1.msra.mxu0 %v7138
    %8851 = vmatprep.subr.mxu0 0.0
    %8852 = vmatpush1.msra.mxu0 %v7139
    %8853 = vmatprep.subr.mxu0 0.0
    %8854 = vmatpush1.msra.mxu0 %v7140
    %8855 = vmatprep.subr.mxu0 0.0
    %8856 = vmatpush1.msra.mxu0 %v7141
    %8857 = vmatprep.subr.mxu0 0.0
    %8858 = vmatpush1.msra.mxu0 %v7142
    %8859 = vmatprep.subr.mxu0 0.0
    %8860 = vmatpush1.msra.mxu0 %v7143
    %8861 = vmatprep.subr.mxu0 0.0
    %8862 = vmatpush1.msra.mxu0 %v7144
    %8863 = vmatprep.subr.mxu0 0.0
    %8864 = vmatpush1.msra.mxu0 %v7145
    %8865 = vmatprep.subr.mxu0 0.0
    %8866 = vmatpush1.msra.mxu0 0.0
    %8867 = vmatprep.subr.mxu0 0.0
    %8868 = vmatpush1.msra.mxu0 0.0
    %8869 = vmatprep.subr.mxu0 0.0
    %8870 = vmatpush1.msra.mxu0 0.0
    %8871 = vmatprep.subr.mxu0 0.0
    %8872 = vmatpush1.msra.mxu0 0.0
    %8873 = vmatprep.subr.mxu0 0.0
    %8874 = vmatpush1.msra.mxu0 0.0
    %8875 = vmatprep.subr.mxu0 0.0
    %8876 = vmatpush1.msra.mxu0 0.0
    %8877 = vmatprep.subr.mxu0 0.0
    %8878 = vmatpush1.msra.mxu0 0.0
    %8879 = vmatprep.subr.mxu0 0.0
    %8880 = vmatpush1.msra.mxu0 0.0
    %8881 = vmatprep.subr.mxu0 0.0
    %8882 = vmatpush1.msra.mxu0 0.0
    %8883 = vmatprep.subr.mxu0 0.0
    %8884 = vmatpush1.msra.mxu0 0.0
    %8885 = vmatprep.subr.mxu0 0.0
    %8886 = vmatpush1.msra.mxu0 0.0
    %8887 = vmatprep.subr.mxu0 0.0
    %8888 = vmatpush1.msra.mxu0 0.0
    %8889 = vmatprep.subr.mxu0 0.0
    %8890 = vmatpush1.msra.mxu0 0.0
    %8891 = vmatprep.subr.mxu0 0.0
    %8892 = vmatpush1.msra.mxu0 0.0
    %8893 = vmatprep.subr.mxu0 0.0
    %8894 = vmatpush1.msra.mxu0 0.0
    %8895 = vmatprep.subr.mxu0 0.0
    %8896 = vmatpush1.msra.mxu0 0.0
    %8897 = vmatprep.subr.mxu0 0.0
    %8898 = vmatpush1.msra.mxu0 0.0
    %8899 = vmatprep.subr.mxu0 0.0
    %8900 = vmatpush1.msra.mxu0 0.0
    %8901 = vmatprep.subr.mxu0 0.0
    %8902 = vmatpush1.msra.mxu0 0.0
    %8903 = vmatprep.subr.mxu0 0.0
    %8904 = vmatpush1.msra.mxu0 0.0
    %8905 = vmatprep.subr.mxu0 0.0
    %8906 = vmatpush1.msra.mxu0 0.0
    %8907 = vmatprep.subr.mxu0 0.0
    %8908 = vmatpush1.msra.mxu0 0.0
    %8909 = vmatprep.subr.mxu0 0.0
    %8910 = vmatpush1.msra.mxu0 0.0
    %8911 = vmatprep.subr.mxu0 0.0
    %8912 = vmatpush1.msra.mxu0 0.0
    %8913 = vmatprep.mubr.f32.mxu0 0.0
    %8914 = vmatmul.mubr.f32.gmra.mrb[0].mxu0 %v8844
    %v8915 = vpop.f32.mrb[0].mxu0
    %v8916 = vadd.f32 0.0, %v8915
    %v8917 = vpop.f32.mrb[0].mxu0
    %8918 = vmatprep.mubr.f32.mxu0 0.0
    %8919 = vmatmul.mubr.f32.gmra.mrb[0].mxu0 %v8847
    %v8920 = vpop.f32.mrb[0].mxu0
    %v8921 = vadd.f32 0.0, %v8920
    %v8922 = vpop.f32.mrb[0].mxu0
    %8923 = vdwg.mxu0
    %v8924 = vadd.f32 %v8841, %v8916
    %v8925 = vadd.f32 %v8842, %v8921
    %v8927 = vsel %vm6160, %v8407, 0
    %v8930 = vsel %vm6160, %v8412, 0
    %8932 = vmatprep.subr.mxu0 0.0
    %8933 = vmatpush1.msra.mxu0 %v7230
    %8934 = vmatprep.subr.mxu0 0.0
    %8935 = vmatpush1.msra.mxu0 %v7231
    %8936 = vmatprep.subr.mxu0 0.0
    %8937 = vmatpush1.msra.mxu0 %v7232
    %8938 = vmatprep.subr.mxu0 0.0
    %8939 = vmatpush1.msra.mxu0 %v7233
    %8940 = vmatprep.subr.mxu0 0.0
    %8941 = vmatpush1.msra.mxu0 %v7234
    %8942 = vmatprep.subr.mxu0 0.0
    %8943 = vmatpush1.msra.mxu0 %v7235
    %8944 = vmatprep.subr.mxu0 0.0
    %8945 = vmatpush1.msra.mxu0 %v7236
    %8946 = vmatprep.subr.mxu0 0.0
    %8947 = vmatpush1.msra.mxu0 %v7237
    %8948 = vmatprep.subr.mxu0 0.0
    %8949 = vmatpush1.msra.mxu0 0.0
    %8950 = vmatprep.subr.mxu0 0.0
    %8951 = vmatpush1.msra.mxu0 0.0
    %8952 = vmatprep.subr.mxu0 0.0
    %8953 = vmatpush1.msra.mxu0 0.0
    %8954 = vmatprep.subr.mxu0 0.0
    %8955 = vmatpush1.msra.mxu0 0.0
    %8956 = vmatprep.subr.mxu0 0.0
    %8957 = vmatpush1.msra.mxu0 0.0
    %8958 = vmatprep.subr.mxu0 0.0
    %8959 = vmatpush1.msra.mxu0 0.0
    %8960 = vmatprep.subr.mxu0 0.0
    %8961 = vmatpush1.msra.mxu0 0.0
    %8962 = vmatprep.subr.mxu0 0.0
    %8963 = vmatpush1.msra.mxu0 0.0
    %8964 = vmatprep.subr.mxu0 0.0
    %8965 = vmatpush1.msra.mxu0 0.0
    %8966 = vmatprep.subr.mxu0 0.0
    %8967 = vmatpush1.msra.mxu0 0.0
    %8968 = vmatprep.subr.mxu0 0.0
    %8969 = vmatpush1.msra.mxu0 0.0
    %8970 = vmatprep.subr.mxu0 0.0
    %8971 = vmatpush1.msra.mxu0 0.0
    %8972 = vmatprep.subr.mxu0 0.0
    %8973 = vmatpush1.msra.mxu0 0.0
    %8974 = vmatprep.subr.mxu0 0.0
    %8975 = vmatpush1.msra.mxu0 0.0
    %8976 = vmatprep.subr.mxu0 0.0
    %8977 = vmatpush1.msra.mxu0 0.0
    %8978 = vmatprep.subr.mxu0 0.0
    %8979 = vmatpush1.msra.mxu0 0.0
    %8980 = vmatprep.subr.mxu0 0.0
    %8981 = vmatpush1.msra.mxu0 0.0
    %8982 = vmatprep.subr.mxu0 0.0
    %8983 = vmatpush1.msra.mxu0 0.0
    %8984 = vmatprep.subr.mxu0 0.0
    %8985 = vmatpush1.msra.mxu0 0.0
    %8986 = vmatprep.subr.mxu0 0.0
    %8987 = vmatpush1.msra.mxu0 0.0
    %8988 = vmatprep.subr.mxu0 0.0
    %8989 = vmatpush1.msra.mxu0 0.0
    %8990 = vmatprep.subr.mxu0 0.0
    %8991 = vmatpush1.msra.mxu0 0.0
    %8992 = vmatprep.subr.mxu0 0.0
    %8993 = vmatpush1.msra.mxu0 0.0
    %8994 = vmatprep.subr.mxu0 0.0
    %8995 = vmatpush1.msra.mxu0 0.0
    %8996 = vmatprep.mubr.f32.mxu0 0.0
    %8997 = vmatmul.mubr.f32.gmra.mrb[0].mxu0 %v8927
    %v8998 = vpop.f32.mrb[0].mxu0
    %v8999 = vadd.f32 0.0, %v8998
    %v9000 = vpop.f32.mrb[0].mxu0
    %9001 = vmatprep.mubr.f32.mxu0 0.0
    %9002 = vmatmul.mubr.f32.gmra.mrb[0].mxu0 %v8930
    %v9003 = vpop.f32.mrb[0].mxu0
    %v9004 = vadd.f32 0.0, %v9003
    %v9005 = vpop.f32.mrb[0].mxu0
    %9006 = vdwg.mxu0
    %v9007 = vadd.f32 %v8924, %v8999
    %v9008 = vadd.f32 %v8925, %v9004
    %v9010 = vsel %vm6160, %v8417, 0
    %v9013 = vsel %vm6160, %v8422, 0
    %9015 = vmatprep.subr.mxu0 0.0
    %9016 = vmatpush1.msra.mxu0 %v7322
    %9017 = vmatprep.subr.mxu0 0.0
    %9018 = vmatpush1.msra.mxu0 %v7323
    %9019 = vmatprep.subr.mxu0 0.0
    %9020 = vmatpush1.msra.mxu0 %v7324
    %9021 = vmatprep.subr.mxu0 0.0
    %9022 = vmatpush1.msra.mxu0 %v7325
    %9023 = vmatprep.subr.mxu0 0.0
    %9024 = vmatpush1.msra.mxu0 %v7326
    %9025 = vmatprep.subr.mxu0 0.0
    %9026 = vmatpush1.msra.mxu0 %v7327
    %9027 = vmatprep.subr.mxu0 0.0
    %9028 = vmatpush1.msra.mxu0 %v7328
    %9029 = vmatprep.subr.mxu0 0.0
    %9030 = vmatpush1.msra.mxu0 %v7329
    %9031 = vmatprep.subr.mxu0 0.0
    %9032 = vmatpush1.msra.mxu0 0.0
    %9033 = vmatprep.subr.mxu0 0.0
    %9034 = vmatpush1.msra.mxu0 0.0
    %9035 = vmatprep.subr.mxu0 0.0
    %9036 = vmatpush1.msra.mxu0 0.0
    %9037 = vmatprep.subr.mxu0 0.0
    %9038 = vmatpush1.msra.mxu0 0.0
    %9039 = vmatprep.subr.mxu0 0.0
    %9040 = vmatpush1.msra.mxu0 0.0
    %9041 = vmatprep.subr.mxu0 0.0
    %9042 = vmatpush1.msra.mxu0 0.0
    %9043 = vmatprep.subr.mxu0 0.0
    %9044 = vmatpush1.msra.mxu0 0.0
    %9045 = vmatprep.subr.mxu0 0.0
    %9046 = vmatpush1.msra.mxu0 0.0
    %9047 = vmatprep.subr.mxu0 0.0
    %9048 = vmatpush1.msra.mxu0 0.0
    %9049 = vmatprep.subr.mxu0 0.0
    %9050 = vmatpush1.msra.mxu0 0.0
    %9051 = vmatprep.subr.mxu0 0.0
    %9052 = vmatpush1.msra.mxu0 0.0
    %9053 = vmatprep.subr.mxu0 0.0
    %9054 = vmatpush1.msra.mxu0 0.0
    %9055 = vmatprep.subr.mxu0 0.0
    %9056 = vmatpush1.msra.mxu0 0.0
    %9057 = vmatprep.subr.mxu0 0.0
    %9058 = vmatpush1.msra.mxu0 0.0
    %9059 = vmatprep.subr.mxu0 0.0
    %9060 = vmatpush1.msra.mxu0 0.0
    %9061 = vmatprep.subr.mxu0 0.0
    %9062 = vmatpush1.msra.mxu0 0.0
    %9063 = vmatprep.subr.mxu0 0.0
    %9064 = vmatpush1.msra.mxu0 0.0
    %9065 = vmatprep.subr.mxu0 0.0
    %9066 = vmatpush1.msra.mxu0 0.0
    %9067 = vmatprep.subr.mxu0 0.0
    %9068 = vmatpush1.msra.mxu0 0.0
    %9069 = vmatprep.subr.mxu0 0.0
    %9070 = vmatpush1.msra.mxu0 0.0
    %9071 = vmatprep.subr.mxu0 0.0
    %9072 = vmatpush1.msra.mxu0 0.0
    %9073 = vmatprep.subr.mxu0 0.0
    %9074 = vmatpush1.msra.mxu0 0.0
    %9075 = vmatprep.subr.mxu0 0.0
    %9076 = vmatpush1.msra.mxu0 0.0
    %9077 = vmatprep.subr.mxu0 0.0
    %9078 = vmatpush1.msra.mxu0 0.0
    %9079 = vmatprep.mubr.f32.mxu0 0.0
    %9080 = vmatmul.mubr.f32.gmra.mrb[0].mxu0 %v9010
    %v9081 = vpop.f32.mrb[0].mxu0
    %v9082 = vadd.f32 0.0, %v9081
    %v9083 = vpop.f32.mrb[0].mxu0
    %9084 = vmatprep.mubr.f32.mxu0 0.0
    %9085 = vmatmul.mubr.f32.gmra.mrb[0].mxu0 %v9013
    %v9086 = vpop.f32.mrb[0].mxu0
    %v9087 = vadd.f32 0.0, %v9086
    %v9088 = vpop.f32.mrb[0].mxu0
    %9089 = vdwg.mxu0
    %v9090 = vadd.f32 %v9007, %v9082
    %v9091 = vadd.f32 %v9008, %v9087
    %v9093 = vsel %vm6160, %v8427, 0
    %v9096 = vsel %vm6160, %v8432, 0
    %9098 = vmatprep.subr.mxu0 0.0
    %9099 = vmatpush1.msra.mxu0 %v7414
    %9100 = vmatprep.subr.mxu0 0.0
    %9101 = vmatpush1.msra.mxu0 %v7415
    %9102 = vmatprep.subr.mxu0 0.0
    %9103 = vmatpush1.msra.mxu0 %v7416
    %9104 = vmatprep.subr.mxu0 0.0
    %9105 = vmatpush1.msra.mxu0 %v7417
    %9106 = vmatprep.subr.mxu0 0.0
    %9107 = vmatpush1.msra.mxu0 %v7418
    %9108 = vmatprep.subr.mxu0 0.0
    %9109 = vmatpush1.msra.mxu0 %v7419
    %9110 = vmatprep.subr.mxu0 0.0
    %9111 = vmatpush1.msra.mxu0 %v7420
    %9112 = vmatprep.subr.mxu0 0.0
    %9113 = vmatpush1.msra.mxu0 %v7421
    %9114 = vmatprep.subr.mxu0 0.0
    %9115 = vmatpush1.msra.mxu0 0.0
    %9116 = vmatprep.subr.mxu0 0.0
    %9117 = vmatpush1.msra.mxu0 0.0
    %9118 = vmatprep.subr.mxu0 0.0
    %9119 = vmatpush1.msra.mxu0 0.0
    %9120 = vmatprep.subr.mxu0 0.0
    %9121 = vmatpush1.msra.mxu0 0.0
    %9122 = vmatprep.subr.mxu0 0.0
    %9123 = vmatpush1.msra.mxu0 0.0
    %9124 = vmatprep.subr.mxu0 0.0
    %9125 = vmatpush1.msra.mxu0 0.0
    %9126 = vmatprep.subr.mxu0 0.0
    %9127 = vmatpush1.msra.mxu0 0.0
    %9128 = vmatprep.subr.mxu0 0.0
    %9129 = vmatpush1.msra.mxu0 0.0
    %9130 = vmatprep.subr.mxu0 0.0
    %9131 = vmatpush1.msra.mxu0 0.0
    %9132 = vmatprep.subr.mxu0 0.0
    %9133 = vmatpush1.msra.mxu0 0.0
    %9134 = vmatprep.subr.mxu0 0.0
    %9135 = vmatpush1.msra.mxu0 0.0
    %9136 = vmatprep.subr.mxu0 0.0
    %9137 = vmatpush1.msra.mxu0 0.0
    %9138 = vmatprep.subr.mxu0 0.0
    %9139 = vmatpush1.msra.mxu0 0.0
    %9140 = vmatprep.subr.mxu0 0.0
    %9141 = vmatpush1.msra.mxu0 0.0
    %9142 = vmatprep.subr.mxu0 0.0
    %9143 = vmatpush1.msra.mxu0 0.0
    %9144 = vmatprep.subr.mxu0 0.0
    %9145 = vmatpush1.msra.mxu0 0.0
    %9146 = vmatprep.subr.mxu0 0.0
    %9147 = vmatpush1.msra.mxu0 0.0
    %9148 = vmatprep.subr.mxu0 0.0
    %9149 = vmatpush1.msra.mxu0 0.0
    %9150 = vmatprep.subr.mxu0 0.0
    %9151 = vmatpush1.msra.mxu0 0.0
    %9152 = vmatprep.subr.mxu0 0.0
    %9153 = vmatpush1.msra.mxu0 0.0
    %9154 = vmatprep.subr.mxu0 0.0
    %9155 = vmatpush1.msra.mxu0 0.0
    %9156 = vmatprep.subr.mxu0 0.0
    %9157 = vmatpush1.msra.mxu0 0.0
    %9158 = vmatprep.subr.mxu0 0.0
    %9159 = vmatpush1.msra.mxu0 0.0
    %9160 = vmatprep.subr.mxu0 0.0
    %9161 = vmatpush1.msra.mxu0 0.0
    %9162 = vmatprep.mubr.f32.mxu0 0.0
    %9163 = vmatmul.mubr.f32.gmra.mrb[0].mxu0 %v9093
    %v9164 = vpop.f32.mrb[0].mxu0
    %v9165 = vadd.f32 0.0, %v9164
    %v9166 = vpop.f32.mrb[0].mxu0
    %9167 = vmatprep.mubr.f32.mxu0 0.0
    %9168 = vmatmul.mubr.f32.gmra.mrb[0].mxu0 %v9096
    %v9169 = vpop.f32.mrb[0].mxu0
    %v9170 = vadd.f32 0.0, %v9169
    %v9171 = vpop.f32.mrb[0].mxu0
    %9172 = vdwg.mxu0
    %v9173 = vadd.f32 %v9090, %v9165
    %v9174 = vadd.f32 %v9091, %v9170
    %v9176 = vsel %vm6160, %v8437, 0
    %v9179 = vsel %vm6160, %v8442, 0
    %9181 = vmatprep.subr.mxu0 0.0
    %9182 = vmatpush1.msra.mxu0 %v7506
    %9183 = vmatprep.subr.mxu0 0.0
    %9184 = vmatpush1.msra.mxu0 %v7507
    %9185 = vmatprep.subr.mxu0 0.0
    %9186 = vmatpush1.msra.mxu0 %v7508
    %9187 = vmatprep.subr.mxu0 0.0
    %9188 = vmatpush1.msra.mxu0 %v7509
    %9189 = vmatprep.subr.mxu0 0.0
    %9190 = vmatpush1.msra.mxu0 %v7510
    %9191 = vmatprep.subr.mxu0 0.0
    %9192 = vmatpush1.msra.mxu0 %v7511
    %9193 = vmatprep.subr.mxu0 0.0
    %9194 = vmatpush1.msra.mxu0 %v7512
    %9195 = vmatprep.subr.mxu0 0.0
    %9196 = vmatpush1.msra.mxu0 %v7513
    %9197 = vmatprep.subr.mxu0 0.0
    %9198 = vmatpush1.msra.mxu0 0.0
    %9199 = vmatprep.subr.mxu0 0.0
    %9200 = vmatpush1.msra.mxu0 0.0
    %9201 = vmatprep.subr.mxu0 0.0
    %9202 = vmatpush1.msra.mxu0 0.0
    %9203 = vmatprep.subr.mxu0 0.0
    %9204 = vmatpush1.msra.mxu0 0.0
    %9205 = vmatprep.subr.mxu0 0.0
    %9206 = vmatpush1.msra.mxu0 0.0
    %9207 = vmatprep.subr.mxu0 0.0
    %9208 = vmatpush1.msra.mxu0 0.0
    %9209 = vmatprep.subr.mxu0 0.0
    %9210 = vmatpush1.msra.mxu0 0.0
    %9211 = vmatprep.subr.mxu0 0.0
    %9212 = vmatpush1.msra.mxu0 0.0
    %9213 = vmatprep.subr.mxu0 0.0
    %9214 = vmatpush1.msra.mxu0 0.0
    %9215 = vmatprep.subr.mxu0 0.0
    %9216 = vmatpush1.msra.mxu0 0.0
    %9217 = vmatprep.subr.mxu0 0.0
    %9218 = vmatpush1.msra.mxu0 0.0
    %9219 = vmatprep.subr.mxu0 0.0
    %9220 = vmatpush1.msra.mxu0 0.0
    %9221 = vmatprep.subr.mxu0 0.0
    %9222 = vmatpush1.msra.mxu0 0.0
    %9223 = vmatprep.subr.mxu0 0.0
    %9224 = vmatpush1.msra.mxu0 0.0
    %9225 = vmatprep.subr.mxu0 0.0
    %9226 = vmatpush1.msra.mxu0 0.0
    %9227 = vmatprep.subr.mxu0 0.0
    %9228 = vmatpush1.msra.mxu0 0.0
    %9229 = vmatprep.subr.mxu0 0.0
    %9230 = vmatpush1.msra.mxu0 0.0
    %9231 = vmatprep.subr.mxu0 0.0
    %9232 = vmatpush1.msra.mxu0 0.0
    %9233 = vmatprep.subr.mxu0 0.0
    %9234 = vmatpush1.msra.mxu0 0.0
    %9235 = vmatprep.subr.mxu0 0.0
    %9236 = vmatpush1.msra.mxu0 0.0
    %9237 = vmatprep.subr.mxu0 0.0
    %9238 = vmatpush1.msra.mxu0 0.0
    %9239 = vmatprep.subr.mxu0 0.0
    %9240 = vmatpush1.msra.mxu0 0.0
    %9241 = vmatprep.subr.mxu0 0.0
    %9242 = vmatpush1.msra.mxu0 0.0
    %9243 = vmatprep.subr.mxu0 0.0
    %9244 = vmatpush1.msra.mxu0 0.0
    %9245 = vmatprep.mubr.f32.mxu0 0.0
    %9246 = vmatmul.mubr.f32.gmra.mrb[0].mxu0 %v9176
    %v9247 = vpop.f32.mrb[0].mxu0
    %v9248 = vadd.f32 0.0, %v9247
    %v9249 = vpop.f32.mrb[0].mxu0
    %9250 = vmatprep.mubr.f32.mxu0 0.0
    %9251 = vmatmul.mubr.f32.gmra.mrb[0].mxu0 %v9179
    %v9252 = vpop.f32.mrb[0].mxu0
    %v9253 = vadd.f32 0.0, %v9252
    %v9254 = vpop.f32.mrb[0].mxu0
    %9255 = vdwg.mxu0
    %v9256 = vadd.f32 %v9173, %v9248
    %v9257 = vadd.f32 %v9174, %v9253
    %v9259 = vsel %vm6160, %v8447, 0
    %v9262 = vsel %vm6160, %v8452, 0
    %9264 = vmatprep.subr.mxu0 0.0
    %9265 = vmatpush1.msra.mxu0 %v7598
    %9266 = vmatprep.subr.mxu0 0.0
    %9267 = vmatpush1.msra.mxu0 %v7599
    %9268 = vmatprep.subr.mxu0 0.0
    %9269 = vmatpush1.msra.mxu0 %v7600
    %9270 = vmatprep.subr.mxu0 0.0
    %9271 = vmatpush1.msra.mxu0 %v7601
    %9272 = vmatprep.subr.mxu0 0.0
    %9273 = vmatpush1.msra.mxu0 %v7602
    %9274 = vmatprep.subr.mxu0 0.0
    %9275 = vmatpush1.msra.mxu0 %v7603
    %9276 = vmatprep.subr.mxu0 0.0
    %9277 = vmatpush1.msra.mxu0 %v7604
    %9278 = vmatprep.subr.mxu0 0.0
    %9279 = vmatpush1.msra.mxu0 %v7605
    %9280 = vmatprep.subr.mxu0 0.0
    %9281 = vmatpush1.msra.mxu0 0.0
    %9282 = vmatprep.subr.mxu0 0.0
    %9283 = vmatpush1.msra.mxu0 0.0
    %9284 = vmatprep.subr.mxu0 0.0
    %9285 = vmatpush1.msra.mxu0 0.0
    %9286 = vmatprep.subr.mxu0 0.0
    %9287 = vmatpush1.msra.mxu0 0.0
    %9288 = vmatprep.subr.mxu0 0.0
    %9289 = vmatpush1.msra.mxu0 0.0
    %9290 = vmatprep.subr.mxu0 0.0
    %9291 = vmatpush1.msra.mxu0 0.0
    %9292 = vmatprep.subr.mxu0 0.0
    %9293 = vmatpush1.msra.mxu0 0.0
    %9294 = vmatprep.subr.mxu0 0.0
    %9295 = vmatpush1.msra.mxu0 0.0
    %9296 = vmatprep.subr.mxu0 0.0
    %9297 = vmatpush1.msra.mxu0 0.0
    %9298 = vmatprep.subr.mxu0 0.0
    %9299 = vmatpush1.msra.mxu0 0.0
    %9300 = vmatprep.subr.mxu0 0.0
    %9301 = vmatpush1.msra.mxu0 0.0
    %9302 = vmatprep.subr.mxu0 0.0
    %9303 = vmatpush1.msra.mxu0 0.0
    %9304 = vmatprep.subr.mxu0 0.0
    %9305 = vmatpush1.msra.mxu0 0.0
    %9306 = vmatprep.subr.mxu0 0.0
    %9307 = vmatpush1.msra.mxu0 0.0
    %9308 = vmatprep.subr.mxu0 0.0
    %9309 = vmatpush1.msra.mxu0 0.0
    %9310 = vmatprep.subr.mxu0 0.0
    %9311 = vmatpush1.msra.mxu0 0.0
    %9312 = vmatprep.subr.mxu0 0.0
    %9313 = vmatpush1.msra.mxu0 0.0
    %9314 = vmatprep.subr.mxu0 0.0
    %9315 = vmatpush1.msra.mxu0 0.0
    %9316 = vmatprep.subr.mxu0 0.0
    %9317 = vmatpush1.msra.mxu0 0.0
    %9318 = vmatprep.subr.mxu0 0.0
    %9319 = vmatpush1.msra.mxu0 0.0
    %9320 = vmatprep.subr.mxu0 0.0
    %9321 = vmatpush1.msra.mxu0 0.0
    %9322 = vmatprep.subr.mxu0 0.0
    %9323 = vmatpush1.msra.mxu0 0.0
    %9324 = vmatprep.subr.mxu0 0.0
    %9325 = vmatpush1.msra.mxu0 0.0
    %9326 = vmatprep.subr.mxu0 0.0
    %9327 = vmatpush1.msra.mxu0 0.0
    %9328 = vmatprep.mubr.f32.mxu0 0.0
    %9329 = vmatmul.mubr.f32.gmra.mrb[0].mxu0 %v9259
    %v9330 = vpop.f32.mrb[0].mxu0
    %v9331 = vadd.f32 0.0, %v9330
    %v9332 = vpop.f32.mrb[0].mxu0
    %9333 = vmatprep.mubr.f32.mxu0 0.0
    %9334 = vmatmul.mubr.f32.gmra.mrb[0].mxu0 %v9262
    %v9335 = vpop.f32.mrb[0].mxu0
    %v9336 = vadd.f32 0.0, %v9335
    %v9337 = vpop.f32.mrb[0].mxu0
    %9338 = vdwg.mxu0
    %v9339 = vadd.f32 %v9256, %v9331
    %v9340 = vadd.f32 %v9257, %v9336
    %v9342 = vsel %vm6160, %v8457, 0
    %v9345 = vsel %vm6160, %v8462, 0
    %9347 = vmatprep.subr.mxu0 0.0
    %9348 = vmatpush1.msra.mxu0 %v7690
    %9349 = vmatprep.subr.mxu0 0.0
    %9350 = vmatpush1.msra.mxu0 %v7691
    %9351 = vmatprep.subr.mxu0 0.0
    %9352 = vmatpush1.msra.mxu0 %v7692
    %9353 = vmatprep.subr.mxu0 0.0
    %9354 = vmatpush1.msra.mxu0 %v7693
    %9355 = vmatprep.subr.mxu0 0.0
    %9356 = vmatpush1.msra.mxu0 %v7694
    %9357 = vmatprep.subr.mxu0 0.0
    %9358 = vmatpush1.msra.mxu0 %v7695
    %9359 = vmatprep.subr.mxu0 0.0
    %9360 = vmatpush1.msra.mxu0 %v7696
    %9361 = vmatprep.subr.mxu0 0.0
    %9362 = vmatpush1.msra.mxu0 %v7697
    %9363 = vmatprep.subr.mxu0 0.0
    %9364 = vmatpush1.msra.mxu0 0.0
    %9365 = vmatprep.subr.mxu0 0.0
    %9366 = vmatpush1.msra.mxu0 0.0
    %9367 = vmatprep.subr.mxu0 0.0
    %9368 = vmatpush1.msra.mxu0 0.0
    %9369 = vmatprep.subr.mxu0 0.0
    %9370 = vmatpush1.msra.mxu0 0.0
    %9371 = vmatprep.subr.mxu0 0.0
    %9372 = vmatpush1.msra.mxu0 0.0
    %9373 = vmatprep.subr.mxu0 0.0
    %9374 = vmatpush1.msra.mxu0 0.0
    %9375 = vmatprep.subr.mxu0 0.0
    %9376 = vmatpush1.msra.mxu0 0.0
    %9377 = vmatprep.subr.mxu0 0.0
    %9378 = vmatpush1.msra.mxu0 0.0
    %9379 = vmatprep.subr.mxu0 0.0
    %9380 = vmatpush1.msra.mxu0 0.0
    %9381 = vmatprep.subr.mxu0 0.0
    %9382 = vmatpush1.msra.mxu0 0.0
    %9383 = vmatprep.subr.mxu0 0.0
    %9384 = vmatpush1.msra.mxu0 0.0
    %9385 = vmatprep.subr.mxu0 0.0
    %9386 = vmatpush1.msra.mxu0 0.0
    %9387 = vmatprep.subr.mxu0 0.0
    %9388 = vmatpush1.msra.mxu0 0.0
    %9389 = vmatprep.subr.mxu0 0.0
    %9390 = vmatpush1.msra.mxu0 0.0
    %9391 = vmatprep.subr.mxu0 0.0
    %9392 = vmatpush1.msra.mxu0 0.0
    %9393 = vmatprep.subr.mxu0 0.0
    %9394 = vmatpush1.msra.mxu0 0.0
    %9395 = vmatprep.subr.mxu0 0.0
    %9396 = vmatpush1.msra.mxu0 0.0
    %9397 = vmatprep.subr.mxu0 0.0
    %9398 = vmatpush1.msra.mxu0 0.0
    %9399 = vmatprep.subr.mxu0 0.0
    %9400 = vmatpush1.msra.mxu0 0.0
    %9401 = vmatprep.subr.mxu0 0.0
    %9402 = vmatpush1.msra.mxu0 0.0
    %9403 = vmatprep.subr.mxu0 0.0
    %9404 = vmatpush1.msra.mxu0 0.0
    %9405 = vmatprep.subr.mxu0 0.0
    %9406 = vmatpush1.msra.mxu0 0.0
    %9407 = vmatprep.subr.mxu0 0.0
    %9408 = vmatpush1.msra.mxu0 0.0
    %9409 = vmatprep.subr.mxu0 0.0
    %9410 = vmatpush1.msra.mxu0 0.0
    %9411 = vmatprep.mubr.f32.mxu0 0.0
    %9412 = vmatmul.mubr.f32.gmra.mrb[0].mxu0 %v9342
    %v9413 = vpop.f32.mrb[0].mxu0
    %v9414 = vadd.f32 0.0, %v9413
    %v9415 = vpop.f32.mrb[0].mxu0
    %9416 = vmatprep.mubr.f32.mxu0 0.0
    %9417 = vmatmul.mubr.f32.gmra.mrb[0].mxu0 %v9345
    %v9418 = vpop.f32.mrb[0].mxu0
    %v9419 = vadd.f32 0.0, %v9418
    %v9420 = vpop.f32.mrb[0].mxu0
    %9421 = vdwg.mxu0
    %v9422 = vadd.f32 %v9339, %v9414
    %v9423 = vadd.f32 %v9340, %v9419
    %v9425 = vsel %vm6160, %v8467, 0
    %v9428 = vsel %vm6160, %v8472, 0
    %9430 = vmatprep.subr.mxu0 0.0
    %9431 = vmatpush1.msra.mxu0 %v7782
    %9432 = vmatprep.subr.mxu0 0.0
    %9433 = vmatpush1.msra.mxu0 %v7783
    %9434 = vmatprep.subr.mxu0 0.0
    %9435 = vmatpush1.msra.mxu0 %v7784
    %9436 = vmatprep.subr.mxu0 0.0
    %9437 = vmatpush1.msra.mxu0 %v7785
    %9438 = vmatprep.subr.mxu0 0.0
    %9439 = vmatpush1.msra.mxu0 %v7786
    %9440 = vmatprep.subr.mxu0 0.0
    %9441 = vmatpush1.msra.mxu0 %v7787
    %9442 = vmatprep.subr.mxu0 0.0
    %9443 = vmatpush1.msra.mxu0 %v7788
    %9444 = vmatprep.subr.mxu0 0.0
    %9445 = vmatpush1.msra.mxu0 %v7789
    %9446 = vmatprep.subr.mxu0 0.0
    %9447 = vmatpush1.msra.mxu0 0.0
    %9448 = vmatprep.subr.mxu0 0.0
    %9449 = vmatpush1.msra.mxu0 0.0
    %9450 = vmatprep.subr.mxu0 0.0
    %9451 = vmatpush1.msra.mxu0 0.0
    %9452 = vmatprep.subr.mxu0 0.0
    %9453 = vmatpush1.msra.mxu0 0.0
    %9454 = vmatprep.subr.mxu0 0.0
    %9455 = vmatpush1.msra.mxu0 0.0
    %9456 = vmatprep.subr.mxu0 0.0
    %9457 = vmatpush1.msra.mxu0 0.0
    %9458 = vmatprep.subr.mxu0 0.0
    %9459 = vmatpush1.msra.mxu0 0.0
    %9460 = vmatprep.subr.mxu0 0.0
    %9461 = vmatpush1.msra.mxu0 0.0
    %9462 = vmatprep.subr.mxu0 0.0
    %9463 = vmatpush1.msra.mxu0 0.0
    %9464 = vmatprep.subr.mxu0 0.0
    %9465 = vmatpush1.msra.mxu0 0.0
    %9466 = vmatprep.subr.mxu0 0.0
    %9467 = vmatpush1.msra.mxu0 0.0
    %9468 = vmatprep.subr.mxu0 0.0
    %9469 = vmatpush1.msra.mxu0 0.0
    %9470 = vmatprep.subr.mxu0 0.0
    %9471 = vmatpush1.msra.mxu0 0.0
    %9472 = vmatprep.subr.mxu0 0.0
    %9473 = vmatpush1.msra.mxu0 0.0
    %9474 = vmatprep.subr.mxu0 0.0
    %9475 = vmatpush1.msra.mxu0 0.0
    %9476 = vmatprep.subr.mxu0 0.0
    %9477 = vmatpush1.msra.mxu0 0.0
    %9478 = vmatprep.subr.mxu0 0.0
    %9479 = vmatpush1.msra.mxu0 0.0
    %9480 = vmatprep.subr.mxu0 0.0
    %9481 = vmatpush1.msra.mxu0 0.0
    %9482 = vmatprep.subr.mxu0 0.0
    %9483 = vmatpush1.msra.mxu0 0.0
    %9484 = vmatprep.subr.mxu0 0.0
    %9485 = vmatpush1.msra.mxu0 0.0
    %9486 = vmatprep.subr.mxu0 0.0
    %9487 = vmatpush1.msra.mxu0 0.0
    %9488 = vmatprep.subr.mxu0 0.0
    %9489 = vmatpush1.msra.mxu0 0.0
    %9490 = vmatprep.subr.mxu0 0.0
    %9491 = vmatpush1.msra.mxu0 0.0
    %9492 = vmatprep.subr.mxu0 0.0
    %9493 = vmatpush1.msra.mxu0 0.0
    %9494 = vmatprep.mubr.f32.mxu0 0.0
    %9495 = vmatmul.mubr.f32.gmra.mrb[0].mxu0 %v9425
    %v9496 = vpop.f32.mrb[0].mxu0
    %v9497 = vadd.f32 0.0, %v9496
    %v9498 = vpop.f32.mrb[0].mxu0
    %9499 = vmatprep.mubr.f32.mxu0 0.0
    %9500 = vmatmul.mubr.f32.gmra.mrb[0].mxu0 %v9428
    %v9501 = vpop.f32.mrb[0].mxu0
    %v9502 = vadd.f32 0.0, %v9501
    %v9503 = vpop.f32.mrb[0].mxu0
    %9504 = vdwg.mxu0
    %v9505 = vadd.f32 %v9422, %v9497
    %v9506 = vadd.f32 %v9423, %v9502
    %v9508 = vsel %vm6160, %v8477, 0
    %v9511 = vsel %vm6160, %v8482, 0
    %9513 = vmatprep.subr.mxu0 0.0
    %9514 = vmatpush1.msra.mxu0 %v7874
    %9515 = vmatprep.subr.mxu0 0.0
    %9516 = vmatpush1.msra.mxu0 %v7875
    %9517 = vmatprep.subr.mxu0 0.0
    %9518 = vmatpush1.msra.mxu0 %v7876
    %9519 = vmatprep.subr.mxu0 0.0
    %9520 = vmatpush1.msra.mxu0 %v7877
    %9521 = vmatprep.subr.mxu0 0.0
    %9522 = vmatpush1.msra.mxu0 %v7878
    %9523 = vmatprep.subr.mxu0 0.0
    %9524 = vmatpush1.msra.mxu0 %v7879
    %9525 = vmatprep.subr.mxu0 0.0
    %9526 = vmatpush1.msra.mxu0 %v7880
    %9527 = vmatprep.subr.mxu0 0.0
    %9528 = vmatpush1.msra.mxu0 %v7881
    %9529 = vmatprep.subr.mxu0 0.0
    %9530 = vmatpush1.msra.mxu0 0.0
    %9531 = vmatprep.subr.mxu0 0.0
    %9532 = vmatpush1.msra.mxu0 0.0
    %9533 = vmatprep.subr.mxu0 0.0
    %9534 = vmatpush1.msra.mxu0 0.0
    %9535 = vmatprep.subr.mxu0 0.0
    %9536 = vmatpush1.msra.mxu0 0.0
    %9537 = vmatprep.subr.mxu0 0.0
    %9538 = vmatpush1.msra.mxu0 0.0
    %9539 = vmatprep.subr.mxu0 0.0
    %9540 = vmatpush1.msra.mxu0 0.0
    %9541 = vmatprep.subr.mxu0 0.0
    %9542 = vmatpush1.msra.mxu0 0.0
    %9543 = vmatprep.subr.mxu0 0.0
    %9544 = vmatpush1.msra.mxu0 0.0
    %9545 = vmatprep.subr.mxu0 0.0
    %9546 = vmatpush1.msra.mxu0 0.0
    %9547 = vmatprep.subr.mxu0 0.0
    %9548 = vmatpush1.msra.mxu0 0.0
    %9549 = vmatprep.subr.mxu0 0.0
    %9550 = vmatpush1.msra.mxu0 0.0
    %9551 = vmatprep.subr.mxu0 0.0
    %9552 = vmatpush1.msra.mxu0 0.0
    %9553 = vmatprep.subr.mxu0 0.0
    %9554 = vmatpush1.msra.mxu0 0.0
    %9555 = vmatprep.subr.mxu0 0.0
    %9556 = vmatpush1.msra.mxu0 0.0
    %9557 = vmatprep.subr.mxu0 0.0
    %9558 = vmatpush1.msra.mxu0 0.0
    %9559 = vmatprep.subr.mxu0 0.0
    %9560 = vmatpush1.msra.mxu0 0.0
    %9561 = vmatprep.subr.mxu0 0.0
    %9562 = vmatpush1.msra.mxu0 0.0
    %9563 = vmatprep.subr.mxu0 0.0
    %9564 = vmatpush1.msra.mxu0 0.0
    %9565 = vmatprep.subr.mxu0 0.0
    %9566 = vmatpush1.msra.mxu0 0.0
    %9567 = vmatprep.subr.mxu0 0.0
    %9568 = vmatpush1.msra.mxu0 0.0
    %9569 = vmatprep.subr.mxu0 0.0
    %9570 = vmatpush1.msra.mxu0 0.0
    %9571 = vmatprep.subr.mxu0 0.0
    %9572 = vmatpush1.msra.mxu0 0.0
    %9573 = vmatprep.subr.mxu0 0.0
    %9574 = vmatpush1.msra.mxu0 0.0
    %9575 = vmatprep.subr.mxu0 0.0
    %9576 = vmatpush1.msra.mxu0 0.0
    %9577 = vmatprep.mubr.f32.mxu0 0.0
    %9578 = vmatmul.mubr.f32.gmra.mrb[0].mxu0 %v9508
    %v9579 = vpop.f32.mrb[0].mxu0
    %v9580 = vadd.f32 0.0, %v9579
    %v9581 = vpop.f32.mrb[0].mxu0
    %9582 = vmatprep.mubr.f32.mxu0 0.0
    %9583 = vmatmul.mubr.f32.gmra.mrb[0].mxu0 %v9511
    %v9584 = vpop.f32.mrb[0].mxu0
    %v9585 = vadd.f32 0.0, %v9584
    %v9586 = vpop.f32.mrb[0].mxu0
    %9587 = vdwg.mxu0
    %v9588 = vadd.f32 %v9505, %v9580
    %v9589 = vadd.f32 %v9506, %v9585
    %v9591 = vsel %vm6160, %v8487, 0
    %v9594 = vsel %vm6160, %v8492, 0
    %9596 = vmatprep.subr.mxu0 0.0
    %9597 = vmatpush1.msra.mxu0 %v7966
    %9598 = vmatprep.subr.mxu0 0.0
    %9599 = vmatpush1.msra.mxu0 %v7967
    %9600 = vmatprep.subr.mxu0 0.0
    %9601 = vmatpush1.msra.mxu0 %v7968
    %9602 = vmatprep.subr.mxu0 0.0
    %9603 = vmatpush1.msra.mxu0 %v7969
    %9604 = vmatprep.subr.mxu0 0.0
    %9605 = vmatpush1.msra.mxu0 %v7970
    %9606 = vmatprep.subr.mxu0 0.0
    %9607 = vmatpush1.msra.mxu0 %v7971
    %9608 = vmatprep.subr.mxu0 0.0
    %9609 = vmatpush1.msra.mxu0 %v7972
    %9610 = vmatprep.subr.mxu0 0.0
    %9611 = vmatpush1.msra.mxu0 %v7973
    %9612 = vmatprep.subr.mxu0 0.0
    %9613 = vmatpush1.msra.mxu0 0.0
    %9614 = vmatprep.subr.mxu0 0.0
    %9615 = vmatpush1.msra.mxu0 0.0
    %9616 = vmatprep.subr.mxu0 0.0
    %9617 = vmatpush1.msra.mxu0 0.0
    %9618 = vmatprep.subr.mxu0 0.0
    %9619 = vmatpush1.msra.mxu0 0.0
    %9620 = vmatprep.subr.mxu0 0.0
    %9621 = vmatpush1.msra.mxu0 0.0
    %9622 = vmatprep.subr.mxu0 0.0
    %9623 = vmatpush1.msra.mxu0 0.0
    %9624 = vmatprep.subr.mxu0 0.0
    %9625 = vmatpush1.msra.mxu0 0.0
    %9626 = vmatprep.subr.mxu0 0.0
    %9627 = vmatpush1.msra.mxu0 0.0
    %9628 = vmatprep.subr.mxu0 0.0
    %9629 = vmatpush1.msra.mxu0 0.0
    %9630 = vmatprep.subr.mxu0 0.0
    %9631 = vmatpush1.msra.mxu0 0.0
    %9632 = vmatprep.subr.mxu0 0.0
    %9633 = vmatpush1.msra.mxu0 0.0
    %9634 = vmatprep.subr.mxu0 0.0
    %9635 = vmatpush1.msra.mxu0 0.0
    %9636 = vmatprep.subr.mxu0 0.0
    %9637 = vmatpush1.msra.mxu0 0.0
    %9638 = vmatprep.subr.mxu0 0.0
    %9639 = vmatpush1.msra.mxu0 0.0
    %9640 = vmatprep.subr.mxu0 0.0
    %9641 = vmatpush1.msra.mxu0 0.0
    %9642 = vmatprep.subr.mxu0 0.0
    %9643 = vmatpush1.msra.mxu0 0.0
    %9644 = vmatprep.subr.mxu0 0.0
    %9645 = vmatpush1.msra.mxu0 0.0
    %9646 = vmatprep.subr.mxu0 0.0
    %9647 = vmatpush1.msra.mxu0 0.0
    %9648 = vmatprep.subr.mxu0 0.0
    %9649 = vmatpush1.msra.mxu0 0.0
    %9650 = vmatprep.subr.mxu0 0.0
    %9651 = vmatpush1.msra.mxu0 0.0
    %9652 = vmatprep.subr.mxu0 0.0
    %9653 = vmatpush1.msra.mxu0 0.0
    %9654 = vmatprep.subr.mxu0 0.0
    %9655 = vmatpush1.msra.mxu0 0.0
    %9656 = vmatprep.subr.mxu0 0.0
    %9657 = vmatpush1.msra.mxu0 0.0
    %9658 = vmatprep.subr.mxu0 0.0
    %9659 = vmatpush1.msra.mxu0 0.0
    %9660 = vmatprep.mubr.f32.mxu0 0.0
    %9661 = vmatmul.mubr.f32.gmra.mrb[0].mxu0 %v9591
    %v9662 = vpop.f32.mrb[0].mxu0
    %v9663 = vadd.f32 0.0, %v9662
    %v9664 = vpop.f32.mrb[0].mxu0
    %9665 = vmatprep.mubr.f32.mxu0 0.0
    %9666 = vmatmul.mubr.f32.gmra.mrb[0].mxu0 %v9594
    %v9667 = vpop.f32.mrb[0].mxu0
    %v9668 = vadd.f32 0.0, %v9667
    %v9669 = vpop.f32.mrb[0].mxu0
    %9670 = vdwg.mxu0
    %v9671 = vadd.f32 %v9588, %v9663
    %v9672 = vadd.f32 %v9589, %v9668
    %v9674 = vsel %vm6160, %v8497, 0
    %v9677 = vsel %vm6160, %v8502, 0
    %9679 = vmatprep.subr.mxu0 0.0
    %9680 = vmatpush1.msra.mxu0 %v8058
    %9681 = vmatprep.subr.mxu0 0.0
    %9682 = vmatpush1.msra.mxu0 %v8059
    %9683 = vmatprep.subr.mxu0 0.0
    %9684 = vmatpush1.msra.mxu0 %v8060
    %9685 = vmatprep.subr.mxu0 0.0
    %9686 = vmatpush1.msra.mxu0 %v8061
    %9687 = vmatprep.subr.mxu0 0.0
    %9688 = vmatpush1.msra.mxu0 %v8062
    %9689 = vmatprep.subr.mxu0 0.0
    %9690 = vmatpush1.msra.mxu0 %v8063
    %9691 = vmatprep.subr.mxu0 0.0
    %9692 = vmatpush1.msra.mxu0 %v8064
    %9693 = vmatprep.subr.mxu0 0.0
    %9694 = vmatpush1.msra.mxu0 %v8065
    %9695 = vmatprep.subr.mxu0 0.0
    %9696 = vmatpush1.msra.mxu0 0.0
    %9697 = vmatprep.subr.mxu0 0.0
    %9698 = vmatpush1.msra.mxu0 0.0
    %9699 = vmatprep.subr.mxu0 0.0
    %9700 = vmatpush1.msra.mxu0 0.0
    %9701 = vmatprep.subr.mxu0 0.0
    %9702 = vmatpush1.msra.mxu0 0.0
    %9703 = vmatprep.subr.mxu0 0.0
    %9704 = vmatpush1.msra.mxu0 0.0
    %9705 = vmatprep.subr.mxu0 0.0
    %9706 = vmatpush1.msra.mxu0 0.0
    %9707 = vmatprep.subr.mxu0 0.0
    %9708 = vmatpush1.msra.mxu0 0.0
    %9709 = vmatprep.subr.mxu0 0.0
    %9710 = vmatpush1.msra.mxu0 0.0
    %9711 = vmatprep.subr.mxu0 0.0
    %9712 = vmatpush1.msra.mxu0 0.0
    %9713 = vmatprep.subr.mxu0 0.0
    %9714 = vmatpush1.msra.mxu0 0.0
    %9715 = vmatprep.subr.mxu0 0.0
    %9716 = vmatpush1.msra.mxu0 0.0
    %9717 = vmatprep.subr.mxu0 0.0
    %9718 = vmatpush1.msra.mxu0 0.0
    %9719 = vmatprep.subr.mxu0 0.0
    %9720 = vmatpush1.msra.mxu0 0.0
    %9721 = vmatprep.subr.mxu0 0.0
    %9722 = vmatpush1.msra.mxu0 0.0
    %9723 = vmatprep.subr.mxu0 0.0
    %9724 = vmatpush1.msra.mxu0 0.0
    %9725 = vmatprep.subr.mxu0 0.0
    %9726 = vmatpush1.msra.mxu0 0.0
    %9727 = vmatprep.subr.mxu0 0.0
    %9728 = vmatpush1.msra.mxu0 0.0
    %9729 = vmatprep.subr.mxu0 0.0
    %9730 = vmatpush1.msra.mxu0 0.0
    %9731 = vmatprep.subr.mxu0 0.0
    %9732 = vmatpush1.msra.mxu0 0.0
    %9733 = vmatprep.subr.mxu0 0.0
    %9734 = vmatpush1.msra.mxu0 0.0
    %9735 = vmatprep.subr.mxu0 0.0
    %9736 = vmatpush1.msra.mxu0 0.0
    %9737 = vmatprep.subr.mxu0 0.0
    %9738 = vmatpush1.msra.mxu0 0.0
    %9739 = vmatprep.subr.mxu0 0.0
    %9740 = vmatpush1.msra.mxu0 0.0
    %9741 = vmatprep.subr.mxu0 0.0
    %9742 = vmatpush1.msra.mxu0 0.0
    %9743 = vmatprep.mubr.f32.mxu0 0.0
    %9744 = vmatmul.mubr.f32.gmra.mrb[0].mxu0 %v9674
    %v9745 = vpop.f32.mrb[0].mxu0
    %v9746 = vadd.f32 0.0, %v9745
    %v9747 = vpop.f32.mrb[0].mxu0
    %9748 = vmatprep.mubr.f32.mxu0 0.0
    %9749 = vmatmul.mubr.f32.gmra.mrb[0].mxu0 %v9677
    %v9750 = vpop.f32.mrb[0].mxu0
    %v9751 = vadd.f32 0.0, %v9750
    %v9752 = vpop.f32.mrb[0].mxu0
    %9753 = vdwg.mxu0
    %v9754 = vadd.f32 %v9671, %v9746
    %v9755 = vadd.f32 %v9672, %v9751
    %v9757 = vsel %vm6160, %v8507, 0
    %v9760 = vsel %vm6160, %v8512, 0
    %9762 = vmatprep.subr.mxu0 0.0
    %9763 = vmatpush1.msra.mxu0 %v8150
    %9764 = vmatprep.subr.mxu0 0.0
    %9765 = vmatpush1.msra.mxu0 %v8151
    %9766 = vmatprep.subr.mxu0 0.0
    %9767 = vmatpush1.msra.mxu0 %v8152
    %9768 = vmatprep.subr.mxu0 0.0
    %9769 = vmatpush1.msra.mxu0 %v8153
    %9770 = vmatprep.subr.mxu0 0.0
    %9771 = vmatpush1.msra.mxu0 %v8154
    %9772 = vmatprep.subr.mxu0 0.0
    %9773 = vmatpush1.msra.mxu0 %v8155
    %9774 = vmatprep.subr.mxu0 0.0
    %9775 = vmatpush1.msra.mxu0 %v8156
    %9776 = vmatprep.subr.mxu0 0.0
    %9777 = vmatpush1.msra.mxu0 %v8157
    %9778 = vmatprep.subr.mxu0 0.0
    %9779 = vmatpush1.msra.mxu0 0.0
    %9780 = vmatprep.subr.mxu0 0.0
    %9781 = vmatpush1.msra.mxu0 0.0
    %9782 = vmatprep.subr.mxu0 0.0
    %9783 = vmatpush1.msra.mxu0 0.0
    %9784 = vmatprep.subr.mxu0 0.0
    %9785 = vmatpush1.msra.mxu0 0.0
    %9786 = vmatprep.subr.mxu0 0.0
    %9787 = vmatpush1.msra.mxu0 0.0
    %9788 = vmatprep.subr.mxu0 0.0
    %9789 = vmatpush1.msra.mxu0 0.0
    %9790 = vmatprep.subr.mxu0 0.0
    %9791 = vmatpush1.msra.mxu0 0.0
    %9792 = vmatprep.subr.mxu0 0.0
    %9793 = vmatpush1.msra.mxu0 0.0
    %9794 = vmatprep.subr.mxu0 0.0
    %9795 = vmatpush1.msra.mxu0 0.0
    %9796 = vmatprep.subr.mxu0 0.0
    %9797 = vmatpush1.msra.mxu0 0.0
    %9798 = vmatprep.subr.mxu0 0.0
    %9799 = vmatpush1.msra.mxu0 0.0
    %9800 = vmatprep.subr.mxu0 0.0
    %9801 = vmatpush1.msra.mxu0 0.0
    %9802 = vmatprep.subr.mxu0 0.0
    %9803 = vmatpush1.msra.mxu0 0.0
    %9804 = vmatprep.subr.mxu0 0.0
    %9805 = vmatpush1.msra.mxu0 0.0
    %9806 = vmatprep.subr.mxu0 0.0
    %9807 = vmatpush1.msra.mxu0 0.0
    %9808 = vmatprep.subr.mxu0 0.0
    %9809 = vmatpush1.msra.mxu0 0.0
    %9810 = vmatprep.subr.mxu0 0.0
    %9811 = vmatpush1.msra.mxu0 0.0
    %9812 = vmatprep.subr.mxu0 0.0
    %9813 = vmatpush1.msra.mxu0 0.0
    %9814 = vmatprep.subr.mxu0 0.0
    %9815 = vmatpush1.msra.mxu0 0.0
    %9816 = vmatprep.subr.mxu0 0.0
    %9817 = vmatpush1.msra.mxu0 0.0
    %9818 = vmatprep.subr.mxu0 0.0
    %9819 = vmatpush1.msra.mxu0 0.0
    %9820 = vmatprep.subr.mxu0 0.0
    %9821 = vmatpush1.msra.mxu0 0.0
    %9822 = vmatprep.subr.mxu0 0.0
    %9823 = vmatpush1.msra.mxu0 0.0
    %9824 = vmatprep.subr.mxu0 0.0
    %9825 = vmatpush1.msra.mxu0 0.0
    %9826 = vmatprep.mubr.f32.mxu0 0.0
    %9827 = vmatmul.mubr.f32.gmra.mrb[0].mxu0 %v9757
    %v9828 = vpop.f32.mrb[0].mxu0
    %v9829 = vadd.f32 0.0, %v9828
    %v9830 = vpop.f32.mrb[0].mxu0
    %9831 = vmatprep.mubr.f32.mxu0 0.0
    %9832 = vmatmul.mubr.f32.gmra.mrb[0].mxu0 %v9760
    %v9833 = vpop.f32.mrb[0].mxu0
    %v9834 = vadd.f32 0.0, %v9833
    %v9835 = vpop.f32.mrb[0].mxu0
    %9836 = vdwg.mxu0
    %v9837 = vadd.f32 %v9754, %v9829
    %v9838 = vadd.f32 %v9755, %v9834
    %v9839 = vld [vmem:[%s7] sm:$0x1]
    %v9840 = vlaneseq
    %v9841 = vshrl.u32 %v9840, 7
    %v9842 = vsub.s32 0, %v9841
    %v9843 = vrot.slane %v9839, %v9842
    %v9844 = vadd.f32 %v8239, %v9843
    %v9845 = vadd.f32 %v8240, %v9843
    %v9846 = vadd.f32 %v9837, %v9843
    %v9847 = vadd.f32 %v9838, %v9843
    %v9848 = vadd.f32 %v9844, %v9845
    %v9849 = vadd.f32 %v9848, %v9846
    %v9850 = vadd.f32 %v9849, %v9847
    %v9851 = vrot.slane %v9850, 4
    %v9852 = vadd.f32 %v9850, %v9851
    %v9853 = vrot.slane %v9852, 2
    %v9854 = vadd.f32 %v9852, %v9853
    %v9855 = vrot.slane %v9854, 1
    %v9856 = vadd.f32 %v9854, %v9855
    %v9857 = vrcp.pop 32.0
    %v9858 = vmul.f32 %v9856, %v9857
    %v9859 = vsub.f32 %v9844, %v9858
    %v9860 = vsub.f32 %v9845, %v9858
    %v9861 = vsub.f32 %v9846, %v9858
    %v9862 = vsub.f32 %v9847, %v9858
    %v9863 = vmul.f32 %v9859, %v9859
    %v9864 = vmul.f32 %v9860, %v9860
    %v9865 = vmul.f32 %v9861, %v9861
    %v9866 = vmul.f32 %v9862, %v9862
    %v9867 = vadd.f32 %v9863, %v9864
    %v9868 = vadd.f32 %v9867, %v9865
    %v9869 = vadd.f32 %v9868, %v9866
    %v9870 = vrot.slane %v9869, 4
    %v9871 = vadd.f32 %v9869, %v9870
    %v9872 = vrot.slane %v9871, 2
    %v9873 = vadd.f32 %v9871, %v9872
    %v9874 = vrot.slane %v9873, 1
    %v9875 = vadd.f32 %v9873, %v9874
    %v9876 = vmul.f32 %v9875, %v9857
    %v9877 = vadd.f32 %v9876, 1e-05
    %v9878 = vrsqrt.pop %v9877
    %v9879 = vmul.f32 %v9859, %v9878
    %v9880 = vmul.f32 %v9860, %v9878
    %v9881 = vmul.f32 %v9861, %v9878
    %v9882 = vmul.f32 %v9862, %v9878
    %v9883 = vld [vmem:[%s7 + $0x1] sm:$0x1]
    %v9884 = vlaneseq
    %v9885 = vshrl.u32 %v9884, 7
    %v9886 = vsub.s32 0, %v9885
    %v9887 = vrot.slane %v9883, %v9886
    %v9888 = vmul.f32 %v9879, %v9887
    %v9889 = vmul.f32 %v9880, %v9887
    %v9890 = vmul.f32 %v9881, %v9887
    %v9891 = vmul.f32 %v9882, %v9887
    %v9892 = vld [vmem:[%s7 + $0x2] sm:$0x1]
    %v9893 = vlaneseq
    %v9894 = vshrl.u32 %v9893, 7
    %v9895 = vsub.s32 0, %v9894
    %v9896 = vrot.slane %v9892, %v9895
    %v9897 = vadd.f32 %v9888, %v9896
    %v9898 = vadd.f32 %v9889, %v9896
    %v9899 = vadd.f32 %v9890, %v9896
    %v9900 = vadd.f32 %v9891, %v9896
    %vm9901 = vcmp.gt.f32.partialorder %v9897, 0.0
    %vm9902 = vcmp.gt.f32.partialorder %v9898, 0.0
    %vm9903 = vcmp.gt.f32.partialorder %v9899, 0.0
    %vm9904 = vcmp.gt.f32.partialorder %v9900, 0.0
    %v9905 = vmul.f32 %v9897, 0.2
    %v9906 = vmul.f32 %v9898, 0.2
    %v9907 = vmul.f32 %v9899, 0.2
    %v9908 = vmul.f32 %v9900, 0.2
    %v9909 = vsel %vm9901, %v9897, %v9905
    %v9910 = vsel %vm9902, %v9898, %v9906
    %v9911 = vsel %vm9903, %v9899, %v9907
    %v9912 = vsel %vm9904, %v9900, %v9908
    %v9913 = vld [vmem:[%s6] sm:$0xff]
    %v9914 = vld [vmem:[%s6 + $0x8] sm:$0xff]
    %v9915 = vmul.f32 %v9909, %v9913
    %v9916 = vmul.f32 %v9910, %v9914
    %v9917 = vmul.f32 %v9911, %v9913
    %v9918 = vmul.f32 %v9912, %v9914
    %v9919 = vmul.u32 %v6483, 16
    %vm9920 = vcmp.ge.s32.totalorder %v6500, %v9919
    %v9921 = vadd.s32 %v6483, 1
    %v9922 = vmul.u32 %v9921, 16
    %vm9923 = vcmp.lt.s32.totalorder %v6500, %v9922
    %vm9924 = vmand %vm9920, %vm9923
    %v9925 = vsel %vm9924, 1, 0
    %v9926 = vcvt.s32.f32 %v9925
    %vm9927 = vcmask 261120
    %v9929 = vsel %vm9927, %v9926, 0
    %9931 = vmatprep.subr.mxu0 0.0
    %9932 = vmatpush1.msra.mxu0 %v9915
    %9933 = vmatprep.subr.mxu0 0.0
    %9934 = vmatpush1.msra.mxu0 %v9916
    %9935 = vmatprep.subr.mxu0 0.0
    %9936 = vmatpush1.msra.mxu0 %v9917
    %9937 = vmatprep.subr.mxu0 0.0
    %9938 = vmatpush1.msra.mxu0 %v9918
    %9939 = vmatprep.subr.mxu0 0.0
    %9940 = vmatpush1.msra.mxu0 0.0
    %9941 = vmatprep.subr.mxu0 0.0
    %9942 = vmatpush1.msra.mxu0 0.0
    %9943 = vmatprep.subr.mxu0 0.0
    %9944 = vmatpush1.msra.mxu0 0.0
    %9945 = vmatprep.subr.mxu0 0.0
    %9946 = vmatpush1.msra.mxu0 0.0
    %9947 = vmatprep.subr.mxu0 0.0
    %9948 = vmatpush1.msra.mxu0 0.0
    %9949 = vmatprep.subr.mxu0 0.0
    %9950 = vmatpush1.msra.mxu0 0.0
    %9951 = vmatprep.subr.mxu0 0.0
    %9952 = vmatpush1.msra.mxu0 0.0
    %9953 = vmatprep.subr.mxu0 0.0
    %9954 = vmatpush1.msra.mxu0 0.0
    %9955 = vmatprep.subr.mxu0 0.0
    %9956 = vmatpush1.msra.mxu0 0.0
    %9957 = vmatprep.subr.mxu0 0.0
    %9958 = vmatpush1.msra.mxu0 0.0
    %9959 = vmatprep.subr.mxu0 0.0
    %9960 = vmatpush1.msra.mxu0 0.0
    %9961 = vmatprep.subr.mxu0 0.0
    %9962 = vmatpush1.msra.mxu0 0.0
    %9963 = vmatprep.subr.mxu0 0.0
    %9964 = vmatpush1.msra.mxu0 0.0
    %9965 = vmatprep.subr.mxu0 0.0
    %9966 = vmatpush1.msra.mxu0 0.0
    %9967 = vmatprep.subr.mxu0 0.0
    %9968 = vmatpush1.msra.mxu0 0.0
    %9969 = vmatprep.subr.mxu0 0.0
    %9970 = vmatpush1.msra.mxu0 0.0
    %9971 = vmatprep.subr.mxu0 0.0
    %9972 = vmatpush1.msra.mxu0 0.0
    %9973 = vmatprep.subr.mxu0 0.0
    %9974 = vmatpush1.msra.mxu0 0.0
    %9975 = vmatprep.subr.mxu0 0.0
    %9976 = vmatpush1.msra.mxu0 0.0
    %9977 = vmatprep.subr.mxu0 0.0
    %9978 = vmatpush1.msra.mxu0 0.0
    %9979 = vmatprep.subr.mxu0 0.0
    %9980 = vmatpush1.msra.mxu0 0.0
    %9981 = vmatprep.subr.mxu0 0.0
    %9982 = vmatpush1.msra.mxu0 0.0
    %9983 = vmatprep.subr.mxu0 0.0
    %9984 = vmatpush1.msra.mxu0 0.0
    %9985 = vmatprep.subr.mxu0 0.0
    %9986 = vmatpush1.msra.mxu0 0.0
    %9987 = vmatprep.subr.mxu0 0.0
    %9988 = vmatpush1.msra.mxu0 0.0
    %9989 = vmatprep.subr.mxu0 0.0
    %9990 = vmatpush1.msra.mxu0 0.0
    %9991 = vmatprep.subr.mxu0 0.0
    %9992 = vmatpush1.msra.mxu0 0.0
    %9993 = vmatprep.subr.mxu0 0.0
    %9994 = vmatpush1.msra.mxu0 0.0
    %9995 = vmatprep.mubr.f32.mxu0 0.0
    %9996 = vmatmul.mubr.f32.gmra.mrb[0].mxu0 %v9929
    %v9997 = vpop.f32.mrb[0].mxu0
    %v9998 = vadd.f32 0.0, %v9997
    %v9999 = vpop.f32.mrb[0].mxu0
    %10000 = vdwg.mxu0
    %vm10001 = vcmask 1041408
    %v10002 = vsel %vm10001, %v9998, 0.0
    %10003 = vadd.xlane.f32.xlu0 %v10002
    %v10004 = vpop.xlane.xlu0 %10003
    %v10005 = vld [vmem:[%s7 + $0x3] sm:$0x1]
    %v10006 = vlaneseq
    %v10007 = vshrl.u32 %v10006, 7
    %v10008 = vsub.s32 0, %v10007
    %v10009 = vrot.slane %v10005, %v10008
    %v10010 = vadd.f32 %v10004, %v10009
    %v10011 = vxor.u32 %v10010, 2147483648
    %v10012 = vmul.f32 %v10011, 1.442695
    %v10013 = vpow.pop %v10012
    %v10014 = vadd.f32 %v10013, 1.0
    %v10015 = vrcp.pop %v10014
    %v10016 = vmul.f32 1.0, %v10015
    %vm10017 = vcmask 1024
    %10018 = vst.msk [vmem:[%s8] sm:$0x3] %vm10017, %v10016
    // Predicated region
    $region42: #{discriminator_forward.1} parent=1 // pred_check
      _
    $region43: #{discriminator_forward.1} parent=1 // pred_check_branch
      %10020 = sbr.rel (0) target = $region45
    $region44: #{discriminator_forward.1} parent=1 // pred_region
      _
    $region45: #{discriminator_forward.1} parent=1 // pred_fallthru
      _
    // Predicated region
    $region46: #{discriminator_forward.1} parent=1 // pred_check
      _
    $region47: #{discriminator_forward.1} parent=1 // pred_check_branch
      %10022 = sbr.rel (0) target = $region49
    $region48: #{discriminator_forward.1} parent=1 // pred_region
      _
    $region49: #{discriminator_forward.1} parent=1 // pred_fallthru
      _
    %10023 = vsyncpa [#allocation3], 1
    %10024 = vsyncpa [#allocation5], 1

</llo_original>
